<compile_context>
chip_gen: v7x
topology: tpu7x:2x2x1
jax: 0.10.0
libtpu: 0.0.40
codegen_flags: <defaults>
</compile_context>

<pallas_src>
import functools

import numpy as np
import jax
import jax.numpy as jnp
from jax import lax
from jax.experimental import pallas as pl
from jax.experimental.pallas import tpu as pltpu


# --------------------------------------------------------------------------------------
# Kernel
# --------------------------------------------------------------------------------------
def _make_csam_kernel(precision):
    """Kernel factory; `precision` pins the MXU pass count of the f32 dots (or None)."""

    def _csam_kernel(x_ref, w1t_ref, w2t_ref, w3t_ref, mconv_ref, bias_ref, o_ref):
        x = x_ref[...].astype(jnp.float32)                 # (bt, C, S): in-kernel upcast
        bt = x.shape[0]

        # ---- CSAMChannelModule ----
        avg = jnp.mean(x, axis=2)                          # (bt, C) adaptive avg pool
        mx = jnp.max(x, axis=2)                            # (bt, C) adaptive max pool
        ym = jnp.concatenate([avg, mx], axis=0)            # (2*bt, C): avg rows, then max rows

        # Shared bias-free MLP applied to all pooled vectors at once (batched M dimension).
        h = jnp.maximum(jnp.dot(ym, w1t_ref[...],
                                preferred_element_type=jnp.float32,
                                precision=precision), 0.0)
        h = jnp.maximum(jnp.dot(h, w2t_ref[...],
                                preferred_element_type=jnp.float32,
                                precision=precision), 0.0)
        o = jnp.dot(h, w3t_ref[...],
                    preferred_element_type=jnp.float32,
                    precision=precision)                   # (2*bt, C)

        ch_att = jax.nn.sigmoid(o[:bt] + o[bt:])           # (bt, C)
        y_cam = x * (1.0 + ch_att[:, :, None])             # x + x * att

        # ---- CSAMSpatialModule ----
        c_max = jnp.max(y_cam, axis=1)                     # (bt, S) channel max pool
        c_mean = jnp.mean(y_cam, axis=1)                   # (bt, S) channel mean pool
        pooled = jnp.concatenate([c_max, c_mean], axis=1)  # (bt, 2S): fused K axis
        # 7x7x7 "same" Conv3d(2 -> 1) as ONE matmul against the stacked Toeplitz matrix.
        conv = (jnp.dot(pooled, mconv_ref[...],
                        preferred_element_type=jnp.float32,
                        precision=precision)
                + bias_ref[0])                             # (bt, S), scalar bias from SMEM
        sp_att = jax.nn.sigmoid(conv)                      # (bt, S)

        o_ref[...] = (y_cam * (1.0 + sp_att[:, None, :])).astype(o_ref.dtype)

    return _csam_kernel


# --------------------------------------------------------------------------------------
# Conv3d(2->1, k, "same") -> stacked (2S, S) Toeplitz matrix
# --------------------------------------------------------------------------------------
@functools.lru_cache(maxsize=8)
def _conv_index_tables(T, H, W, K):
    """Weight-independent index tables (cached on spatial dims only -> never stale)."""
    pad = (K - 1) // 2
    ti, hi, wi = np.meshgrid(np.arange(T), np.arange(H), np.arange(W), indexing="ij")
    ti, hi, wi = ti.reshape(-1), hi.reshape(-1), wi.reshape(-1)
    dt = ti[:, None] - ti[None, :] + pad                   # (S_in, S_out)
    dh = hi[:, None] - hi[None, :] + pad
    dw = wi[:, None] - wi[None, :] + pad
    valid = (dt >= 0) & (dt < K) & (dh >= 0) & (dh < K) & (dw >= 0) & (dw < K)
    return (np.clip(dt, 0, K - 1), np.clip(dh, 0, K - 1), np.clip(dw, 0, K - 1), valid)


def _build_conv_matrix_np(conv_w_np, T, H, W):
    K = conv_w_np.shape[-1]
    dtc, dhc, dwc, valid = _conv_index_tables(T, H, W, K)
    w = np.asarray(conv_w_np, np.float32)[0]               # (2, K, K, K)
    m = np.where(valid[None], w[:, dtc, dhc, dwc], 0.0).astype(np.float32)  # (2, S, S)
    # Rows [0, S) = max-channel weights, rows [S, 2S) = mean-channel weights
    # (matches CSAMChannelPool's cat(max, mean)).
    return np.concatenate([m[0], m[1]], axis=0)            # (2S, S)


@functools.lru_cache(maxsize=8)
def _cached_conv_matrix(conv_w_bytes, conv_w_shape, T, H, W):
    conv_w = np.frombuffer(conv_w_bytes, dtype=np.float32).reshape(conv_w_shape)
    # Device-resident constant, reused across eager calls (keyed on the weight bytes, so a
    # new weight array produces a new entry rather than a stale hit).
    return jnp.asarray(_build_conv_matrix_np(conv_w, T, H, W))


def _build_conv_matrix_traced(conv_w, T, H, W):
    """Tracer-safe build (used when csam_forward is jitted with traced weights)."""
    K = conv_w.shape[-1]
    dtc, dhc, dwc, valid = _conv_index_tables(T, H, W, K)
    w = jnp.asarray(conv_w, jnp.float32)[0]                # (2, K, K, K)
    m = jnp.where(jnp.asarray(valid)[None], w[:, dtc, dhc, dwc], 0.0)       # (2, S, S)
    return jnp.concatenate([m[0], m[1]], axis=0)           # (2S, S)


def _get_conv_matrix(conv_w, T, H, W):
    try:
        w_np = np.asarray(conv_w, np.float32)              # raises on tracers
    except Exception:
        return _build_conv_matrix_traced(conv_w, T, H, W)
    return _cached_conv_matrix(w_np.tobytes(), w_np.shape, T, H, W)


# --------------------------------------------------------------------------------------
# Wrapper
# --------------------------------------------------------------------------------------
def _device_info():
    """(is_v7x, physical_vmem_bytes_per_core); conservative defaults if undetectable."""
    try:
        kind = jax.devices()[0].device_kind.lower()
    except Exception:
        kind = ""
    is_v7 = ("v7" in kind) or ("7x" in kind)
    phys_vmem = (64 << 20) if is_v7 else (128 << 20)
    return is_v7, phys_vmem


def csam_forward(x, w1, w2, w3, conv_w, conv_b, *, b_tile=None):
    B, C, T, H, W = x.shape
    S = T * H * W
    Ch = w1.shape[0]
    itemsize = jnp.dtype(x.dtype).itemsize

    is_v7, phys_vmem = _device_info()

    if b_tile is None:
        # Single grid step on v5e/v6e (1 TC: extra steps are pure overhead and halve the M
        # of the only significant MXU dot).  On v7x, split 2-way for megacore only when the
        # per-TC HBM traffic clearly exceeds the ~0.35 us per-step fixed overhead.
        b_tile = B
        if is_v7 and B >= 2 and B % 2 == 0:
            per_tc_io_bytes = 2 * (B // 2) * C * S * itemsize   # x in + out per TC
            if per_tc_io_bytes > (4 << 20):
                b_tile = B // 2
    assert B % b_tile == 0, "b_tile must divide B"

    x_flat = x.reshape(B, C, S)                            # native dtype; upcast in-kernel
    mconv = _get_conv_matrix(conv_w, T, H, W)              # (2S, S) f32
    bias = jnp.asarray(conv_b, jnp.float32).reshape(1)     # scalar bias -> SMEM
    w1t = jnp.asarray(w1, jnp.float32).T                   # (C, Ch)
    w2t = jnp.asarray(w2, jnp.float32).T                   # (Ch, Ch)
    w3t = jnp.asarray(w3, jnp.float32).T                   # (Ch, C)

    # VMEM budget: mconv (worst case 2 buffers) + double-buffered x/out tiles
    # + live f32 intermediates (x upcast, y_cam, output, headroom) + small weights.
    est = (2 * 4 * 2 * S * S
           + 2 * 2 * b_tile * C * S * itemsize
           + 6 * 4 * b_tile * C * S
           + 4 * 4 * (2 * C * Ch + Ch * Ch))
    vmem_limit = int(min(max(1.25 * est, 32 << 20), phys_vmem - (16 << 20)))

    cost = pl.CostEstimate(
        flops=int(2 * B * (2 * S) * S                      # conv dot
                  + 2 * (2 * B) * (2 * C * Ch + Ch * Ch)   # channel MLP
                  + 10 * B * C * S),                       # elementwise / pools
        transcendentals=int(B * (C + S)),                  # sigmoids
        bytes_accessed=int(2 * B * C * S * itemsize        # x in + out
                           + 4 * 2 * S * S                 # Toeplitz matrix
                           + 4 * (2 * C * Ch + Ch * Ch)),
    )

    def _run(fast):
        # `fast`: single-buffer grid-invariant operands + pin MXU precision.  The fallback
        # (fast=False) is exactly the previously validated configuration.
        const_kw = {"pipeline_mode": pl.Buffered(1)} if fast else {}
        precision = lax.Precision.HIGHEST if fast else None
        return pl.pallas_call(
            _make_csam_kernel(precision),
            out_shape=jax.ShapeDtypeStruct((B, C, S), x_flat.dtype),
            grid=(B // b_tile,),
            in_specs=[
                pl.BlockSpec((b_tile, C, S), lambda b: (b, 0, 0)),      # x tile
                pl.BlockSpec((C, Ch), lambda b: (0, 0), **const_kw),    # fc1 weight (pre-T)
                pl.BlockSpec((Ch, Ch), lambda b: (0, 0), **const_kw),   # fc2 weight
                pl.BlockSpec((Ch, C), lambda b: (0, 0), **const_kw),    # fc3 weight
                pl.BlockSpec((2 * S, S), lambda b: (0, 0), **const_kw), # fused conv Toeplitz
                pl.BlockSpec(memory_space=pltpu.MemorySpace.SMEM),      # conv bias scalar
            ],
            out_specs=pl.BlockSpec((b_tile, C, S), lambda b: (b, 0, 0)),
            compiler_params=pltpu.CompilerParams(
                dimension_semantics=("parallel",),
                vmem_limit_bytes=vmem_limit,
            ),
            cost_estimate=cost,
        )(x_flat, w1t, w2t, w3t, mconv, bias)

    try:
        out_flat = _run(fast=True)
    except Exception:
        # This jax/Mosaic build rejected pipeline_mode / pinned precision; retry with the
        # known-good configuration (identical numerics/semantics).
        out_flat = _run(fast=False)
    return out_flat.reshape(B, C, T, H, W)


# --------------------------------------------------------------------------------------
# Pure-JAX reference (matches the PyTorch forward semantics)
# --------------------------------------------------------------------------------------
def csam_reference(x, w1, w2, w3, conv_w, conv_b):
    avg = x.mean(axis=(2, 3, 4))
    mx = x.max(axis=(2, 3, 4))

    def fc(v):
        h = jax.nn.relu(v @ w1.T)
        h = jax.nn.relu(h @ w2.T)
        return h @ w3.T

    y = jax.nn.sigmoid(fc(avg) + fc(mx))[:, :, None, None, None]
    x1 = x + x * y
    comp = jnp.stack([x1.max(axis=1), x1.mean(axis=1)], axis=1)    # (B, 2, T, H, W)
    conv = lax.conv_general_dilated(
        comp, conv_w, window_strides=(1, 1, 1), padding=[(3, 3)] * 3,
        dimension_numbers=("NCDHW", "OIDHW", "NCDHW")) + conv_b.reshape(1, 1, 1, 1, 1)
    att = jax.nn.sigmoid(conv)
    return x1 + x1 * att


if __name__ == "__main__":
    key = jax.random.PRNGKey(0)
    B, C, T, H, W = 4, 32, 4, 8, 8
    reduction = 16
    Ch = C // reduction

    kx, k1, k2, k3, kc, kb = jax.random.split(key, 6)
    x = jax.random.normal(kx, (B, C, T, H, W), jnp.float32)
    # Deterministic synthetic parameters (PyTorch module shapes, (out, in) convention).
    w1 = jax.random.normal(k1, (Ch, C), jnp.float32) * 0.2        # Linear(C   -> C/r), no bias
    w2 = jax.random.normal(k2, (Ch, Ch), jnp.float32) * 0.2       # Linear(C/r -> C/r), no bias
    w3 = jax.random.normal(k3, (C, Ch), jnp.float32) * 0.2        # Linear(C/r -> C),  no bias
    conv_w = jax.random.normal(kc, (1, 2, 7, 7, 7), jnp.float32) * 0.05   # Conv3d(2->1, k=7)
    conv_b = jax.random.normal(kb, (1,), jnp.float32) * 0.05

    out = csam_forward(x, w1, w2, w3, conv_w, conv_b)
    out = jax.block_until_ready(out)

    ref = csam_reference(x, w1, w2, w3, conv_w, conv_b)
    assert out.shape == ref.shape == (B, C, T, H, W)
    max_err = float(jnp.max(jnp.abs(out - ref)))
    if max_err > 5e-3:
        raise AssertionError(f"mismatch vs reference: max abs err {max_err}")
    print("KERNEL_OK")
</pallas_src>

<mosaic_0001>
module attributes {stable_mosaic.version = 11 : i64} {
  func.func @_csam_kernel(%arg0: i32, %arg1: memref<4x32x256xf32, #tpu.memory_space<vmem>>, %arg2: memref<32x2xf32, #tpu.memory_space<vmem>>, %arg3: memref<2x2xf32, #tpu.memory_space<vmem>>, %arg4: memref<2x32xf32, #tpu.memory_space<vmem>>, %arg5: memref<512x256xf32, #tpu.memory_space<vmem>>, %arg6: memref<1xf32, #tpu.memory_space<smem>>, %arg7: memref<4x32x256xf32, #tpu.memory_space<vmem>>) attributes {dimension_semantics = [#tpu.dimension_semantics<parallel>], iteration_bounds = array<i64: 1>, scalar_prefetch = 0 : i64, scratch_operands = 0 : i64, tpu.core_type = #tpu.core_type<tc>, window_params = [{transform_indices = @transform_0, window_bounds = array<i64: 4, 32, 256>}, {pipeline_mode = #tpu.pipeline_mode<synchronous>, transform_indices = @transform_1, window_bounds = array<i64: 32, 2>}, {pipeline_mode = #tpu.pipeline_mode<synchronous>, transform_indices = @transform_2, window_bounds = array<i64: 2, 2>}, {pipeline_mode = #tpu.pipeline_mode<synchronous>, transform_indices = @transform_3, window_bounds = array<i64: 2, 32>}, {pipeline_mode = #tpu.pipeline_mode<synchronous>, transform_indices = @transform_4, window_bounds = array<i64: 512, 256>}, {transform_indices = @transform_5, window_bounds = array<i64: 1>}, {transform_indices = @transform_6, window_bounds = array<i64: 4, 32, 256>}]} {
    %c0 = arith.constant 0 : index
    %c0_0 = arith.constant 0 : index
    %c0_1 = arith.constant 0 : index
    %0 = vector.load %arg1[%c0, %c0_0, %c0_1] : memref<4x32x256xf32, #tpu.memory_space<vmem>>, vector<4x32x256xf32>
    %cst = arith.constant dense<0.000000e+00> : vector<4x32xf32>
    %1 = vector.multi_reduction <add>, %0, %cst [2] : vector<4x32x256xf32> to vector<4x32xf32>
    %cst_2 = arith.constant 2.560000e+02 : f32
    %2 = vector.broadcast %cst_2 : f32 to vector<4x32xf32>
    %3 = arith.divf %1, %2 : vector<4x32xf32>
    %cst_3 = arith.constant dense<0xFF800000> : vector<4x32xf32>
    %4 = vector.multi_reduction <maximumf>, %0, %cst_3 [2] : vector<4x32x256xf32> to vector<4x32xf32>
    %5 = tpu.concatenate %3, %4 in 0 : vector<4x32xf32>, vector<4x32xf32> -> vector<8x32xf32>
    %c0_4 = arith.constant 0 : index
    %c0_5 = arith.constant 0 : index
    %6 = vector.load %arg2[%c0_4, %c0_5] : memref<32x2xf32, #tpu.memory_space<vmem>>, vector<32x2xf32>
    %cst_6 = arith.constant dense<0.000000e+00> : vector<8x2xf32>
    %7 = tpu.matmul %5, %6, %cst_6 {dimension_numbers = #tpu.dot_dimension_numbers<[1], [0], [0], [1], [0, 0, 1, 1], [], []>, precision = #tpu.contract_precision<fp32>} : vector<8x32xf32>, vector<32x2xf32>, vector<8x2xf32> -> vector<8x2xf32>
    %cst_7 = arith.constant 0.000000e+00 : f32
    %8 = vector.broadcast %cst_7 : f32 to vector<8x2xf32>
    %9 = arith.maximumf %7, %8 : vector<8x2xf32>
    %c0_8 = arith.constant 0 : index
    %c0_9 = arith.constant 0 : index
    %10 = vector.load %arg3[%c0_8, %c0_9] : memref<2x2xf32, #tpu.memory_space<vmem>>, vector<2x2xf32>
    %cst_10 = arith.constant dense<0.000000e+00> : vector<8x2xf32>
    %11 = tpu.matmul %9, %10, %cst_10 {dimension_numbers = #tpu.dot_dimension_numbers<[1], [0], [0], [1], [0, 0, 1, 1], [], []>, precision = #tpu.contract_precision<fp32>} : vector<8x2xf32>, vector<2x2xf32>, vector<8x2xf32> -> vector<8x2xf32>
    %cst_11 = arith.constant 0.000000e+00 : f32
    %12 = vector.broadcast %cst_11 : f32 to vector<8x2xf32>
    %13 = arith.maximumf %11, %12 : vector<8x2xf32>
    %c0_12 = arith.constant 0 : index
    %c0_13 = arith.constant 0 : index
    %14 = vector.load %arg4[%c0_12, %c0_13] : memref<2x32xf32, #tpu.memory_space<vmem>>, vector<2x32xf32>
    %cst_14 = arith.constant dense<0.000000e+00> : vector<8x32xf32>
    %15 = tpu.matmul %13, %14, %cst_14 {dimension_numbers = #tpu.dot_dimension_numbers<[1], [0], [0], [1], [0, 0, 1, 1], [], []>, precision = #tpu.contract_precision<fp32>} : vector<8x2xf32>, vector<2x32xf32>, vector<8x32xf32> -> vector<8x32xf32>
    %16 = vector.extract_strided_slice %15 {offsets = [0, 0], sizes = [4, 32], strides = [1, 1]} : vector<8x32xf32> to vector<4x32xf32>
    %17 = vector.extract_strided_slice %15 {offsets = [4, 0], sizes = [4, 32], strides = [1, 1]} : vector<8x32xf32> to vector<4x32xf32>
    %18 = arith.addf %16, %17 : vector<4x32xf32>
    %19 = arith.negf %18 : vector<4x32xf32>
    %20 = math.exp %19 : vector<4x32xf32>
    %cst_15 = arith.constant 1.000000e+00 : f32
    %21 = vector.broadcast %cst_15 : f32 to vector<4x32xf32>
    %22 = arith.addf %21, %20 : vector<4x32xf32>
    %23 = arith.divf %21, %22 : vector<4x32xf32>
    %24 = vector.shape_cast %23 : vector<4x32xf32> to vector<4x32x1xf32>
    %cst_16 = arith.constant 1.000000e+00 : f32
    %25 = vector.broadcast %cst_16 : f32 to vector<4x32x1xf32>
    %26 = arith.addf %25, %24 : vector<4x32x1xf32>
    %27 = vector.broadcast %26 : vector<4x32x1xf32> to vector<4x32x256xf32>
    %28 = arith.mulf %0, %27 : vector<4x32x256xf32>
    %cst_17 = arith.constant dense<0xFF800000> : vector<4x256xf32>
    %29 = vector.multi_reduction <maximumf>, %28, %cst_17 [1] : vector<4x32x256xf32> to vector<4x256xf32>
    %cst_18 = arith.constant dense<0.000000e+00> : vector<4x256xf32>
    %30 = vector.multi_reduction <add>, %28, %cst_18 [1] : vector<4x32x256xf32> to vector<4x256xf32>
    %cst_19 = arith.constant 3.200000e+01 : f32
    %31 = vector.broadcast %cst_19 : f32 to vector<4x256xf32>
    %32 = arith.divf %30, %31 : vector<4x256xf32>
    %33 = tpu.concatenate %29, %32 in 1 : vector<4x256xf32>, vector<4x256xf32> -> vector<4x512xf32>
    %c0_20 = arith.constant 0 : index
    %c0_21 = arith.constant 0 : index
    %34 = vector.load %arg5[%c0_20, %c0_21] : memref<512x256xf32, #tpu.memory_space<vmem>>, vector<512x256xf32>
    %cst_22 = arith.constant dense<0.000000e+00> : vector<4x256xf32>
    %35 = tpu.matmul %33, %34, %cst_22 {dimension_numbers = #tpu.dot_dimension_numbers<[1], [0], [0], [1], [0, 0, 1, 1], [], []>, precision = #tpu.contract_precision<fp32>} : vector<4x512xf32>, vector<512x256xf32>, vector<4x256xf32> -> vector<4x256xf32>
    %c0_23 = arith.constant 0 : index
    %36 = memref.load %arg6[%c0_23] : memref<1xf32, #tpu.memory_space<smem>>
    %37 = vector.broadcast %36 : f32 to vector<4x256xf32>
    %38 = arith.addf %35, %37 : vector<4x256xf32>
    %39 = arith.negf %38 : vector<4x256xf32>
    %40 = math.exp %39 : vector<4x256xf32>
    %cst_24 = arith.constant 1.000000e+00 : f32
    %41 = vector.broadcast %cst_24 : f32 to vector<4x256xf32>
    %42 = arith.addf %41, %40 : vector<4x256xf32>
    %43 = arith.divf %41, %42 : vector<4x256xf32>
    %44 = vector.shape_cast %43 : vector<4x256xf32> to vector<4x1x256xf32>
    %cst_25 = arith.constant 1.000000e+00 : f32
    %45 = vector.broadcast %cst_25 : f32 to vector<4x1x256xf32>
    %46 = arith.addf %45, %44 : vector<4x1x256xf32>
    %47 = vector.broadcast %46 : vector<4x1x256xf32> to vector<4x32x256xf32>
    %48 = arith.mulf %28, %47 : vector<4x32x256xf32>
    %c0_26 = arith.constant 0 : index
    %c0_27 = arith.constant 0 : index
    %c0_28 = arith.constant 0 : index
    %49 = vector.load %arg7[%c0_26, %c0_27, %c0_28] : memref<4x32x256xf32, #tpu.memory_space<vmem>>, vector<4x32x256xf32>
    tpu.vector_store %arg7[%c0_26, %c0_27, %c0_28], %48 {strides = array<i32>} : memref<4x32x256xf32, #tpu.memory_space<vmem>>, vector<4x32x256xf32>,
    return
  }
  func.func @transform_0(%arg0: i32) -> (i32, i32, i32) {
    %c0_i32 = arith.constant 0 : i32
    %c0_i32_0 = arith.constant 0 : i32
    %c0_i32_1 = arith.constant 0 : i32
    return %arg0, %c0_i32, %c0_i32_0 : i32, i32, i32
  }
  func.func @transform_1(%arg0: i32) -> (i32, i32) {
    %c0_i32 = arith.constant 0 : i32
    %c0_i32_0 = arith.constant 0 : i32
    %c0_i32_1 = arith.constant 0 : i32
    return %c0_i32, %c0_i32_0 : i32, i32
  }
  func.func @transform_2(%arg0: i32) -> (i32, i32) {
    %c0_i32 = arith.constant 0 : i32
    %c0_i32_0 = arith.constant 0 : i32
    %c0_i32_1 = arith.constant 0 : i32
    return %c0_i32, %c0_i32_0 : i32, i32
  }
  func.func @transform_3(%arg0: i32) -> (i32, i32) {
    %c0_i32 = arith.constant 0 : i32
    %c0_i32_0 = arith.constant 0 : i32
    %c0_i32_1 = arith.constant 0 : i32
    return %c0_i32, %c0_i32_0 : i32, i32
  }
  func.func @transform_4(%arg0: i32) -> (i32, i32) {
    %c0_i32 = arith.constant 0 : i32
    %c0_i32_0 = arith.constant 0 : i32
    %c0_i32_1 = arith.constant 0 : i32
    return %c0_i32, %c0_i32_0 : i32, i32
  }
  func.func @transform_5(%arg0: i32) -> i32 {
    %c0_i32 = arith.constant 0 : i32
    %c0_i32_0 = arith.constant 0 : i32
    return %c0_i32 : i32
  }
  func.func @transform_6(%arg0: i32) -> (i32, i32, i32) {
    %c0_i32 = arith.constant 0 : i32
    %c0_i32_0 = arith.constant 0 : i32
    %c0_i32_1 = arith.constant 0 : i32
    return %arg0, %c0_i32, %c0_i32_0 : i32, i32, i32
  }
}

module attributes {stable_mosaic.version = 11 : i64} {
  func.func @_csam_kernel(%arg0: i32, %arg1: memref<4x32x256xf32, #tpu.memory_space<vmem>>, %arg2: memref<32x2xf32, #tpu.memory_space<vmem>>, %arg3: memref<2x2xf32, #tpu.memory_space<vmem>>, %arg4: memref<2x32xf32, #tpu.memory_space<vmem>>, %arg5: memref<512x256xf32, #tpu.memory_space<vmem>>, %arg6: memref<1xf32, #tpu.memory_space<smem>>, %arg7: memref<4x32x256xf32, #tpu.memory_space<vmem>>) attributes {dimension_semantics = [#tpu.dimension_semantics<parallel>], iteration_bounds = array<i64: 1>, scalar_prefetch = 0 : i64, scratch_operands = 0 : i64, tpu.core_type = #tpu.core_type<tc>, window_params = [{transform_indices = @transform_0, window_bounds = array<i64: 4, 32, 256>}, {pipeline_mode = #tpu.pipeline_mode<synchronous>, transform_indices = @transform_1, window_bounds = array<i64: 32, 2>}, {pipeline_mode = #tpu.pipeline_mode<synchronous>, transform_indices = @transform_2, window_bounds = array<i64: 2, 2>}, {pipeline_mode = #tpu.pipeline_mode<synchronous>, transform_indices = @transform_3, window_bounds = array<i64: 2, 32>}, {pipeline_mode = #tpu.pipeline_mode<synchronous>, transform_indices = @transform_4, window_bounds = array<i64: 512, 256>}, {transform_indices = @transform_5, window_bounds = array<i64: 1>}, {transform_indices = @transform_6, window_bounds = array<i64: 4, 32, 256>}]} {
    %c0 = arith.constant 0 : index
    %c0_0 = arith.constant 0 : index
    %c0_1 = arith.constant 0 : index
    %0 = vector.load %arg1[%c0, %c0_0, %c0_1] : memref<4x32x256xf32, #tpu.memory_space<vmem>>, vector<4x32x256xf32>
    %cst = arith.constant dense<0.000000e+00> : vector<4x32xf32>
    %1 = vector.multi_reduction <add>, %0, %cst [2] : vector<4x32x256xf32> to vector<4x32xf32>
    %cst_2 = arith.constant 2.560000e+02 : f32
    %2 = vector.broadcast %cst_2 : f32 to vector<4x32xf32>
    %3 = arith.divf %1, %2 : vector<4x32xf32>
    %cst_3 = arith.constant dense<0xFF800000> : vector<4x32xf32>
    %4 = vector.multi_reduction <maximumf>, %0, %cst_3 [2] : vector<4x32x256xf32> to vector<4x32xf32>
    %5 = tpu.concatenate %3, %4 in 0 : vector<4x32xf32>, vector<4x32xf32> -> vector<8x32xf32>
    %c0_4 = arith.constant 0 : index
    %c0_5 = arith.constant 0 : index
    %6 = vector.load %arg2[%c0_4, %c0_5] : memref<32x2xf32, #tpu.memory_space<vmem>>, vector<32x2xf32>
    %cst_6 = arith.constant dense<0.000000e+00> : vector<8x2xf32>
    %7 = tpu.matmul %5, %6, %cst_6 {dimension_numbers = #tpu.dot_dimension_numbers<[1], [0], [0], [1], [0, 0, 1, 1], [], []>} : vector<8x32xf32>, vector<32x2xf32>, vector<8x2xf32> -> vector<8x2xf32>
    %cst_7 = arith.constant 0.000000e+00 : f32
    %8 = vector.broadcast %cst_7 : f32 to vector<8x2xf32>
    %9 = arith.maximumf %7, %8 : vector<8x2xf32>
    %c0_8 = arith.constant 0 : index
    %c0_9 = arith.constant 0 : index
    %10 = vector.load %arg3[%c0_8, %c0_9] : memref<2x2xf32, #tpu.memory_space<vmem>>, vector<2x2xf32>
    %cst_10 = arith.constant dense<0.000000e+00> : vector<8x2xf32>
    %11 = tpu.matmul %9, %10, %cst_10 {dimension_numbers = #tpu.dot_dimension_numbers<[1], [0], [0], [1], [0, 0, 1, 1], [], []>} : vector<8x2xf32>, vector<2x2xf32>, vector<8x2xf32> -> vector<8x2xf32>
    %cst_11 = arith.constant 0.000000e+00 : f32
    %12 = vector.broadcast %cst_11 : f32 to vector<8x2xf32>
    %13 = arith.maximumf %11, %12 : vector<8x2xf32>
    %c0_12 = arith.constant 0 : index
    %c0_13 = arith.constant 0 : index
    %14 = vector.load %arg4[%c0_12, %c0_13] : memref<2x32xf32, #tpu.memory_space<vmem>>, vector<2x32xf32>
    %cst_14 = arith.constant dense<0.000000e+00> : vector<8x32xf32>
    %15 = tpu.matmul %13, %14, %cst_14 {dimension_numbers = #tpu.dot_dimension_numbers<[1], [0], [0], [1], [0, 0, 1, 1], [], []>} : vector<8x2xf32>, vector<2x32xf32>, vector<8x32xf32> -> vector<8x32xf32>
    %16 = vector.extract_strided_slice %15 {offsets = [0, 0], sizes = [4, 32], strides = [1, 1]} : vector<8x32xf32> to vector<4x32xf32>
    %17 = vector.extract_strided_slice %15 {offsets = [4, 0], sizes = [4, 32], strides = [1, 1]} : vector<8x32xf32> to vector<4x32xf32>
    %18 = arith.addf %16, %17 : vector<4x32xf32>
    %19 = arith.negf %18 : vector<4x32xf32>
    %20 = math.exp %19 : vector<4x32xf32>
    %cst_15 = arith.constant 1.000000e+00 : f32
    %21 = vector.broadcast %cst_15 : f32 to vector<4x32xf32>
    %22 = arith.addf %21, %20 : vector<4x32xf32>
    %23 = arith.divf %21, %22 : vector<4x32xf32>
    %24 = vector.shape_cast %23 : vector<4x32xf32> to vector<4x32x1xf32>
    %cst_16 = arith.constant 1.000000e+00 : f32
    %25 = vector.broadcast %cst_16 : f32 to vector<4x32x1xf32>
    %26 = arith.addf %25, %24 : vector<4x32x1xf32>
    %27 = vector.broadcast %26 : vector<4x32x1xf32> to vector<4x32x256xf32>
    %28 = arith.mulf %0, %27 : vector<4x32x256xf32>
    %cst_17 = arith.constant dense<0xFF800000> : vector<4x256xf32>
    %29 = vector.multi_reduction <maximumf>, %28, %cst_17 [1] : vector<4x32x256xf32> to vector<4x256xf32>
    %cst_18 = arith.constant dense<0.000000e+00> : vector<4x256xf32>
    %30 = vector.multi_reduction <add>, %28, %cst_18 [1] : vector<4x32x256xf32> to vector<4x256xf32>
    %cst_19 = arith.constant 3.200000e+01 : f32
    %31 = vector.broadcast %cst_19 : f32 to vector<4x256xf32>
    %32 = arith.divf %30, %31 : vector<4x256xf32>
    %33 = tpu.concatenate %29, %32 in 1 : vector<4x256xf32>, vector<4x256xf32> -> vector<4x512xf32>
    %c0_20 = arith.constant 0 : index
    %c0_21 = arith.constant 0 : index
    %34 = vector.load %arg5[%c0_20, %c0_21] : memref<512x256xf32, #tpu.memory_space<vmem>>, vector<512x256xf32>
    %cst_22 = arith.constant dense<0.000000e+00> : vector<4x256xf32>
    %35 = tpu.matmul %33, %34, %cst_22 {dimension_numbers = #tpu.dot_dimension_numbers<[1], [0], [0], [1], [0, 0, 1, 1], [], []>} : vector<4x512xf32>, vector<512x256xf32>, vector<4x256xf32> -> vector<4x256xf32>
    %c0_23 = arith.constant 0 : index
    %36 = memref.load %arg6[%c0_23] : memref<1xf32, #tpu.memory_space<smem>>
    %37 = vector.broadcast %36 : f32 to vector<4x256xf32>
    %38 = arith.addf %35, %37 : vector<4x256xf32>
    %39 = arith.negf %38 : vector<4x256xf32>
    %40 = math.exp %39 : vector<4x256xf32>
    %cst_24 = arith.constant 1.000000e+00 : f32
    %41 = vector.broadcast %cst_24 : f32 to vector<4x256xf32>
    %42 = arith.addf %41, %40 : vector<4x256xf32>
    %43 = arith.divf %41, %42 : vector<4x256xf32>
    %44 = vector.shape_cast %43 : vector<4x256xf32> to vector<4x1x256xf32>
    %cst_25 = arith.constant 1.000000e+00 : f32
    %45 = vector.broadcast %cst_25 : f32 to vector<4x1x256xf32>
    %46 = arith.addf %45, %44 : vector<4x1x256xf32>
    %47 = vector.broadcast %46 : vector<4x1x256xf32> to vector<4x32x256xf32>
    %48 = arith.mulf %28, %47 : vector<4x32x256xf32>
    %c0_26 = arith.constant 0 : index
    %c0_27 = arith.constant 0 : index
    %c0_28 = arith.constant 0 : index
    %49 = vector.load %arg7[%c0_26, %c0_27, %c0_28] : memref<4x32x256xf32, #tpu.memory_space<vmem>>, vector<4x32x256xf32>
    tpu.vector_store %arg7[%c0_26, %c0_27, %c0_28], %48 {strides = array<i32>} : memref<4x32x256xf32, #tpu.memory_space<vmem>>, vector<4x32x256xf32>,
    return
  }
  func.func @transform_0(%arg0: i32) -> (i32, i32, i32) {
    %c0_i32 = arith.constant 0 : i32
    %c0_i32_0 = arith.constant 0 : i32
    %c0_i32_1 = arith.constant 0 : i32
    return %arg0, %c0_i32, %c0_i32_0 : i32, i32, i32
  }
  func.func @transform_1(%arg0: i32) -> (i32, i32) {
    %c0_i32 = arith.constant 0 : i32
    %c0_i32_0 = arith.constant 0 : i32
    %c0_i32_1 = arith.constant 0 : i32
    return %c0_i32, %c0_i32_0 : i32, i32
  }
  func.func @transform_2(%arg0: i32) -> (i32, i32) {
    %c0_i32 = arith.constant 0 : i32
    %c0_i32_0 = arith.constant 0 : i32
    %c0_i32_1 = arith.constant 0 : i32
    return %c0_i32, %c0_i32_0 : i32, i32
  }
  func.func @transform_3(%arg0: i32) -> (i32, i32) {
    %c0_i32 = arith.constant 0 : i32
    %c0_i32_0 = arith.constant 0 : i32
    %c0_i32_1 = arith.constant 0 : i32
    return %c0_i32, %c0_i32_0 : i32, i32
  }
  func.func @transform_4(%arg0: i32) -> (i32, i32) {
    %c0_i32 = arith.constant 0 : i32
    %c0_i32_0 = arith.constant 0 : i32
    %c0_i32_1 = arith.constant 0 : i32
    return %c0_i32, %c0_i32_0 : i32, i32
  }
  func.func @transform_5(%arg0: i32) -> i32 {
    %c0_i32 = arith.constant 0 : i32
    %c0_i32_0 = arith.constant 0 : i32
    return %c0_i32 : i32
  }
  func.func @transform_6(%arg0: i32) -> (i32, i32, i32) {
    %c0_i32 = arith.constant 0 : i32
    %c0_i32_0 = arith.constant 0 : i32
    %c0_i32_1 = arith.constant 0 : i32
    return %arg0, %c0_i32, %c0_i32_0 : i32, i32, i32
  }
}

</mosaic_0001>

<llo_original>
// kernel: tpu_custom_call.1
$region0: #{tpu_custom_call.1}
  #allocation0 [shape = 'u32[]', space=smem, size = 0x4, offset = 0x4, fixed_abs, tag = 'smem constant byte address 0x4 - core index']
  #allocation1 [shape = 'u32[144,128]{1,0:T(1,128)}', space=vmem, size = 0x12000, scoped, tag = 'internal scratch']
  #allocation2 [shape = 'f32[1]{0:T(128)S(6)}', space=smem, size = 0x200, scoped, tag = 'scoped memory for tpu_custom_call.1']
  %s0 = inlined_call_operand.hbm [shape: f32[4,32,256], index: 0, kind: input, shape index: {}]
  %s1 = inlined_call_operand.vmem [shape: f32[32,2], index: 1, kind: input, shape index: {}]
  %s2 = inlined_call_operand.vmem [shape: f32[2,2], index: 2, kind: input, shape index: {}]
  %s3 = inlined_call_operand.vmem [shape: f32[2,32], index: 3, kind: input, shape index: {}]
  %s4 = inlined_call_operand.hbm [shape: f32[512,256], index: 4, kind: input, shape index: {}]
  %s5 = inlined_call_operand.<no memory space> [shape: f32[1], index: 5, kind: input, shape index: {}]
  %s6 = inlined_call_operand.hbm [shape: f32[4,32,256], index: 6, kind: output, shape index: {}]
  %s7 = sld [smem:[#allocation0]]
  $region42: #{tpu_custom_call.1} parent=0
    _
  %s9 = ssub.s32 1, %s7
  %s10 = scalar_select 0, %s9, %s7
  %11 = sst [smem:[#allocation2]] %s5
  $region1: #{tpu_custom_call.1} parent=0
    #allocation3 [shape = 'u8[131072]{0}', space=vmem, size = 0x20000, scoped, tag = 'input window, operand 0, single buffered']
    #allocation4 [shape = 's32[1]{0}', space=sflag, size = 0x4, scoped, tag = 'scoped memory for tpu_custom_call.1']
    #allocation5 [shape = 's32[1]{0}', space=sflag, size = 0x4, scoped, tag = 'scoped memory for tpu_custom_call.1']
    #allocation6 [shape = 'u8[524288]{0}', space=vmem, size = 0x80000, scoped, tag = 'input window, operand 4, single buffered']
    #allocation7 [shape = 's32[1]{0}', space=sflag, size = 0x4, scoped, tag = 'scoped memory for tpu_custom_call.1']
    #allocation8 [shape = 'u8[131072]{0}', space=vmem, size = 0x20000, scoped, tag = 'output window, operand 0, single buffered']
    %12 = vsyncpa [#allocation4], 0
    %13 = vsyncpa [#allocation7], 0
    %14 = vsyncpa [#allocation5], 0
    // Predicated region
    $region2: #{tpu_custom_call.1} parent=1 // pred_check
      _
    $region3: #{tpu_custom_call.1} parent=1 // pred_check_branch
      %16 = sbr.rel (0) target = $region5
    $region4: #{tpu_custom_call.1} parent=1 // pred_region
      %s18 = ssub.s32 4096, 4096
      %19 = vsyncadd [#allocation4], %s18
      %s20 = sshll.u32 [#allocation3], 4
      %s21 = int_to_ptr.vmem [resolvable:$true] %s20
      %26 = dma.hbm_to_vmem [thread:$0]  %s0, 4096, %s21, [#allocation4], 256, 256, 16
    $region5: #{tpu_custom_call.1} parent=1 // pred_fallthru
      _
    // Predicated region
    $region6: #{tpu_custom_call.1} parent=1 // pred_check
      _
    $region7: #{tpu_custom_call.1} parent=1 // pred_check_branch
      %28 = sbr.rel (0) target = $region9
    $region8: #{tpu_custom_call.1} parent=1 // pred_region
      _
    $region9: #{tpu_custom_call.1} parent=1 // pred_fallthru
      _
    // Predicated region
    $region10: #{tpu_custom_call.1} parent=1 // pred_check
      _
    $region11: #{tpu_custom_call.1} parent=1 // pred_check_branch
      %30 = sbr.rel (0) target = $region13
    $region12: #{tpu_custom_call.1} parent=1 // pred_region
      _
    $region13: #{tpu_custom_call.1} parent=1 // pred_fallthru
      _
    // Predicated region
    $region14: #{tpu_custom_call.1} parent=1 // pred_check
      _
    $region15: #{tpu_custom_call.1} parent=1 // pred_check_branch
      %32 = sbr.rel (0) target = $region17
    $region16: #{tpu_custom_call.1} parent=1 // pred_region
      _
    $region17: #{tpu_custom_call.1} parent=1 // pred_fallthru
      _
    // Predicated region
    $region18: #{tpu_custom_call.1} parent=1 // pred_check
      _
    $region19: #{tpu_custom_call.1} parent=1 // pred_check_branch
      %34 = sbr.rel (0) target = $region21
    $region20: #{tpu_custom_call.1} parent=1 // pred_region
      %s36 = ssub.s32 16384, 16384
      %37 = vsyncadd [#allocation7], %s36
      %s38 = sshll.u32 [#allocation6], 4
      %s39 = int_to_ptr.vmem [resolvable:$true] %s38
      %44 = dma.hbm_to_vmem [thread:$0]  %s4, 16384, %s39, [#allocation7], 256, 256, 16
    $region21: #{tpu_custom_call.1} parent=1 // pred_fallthru
      _
    // Predicated region
    $region22: #{tpu_custom_call.1} parent=1 // pred_check
      _
    $region23: #{tpu_custom_call.1} parent=1 // pred_check_branch
      %46 = sbr.rel (0) target = $region25
    $region24: #{tpu_custom_call.1} parent=1 // pred_region
      _
    $region25: #{tpu_custom_call.1} parent=1 // pred_fallthru
      _
    // Predicated region
    $region26: #{tpu_custom_call.1} parent=1 // pred_check
      _
    $region27: #{tpu_custom_call.1} parent=1 // pred_check_branch
      %48 = sbr.rel (0) target = $region29
    $region28: #{tpu_custom_call.1} parent=1 // pred_region
      %49 = dma.done [#allocation4], 4096
    $region29: #{tpu_custom_call.1} parent=1 // pred_fallthru
      _
    // Predicated region
    $region30: #{tpu_custom_call.1} parent=1 // pred_check
      _
    $region31: #{tpu_custom_call.1} parent=1 // pred_check_branch
      %51 = sbr.rel (0) target = $region33
    $region32: #{tpu_custom_call.1} parent=1 // pred_region
      %52 = dma.done [#allocation7], 16384
    $region33: #{tpu_custom_call.1} parent=1 // pred_fallthru
      _
    %v53 = vld [vmem:[#allocation3] sm:$0xff]
    %v54 = vld [vmem:[#allocation3 + $0x8] sm:$0xff]
    %v55 = vld [vmem:[#allocation3 + $0x10] sm:$0xff]
    %v56 = vld [vmem:[#allocation3 + $0x18] sm:$0xff]
    %v57 = vld [vmem:[#allocation3 + $0x20] sm:$0xff]
    %v58 = vld [vmem:[#allocation3 + $0x28] sm:$0xff]
    %v59 = vld [vmem:[#allocation3 + $0x30] sm:$0xff]
    %v60 = vld [vmem:[#allocation3 + $0x38] sm:$0xff]
    %v61 = vld [vmem:[#allocation3 + $0x40] sm:$0xff]
    %v62 = vld [vmem:[#allocation3 + $0x48] sm:$0xff]
    %v63 = vld [vmem:[#allocation3 + $0x50] sm:$0xff]
    %v64 = vld [vmem:[#allocation3 + $0x58] sm:$0xff]
    %v65 = vld [vmem:[#allocation3 + $0x60] sm:$0xff]
    %v66 = vld [vmem:[#allocation3 + $0x68] sm:$0xff]
    %v67 = vld [vmem:[#allocation3 + $0x70] sm:$0xff]
    %v68 = vld [vmem:[#allocation3 + $0x78] sm:$0xff]
    %v69 = vld [vmem:[#allocation3 + $0x80] sm:$0xff]
    %v70 = vld [vmem:[#allocation3 + $0x88] sm:$0xff]
    %v71 = vld [vmem:[#allocation3 + $0x90] sm:$0xff]
    %v72 = vld [vmem:[#allocation3 + $0x98] sm:$0xff]
    %v73 = vld [vmem:[#allocation3 + $0xa0] sm:$0xff]
    %v74 = vld [vmem:[#allocation3 + $0xa8] sm:$0xff]
    %v75 = vld [vmem:[#allocation3 + $0xb0] sm:$0xff]
    %v76 = vld [vmem:[#allocation3 + $0xb8] sm:$0xff]
    %v77 = vld [vmem:[#allocation3 + $0xc0] sm:$0xff]
    %v78 = vld [vmem:[#allocation3 + $0xc8] sm:$0xff]
    %v79 = vld [vmem:[#allocation3 + $0xd0] sm:$0xff]
    %v80 = vld [vmem:[#allocation3 + $0xd8] sm:$0xff]
    %v81 = vld [vmem:[#allocation3 + $0xe0] sm:$0xff]
    %v82 = vld [vmem:[#allocation3 + $0xe8] sm:$0xff]
    %v83 = vld [vmem:[#allocation3 + $0xf0] sm:$0xff]
    %v84 = vld [vmem:[#allocation3 + $0xf8] sm:$0xff]
    %v85 = vadd.f32 %v53, %v54
    %86 = vadd.xlane.f32.xlu0 %v85
    %v87 = vpop.xlane.xlu0 %86
    %v88 = vadd.f32 %v55, %v56
    %89 = vadd.xlane.f32.xlu0 %v88
    %v90 = vpop.xlane.xlu0 %89
    %v91 = vadd.f32 %v57, %v58
    %92 = vadd.xlane.f32.xlu0 %v91
    %v93 = vpop.xlane.xlu0 %92
    %v94 = vadd.f32 %v59, %v60
    %95 = vadd.xlane.f32.xlu0 %v94
    %v96 = vpop.xlane.xlu0 %95
    %v97 = vadd.f32 %v61, %v62
    %98 = vadd.xlane.f32.xlu0 %v97
    %v99 = vpop.xlane.xlu0 %98
    %v100 = vadd.f32 %v63, %v64
    %101 = vadd.xlane.f32.xlu0 %v100
    %v102 = vpop.xlane.xlu0 %101
    %v103 = vadd.f32 %v65, %v66
    %104 = vadd.xlane.f32.xlu0 %v103
    %v105 = vpop.xlane.xlu0 %104
    %v106 = vadd.f32 %v67, %v68
    %107 = vadd.xlane.f32.xlu0 %v106
    %v108 = vpop.xlane.xlu0 %107
    %v109 = vadd.f32 %v69, %v70
    %110 = vadd.xlane.f32.xlu0 %v109
    %v111 = vpop.xlane.xlu0 %110
    %v112 = vadd.f32 %v71, %v72
    %113 = vadd.xlane.f32.xlu0 %v112
    %v114 = vpop.xlane.xlu0 %113
    %v115 = vadd.f32 %v73, %v74
    %116 = vadd.xlane.f32.xlu0 %v115
    %v117 = vpop.xlane.xlu0 %116
    %v118 = vadd.f32 %v75, %v76
    %119 = vadd.xlane.f32.xlu0 %v118
    %v120 = vpop.xlane.xlu0 %119
    %v121 = vadd.f32 %v77, %v78
    %122 = vadd.xlane.f32.xlu0 %v121
    %v123 = vpop.xlane.xlu0 %122
    %v124 = vadd.f32 %v79, %v80
    %125 = vadd.xlane.f32.xlu0 %v124
    %v126 = vpop.xlane.xlu0 %125
    %v127 = vadd.f32 %v81, %v82
    %128 = vadd.xlane.f32.xlu0 %v127
    %v129 = vpop.xlane.xlu0 %128
    %v130 = vadd.f32 %v83, %v84
    %131 = vadd.xlane.f32.xlu0 %v130
    %v132 = vpop.xlane.xlu0 %131
    %v133 = vrcp.pop 256.0
    %v134 = vmul.f32 %v87, %v133
    %v135 = vmul.f32 %v90, %v133
    %v136 = vmul.f32 %v93, %v133
    %v137 = vmul.f32 %v96, %v133
    %v138 = vmul.f32 %v99, %v133
    %v139 = vmul.f32 %v102, %v133
    %v140 = vmul.f32 %v105, %v133
    %v141 = vmul.f32 %v108, %v133
    %v142 = vmul.f32 %v111, %v133
    %v143 = vmul.f32 %v114, %v133
    %v144 = vmul.f32 %v117, %v133
    %v145 = vmul.f32 %v120, %v133
    %v146 = vmul.f32 %v123, %v133
    %v147 = vmul.f32 %v126, %v133
    %v148 = vmul.f32 %v129, %v133
    %v149 = vmul.f32 %v132, %v133
    %v150 = vmax.f32 %v53, %v54
    %151 = vmax.xlane.f32.xlu0 %v150
    %v152 = vpop.xlane.xlu0 %151
    %v153 = vmax.f32 %v55, %v56
    %154 = vmax.xlane.f32.xlu0 %v153
    %v155 = vpop.xlane.xlu0 %154
    %v156 = vmax.f32 %v57, %v58
    %157 = vmax.xlane.f32.xlu0 %v156
    %v158 = vpop.xlane.xlu0 %157
    %v159 = vmax.f32 %v59, %v60
    %160 = vmax.xlane.f32.xlu0 %v159
    %v161 = vpop.xlane.xlu0 %160
    %v162 = vmax.f32 %v61, %v62
    %163 = vmax.xlane.f32.xlu0 %v162
    %v164 = vpop.xlane.xlu0 %163
    %v165 = vmax.f32 %v63, %v64
    %166 = vmax.xlane.f32.xlu0 %v165
    %v167 = vpop.xlane.xlu0 %166
    %v168 = vmax.f32 %v65, %v66
    %169 = vmax.xlane.f32.xlu0 %v168
    %v170 = vpop.xlane.xlu0 %169
    %v171 = vmax.f32 %v67, %v68
    %172 = vmax.xlane.f32.xlu0 %v171
    %v173 = vpop.xlane.xlu0 %172
    %v174 = vmax.f32 %v69, %v70
    %175 = vmax.xlane.f32.xlu0 %v174
    %v176 = vpop.xlane.xlu0 %175
    %v177 = vmax.f32 %v71, %v72
    %178 = vmax.xlane.f32.xlu0 %v177
    %v179 = vpop.xlane.xlu0 %178
    %v180 = vmax.f32 %v73, %v74
    %181 = vmax.xlane.f32.xlu0 %v180
    %v182 = vpop.xlane.xlu0 %181
    %v183 = vmax.f32 %v75, %v76
    %184 = vmax.xlane.f32.xlu0 %v183
    %v185 = vpop.xlane.xlu0 %184
    %v186 = vmax.f32 %v77, %v78
    %187 = vmax.xlane.f32.xlu0 %v186
    %v188 = vpop.xlane.xlu0 %187
    %v189 = vmax.f32 %v79, %v80
    %190 = vmax.xlane.f32.xlu0 %v189
    %v191 = vpop.xlane.xlu0 %190
    %v192 = vmax.f32 %v81, %v82
    %193 = vmax.xlane.f32.xlu0 %v192
    %v194 = vpop.xlane.xlu0 %193
    %v195 = vmax.f32 %v83, %v84
    %196 = vmax.xlane.f32.xlu0 %v195
    %v197 = vpop.xlane.xlu0 %196
    %v214 = vlaneseq
    %v215 = vand.u32 %v214, 127
    %v216 = vlaneseq
    %v217 = vshrl.u32 %v216, 7
    %v218 = vsub.s32 %v215, %v217
    %v219 = vrot.slane %v134, %v218
    %v220 = vadd.s32 %v215, 4294967288
    %v221 = vlaneseq
    %v222 = vshrl.u32 %v221, 7
    %v223 = vsub.s32 %v220, %v222
    %v224 = vrot.slane %v135, %v223
    %vm225 = vcmask 130112
    %v226 = vsel %vm225, %v224, %v219
    %v227 = vadd.s32 %v215, 4294967280
    %v228 = vlaneseq
    %v229 = vshrl.u32 %v228, 7
    %v230 = vsub.s32 %v227, %v229
    %v231 = vrot.slane %v136, %v230
    %vm232 = vcmask 195712
    %v233 = vsel %vm232, %v231, %v226
    %v234 = vadd.s32 %v215, 4294967272
    %v235 = vlaneseq
    %v236 = vshrl.u32 %v235, 7
    %v237 = vsub.s32 %v234, %v236
    %v238 = vrot.slane %v137, %v237
    %vm239 = vcmask 261312
    %v240 = vsel %vm239, %v238, %v233
    %v241 = vlaneseq
    %v242 = vshrl.u32 %v241, 7
    %v243 = vsub.s32 %v215, %v242
    %v244 = vrot.slane %v138, %v243
    %v245 = vlaneseq
    %v246 = vshrl.u32 %v245, 7
    %v247 = vsub.s32 %v220, %v246
    %v248 = vrot.slane %v139, %v247
    %v249 = vsel %vm225, %v248, %v244
    %v250 = vlaneseq
    %v251 = vshrl.u32 %v250, 7
    %v252 = vsub.s32 %v227, %v251
    %v253 = vrot.slane %v140, %v252
    %v254 = vsel %vm232, %v253, %v249
    %v255 = vlaneseq
    %v256 = vshrl.u32 %v255, 7
    %v257 = vsub.s32 %v234, %v256
    %v258 = vrot.slane %v141, %v257
    %v259 = vsel %vm239, %v258, %v254
    %v260 = vlaneseq
    %v261 = vshrl.u32 %v260, 7
    %v262 = vsub.s32 %v215, %v261
    %v263 = vrot.slane %v142, %v262
    %v264 = vlaneseq
    %v265 = vshrl.u32 %v264, 7
    %v266 = vsub.s32 %v220, %v265
    %v267 = vrot.slane %v143, %v266
    %v268 = vsel %vm225, %v267, %v263
    %v269 = vlaneseq
    %v270 = vshrl.u32 %v269, 7
    %v271 = vsub.s32 %v227, %v270
    %v272 = vrot.slane %v144, %v271
    %v273 = vsel %vm232, %v272, %v268
    %v274 = vlaneseq
    %v275 = vshrl.u32 %v274, 7
    %v276 = vsub.s32 %v234, %v275
    %v277 = vrot.slane %v145, %v276
    %v278 = vsel %vm239, %v277, %v273
    %v279 = vlaneseq
    %v280 = vshrl.u32 %v279, 7
    %v281 = vsub.s32 %v215, %v280
    %v282 = vrot.slane %v146, %v281
    %v283 = vlaneseq
    %v284 = vshrl.u32 %v283, 7
    %v285 = vsub.s32 %v220, %v284
    %v286 = vrot.slane %v147, %v285
    %v287 = vsel %vm225, %v286, %v282
    %v288 = vlaneseq
    %v289 = vshrl.u32 %v288, 7
    %v290 = vsub.s32 %v227, %v289
    %v291 = vrot.slane %v148, %v290
    %v292 = vsel %vm232, %v291, %v287
    %v293 = vlaneseq
    %v294 = vshrl.u32 %v293, 7
    %v295 = vsub.s32 %v234, %v294
    %v296 = vrot.slane %v149, %v295
    %v297 = vsel %vm239, %v296, %v292
    %vm298 = vcmask 1041409
    %v299 = vsel %vm298, %v259, %v240
    %vm300 = vcmask 1042434
    %v301 = vsel %vm300, %v278, %v299
    %vm302 = vcmask 1043459
    %v303 = vsel %vm302, %v297, %v301
    %v321 = vlaneseq
    %v322 = vshrl.u32 %v321, 7
    %v323 = vsub.s32 %v215, %v322
    %v324 = vrot.slane %v152, %v323
    %v325 = vlaneseq
    %v326 = vshrl.u32 %v325, 7
    %v327 = vsub.s32 %v220, %v326
    %v328 = vrot.slane %v155, %v327
    %v329 = vsel %vm225, %v328, %v324
    %v330 = vlaneseq
    %v331 = vshrl.u32 %v330, 7
    %v332 = vsub.s32 %v227, %v331
    %v333 = vrot.slane %v158, %v332
    %v334 = vsel %vm232, %v333, %v329
    %v335 = vlaneseq
    %v336 = vshrl.u32 %v335, 7
    %v337 = vsub.s32 %v234, %v336
    %v338 = vrot.slane %v161, %v337
    %v339 = vsel %vm239, %v338, %v334
    %v340 = vlaneseq
    %v341 = vshrl.u32 %v340, 7
    %v342 = vsub.s32 %v215, %v341
    %v343 = vrot.slane %v164, %v342
    %v344 = vlaneseq
    %v345 = vshrl.u32 %v344, 7
    %v346 = vsub.s32 %v220, %v345
    %v347 = vrot.slane %v167, %v346
    %v348 = vsel %vm225, %v347, %v343
    %v349 = vlaneseq
    %v350 = vshrl.u32 %v349, 7
    %v351 = vsub.s32 %v227, %v350
    %v352 = vrot.slane %v170, %v351
    %v353 = vsel %vm232, %v352, %v348
    %v354 = vlaneseq
    %v355 = vshrl.u32 %v354, 7
    %v356 = vsub.s32 %v234, %v355
    %v357 = vrot.slane %v173, %v356
    %v358 = vsel %vm239, %v357, %v353
    %v359 = vlaneseq
    %v360 = vshrl.u32 %v359, 7
    %v361 = vsub.s32 %v215, %v360
    %v362 = vrot.slane %v176, %v361
    %v363 = vlaneseq
    %v364 = vshrl.u32 %v363, 7
    %v365 = vsub.s32 %v220, %v364
    %v366 = vrot.slane %v179, %v365
    %v367 = vsel %vm225, %v366, %v362
    %v368 = vlaneseq
    %v369 = vshrl.u32 %v368, 7
    %v370 = vsub.s32 %v227, %v369
    %v371 = vrot.slane %v182, %v370
    %v372 = vsel %vm232, %v371, %v367
    %v373 = vlaneseq
    %v374 = vshrl.u32 %v373, 7
    %v375 = vsub.s32 %v234, %v374
    %v376 = vrot.slane %v185, %v375
    %v377 = vsel %vm239, %v376, %v372
    %v378 = vlaneseq
    %v379 = vshrl.u32 %v378, 7
    %v380 = vsub.s32 %v215, %v379
    %v381 = vrot.slane %v188, %v380
    %v382 = vlaneseq
    %v383 = vshrl.u32 %v382, 7
    %v384 = vsub.s32 %v220, %v383
    %v385 = vrot.slane %v191, %v384
    %v386 = vsel %vm225, %v385, %v381
    %v387 = vlaneseq
    %v388 = vshrl.u32 %v387, 7
    %v389 = vsub.s32 %v227, %v388
    %v390 = vrot.slane %v194, %v389
    %v391 = vsel %vm232, %v390, %v386
    %v392 = vlaneseq
    %v393 = vshrl.u32 %v392, 7
    %v394 = vsub.s32 %v234, %v393
    %v395 = vrot.slane %v197, %v394
    %v396 = vsel %vm239, %v395, %v391
    %vm397 = vcmask 1045509
    %v398 = vsel %vm397, %v358, %v339
    %vm399 = vcmask 1046534
    %v400 = vsel %vm399, %v377, %v398
    %vm401 = vcmask 1047559
    %v402 = vsel %vm401, %v396, %v400
    %vm404 = vcmask 1043456
    %v405 = vsel %vm404, %v303, %v402
    %v406 = vld [vmem:[%s1] sm:$0xff]
    %v407 = vld [vmem:[%s1 + $0x8] sm:$0xff]
    %v408 = vld [vmem:[%s1 + $0x10] sm:$0xff]
    %v409 = vld [vmem:[%s1 + $0x18] sm:$0xff]
    %vm410 = vcmask 261120
    %v412 = vsel %vm410, %v405, 0
    %414 = vmatprep.subr.mxu0 0.0
    %v415 = vand.u32 %v406, 4294901760
    %416 = vmatpush1.msra.mxu0 %v415
    %417 = vmatprep.subr.mxu0 0.0
    %v418 = vand.u32 %v407, 4294901760
    %419 = vmatpush1.msra.mxu0 %v418
    %420 = vmatprep.subr.mxu0 0.0
    %v421 = vand.u32 %v408, 4294901760
    %422 = vmatpush1.msra.mxu0 %v421
    %423 = vmatprep.subr.mxu0 0.0
    %v424 = vand.u32 %v409, 4294901760
    %425 = vmatpush1.msra.mxu0 %v424
    %426 = vmatprep.subr.mxu0 0.0
    %427 = vmatpush1.msra.mxu0 0.0
    %428 = vmatprep.subr.mxu0 0.0
    %429 = vmatpush1.msra.mxu0 0.0
    %430 = vmatprep.subr.mxu0 0.0
    %431 = vmatpush1.msra.mxu0 0.0
    %432 = vmatprep.subr.mxu0 0.0
    %433 = vmatpush1.msra.mxu0 0.0
    %434 = vmatprep.subr.mxu0 0.0
    %435 = vmatpush1.msra.mxu0 0.0
    %436 = vmatprep.subr.mxu0 0.0
    %437 = vmatpush1.msra.mxu0 0.0
    %438 = vmatprep.subr.mxu0 0.0
    %439 = vmatpush1.msra.mxu0 0.0
    %440 = vmatprep.subr.mxu0 0.0
    %441 = vmatpush1.msra.mxu0 0.0
    %442 = vmatprep.subr.mxu0 0.0
    %443 = vmatpush1.msra.mxu0 0.0
    %444 = vmatprep.subr.mxu0 0.0
    %445 = vmatpush1.msra.mxu0 0.0
    %446 = vmatprep.subr.mxu0 0.0
    %447 = vmatpush1.msra.mxu0 0.0
    %448 = vmatprep.subr.mxu0 0.0
    %449 = vmatpush1.msra.mxu0 0.0
    %450 = vmatprep.subr.mxu0 0.0
    %451 = vmatpush1.msra.mxu0 0.0
    %452 = vmatprep.subr.mxu0 0.0
    %453 = vmatpush1.msra.mxu0 0.0
    %454 = vmatprep.subr.mxu0 0.0
    %455 = vmatpush1.msra.mxu0 0.0
    %456 = vmatprep.subr.mxu0 0.0
    %457 = vmatpush1.msra.mxu0 0.0
    %458 = vmatprep.subr.mxu0 0.0
    %459 = vmatpush1.msra.mxu0 0.0
    %460 = vmatprep.subr.mxu0 0.0
    %461 = vmatpush1.msra.mxu0 0.0
    %462 = vmatprep.subr.mxu0 0.0
    %463 = vmatpush1.msra.mxu0 0.0
    %464 = vmatprep.subr.mxu0 0.0
    %465 = vmatpush1.msra.mxu0 0.0
    %466 = vmatprep.subr.mxu0 0.0
    %467 = vmatpush1.msra.mxu0 0.0
    %468 = vmatprep.subr.mxu0 0.0
    %469 = vmatpush1.msra.mxu0 0.0
    %470 = vmatprep.subr.mxu0 0.0
    %471 = vmatpush1.msra.mxu0 0.0
    %472 = vmatprep.subr.mxu0 0.0
    %473 = vmatpush1.msra.mxu0 0.0
    %474 = vmatprep.subr.mxu0 0.0
    %475 = vmatpush1.msra.mxu0 0.0
    %476 = vmatprep.subr.mxu0 0.0
    %477 = vmatpush1.msra.mxu0 0.0
    %478 = vmatprep.subr.mxu0 0.0
    %479 = vmatpush1.msra.mxu0 0.0
    %480 = vmatprep.subr.mxu0 0.0
    %481 = vmatpush1.msra.mxu0 0.0
    %482 = vmatprep.mubr.f32.mxu0 0.0
    %v483 = vand.u32 %v412, 4294901760
    %v484 = vsub.f32 %v412, %v483
    %v485 = vand.u32 %v484, 4294901760
    %v486 = vsub.f32 %v484, %v485
    %v487 = vand.u32 %v486, 4294901760
    %488 = vmatmul.mubr.f32.gmra.mrb[0].mxu0 %v487
    %v489 = vpop.f32.mrb[0].mxu0
    %v490 = vadd.f32 0.0, %v489
    %v491 = vpop.f32.mrb[0].mxu0
    %492 = vdwg.mxu0
    %493 = vmatprep.subr.mxu0 0.0
    %v494 = vand.u32 %v406, 4294901760
    %v495 = vsub.f32 %v406, %v494
    %v496 = vand.u32 %v495, 4294901760
    %v497 = vsub.f32 %v495, %v496
    %v498 = vand.u32 %v497, 4294901760
    %499 = vmatpush1.msra.mxu0 %v498
    %500 = vmatprep.subr.mxu0 0.0
    %v501 = vand.u32 %v407, 4294901760
    %v502 = vsub.f32 %v407, %v501
    %v503 = vand.u32 %v502, 4294901760
    %v504 = vsub.f32 %v502, %v503
    %v505 = vand.u32 %v504, 4294901760
    %506 = vmatpush1.msra.mxu0 %v505
    %507 = vmatprep.subr.mxu0 0.0
    %v508 = vand.u32 %v408, 4294901760
    %v509 = vsub.f32 %v408, %v508
    %v510 = vand.u32 %v509, 4294901760
    %v511 = vsub.f32 %v509, %v510
    %v512 = vand.u32 %v511, 4294901760
    %513 = vmatpush1.msra.mxu0 %v512
    %514 = vmatprep.subr.mxu0 0.0
    %v515 = vand.u32 %v409, 4294901760
    %v516 = vsub.f32 %v409, %v515
    %v517 = vand.u32 %v516, 4294901760
    %v518 = vsub.f32 %v516, %v517
    %v519 = vand.u32 %v518, 4294901760
    %520 = vmatpush1.msra.mxu0 %v519
    %521 = vmatprep.subr.mxu0 0.0
    %522 = vmatpush1.msra.mxu0 0.0
    %523 = vmatprep.subr.mxu0 0.0
    %524 = vmatpush1.msra.mxu0 0.0
    %525 = vmatprep.subr.mxu0 0.0
    %526 = vmatpush1.msra.mxu0 0.0
    %527 = vmatprep.subr.mxu0 0.0
    %528 = vmatpush1.msra.mxu0 0.0
    %529 = vmatprep.subr.mxu0 0.0
    %530 = vmatpush1.msra.mxu0 0.0
    %531 = vmatprep.subr.mxu0 0.0
    %532 = vmatpush1.msra.mxu0 0.0
    %533 = vmatprep.subr.mxu0 0.0
    %534 = vmatpush1.msra.mxu0 0.0
    %535 = vmatprep.subr.mxu0 0.0
    %536 = vmatpush1.msra.mxu0 0.0
    %537 = vmatprep.subr.mxu0 0.0
    %538 = vmatpush1.msra.mxu0 0.0
    %539 = vmatprep.subr.mxu0 0.0
    %540 = vmatpush1.msra.mxu0 0.0
    %541 = vmatprep.subr.mxu0 0.0
    %542 = vmatpush1.msra.mxu0 0.0
    %543 = vmatprep.subr.mxu0 0.0
    %544 = vmatpush1.msra.mxu0 0.0
    %545 = vmatprep.subr.mxu0 0.0
    %546 = vmatpush1.msra.mxu0 0.0
    %547 = vmatprep.subr.mxu0 0.0
    %548 = vmatpush1.msra.mxu0 0.0
    %549 = vmatprep.subr.mxu0 0.0
    %550 = vmatpush1.msra.mxu0 0.0
    %551 = vmatprep.subr.mxu0 0.0
    %552 = vmatpush1.msra.mxu0 0.0
    %553 = vmatprep.subr.mxu0 0.0
    %554 = vmatpush1.msra.mxu0 0.0
    %555 = vmatprep.subr.mxu0 0.0
    %556 = vmatpush1.msra.mxu0 0.0
    %557 = vmatprep.subr.mxu0 0.0
    %558 = vmatpush1.msra.mxu0 0.0
    %559 = vmatprep.subr.mxu0 0.0
    %560 = vmatpush1.msra.mxu0 0.0
    %561 = vmatprep.subr.mxu0 0.0
    %562 = vmatpush1.msra.mxu0 0.0
    %563 = vmatprep.subr.mxu0 0.0
    %564 = vmatpush1.msra.mxu0 0.0
    %565 = vmatprep.subr.mxu0 0.0
    %566 = vmatpush1.msra.mxu0 0.0
    %567 = vmatprep.subr.mxu0 0.0
    %568 = vmatpush1.msra.mxu0 0.0
    %569 = vmatprep.subr.mxu0 0.0
    %570 = vmatpush1.msra.mxu0 0.0
    %571 = vmatprep.subr.mxu0 0.0
    %572 = vmatpush1.msra.mxu0 0.0
    %573 = vmatprep.subr.mxu0 0.0
    %574 = vmatpush1.msra.mxu0 0.0
    %575 = vmatprep.subr.mxu0 0.0
    %576 = vmatpush1.msra.mxu0 0.0
    %577 = vmatprep.mubr.f32.mxu0 0.0
    %v578 = vand.u32 %v412, 4294901760
    %579 = vmatmul.mubr.f32.gmra.mrb[0].mxu0 %v578
    %v580 = vpop.f32.mrb[0].mxu0
    %v581 = vadd.f32 %v490, %v580
    %v582 = vpop.f32.mrb[0].mxu0
    %583 = vdwg.mxu0
    %584 = vmatprep.subr.mxu0 0.0
    %v585 = vand.u32 %v406, 4294901760
    %v586 = vsub.f32 %v406, %v585
    %587 = vmatpush1.msra.mxu0 %v586
    %588 = vmatprep.subr.mxu0 0.0
    %v589 = vand.u32 %v407, 4294901760
    %v590 = vsub.f32 %v407, %v589
    %591 = vmatpush1.msra.mxu0 %v590
    %592 = vmatprep.subr.mxu0 0.0
    %v593 = vand.u32 %v408, 4294901760
    %v594 = vsub.f32 %v408, %v593
    %595 = vmatpush1.msra.mxu0 %v594
    %596 = vmatprep.subr.mxu0 0.0
    %v597 = vand.u32 %v409, 4294901760
    %v598 = vsub.f32 %v409, %v597
    %599 = vmatpush1.msra.mxu0 %v598
    %600 = vmatprep.subr.mxu0 0.0
    %601 = vmatpush1.msra.mxu0 0.0
    %602 = vmatprep.subr.mxu0 0.0
    %603 = vmatpush1.msra.mxu0 0.0
    %604 = vmatprep.subr.mxu0 0.0
    %605 = vmatpush1.msra.mxu0 0.0
    %606 = vmatprep.subr.mxu0 0.0
    %607 = vmatpush1.msra.mxu0 0.0
    %608 = vmatprep.subr.mxu0 0.0
    %609 = vmatpush1.msra.mxu0 0.0
    %610 = vmatprep.subr.mxu0 0.0
    %611 = vmatpush1.msra.mxu0 0.0
    %612 = vmatprep.subr.mxu0 0.0
    %613 = vmatpush1.msra.mxu0 0.0
    %614 = vmatprep.subr.mxu0 0.0
    %615 = vmatpush1.msra.mxu0 0.0
    %616 = vmatprep.subr.mxu0 0.0
    %617 = vmatpush1.msra.mxu0 0.0
    %618 = vmatprep.subr.mxu0 0.0
    %619 = vmatpush1.msra.mxu0 0.0
    %620 = vmatprep.subr.mxu0 0.0
    %621 = vmatpush1.msra.mxu0 0.0
    %622 = vmatprep.subr.mxu0 0.0
    %623 = vmatpush1.msra.mxu0 0.0
    %624 = vmatprep.subr.mxu0 0.0
    %625 = vmatpush1.msra.mxu0 0.0
    %626 = vmatprep.subr.mxu0 0.0
    %627 = vmatpush1.msra.mxu0 0.0
    %628 = vmatprep.subr.mxu0 0.0
    %629 = vmatpush1.msra.mxu0 0.0
    %630 = vmatprep.subr.mxu0 0.0
    %631 = vmatpush1.msra.mxu0 0.0
    %632 = vmatprep.subr.mxu0 0.0
    %633 = vmatpush1.msra.mxu0 0.0
    %634 = vmatprep.subr.mxu0 0.0
    %635 = vmatpush1.msra.mxu0 0.0
    %636 = vmatprep.subr.mxu0 0.0
    %637 = vmatpush1.msra.mxu0 0.0
    %638 = vmatprep.subr.mxu0 0.0
    %639 = vmatpush1.msra.mxu0 0.0
    %640 = vmatprep.subr.mxu0 0.0
    %641 = vmatpush1.msra.mxu0 0.0
    %642 = vmatprep.subr.mxu0 0.0
    %643 = vmatpush1.msra.mxu0 0.0
    %644 = vmatprep.subr.mxu0 0.0
    %645 = vmatpush1.msra.mxu0 0.0
    %646 = vmatprep.subr.mxu0 0.0
    %647 = vmatpush1.msra.mxu0 0.0
    %648 = vmatprep.subr.mxu0 0.0
    %649 = vmatpush1.msra.mxu0 0.0
    %650 = vmatprep.subr.mxu0 0.0
    %651 = vmatpush1.msra.mxu0 0.0
    %652 = vmatprep.subr.mxu0 0.0
    %653 = vmatpush1.msra.mxu0 0.0
    %654 = vmatprep.subr.mxu0 0.0
    %655 = vmatpush1.msra.mxu0 0.0
    %656 = vmatprep.mubr.f32.mxu0 0.0
    %v657 = vand.u32 %v412, 4294901760
    %v658 = vsub.f32 %v412, %v657
    %659 = vmatmul.mubr.f32.gmra.mrb[0].mxu0 %v658
    %v660 = vpop.f32.mrb[0].mxu0
    %v661 = vadd.f32 %v581, %v660
    %v662 = vpop.f32.mrb[0].mxu0
    %663 = vdwg.mxu0
    %664 = vmatprep.subr.mxu0 0.0
    %v665 = vand.u32 %v406, 4294901760
    %666 = vmatpush1.msra.mxu0 %v665
    %667 = vmatprep.subr.mxu0 0.0
    %v668 = vand.u32 %v407, 4294901760
    %669 = vmatpush1.msra.mxu0 %v668
    %670 = vmatprep.subr.mxu0 0.0
    %v671 = vand.u32 %v408, 4294901760
    %672 = vmatpush1.msra.mxu0 %v671
    %673 = vmatprep.subr.mxu0 0.0
    %v674 = vand.u32 %v409, 4294901760
    %675 = vmatpush1.msra.mxu0 %v674
    %676 = vmatprep.subr.mxu0 0.0
    %677 = vmatpush1.msra.mxu0 0.0
    %678 = vmatprep.subr.mxu0 0.0
    %679 = vmatpush1.msra.mxu0 0.0
    %680 = vmatprep.subr.mxu0 0.0
    %681 = vmatpush1.msra.mxu0 0.0
    %682 = vmatprep.subr.mxu0 0.0
    %683 = vmatpush1.msra.mxu0 0.0
    %684 = vmatprep.subr.mxu0 0.0
    %685 = vmatpush1.msra.mxu0 0.0
    %686 = vmatprep.subr.mxu0 0.0
    %687 = vmatpush1.msra.mxu0 0.0
    %688 = vmatprep.subr.mxu0 0.0
    %689 = vmatpush1.msra.mxu0 0.0
    %690 = vmatprep.subr.mxu0 0.0
    %691 = vmatpush1.msra.mxu0 0.0
    %692 = vmatprep.subr.mxu0 0.0
    %693 = vmatpush1.msra.mxu0 0.0
    %694 = vmatprep.subr.mxu0 0.0
    %695 = vmatpush1.msra.mxu0 0.0
    %696 = vmatprep.subr.mxu0 0.0
    %697 = vmatpush1.msra.mxu0 0.0
    %698 = vmatprep.subr.mxu0 0.0
    %699 = vmatpush1.msra.mxu0 0.0
    %700 = vmatprep.subr.mxu0 0.0
    %701 = vmatpush1.msra.mxu0 0.0
    %702 = vmatprep.subr.mxu0 0.0
    %703 = vmatpush1.msra.mxu0 0.0
    %704 = vmatprep.subr.mxu0 0.0
    %705 = vmatpush1.msra.mxu0 0.0
    %706 = vmatprep.subr.mxu0 0.0
    %707 = vmatpush1.msra.mxu0 0.0
    %708 = vmatprep.subr.mxu0 0.0
    %709 = vmatpush1.msra.mxu0 0.0
    %710 = vmatprep.subr.mxu0 0.0
    %711 = vmatpush1.msra.mxu0 0.0
    %712 = vmatprep.subr.mxu0 0.0
    %713 = vmatpush1.msra.mxu0 0.0
    %714 = vmatprep.subr.mxu0 0.0
    %715 = vmatpush1.msra.mxu0 0.0
    %716 = vmatprep.subr.mxu0 0.0
    %717 = vmatpush1.msra.mxu0 0.0
    %718 = vmatprep.subr.mxu0 0.0
    %719 = vmatpush1.msra.mxu0 0.0
    %720 = vmatprep.subr.mxu0 0.0
    %721 = vmatpush1.msra.mxu0 0.0
    %722 = vmatprep.subr.mxu0 0.0
    %723 = vmatpush1.msra.mxu0 0.0
    %724 = vmatprep.subr.mxu0 0.0
    %725 = vmatpush1.msra.mxu0 0.0
    %726 = vmatprep.subr.mxu0 0.0
    %727 = vmatpush1.msra.mxu0 0.0
    %728 = vmatprep.subr.mxu0 0.0
    %729 = vmatpush1.msra.mxu0 0.0
    %730 = vmatprep.subr.mxu0 0.0
    %731 = vmatpush1.msra.mxu0 0.0
    %732 = vmatprep.mubr.f32.mxu0 0.0
    %v733 = vand.u32 %v412, 4294901760
    %v734 = vsub.f32 %v412, %v733
    %v735 = vand.u32 %v734, 4294901760
    %736 = vmatmul.mubr.f32.gmra.mrb[0].mxu0 %v735
    %v737 = vpop.f32.mrb[0].mxu0
    %v738 = vadd.f32 %v661, %v737
    %v739 = vpop.f32.mrb[0].mxu0
    %740 = vdwg.mxu0
    %741 = vmatprep.subr.mxu0 0.0
    %v742 = vand.u32 %v406, 4294901760
    %v743 = vsub.f32 %v406, %v742
    %v744 = vand.u32 %v743, 4294901760
    %745 = vmatpush1.msra.mxu0 %v744
    %746 = vmatprep.subr.mxu0 0.0
    %v747 = vand.u32 %v407, 4294901760
    %v748 = vsub.f32 %v407, %v747
    %v749 = vand.u32 %v748, 4294901760
    %750 = vmatpush1.msra.mxu0 %v749
    %751 = vmatprep.subr.mxu0 0.0
    %v752 = vand.u32 %v408, 4294901760
    %v753 = vsub.f32 %v408, %v752
    %v754 = vand.u32 %v753, 4294901760
    %755 = vmatpush1.msra.mxu0 %v754
    %756 = vmatprep.subr.mxu0 0.0
    %v757 = vand.u32 %v409, 4294901760
    %v758 = vsub.f32 %v409, %v757
    %v759 = vand.u32 %v758, 4294901760
    %760 = vmatpush1.msra.mxu0 %v759
    %761 = vmatprep.subr.mxu0 0.0
    %762 = vmatpush1.msra.mxu0 0.0
    %763 = vmatprep.subr.mxu0 0.0
    %764 = vmatpush1.msra.mxu0 0.0
    %765 = vmatprep.subr.mxu0 0.0
    %766 = vmatpush1.msra.mxu0 0.0
    %767 = vmatprep.subr.mxu0 0.0
    %768 = vmatpush1.msra.mxu0 0.0
    %769 = vmatprep.subr.mxu0 0.0
    %770 = vmatpush1.msra.mxu0 0.0
    %771 = vmatprep.subr.mxu0 0.0
    %772 = vmatpush1.msra.mxu0 0.0
    %773 = vmatprep.subr.mxu0 0.0
    %774 = vmatpush1.msra.mxu0 0.0
    %775 = vmatprep.subr.mxu0 0.0
    %776 = vmatpush1.msra.mxu0 0.0
    %777 = vmatprep.subr.mxu0 0.0
    %778 = vmatpush1.msra.mxu0 0.0
    %779 = vmatprep.subr.mxu0 0.0
    %780 = vmatpush1.msra.mxu0 0.0
    %781 = vmatprep.subr.mxu0 0.0
    %782 = vmatpush1.msra.mxu0 0.0
    %783 = vmatprep.subr.mxu0 0.0
    %784 = vmatpush1.msra.mxu0 0.0
    %785 = vmatprep.subr.mxu0 0.0
    %786 = vmatpush1.msra.mxu0 0.0
    %787 = vmatprep.subr.mxu0 0.0
    %788 = vmatpush1.msra.mxu0 0.0
    %789 = vmatprep.subr.mxu0 0.0
    %790 = vmatpush1.msra.mxu0 0.0
    %791 = vmatprep.subr.mxu0 0.0
    %792 = vmatpush1.msra.mxu0 0.0
    %793 = vmatprep.subr.mxu0 0.0
    %794 = vmatpush1.msra.mxu0 0.0
    %795 = vmatprep.subr.mxu0 0.0
    %796 = vmatpush1.msra.mxu0 0.0
    %797 = vmatprep.subr.mxu0 0.0
    %798 = vmatpush1.msra.mxu0 0.0
    %799 = vmatprep.subr.mxu0 0.0
    %800 = vmatpush1.msra.mxu0 0.0
    %801 = vmatprep.subr.mxu0 0.0
    %802 = vmatpush1.msra.mxu0 0.0
    %803 = vmatprep.subr.mxu0 0.0
    %804 = vmatpush1.msra.mxu0 0.0
    %805 = vmatprep.subr.mxu0 0.0
    %806 = vmatpush1.msra.mxu0 0.0
    %807 = vmatprep.subr.mxu0 0.0
    %808 = vmatpush1.msra.mxu0 0.0
    %809 = vmatprep.subr.mxu0 0.0
    %810 = vmatpush1.msra.mxu0 0.0
    %811 = vmatprep.subr.mxu0 0.0
    %812 = vmatpush1.msra.mxu0 0.0
    %813 = vmatprep.subr.mxu0 0.0
    %814 = vmatpush1.msra.mxu0 0.0
    %815 = vmatprep.subr.mxu0 0.0
    %816 = vmatpush1.msra.mxu0 0.0
    %817 = vmatprep.mubr.f32.mxu0 0.0
    %v818 = vand.u32 %v412, 4294901760
    %819 = vmatmul.mubr.f32.gmra.mrb[0].mxu0 %v818
    %v820 = vpop.f32.mrb[0].mxu0
    %v821 = vadd.f32 %v738, %v820
    %v822 = vpop.f32.mrb[0].mxu0
    %823 = vdwg.mxu0
    %824 = vmatprep.subr.mxu0 0.0
    %v825 = vand.u32 %v406, 4294901760
    %826 = vmatpush1.msra.mxu0 %v825
    %827 = vmatprep.subr.mxu0 0.0
    %v828 = vand.u32 %v407, 4294901760
    %829 = vmatpush1.msra.mxu0 %v828
    %830 = vmatprep.subr.mxu0 0.0
    %v831 = vand.u32 %v408, 4294901760
    %832 = vmatpush1.msra.mxu0 %v831
    %833 = vmatprep.subr.mxu0 0.0
    %v834 = vand.u32 %v409, 4294901760
    %835 = vmatpush1.msra.mxu0 %v834
    %836 = vmatprep.subr.mxu0 0.0
    %837 = vmatpush1.msra.mxu0 0.0
    %838 = vmatprep.subr.mxu0 0.0
    %839 = vmatpush1.msra.mxu0 0.0
    %840 = vmatprep.subr.mxu0 0.0
    %841 = vmatpush1.msra.mxu0 0.0
    %842 = vmatprep.subr.mxu0 0.0
    %843 = vmatpush1.msra.mxu0 0.0
    %844 = vmatprep.subr.mxu0 0.0
    %845 = vmatpush1.msra.mxu0 0.0
    %846 = vmatprep.subr.mxu0 0.0
    %847 = vmatpush1.msra.mxu0 0.0
    %848 = vmatprep.subr.mxu0 0.0
    %849 = vmatpush1.msra.mxu0 0.0
    %850 = vmatprep.subr.mxu0 0.0
    %851 = vmatpush1.msra.mxu0 0.0
    %852 = vmatprep.subr.mxu0 0.0
    %853 = vmatpush1.msra.mxu0 0.0
    %854 = vmatprep.subr.mxu0 0.0
    %855 = vmatpush1.msra.mxu0 0.0
    %856 = vmatprep.subr.mxu0 0.0
    %857 = vmatpush1.msra.mxu0 0.0
    %858 = vmatprep.subr.mxu0 0.0
    %859 = vmatpush1.msra.mxu0 0.0
    %860 = vmatprep.subr.mxu0 0.0
    %861 = vmatpush1.msra.mxu0 0.0
    %862 = vmatprep.subr.mxu0 0.0
    %863 = vmatpush1.msra.mxu0 0.0
    %864 = vmatprep.subr.mxu0 0.0
    %865 = vmatpush1.msra.mxu0 0.0
    %866 = vmatprep.subr.mxu0 0.0
    %867 = vmatpush1.msra.mxu0 0.0
    %868 = vmatprep.subr.mxu0 0.0
    %869 = vmatpush1.msra.mxu0 0.0
    %870 = vmatprep.subr.mxu0 0.0
    %871 = vmatpush1.msra.mxu0 0.0
    %872 = vmatprep.subr.mxu0 0.0
    %873 = vmatpush1.msra.mxu0 0.0
    %874 = vmatprep.subr.mxu0 0.0
    %875 = vmatpush1.msra.mxu0 0.0
    %876 = vmatprep.subr.mxu0 0.0
    %877 = vmatpush1.msra.mxu0 0.0
    %878 = vmatprep.subr.mxu0 0.0
    %879 = vmatpush1.msra.mxu0 0.0
    %880 = vmatprep.subr.mxu0 0.0
    %881 = vmatpush1.msra.mxu0 0.0
    %882 = vmatprep.subr.mxu0 0.0
    %883 = vmatpush1.msra.mxu0 0.0
    %884 = vmatprep.subr.mxu0 0.0
    %885 = vmatpush1.msra.mxu0 0.0
    %886 = vmatprep.subr.mxu0 0.0
    %887 = vmatpush1.msra.mxu0 0.0
    %888 = vmatprep.subr.mxu0 0.0
    %889 = vmatpush1.msra.mxu0 0.0
    %890 = vmatprep.subr.mxu0 0.0
    %891 = vmatpush1.msra.mxu0 0.0
    %892 = vmatprep.mubr.f32.mxu0 0.0
    %v893 = vand.u32 %v412, 4294901760
    %894 = vmatmul.mubr.f32.gmra.mrb[0].mxu0 %v893
    %v895 = vpop.f32.mrb[0].mxu0
    %v896 = vadd.f32 %v821, %v895
    %v897 = vpop.f32.mrb[0].mxu0
    %898 = vdwg.mxu0
    %v899 = vmax.f32 %v896, 0.0
    %v900 = vld [vmem:[%s2] sm:$0x3]
    %vm901 = vcmask 15360
    %v903 = vsel %vm901, %v899, 0
    %vm905 = vcmask 1041408
    %v907 = vsel %vm905, %v900, 0
    %909 = vmatprep.subr.mxu0 0.0
    %v910 = vand.u32 %v907, 4294901760
    %911 = vmatpush1.msra.mxu0 %v910
    %912 = vmatprep.subr.mxu0 0.0
    %913 = vmatpush1.msra.mxu0 0.0
    %914 = vmatprep.subr.mxu0 0.0
    %915 = vmatpush1.msra.mxu0 0.0
    %916 = vmatprep.subr.mxu0 0.0
    %917 = vmatpush1.msra.mxu0 0.0
    %918 = vmatprep.subr.mxu0 0.0
    %919 = vmatpush1.msra.mxu0 0.0
    %920 = vmatprep.subr.mxu0 0.0
    %921 = vmatpush1.msra.mxu0 0.0
    %922 = vmatprep.subr.mxu0 0.0
    %923 = vmatpush1.msra.mxu0 0.0
    %924 = vmatprep.subr.mxu0 0.0
    %925 = vmatpush1.msra.mxu0 0.0
    %926 = vmatprep.subr.mxu0 0.0
    %927 = vmatpush1.msra.mxu0 0.0
    %928 = vmatprep.subr.mxu0 0.0
    %929 = vmatpush1.msra.mxu0 0.0
    %930 = vmatprep.subr.mxu0 0.0
    %931 = vmatpush1.msra.mxu0 0.0
    %932 = vmatprep.subr.mxu0 0.0
    %933 = vmatpush1.msra.mxu0 0.0
    %934 = vmatprep.subr.mxu0 0.0
    %935 = vmatpush1.msra.mxu0 0.0
    %936 = vmatprep.subr.mxu0 0.0
    %937 = vmatpush1.msra.mxu0 0.0
    %938 = vmatprep.subr.mxu0 0.0
    %939 = vmatpush1.msra.mxu0 0.0
    %940 = vmatprep.subr.mxu0 0.0
    %941 = vmatpush1.msra.mxu0 0.0
    %942 = vmatprep.subr.mxu0 0.0
    %943 = vmatpush1.msra.mxu0 0.0
    %944 = vmatprep.subr.mxu0 0.0
    %945 = vmatpush1.msra.mxu0 0.0
    %946 = vmatprep.subr.mxu0 0.0
    %947 = vmatpush1.msra.mxu0 0.0
    %948 = vmatprep.subr.mxu0 0.0
    %949 = vmatpush1.msra.mxu0 0.0
    %950 = vmatprep.subr.mxu0 0.0
    %951 = vmatpush1.msra.mxu0 0.0
    %952 = vmatprep.subr.mxu0 0.0
    %953 = vmatpush1.msra.mxu0 0.0
    %954 = vmatprep.subr.mxu0 0.0
    %955 = vmatpush1.msra.mxu0 0.0
    %956 = vmatprep.subr.mxu0 0.0
    %957 = vmatpush1.msra.mxu0 0.0
    %958 = vmatprep.subr.mxu0 0.0
    %959 = vmatpush1.msra.mxu0 0.0
    %960 = vmatprep.subr.mxu0 0.0
    %961 = vmatpush1.msra.mxu0 0.0
    %962 = vmatprep.subr.mxu0 0.0
    %963 = vmatpush1.msra.mxu0 0.0
    %964 = vmatprep.subr.mxu0 0.0
    %965 = vmatpush1.msra.mxu0 0.0
    %966 = vmatprep.subr.mxu0 0.0
    %967 = vmatpush1.msra.mxu0 0.0
    %968 = vmatprep.subr.mxu0 0.0
    %969 = vmatpush1.msra.mxu0 0.0
    %970 = vmatprep.subr.mxu0 0.0
    %971 = vmatpush1.msra.mxu0 0.0
    %972 = vmatprep.subr.mxu0 0.0
    %973 = vmatpush1.msra.mxu0 0.0
    %974 = vmatprep.mubr.f32.mxu0 0.0
    %v975 = vand.u32 %v903, 4294901760
    %v976 = vsub.f32 %v903, %v975
    %v977 = vand.u32 %v976, 4294901760
    %v978 = vsub.f32 %v976, %v977
    %v979 = vand.u32 %v978, 4294901760
    %980 = vmatmul.mubr.f32.gmra.mrb[0].mxu0 %v979
    %v981 = vpop.f32.mrb[0].mxu0
    %v982 = vadd.f32 0.0, %v981
    %v983 = vpop.f32.mrb[0].mxu0
    %984 = vdwg.mxu0
    %985 = vmatprep.subr.mxu0 0.0
    %v986 = vand.u32 %v907, 4294901760
    %v987 = vsub.f32 %v907, %v986
    %v988 = vand.u32 %v987, 4294901760
    %v989 = vsub.f32 %v987, %v988
    %v990 = vand.u32 %v989, 4294901760
    %991 = vmatpush1.msra.mxu0 %v990
    %992 = vmatprep.subr.mxu0 0.0
    %993 = vmatpush1.msra.mxu0 0.0
    %994 = vmatprep.subr.mxu0 0.0
    %995 = vmatpush1.msra.mxu0 0.0
    %996 = vmatprep.subr.mxu0 0.0
    %997 = vmatpush1.msra.mxu0 0.0
    %998 = vmatprep.subr.mxu0 0.0
    %999 = vmatpush1.msra.mxu0 0.0
    %1000 = vmatprep.subr.mxu0 0.0
    %1001 = vmatpush1.msra.mxu0 0.0
    %1002 = vmatprep.subr.mxu0 0.0
    %1003 = vmatpush1.msra.mxu0 0.0
    %1004 = vmatprep.subr.mxu0 0.0
    %1005 = vmatpush1.msra.mxu0 0.0
    %1006 = vmatprep.subr.mxu0 0.0
    %1007 = vmatpush1.msra.mxu0 0.0
    %1008 = vmatprep.subr.mxu0 0.0
    %1009 = vmatpush1.msra.mxu0 0.0
    %1010 = vmatprep.subr.mxu0 0.0
    %1011 = vmatpush1.msra.mxu0 0.0
    %1012 = vmatprep.subr.mxu0 0.0
    %1013 = vmatpush1.msra.mxu0 0.0
    %1014 = vmatprep.subr.mxu0 0.0
    %1015 = vmatpush1.msra.mxu0 0.0
    %1016 = vmatprep.subr.mxu0 0.0
    %1017 = vmatpush1.msra.mxu0 0.0
    %1018 = vmatprep.subr.mxu0 0.0
    %1019 = vmatpush1.msra.mxu0 0.0
    %1020 = vmatprep.subr.mxu0 0.0
    %1021 = vmatpush1.msra.mxu0 0.0
    %1022 = vmatprep.subr.mxu0 0.0
    %1023 = vmatpush1.msra.mxu0 0.0
    %1024 = vmatprep.subr.mxu0 0.0
    %1025 = vmatpush1.msra.mxu0 0.0
    %1026 = vmatprep.subr.mxu0 0.0
    %1027 = vmatpush1.msra.mxu0 0.0
    %1028 = vmatprep.subr.mxu0 0.0
    %1029 = vmatpush1.msra.mxu0 0.0
    %1030 = vmatprep.subr.mxu0 0.0
    %1031 = vmatpush1.msra.mxu0 0.0
    %1032 = vmatprep.subr.mxu0 0.0
    %1033 = vmatpush1.msra.mxu0 0.0
    %1034 = vmatprep.subr.mxu0 0.0
    %1035 = vmatpush1.msra.mxu0 0.0
    %1036 = vmatprep.subr.mxu0 0.0
    %1037 = vmatpush1.msra.mxu0 0.0
    %1038 = vmatprep.subr.mxu0 0.0
    %1039 = vmatpush1.msra.mxu0 0.0
    %1040 = vmatprep.subr.mxu0 0.0
    %1041 = vmatpush1.msra.mxu0 0.0
    %1042 = vmatprep.subr.mxu0 0.0
    %1043 = vmatpush1.msra.mxu0 0.0
    %1044 = vmatprep.subr.mxu0 0.0
    %1045 = vmatpush1.msra.mxu0 0.0
    %1046 = vmatprep.subr.mxu0 0.0
    %1047 = vmatpush1.msra.mxu0 0.0
    %1048 = vmatprep.subr.mxu0 0.0
    %1049 = vmatpush1.msra.mxu0 0.0
    %1050 = vmatprep.subr.mxu0 0.0
    %1051 = vmatpush1.msra.mxu0 0.0
    %1052 = vmatprep.subr.mxu0 0.0
    %1053 = vmatpush1.msra.mxu0 0.0
    %1054 = vmatprep.mubr.f32.mxu0 0.0
    %v1055 = vand.u32 %v903, 4294901760
    %1056 = vmatmul.mubr.f32.gmra.mrb[0].mxu0 %v1055
    %v1057 = vpop.f32.mrb[0].mxu0
    %v1058 = vadd.f32 %v982, %v1057
    %v1059 = vpop.f32.mrb[0].mxu0
    %1060 = vdwg.mxu0
    %1061 = vmatprep.subr.mxu0 0.0
    %v1062 = vand.u32 %v907, 4294901760
    %v1063 = vsub.f32 %v907, %v1062
    %1064 = vmatpush1.msra.mxu0 %v1063
    %1065 = vmatprep.subr.mxu0 0.0
    %1066 = vmatpush1.msra.mxu0 0.0
    %1067 = vmatprep.subr.mxu0 0.0
    %1068 = vmatpush1.msra.mxu0 0.0
    %1069 = vmatprep.subr.mxu0 0.0
    %1070 = vmatpush1.msra.mxu0 0.0
    %1071 = vmatprep.subr.mxu0 0.0
    %1072 = vmatpush1.msra.mxu0 0.0
    %1073 = vmatprep.subr.mxu0 0.0
    %1074 = vmatpush1.msra.mxu0 0.0
    %1075 = vmatprep.subr.mxu0 0.0
    %1076 = vmatpush1.msra.mxu0 0.0
    %1077 = vmatprep.subr.mxu0 0.0
    %1078 = vmatpush1.msra.mxu0 0.0
    %1079 = vmatprep.subr.mxu0 0.0
    %1080 = vmatpush1.msra.mxu0 0.0
    %1081 = vmatprep.subr.mxu0 0.0
    %1082 = vmatpush1.msra.mxu0 0.0
    %1083 = vmatprep.subr.mxu0 0.0
    %1084 = vmatpush1.msra.mxu0 0.0
    %1085 = vmatprep.subr.mxu0 0.0
    %1086 = vmatpush1.msra.mxu0 0.0
    %1087 = vmatprep.subr.mxu0 0.0
    %1088 = vmatpush1.msra.mxu0 0.0
    %1089 = vmatprep.subr.mxu0 0.0
    %1090 = vmatpush1.msra.mxu0 0.0
    %1091 = vmatprep.subr.mxu0 0.0
    %1092 = vmatpush1.msra.mxu0 0.0
    %1093 = vmatprep.subr.mxu0 0.0
    %1094 = vmatpush1.msra.mxu0 0.0
    %1095 = vmatprep.subr.mxu0 0.0
    %1096 = vmatpush1.msra.mxu0 0.0
    %1097 = vmatprep.subr.mxu0 0.0
    %1098 = vmatpush1.msra.mxu0 0.0
    %1099 = vmatprep.subr.mxu0 0.0
    %1100 = vmatpush1.msra.mxu0 0.0
    %1101 = vmatprep.subr.mxu0 0.0
    %1102 = vmatpush1.msra.mxu0 0.0
    %1103 = vmatprep.subr.mxu0 0.0
    %1104 = vmatpush1.msra.mxu0 0.0
    %1105 = vmatprep.subr.mxu0 0.0
    %1106 = vmatpush1.msra.mxu0 0.0
    %1107 = vmatprep.subr.mxu0 0.0
    %1108 = vmatpush1.msra.mxu0 0.0
    %1109 = vmatprep.subr.mxu0 0.0
    %1110 = vmatpush1.msra.mxu0 0.0
    %1111 = vmatprep.subr.mxu0 0.0
    %1112 = vmatpush1.msra.mxu0 0.0
    %1113 = vmatprep.subr.mxu0 0.0
    %1114 = vmatpush1.msra.mxu0 0.0
    %1115 = vmatprep.subr.mxu0 0.0
    %1116 = vmatpush1.msra.mxu0 0.0
    %1117 = vmatprep.subr.mxu0 0.0
    %1118 = vmatpush1.msra.mxu0 0.0
    %1119 = vmatprep.subr.mxu0 0.0
    %1120 = vmatpush1.msra.mxu0 0.0
    %1121 = vmatprep.subr.mxu0 0.0
    %1122 = vmatpush1.msra.mxu0 0.0
    %1123 = vmatprep.subr.mxu0 0.0
    %1124 = vmatpush1.msra.mxu0 0.0
    %1125 = vmatprep.subr.mxu0 0.0
    %1126 = vmatpush1.msra.mxu0 0.0
    %1127 = vmatprep.mubr.f32.mxu0 0.0
    %v1128 = vand.u32 %v903, 4294901760
    %v1129 = vsub.f32 %v903, %v1128
    %1130 = vmatmul.mubr.f32.gmra.mrb[0].mxu0 %v1129
    %v1131 = vpop.f32.mrb[0].mxu0
    %v1132 = vadd.f32 %v1058, %v1131
    %v1133 = vpop.f32.mrb[0].mxu0
    %1134 = vdwg.mxu0
    %1135 = vmatprep.subr.mxu0 0.0
    %v1136 = vand.u32 %v907, 4294901760
    %1137 = vmatpush1.msra.mxu0 %v1136
    %1138 = vmatprep.subr.mxu0 0.0
    %1139 = vmatpush1.msra.mxu0 0.0
    %1140 = vmatprep.subr.mxu0 0.0
    %1141 = vmatpush1.msra.mxu0 0.0
    %1142 = vmatprep.subr.mxu0 0.0
    %1143 = vmatpush1.msra.mxu0 0.0
    %1144 = vmatprep.subr.mxu0 0.0
    %1145 = vmatpush1.msra.mxu0 0.0
    %1146 = vmatprep.subr.mxu0 0.0
    %1147 = vmatpush1.msra.mxu0 0.0
    %1148 = vmatprep.subr.mxu0 0.0
    %1149 = vmatpush1.msra.mxu0 0.0
    %1150 = vmatprep.subr.mxu0 0.0
    %1151 = vmatpush1.msra.mxu0 0.0
    %1152 = vmatprep.subr.mxu0 0.0
    %1153 = vmatpush1.msra.mxu0 0.0
    %1154 = vmatprep.subr.mxu0 0.0
    %1155 = vmatpush1.msra.mxu0 0.0
    %1156 = vmatprep.subr.mxu0 0.0
    %1157 = vmatpush1.msra.mxu0 0.0
    %1158 = vmatprep.subr.mxu0 0.0
    %1159 = vmatpush1.msra.mxu0 0.0
    %1160 = vmatprep.subr.mxu0 0.0
    %1161 = vmatpush1.msra.mxu0 0.0
    %1162 = vmatprep.subr.mxu0 0.0
    %1163 = vmatpush1.msra.mxu0 0.0
    %1164 = vmatprep.subr.mxu0 0.0
    %1165 = vmatpush1.msra.mxu0 0.0
    %1166 = vmatprep.subr.mxu0 0.0
    %1167 = vmatpush1.msra.mxu0 0.0
    %1168 = vmatprep.subr.mxu0 0.0
    %1169 = vmatpush1.msra.mxu0 0.0
    %1170 = vmatprep.subr.mxu0 0.0
    %1171 = vmatpush1.msra.mxu0 0.0
    %1172 = vmatprep.subr.mxu0 0.0
    %1173 = vmatpush1.msra.mxu0 0.0
    %1174 = vmatprep.subr.mxu0 0.0
    %1175 = vmatpush1.msra.mxu0 0.0
    %1176 = vmatprep.subr.mxu0 0.0
    %1177 = vmatpush1.msra.mxu0 0.0
    %1178 = vmatprep.subr.mxu0 0.0
    %1179 = vmatpush1.msra.mxu0 0.0
    %1180 = vmatprep.subr.mxu0 0.0
    %1181 = vmatpush1.msra.mxu0 0.0
    %1182 = vmatprep.subr.mxu0 0.0
    %1183 = vmatpush1.msra.mxu0 0.0
    %1184 = vmatprep.subr.mxu0 0.0
    %1185 = vmatpush1.msra.mxu0 0.0
    %1186 = vmatprep.subr.mxu0 0.0
    %1187 = vmatpush1.msra.mxu0 0.0
    %1188 = vmatprep.subr.mxu0 0.0
    %1189 = vmatpush1.msra.mxu0 0.0
    %1190 = vmatprep.subr.mxu0 0.0
    %1191 = vmatpush1.msra.mxu0 0.0
    %1192 = vmatprep.subr.mxu0 0.0
    %1193 = vmatpush1.msra.mxu0 0.0
    %1194 = vmatprep.subr.mxu0 0.0
    %1195 = vmatpush1.msra.mxu0 0.0
    %1196 = vmatprep.subr.mxu0 0.0
    %1197 = vmatpush1.msra.mxu0 0.0
    %1198 = vmatprep.subr.mxu0 0.0
    %1199 = vmatpush1.msra.mxu0 0.0
    %1200 = vmatprep.mubr.f32.mxu0 0.0
    %v1201 = vand.u32 %v903, 4294901760
    %v1202 = vsub.f32 %v903, %v1201
    %v1203 = vand.u32 %v1202, 4294901760
    %1204 = vmatmul.mubr.f32.gmra.mrb[0].mxu0 %v1203
    %v1205 = vpop.f32.mrb[0].mxu0
    %v1206 = vadd.f32 %v1132, %v1205
    %v1207 = vpop.f32.mrb[0].mxu0
    %1208 = vdwg.mxu0
    %1209 = vmatprep.subr.mxu0 0.0
    %v1210 = vand.u32 %v907, 4294901760
    %v1211 = vsub.f32 %v907, %v1210
    %v1212 = vand.u32 %v1211, 4294901760
    %1213 = vmatpush1.msra.mxu0 %v1212
    %1214 = vmatprep.subr.mxu0 0.0
    %1215 = vmatpush1.msra.mxu0 0.0
    %1216 = vmatprep.subr.mxu0 0.0
    %1217 = vmatpush1.msra.mxu0 0.0
    %1218 = vmatprep.subr.mxu0 0.0
    %1219 = vmatpush1.msra.mxu0 0.0
    %1220 = vmatprep.subr.mxu0 0.0
    %1221 = vmatpush1.msra.mxu0 0.0
    %1222 = vmatprep.subr.mxu0 0.0
    %1223 = vmatpush1.msra.mxu0 0.0
    %1224 = vmatprep.subr.mxu0 0.0
    %1225 = vmatpush1.msra.mxu0 0.0
    %1226 = vmatprep.subr.mxu0 0.0
    %1227 = vmatpush1.msra.mxu0 0.0
    %1228 = vmatprep.subr.mxu0 0.0
    %1229 = vmatpush1.msra.mxu0 0.0
    %1230 = vmatprep.subr.mxu0 0.0
    %1231 = vmatpush1.msra.mxu0 0.0
    %1232 = vmatprep.subr.mxu0 0.0
    %1233 = vmatpush1.msra.mxu0 0.0
    %1234 = vmatprep.subr.mxu0 0.0
    %1235 = vmatpush1.msra.mxu0 0.0
    %1236 = vmatprep.subr.mxu0 0.0
    %1237 = vmatpush1.msra.mxu0 0.0
    %1238 = vmatprep.subr.mxu0 0.0
    %1239 = vmatpush1.msra.mxu0 0.0
    %1240 = vmatprep.subr.mxu0 0.0
    %1241 = vmatpush1.msra.mxu0 0.0
    %1242 = vmatprep.subr.mxu0 0.0
    %1243 = vmatpush1.msra.mxu0 0.0
    %1244 = vmatprep.subr.mxu0 0.0
    %1245 = vmatpush1.msra.mxu0 0.0
    %1246 = vmatprep.subr.mxu0 0.0
    %1247 = vmatpush1.msra.mxu0 0.0
    %1248 = vmatprep.subr.mxu0 0.0
    %1249 = vmatpush1.msra.mxu0 0.0
    %1250 = vmatprep.subr.mxu0 0.0
    %1251 = vmatpush1.msra.mxu0 0.0
    %1252 = vmatprep.subr.mxu0 0.0
    %1253 = vmatpush1.msra.mxu0 0.0
    %1254 = vmatprep.subr.mxu0 0.0
    %1255 = vmatpush1.msra.mxu0 0.0
    %1256 = vmatprep.subr.mxu0 0.0
    %1257 = vmatpush1.msra.mxu0 0.0
    %1258 = vmatprep.subr.mxu0 0.0
    %1259 = vmatpush1.msra.mxu0 0.0
    %1260 = vmatprep.subr.mxu0 0.0
    %1261 = vmatpush1.msra.mxu0 0.0
    %1262 = vmatprep.subr.mxu0 0.0
    %1263 = vmatpush1.msra.mxu0 0.0
    %1264 = vmatprep.subr.mxu0 0.0
    %1265 = vmatpush1.msra.mxu0 0.0
    %1266 = vmatprep.subr.mxu0 0.0
    %1267 = vmatpush1.msra.mxu0 0.0
    %1268 = vmatprep.subr.mxu0 0.0
    %1269 = vmatpush1.msra.mxu0 0.0
    %1270 = vmatprep.subr.mxu0 0.0
    %1271 = vmatpush1.msra.mxu0 0.0
    %1272 = vmatprep.subr.mxu0 0.0
    %1273 = vmatpush1.msra.mxu0 0.0
    %1274 = vmatprep.subr.mxu0 0.0
    %1275 = vmatpush1.msra.mxu0 0.0
    %1276 = vmatprep.mubr.f32.mxu0 0.0
    %v1277 = vand.u32 %v903, 4294901760
    %1278 = vmatmul.mubr.f32.gmra.mrb[0].mxu0 %v1277
    %v1279 = vpop.f32.mrb[0].mxu0
    %v1280 = vadd.f32 %v1206, %v1279
    %v1281 = vpop.f32.mrb[0].mxu0
    %1282 = vdwg.mxu0
    %1283 = vmatprep.subr.mxu0 0.0
    %v1284 = vand.u32 %v907, 4294901760
    %1285 = vmatpush1.msra.mxu0 %v1284
    %1286 = vmatprep.subr.mxu0 0.0
    %1287 = vmatpush1.msra.mxu0 0.0
    %1288 = vmatprep.subr.mxu0 0.0
    %1289 = vmatpush1.msra.mxu0 0.0
    %1290 = vmatprep.subr.mxu0 0.0
    %1291 = vmatpush1.msra.mxu0 0.0
    %1292 = vmatprep.subr.mxu0 0.0
    %1293 = vmatpush1.msra.mxu0 0.0
    %1294 = vmatprep.subr.mxu0 0.0
    %1295 = vmatpush1.msra.mxu0 0.0
    %1296 = vmatprep.subr.mxu0 0.0
    %1297 = vmatpush1.msra.mxu0 0.0
    %1298 = vmatprep.subr.mxu0 0.0
    %1299 = vmatpush1.msra.mxu0 0.0
    %1300 = vmatprep.subr.mxu0 0.0
    %1301 = vmatpush1.msra.mxu0 0.0
    %1302 = vmatprep.subr.mxu0 0.0
    %1303 = vmatpush1.msra.mxu0 0.0
    %1304 = vmatprep.subr.mxu0 0.0
    %1305 = vmatpush1.msra.mxu0 0.0
    %1306 = vmatprep.subr.mxu0 0.0
    %1307 = vmatpush1.msra.mxu0 0.0
    %1308 = vmatprep.subr.mxu0 0.0
    %1309 = vmatpush1.msra.mxu0 0.0
    %1310 = vmatprep.subr.mxu0 0.0
    %1311 = vmatpush1.msra.mxu0 0.0
    %1312 = vmatprep.subr.mxu0 0.0
    %1313 = vmatpush1.msra.mxu0 0.0
    %1314 = vmatprep.subr.mxu0 0.0
    %1315 = vmatpush1.msra.mxu0 0.0
    %1316 = vmatprep.subr.mxu0 0.0
    %1317 = vmatpush1.msra.mxu0 0.0
    %1318 = vmatprep.subr.mxu0 0.0
    %1319 = vmatpush1.msra.mxu0 0.0
    %1320 = vmatprep.subr.mxu0 0.0
    %1321 = vmatpush1.msra.mxu0 0.0
    %1322 = vmatprep.subr.mxu0 0.0
    %1323 = vmatpush1.msra.mxu0 0.0
    %1324 = vmatprep.subr.mxu0 0.0
    %1325 = vmatpush1.msra.mxu0 0.0
    %1326 = vmatprep.subr.mxu0 0.0
    %1327 = vmatpush1.msra.mxu0 0.0
    %1328 = vmatprep.subr.mxu0 0.0
    %1329 = vmatpush1.msra.mxu0 0.0
    %1330 = vmatprep.subr.mxu0 0.0
    %1331 = vmatpush1.msra.mxu0 0.0
    %1332 = vmatprep.subr.mxu0 0.0
    %1333 = vmatpush1.msra.mxu0 0.0
    %1334 = vmatprep.subr.mxu0 0.0
    %1335 = vmatpush1.msra.mxu0 0.0
    %1336 = vmatprep.subr.mxu0 0.0
    %1337 = vmatpush1.msra.mxu0 0.0
    %1338 = vmatprep.subr.mxu0 0.0
    %1339 = vmatpush1.msra.mxu0 0.0
    %1340 = vmatprep.subr.mxu0 0.0
    %1341 = vmatpush1.msra.mxu0 0.0
    %1342 = vmatprep.subr.mxu0 0.0
    %1343 = vmatpush1.msra.mxu0 0.0
    %1344 = vmatprep.subr.mxu0 0.0
    %1345 = vmatpush1.msra.mxu0 0.0
    %1346 = vmatprep.subr.mxu0 0.0
    %1347 = vmatpush1.msra.mxu0 0.0
    %1348 = vmatprep.mubr.f32.mxu0 0.0
    %v1349 = vand.u32 %v903, 4294901760
    %1350 = vmatmul.mubr.f32.gmra.mrb[0].mxu0 %v1349
    %v1351 = vpop.f32.mrb[0].mxu0
    %v1352 = vadd.f32 %v1280, %v1351
    %v1353 = vpop.f32.mrb[0].mxu0
    %1354 = vdwg.mxu0
    %v1355 = vmax.f32 %v1352, 0.0
    %v1356 = vld [vmem:[%s3] sm:$0x3]
    %v1358 = vsel %vm901, %v1355, 0
    %v1361 = vsel %vm905, %v1356, 0
    %1363 = vmatprep.subr.mxu0 0.0
    %v1364 = vand.u32 %v1361, 4294901760
    %1365 = vmatpush1.msra.mxu0 %v1364
    %1366 = vmatprep.subr.mxu0 0.0
    %1367 = vmatpush1.msra.mxu0 0.0
    %1368 = vmatprep.subr.mxu0 0.0
    %1369 = vmatpush1.msra.mxu0 0.0
    %1370 = vmatprep.subr.mxu0 0.0
    %1371 = vmatpush1.msra.mxu0 0.0
    %1372 = vmatprep.subr.mxu0 0.0
    %1373 = vmatpush1.msra.mxu0 0.0
    %1374 = vmatprep.subr.mxu0 0.0
    %1375 = vmatpush1.msra.mxu0 0.0
    %1376 = vmatprep.subr.mxu0 0.0
    %1377 = vmatpush1.msra.mxu0 0.0
    %1378 = vmatprep.subr.mxu0 0.0
    %1379 = vmatpush1.msra.mxu0 0.0
    %1380 = vmatprep.subr.mxu0 0.0
    %1381 = vmatpush1.msra.mxu0 0.0
    %1382 = vmatprep.subr.mxu0 0.0
    %1383 = vmatpush1.msra.mxu0 0.0
    %1384 = vmatprep.subr.mxu0 0.0
    %1385 = vmatpush1.msra.mxu0 0.0
    %1386 = vmatprep.subr.mxu0 0.0
    %1387 = vmatpush1.msra.mxu0 0.0
    %1388 = vmatprep.subr.mxu0 0.0
    %1389 = vmatpush1.msra.mxu0 0.0
    %1390 = vmatprep.subr.mxu0 0.0
    %1391 = vmatpush1.msra.mxu0 0.0
    %1392 = vmatprep.subr.mxu0 0.0
    %1393 = vmatpush1.msra.mxu0 0.0
    %1394 = vmatprep.subr.mxu0 0.0
    %1395 = vmatpush1.msra.mxu0 0.0
    %1396 = vmatprep.subr.mxu0 0.0
    %1397 = vmatpush1.msra.mxu0 0.0
    %1398 = vmatprep.subr.mxu0 0.0
    %1399 = vmatpush1.msra.mxu0 0.0
    %1400 = vmatprep.subr.mxu0 0.0
    %1401 = vmatpush1.msra.mxu0 0.0
    %1402 = vmatprep.subr.mxu0 0.0
    %1403 = vmatpush1.msra.mxu0 0.0
    %1404 = vmatprep.subr.mxu0 0.0
    %1405 = vmatpush1.msra.mxu0 0.0
    %1406 = vmatprep.subr.mxu0 0.0
    %1407 = vmatpush1.msra.mxu0 0.0
    %1408 = vmatprep.subr.mxu0 0.0
    %1409 = vmatpush1.msra.mxu0 0.0
    %1410 = vmatprep.subr.mxu0 0.0
    %1411 = vmatpush1.msra.mxu0 0.0
    %1412 = vmatprep.subr.mxu0 0.0
    %1413 = vmatpush1.msra.mxu0 0.0
    %1414 = vmatprep.subr.mxu0 0.0
    %1415 = vmatpush1.msra.mxu0 0.0
    %1416 = vmatprep.subr.mxu0 0.0
    %1417 = vmatpush1.msra.mxu0 0.0
    %1418 = vmatprep.subr.mxu0 0.0
    %1419 = vmatpush1.msra.mxu0 0.0
    %1420 = vmatprep.subr.mxu0 0.0
    %1421 = vmatpush1.msra.mxu0 0.0
    %1422 = vmatprep.subr.mxu0 0.0
    %1423 = vmatpush1.msra.mxu0 0.0
    %1424 = vmatprep.subr.mxu0 0.0
    %1425 = vmatpush1.msra.mxu0 0.0
    %1426 = vmatprep.subr.mxu0 0.0
    %1427 = vmatpush1.msra.mxu0 0.0
    %1428 = vmatprep.mubr.f32.mxu0 0.0
    %v1429 = vand.u32 %v1358, 4294901760
    %v1430 = vsub.f32 %v1358, %v1429
    %v1431 = vand.u32 %v1430, 4294901760
    %v1432 = vsub.f32 %v1430, %v1431
    %v1433 = vand.u32 %v1432, 4294901760
    %1434 = vmatmul.mubr.f32.gmra.mrb[0].mxu0 %v1433
    %v1435 = vpop.f32.mrb[0].mxu0
    %v1436 = vadd.f32 0.0, %v1435
    %v1437 = vpop.f32.mrb[0].mxu0
    %1438 = vdwg.mxu0
    %1439 = vmatprep.subr.mxu0 0.0
    %v1440 = vand.u32 %v1361, 4294901760
    %v1441 = vsub.f32 %v1361, %v1440
    %v1442 = vand.u32 %v1441, 4294901760
    %v1443 = vsub.f32 %v1441, %v1442
    %v1444 = vand.u32 %v1443, 4294901760
    %1445 = vmatpush1.msra.mxu0 %v1444
    %1446 = vmatprep.subr.mxu0 0.0
    %1447 = vmatpush1.msra.mxu0 0.0
    %1448 = vmatprep.subr.mxu0 0.0
    %1449 = vmatpush1.msra.mxu0 0.0
    %1450 = vmatprep.subr.mxu0 0.0
    %1451 = vmatpush1.msra.mxu0 0.0
    %1452 = vmatprep.subr.mxu0 0.0
    %1453 = vmatpush1.msra.mxu0 0.0
    %1454 = vmatprep.subr.mxu0 0.0
    %1455 = vmatpush1.msra.mxu0 0.0
    %1456 = vmatprep.subr.mxu0 0.0
    %1457 = vmatpush1.msra.mxu0 0.0
    %1458 = vmatprep.subr.mxu0 0.0
    %1459 = vmatpush1.msra.mxu0 0.0
    %1460 = vmatprep.subr.mxu0 0.0
    %1461 = vmatpush1.msra.mxu0 0.0
    %1462 = vmatprep.subr.mxu0 0.0
    %1463 = vmatpush1.msra.mxu0 0.0
    %1464 = vmatprep.subr.mxu0 0.0
    %1465 = vmatpush1.msra.mxu0 0.0
    %1466 = vmatprep.subr.mxu0 0.0
    %1467 = vmatpush1.msra.mxu0 0.0
    %1468 = vmatprep.subr.mxu0 0.0
    %1469 = vmatpush1.msra.mxu0 0.0
    %1470 = vmatprep.subr.mxu0 0.0
    %1471 = vmatpush1.msra.mxu0 0.0
    %1472 = vmatprep.subr.mxu0 0.0
    %1473 = vmatpush1.msra.mxu0 0.0
    %1474 = vmatprep.subr.mxu0 0.0
    %1475 = vmatpush1.msra.mxu0 0.0
    %1476 = vmatprep.subr.mxu0 0.0
    %1477 = vmatpush1.msra.mxu0 0.0
    %1478 = vmatprep.subr.mxu0 0.0
    %1479 = vmatpush1.msra.mxu0 0.0
    %1480 = vmatprep.subr.mxu0 0.0
    %1481 = vmatpush1.msra.mxu0 0.0
    %1482 = vmatprep.subr.mxu0 0.0
    %1483 = vmatpush1.msra.mxu0 0.0
    %1484 = vmatprep.subr.mxu0 0.0
    %1485 = vmatpush1.msra.mxu0 0.0
    %1486 = vmatprep.subr.mxu0 0.0
    %1487 = vmatpush1.msra.mxu0 0.0
    %1488 = vmatprep.subr.mxu0 0.0
    %1489 = vmatpush1.msra.mxu0 0.0
    %1490 = vmatprep.subr.mxu0 0.0
    %1491 = vmatpush1.msra.mxu0 0.0
    %1492 = vmatprep.subr.mxu0 0.0
    %1493 = vmatpush1.msra.mxu0 0.0
    %1494 = vmatprep.subr.mxu0 0.0
    %1495 = vmatpush1.msra.mxu0 0.0
    %1496 = vmatprep.subr.mxu0 0.0
    %1497 = vmatpush1.msra.mxu0 0.0
    %1498 = vmatprep.subr.mxu0 0.0
    %1499 = vmatpush1.msra.mxu0 0.0
    %1500 = vmatprep.subr.mxu0 0.0
    %1501 = vmatpush1.msra.mxu0 0.0
    %1502 = vmatprep.subr.mxu0 0.0
    %1503 = vmatpush1.msra.mxu0 0.0
    %1504 = vmatprep.subr.mxu0 0.0
    %1505 = vmatpush1.msra.mxu0 0.0
    %1506 = vmatprep.subr.mxu0 0.0
    %1507 = vmatpush1.msra.mxu0 0.0
    %1508 = vmatprep.mubr.f32.mxu0 0.0
    %v1509 = vand.u32 %v1358, 4294901760
    %1510 = vmatmul.mubr.f32.gmra.mrb[0].mxu0 %v1509
    %v1511 = vpop.f32.mrb[0].mxu0
    %v1512 = vadd.f32 %v1436, %v1511
    %v1513 = vpop.f32.mrb[0].mxu0
    %1514 = vdwg.mxu0
    %1515 = vmatprep.subr.mxu0 0.0
    %v1516 = vand.u32 %v1361, 4294901760
    %v1517 = vsub.f32 %v1361, %v1516
    %1518 = vmatpush1.msra.mxu0 %v1517
    %1519 = vmatprep.subr.mxu0 0.0
    %1520 = vmatpush1.msra.mxu0 0.0
    %1521 = vmatprep.subr.mxu0 0.0
    %1522 = vmatpush1.msra.mxu0 0.0
    %1523 = vmatprep.subr.mxu0 0.0
    %1524 = vmatpush1.msra.mxu0 0.0
    %1525 = vmatprep.subr.mxu0 0.0
    %1526 = vmatpush1.msra.mxu0 0.0
    %1527 = vmatprep.subr.mxu0 0.0
    %1528 = vmatpush1.msra.mxu0 0.0
    %1529 = vmatprep.subr.mxu0 0.0
    %1530 = vmatpush1.msra.mxu0 0.0
    %1531 = vmatprep.subr.mxu0 0.0
    %1532 = vmatpush1.msra.mxu0 0.0
    %1533 = vmatprep.subr.mxu0 0.0
    %1534 = vmatpush1.msra.mxu0 0.0
    %1535 = vmatprep.subr.mxu0 0.0
    %1536 = vmatpush1.msra.mxu0 0.0
    %1537 = vmatprep.subr.mxu0 0.0
    %1538 = vmatpush1.msra.mxu0 0.0
    %1539 = vmatprep.subr.mxu0 0.0
    %1540 = vmatpush1.msra.mxu0 0.0
    %1541 = vmatprep.subr.mxu0 0.0
    %1542 = vmatpush1.msra.mxu0 0.0
    %1543 = vmatprep.subr.mxu0 0.0
    %1544 = vmatpush1.msra.mxu0 0.0
    %1545 = vmatprep.subr.mxu0 0.0
    %1546 = vmatpush1.msra.mxu0 0.0
    %1547 = vmatprep.subr.mxu0 0.0
    %1548 = vmatpush1.msra.mxu0 0.0
    %1549 = vmatprep.subr.mxu0 0.0
    %1550 = vmatpush1.msra.mxu0 0.0
    %1551 = vmatprep.subr.mxu0 0.0
    %1552 = vmatpush1.msra.mxu0 0.0
    %1553 = vmatprep.subr.mxu0 0.0
    %1554 = vmatpush1.msra.mxu0 0.0
    %1555 = vmatprep.subr.mxu0 0.0
    %1556 = vmatpush1.msra.mxu0 0.0
    %1557 = vmatprep.subr.mxu0 0.0
    %1558 = vmatpush1.msra.mxu0 0.0
    %1559 = vmatprep.subr.mxu0 0.0
    %1560 = vmatpush1.msra.mxu0 0.0
    %1561 = vmatprep.subr.mxu0 0.0
    %1562 = vmatpush1.msra.mxu0 0.0
    %1563 = vmatprep.subr.mxu0 0.0
    %1564 = vmatpush1.msra.mxu0 0.0
    %1565 = vmatprep.subr.mxu0 0.0
    %1566 = vmatpush1.msra.mxu0 0.0
    %1567 = vmatprep.subr.mxu0 0.0
    %1568 = vmatpush1.msra.mxu0 0.0
    %1569 = vmatprep.subr.mxu0 0.0
    %1570 = vmatpush1.msra.mxu0 0.0
    %1571 = vmatprep.subr.mxu0 0.0
    %1572 = vmatpush1.msra.mxu0 0.0
    %1573 = vmatprep.subr.mxu0 0.0
    %1574 = vmatpush1.msra.mxu0 0.0
    %1575 = vmatprep.subr.mxu0 0.0
    %1576 = vmatpush1.msra.mxu0 0.0
    %1577 = vmatprep.subr.mxu0 0.0
    %1578 = vmatpush1.msra.mxu0 0.0
    %1579 = vmatprep.subr.mxu0 0.0
    %1580 = vmatpush1.msra.mxu0 0.0
    %1581 = vmatprep.mubr.f32.mxu0 0.0
    %v1582 = vand.u32 %v1358, 4294901760
    %v1583 = vsub.f32 %v1358, %v1582
    %1584 = vmatmul.mubr.f32.gmra.mrb[0].mxu0 %v1583
    %v1585 = vpop.f32.mrb[0].mxu0
    %v1586 = vadd.f32 %v1512, %v1585
    %v1587 = vpop.f32.mrb[0].mxu0
    %1588 = vdwg.mxu0
    %1589 = vmatprep.subr.mxu0 0.0
    %v1590 = vand.u32 %v1361, 4294901760
    %1591 = vmatpush1.msra.mxu0 %v1590
    %1592 = vmatprep.subr.mxu0 0.0
    %1593 = vmatpush1.msra.mxu0 0.0
    %1594 = vmatprep.subr.mxu0 0.0
    %1595 = vmatpush1.msra.mxu0 0.0
    %1596 = vmatprep.subr.mxu0 0.0
    %1597 = vmatpush1.msra.mxu0 0.0
    %1598 = vmatprep.subr.mxu0 0.0
    %1599 = vmatpush1.msra.mxu0 0.0
    %1600 = vmatprep.subr.mxu0 0.0
    %1601 = vmatpush1.msra.mxu0 0.0
    %1602 = vmatprep.subr.mxu0 0.0
    %1603 = vmatpush1.msra.mxu0 0.0
    %1604 = vmatprep.subr.mxu0 0.0
    %1605 = vmatpush1.msra.mxu0 0.0
    %1606 = vmatprep.subr.mxu0 0.0
    %1607 = vmatpush1.msra.mxu0 0.0
    %1608 = vmatprep.subr.mxu0 0.0
    %1609 = vmatpush1.msra.mxu0 0.0
    %1610 = vmatprep.subr.mxu0 0.0
    %1611 = vmatpush1.msra.mxu0 0.0
    %1612 = vmatprep.subr.mxu0 0.0
    %1613 = vmatpush1.msra.mxu0 0.0
    %1614 = vmatprep.subr.mxu0 0.0
    %1615 = vmatpush1.msra.mxu0 0.0
    %1616 = vmatprep.subr.mxu0 0.0
    %1617 = vmatpush1.msra.mxu0 0.0
    %1618 = vmatprep.subr.mxu0 0.0
    %1619 = vmatpush1.msra.mxu0 0.0
    %1620 = vmatprep.subr.mxu0 0.0
    %1621 = vmatpush1.msra.mxu0 0.0
    %1622 = vmatprep.subr.mxu0 0.0
    %1623 = vmatpush1.msra.mxu0 0.0
    %1624 = vmatprep.subr.mxu0 0.0
    %1625 = vmatpush1.msra.mxu0 0.0
    %1626 = vmatprep.subr.mxu0 0.0
    %1627 = vmatpush1.msra.mxu0 0.0
    %1628 = vmatprep.subr.mxu0 0.0
    %1629 = vmatpush1.msra.mxu0 0.0
    %1630 = vmatprep.subr.mxu0 0.0
    %1631 = vmatpush1.msra.mxu0 0.0
    %1632 = vmatprep.subr.mxu0 0.0
    %1633 = vmatpush1.msra.mxu0 0.0
    %1634 = vmatprep.subr.mxu0 0.0
    %1635 = vmatpush1.msra.mxu0 0.0
    %1636 = vmatprep.subr.mxu0 0.0
    %1637 = vmatpush1.msra.mxu0 0.0
    %1638 = vmatprep.subr.mxu0 0.0
    %1639 = vmatpush1.msra.mxu0 0.0
    %1640 = vmatprep.subr.mxu0 0.0
    %1641 = vmatpush1.msra.mxu0 0.0
    %1642 = vmatprep.subr.mxu0 0.0
    %1643 = vmatpush1.msra.mxu0 0.0
    %1644 = vmatprep.subr.mxu0 0.0
    %1645 = vmatpush1.msra.mxu0 0.0
    %1646 = vmatprep.subr.mxu0 0.0
    %1647 = vmatpush1.msra.mxu0 0.0
    %1648 = vmatprep.subr.mxu0 0.0
    %1649 = vmatpush1.msra.mxu0 0.0
    %1650 = vmatprep.subr.mxu0 0.0
    %1651 = vmatpush1.msra.mxu0 0.0
    %1652 = vmatprep.subr.mxu0 0.0
    %1653 = vmatpush1.msra.mxu0 0.0
    %1654 = vmatprep.mubr.f32.mxu0 0.0
    %v1655 = vand.u32 %v1358, 4294901760
    %v1656 = vsub.f32 %v1358, %v1655
    %v1657 = vand.u32 %v1656, 4294901760
    %1658 = vmatmul.mubr.f32.gmra.mrb[0].mxu0 %v1657
    %v1659 = vpop.f32.mrb[0].mxu0
    %v1660 = vadd.f32 %v1586, %v1659
    %v1661 = vpop.f32.mrb[0].mxu0
    %1662 = vdwg.mxu0
    %1663 = vmatprep.subr.mxu0 0.0
    %v1664 = vand.u32 %v1361, 4294901760
    %v1665 = vsub.f32 %v1361, %v1664
    %v1666 = vand.u32 %v1665, 4294901760
    %1667 = vmatpush1.msra.mxu0 %v1666
    %1668 = vmatprep.subr.mxu0 0.0
    %1669 = vmatpush1.msra.mxu0 0.0
    %1670 = vmatprep.subr.mxu0 0.0
    %1671 = vmatpush1.msra.mxu0 0.0
    %1672 = vmatprep.subr.mxu0 0.0
    %1673 = vmatpush1.msra.mxu0 0.0
    %1674 = vmatprep.subr.mxu0 0.0
    %1675 = vmatpush1.msra.mxu0 0.0
    %1676 = vmatprep.subr.mxu0 0.0
    %1677 = vmatpush1.msra.mxu0 0.0
    %1678 = vmatprep.subr.mxu0 0.0
    %1679 = vmatpush1.msra.mxu0 0.0
    %1680 = vmatprep.subr.mxu0 0.0
    %1681 = vmatpush1.msra.mxu0 0.0
    %1682 = vmatprep.subr.mxu0 0.0
    %1683 = vmatpush1.msra.mxu0 0.0
    %1684 = vmatprep.subr.mxu0 0.0
    %1685 = vmatpush1.msra.mxu0 0.0
    %1686 = vmatprep.subr.mxu0 0.0
    %1687 = vmatpush1.msra.mxu0 0.0
    %1688 = vmatprep.subr.mxu0 0.0
    %1689 = vmatpush1.msra.mxu0 0.0
    %1690 = vmatprep.subr.mxu0 0.0
    %1691 = vmatpush1.msra.mxu0 0.0
    %1692 = vmatprep.subr.mxu0 0.0
    %1693 = vmatpush1.msra.mxu0 0.0
    %1694 = vmatprep.subr.mxu0 0.0
    %1695 = vmatpush1.msra.mxu0 0.0
    %1696 = vmatprep.subr.mxu0 0.0
    %1697 = vmatpush1.msra.mxu0 0.0
    %1698 = vmatprep.subr.mxu0 0.0
    %1699 = vmatpush1.msra.mxu0 0.0
    %1700 = vmatprep.subr.mxu0 0.0
    %1701 = vmatpush1.msra.mxu0 0.0
    %1702 = vmatprep.subr.mxu0 0.0
    %1703 = vmatpush1.msra.mxu0 0.0
    %1704 = vmatprep.subr.mxu0 0.0
    %1705 = vmatpush1.msra.mxu0 0.0
    %1706 = vmatprep.subr.mxu0 0.0
    %1707 = vmatpush1.msra.mxu0 0.0
    %1708 = vmatprep.subr.mxu0 0.0
    %1709 = vmatpush1.msra.mxu0 0.0
    %1710 = vmatprep.subr.mxu0 0.0
    %1711 = vmatpush1.msra.mxu0 0.0
    %1712 = vmatprep.subr.mxu0 0.0
    %1713 = vmatpush1.msra.mxu0 0.0
    %1714 = vmatprep.subr.mxu0 0.0
    %1715 = vmatpush1.msra.mxu0 0.0
    %1716 = vmatprep.subr.mxu0 0.0
    %1717 = vmatpush1.msra.mxu0 0.0
    %1718 = vmatprep.subr.mxu0 0.0
    %1719 = vmatpush1.msra.mxu0 0.0
    %1720 = vmatprep.subr.mxu0 0.0
    %1721 = vmatpush1.msra.mxu0 0.0
    %1722 = vmatprep.subr.mxu0 0.0
    %1723 = vmatpush1.msra.mxu0 0.0
    %1724 = vmatprep.subr.mxu0 0.0
    %1725 = vmatpush1.msra.mxu0 0.0
    %1726 = vmatprep.subr.mxu0 0.0
    %1727 = vmatpush1.msra.mxu0 0.0
    %1728 = vmatprep.subr.mxu0 0.0
    %1729 = vmatpush1.msra.mxu0 0.0
    %1730 = vmatprep.mubr.f32.mxu0 0.0
    %v1731 = vand.u32 %v1358, 4294901760
    %1732 = vmatmul.mubr.f32.gmra.mrb[0].mxu0 %v1731
    %v1733 = vpop.f32.mrb[0].mxu0
    %v1734 = vadd.f32 %v1660, %v1733
    %v1735 = vpop.f32.mrb[0].mxu0
    %1736 = vdwg.mxu0
    %1737 = vmatprep.subr.mxu0 0.0
    %v1738 = vand.u32 %v1361, 4294901760
    %1739 = vmatpush1.msra.mxu0 %v1738
    %1740 = vmatprep.subr.mxu0 0.0
    %1741 = vmatpush1.msra.mxu0 0.0
    %1742 = vmatprep.subr.mxu0 0.0
    %1743 = vmatpush1.msra.mxu0 0.0
    %1744 = vmatprep.subr.mxu0 0.0
    %1745 = vmatpush1.msra.mxu0 0.0
    %1746 = vmatprep.subr.mxu0 0.0
    %1747 = vmatpush1.msra.mxu0 0.0
    %1748 = vmatprep.subr.mxu0 0.0
    %1749 = vmatpush1.msra.mxu0 0.0
    %1750 = vmatprep.subr.mxu0 0.0
    %1751 = vmatpush1.msra.mxu0 0.0
    %1752 = vmatprep.subr.mxu0 0.0
    %1753 = vmatpush1.msra.mxu0 0.0
    %1754 = vmatprep.subr.mxu0 0.0
    %1755 = vmatpush1.msra.mxu0 0.0
    %1756 = vmatprep.subr.mxu0 0.0
    %1757 = vmatpush1.msra.mxu0 0.0
    %1758 = vmatprep.subr.mxu0 0.0
    %1759 = vmatpush1.msra.mxu0 0.0
    %1760 = vmatprep.subr.mxu0 0.0
    %1761 = vmatpush1.msra.mxu0 0.0
    %1762 = vmatprep.subr.mxu0 0.0
    %1763 = vmatpush1.msra.mxu0 0.0
    %1764 = vmatprep.subr.mxu0 0.0
    %1765 = vmatpush1.msra.mxu0 0.0
    %1766 = vmatprep.subr.mxu0 0.0
    %1767 = vmatpush1.msra.mxu0 0.0
    %1768 = vmatprep.subr.mxu0 0.0
    %1769 = vmatpush1.msra.mxu0 0.0
    %1770 = vmatprep.subr.mxu0 0.0
    %1771 = vmatpush1.msra.mxu0 0.0
    %1772 = vmatprep.subr.mxu0 0.0
    %1773 = vmatpush1.msra.mxu0 0.0
    %1774 = vmatprep.subr.mxu0 0.0
    %1775 = vmatpush1.msra.mxu0 0.0
    %1776 = vmatprep.subr.mxu0 0.0
    %1777 = vmatpush1.msra.mxu0 0.0
    %1778 = vmatprep.subr.mxu0 0.0
    %1779 = vmatpush1.msra.mxu0 0.0
    %1780 = vmatprep.subr.mxu0 0.0
    %1781 = vmatpush1.msra.mxu0 0.0
    %1782 = vmatprep.subr.mxu0 0.0
    %1783 = vmatpush1.msra.mxu0 0.0
    %1784 = vmatprep.subr.mxu0 0.0
    %1785 = vmatpush1.msra.mxu0 0.0
    %1786 = vmatprep.subr.mxu0 0.0
    %1787 = vmatpush1.msra.mxu0 0.0
    %1788 = vmatprep.subr.mxu0 0.0
    %1789 = vmatpush1.msra.mxu0 0.0
    %1790 = vmatprep.subr.mxu0 0.0
    %1791 = vmatpush1.msra.mxu0 0.0
    %1792 = vmatprep.subr.mxu0 0.0
    %1793 = vmatpush1.msra.mxu0 0.0
    %1794 = vmatprep.subr.mxu0 0.0
    %1795 = vmatpush1.msra.mxu0 0.0
    %1796 = vmatprep.subr.mxu0 0.0
    %1797 = vmatpush1.msra.mxu0 0.0
    %1798 = vmatprep.subr.mxu0 0.0
    %1799 = vmatpush1.msra.mxu0 0.0
    %1800 = vmatprep.subr.mxu0 0.0
    %1801 = vmatpush1.msra.mxu0 0.0
    %1802 = vmatprep.mubr.f32.mxu0 0.0
    %v1803 = vand.u32 %v1358, 4294901760
    %1804 = vmatmul.mubr.f32.gmra.mrb[0].mxu0 %v1803
    %v1805 = vpop.f32.mrb[0].mxu0
    %v1806 = vadd.f32 %v1734, %v1805
    %v1807 = vpop.f32.mrb[0].mxu0
    %1808 = vdwg.mxu0
    %v1810 = vrot.slane %v1806, 4
    %v1812 = vadd.f32 %v1806, %v1810
    %v1813 = vxor.u32 %v1812, 2147483648
    %v1814 = vmul.f32 %v1813, 1.442695
    %v1815 = vpow.pop %v1814
    %v1816 = vadd.f32 %v1815, 1.0
    %v1817 = vrcp.pop %v1816
    %v1818 = vmul.f32 1.0, %v1817
    %v1819 = vlaneseq
    %v1820 = vshrl.u32 %v1819, 7
    %v1821 = vsub.s32 0, %v1820
    %v1822 = vrot.slane %v1818, %v1821
    %1824 = vbcast.lane.b32.xlu0 %v1822, 256
    %v1825 = vpop.permute.xlu0 %1824
    %s1827 = sor.u32 256, 8
    %1828 = vbcast.lane.b32.xlu0 %v1822, %s1827
    %v1829 = vpop.permute.xlu0 %1828
    %s1831 = sor.u32 256, 16
    %1832 = vbcast.lane.b32.xlu0 %v1822, %s1831
    %v1833 = vpop.permute.xlu0 %1832
    %s1835 = sor.u32 256, 24
    %1836 = vbcast.lane.b32.xlu0 %v1822, %s1835
    %v1837 = vpop.permute.xlu0 %1836
    %v1838 = vlaneseq
    %v1839 = vshrl.u32 %v1838, 7
    %v1840 = vsub.s32 1, %v1839
    %v1841 = vrot.slane %v1818, %v1840
    %1843 = vbcast.lane.b32.xlu0 %v1841, 256
    %v1844 = vpop.permute.xlu0 %1843
    %s1846 = sor.u32 256, 8
    %1847 = vbcast.lane.b32.xlu0 %v1841, %s1846
    %v1848 = vpop.permute.xlu0 %1847
    %s1850 = sor.u32 256, 16
    %1851 = vbcast.lane.b32.xlu0 %v1841, %s1850
    %v1852 = vpop.permute.xlu0 %1851
    %s1854 = sor.u32 256, 24
    %1855 = vbcast.lane.b32.xlu0 %v1841, %s1854
    %v1856 = vpop.permute.xlu0 %1855
    %v1857 = vlaneseq
    %v1858 = vshrl.u32 %v1857, 7
    %v1859 = vsub.s32 2, %v1858
    %v1860 = vrot.slane %v1818, %v1859
    %1862 = vbcast.lane.b32.xlu0 %v1860, 256
    %v1863 = vpop.permute.xlu0 %1862
    %s1865 = sor.u32 256, 8
    %1866 = vbcast.lane.b32.xlu0 %v1860, %s1865
    %v1867 = vpop.permute.xlu0 %1866
    %s1869 = sor.u32 256, 16
    %1870 = vbcast.lane.b32.xlu0 %v1860, %s1869
    %v1871 = vpop.permute.xlu0 %1870
    %s1873 = sor.u32 256, 24
    %1874 = vbcast.lane.b32.xlu0 %v1860, %s1873
    %v1875 = vpop.permute.xlu0 %1874
    %v1876 = vlaneseq
    %v1877 = vshrl.u32 %v1876, 7
    %v1878 = vsub.s32 3, %v1877
    %v1879 = vrot.slane %v1818, %v1878
    %1881 = vbcast.lane.b32.xlu0 %v1879, 256
    %v1882 = vpop.permute.xlu0 %1881
    %s1884 = sor.u32 256, 8
    %1885 = vbcast.lane.b32.xlu0 %v1879, %s1884
    %v1886 = vpop.permute.xlu0 %1885
    %s1888 = sor.u32 256, 16
    %1889 = vbcast.lane.b32.xlu0 %v1879, %s1888
    %v1890 = vpop.permute.xlu0 %1889
    %s1892 = sor.u32 256, 24
    %1893 = vbcast.lane.b32.xlu0 %v1879, %s1892
    %v1894 = vpop.permute.xlu0 %1893
    %v1895 = vadd.f32 %v1825, 1.0
    %v1896 = vadd.f32 %v1829, 1.0
    %v1897 = vadd.f32 %v1833, 1.0
    %v1898 = vadd.f32 %v1837, 1.0
    %v1899 = vadd.f32 %v1844, 1.0
    %v1900 = vadd.f32 %v1848, 1.0
    %v1901 = vadd.f32 %v1852, 1.0
    %v1902 = vadd.f32 %v1856, 1.0
    %v1903 = vadd.f32 %v1863, 1.0
    %v1904 = vadd.f32 %v1867, 1.0
    %v1905 = vadd.f32 %v1871, 1.0
    %v1906 = vadd.f32 %v1875, 1.0
    %v1907 = vadd.f32 %v1882, 1.0
    %v1908 = vadd.f32 %v1886, 1.0
    %v1909 = vadd.f32 %v1890, 1.0
    %v1910 = vadd.f32 %v1894, 1.0
    %v1911 = vmul.f32 %v53, %v1895
    %v1912 = vmul.f32 %v54, %v1895
    %v1913 = vmul.f32 %v55, %v1896
    %v1914 = vmul.f32 %v56, %v1896
    %v1915 = vmul.f32 %v57, %v1897
    %v1916 = vmul.f32 %v58, %v1897
    %v1917 = vmul.f32 %v59, %v1898
    %v1918 = vmul.f32 %v60, %v1898
    %v1919 = vmul.f32 %v61, %v1899
    %v1920 = vmul.f32 %v62, %v1899
    %v1921 = vmul.f32 %v63, %v1900
    %v1922 = vmul.f32 %v64, %v1900
    %v1923 = vmul.f32 %v65, %v1901
    %v1924 = vmul.f32 %v66, %v1901
    %v1925 = vmul.f32 %v67, %v1902
    %v1926 = vmul.f32 %v68, %v1902
    %v1927 = vmul.f32 %v69, %v1903
    %v1928 = vmul.f32 %v70, %v1903
    %v1929 = vmul.f32 %v71, %v1904
    %v1930 = vmul.f32 %v72, %v1904
    %v1931 = vmul.f32 %v73, %v1905
    %v1932 = vmul.f32 %v74, %v1905
    %v1933 = vmul.f32 %v75, %v1906
    %v1934 = vmul.f32 %v76, %v1906
    %v1935 = vmul.f32 %v77, %v1907
    %v1936 = vmul.f32 %v78, %v1907
    %v1937 = vmul.f32 %v79, %v1908
    %v1938 = vmul.f32 %v80, %v1908
    %v1939 = vmul.f32 %v81, %v1909
    %v1940 = vmul.f32 %v82, %v1909
    %v1941 = vmul.f32 %v83, %v1910
    %v1942 = vmul.f32 %v84, %v1910
    %v1943 = vmax.f32 %v1911, %v1913
    %v1944 = vmax.f32 %v1943, %v1915
    %v1945 = vmax.f32 %v1944, %v1917
    %v1946 = vrot.slane %v1945, 4
    %v1947 = vmax.f32 %v1945, %v1946
    %v1948 = vrot.slane %v1947, 2
    %v1949 = vmax.f32 %v1947, %v1948
    %v1950 = vrot.slane %v1949, 1
    %v1951 = vmax.f32 %v1949, %v1950
    %v1952 = vmax.f32 %v1912, %v1914
    %v1953 = vmax.f32 %v1952, %v1916
    %v1954 = vmax.f32 %v1953, %v1918
    %v1955 = vrot.slane %v1954, 4
    %v1956 = vmax.f32 %v1954, %v1955
    %v1957 = vrot.slane %v1956, 2
    %v1958 = vmax.f32 %v1956, %v1957
    %v1959 = vrot.slane %v1958, 1
    %v1960 = vmax.f32 %v1958, %v1959
    %v1961 = vmax.f32 %v1919, %v1921
    %v1962 = vmax.f32 %v1961, %v1923
    %v1963 = vmax.f32 %v1962, %v1925
    %v1964 = vrot.slane %v1963, 4
    %v1965 = vmax.f32 %v1963, %v1964
    %v1966 = vrot.slane %v1965, 2
    %v1967 = vmax.f32 %v1965, %v1966
    %v1968 = vrot.slane %v1967, 1
    %v1969 = vmax.f32 %v1967, %v1968
    %v1970 = vmax.f32 %v1920, %v1922
    %v1971 = vmax.f32 %v1970, %v1924
    %v1972 = vmax.f32 %v1971, %v1926
    %v1973 = vrot.slane %v1972, 4
    %v1974 = vmax.f32 %v1972, %v1973
    %v1975 = vrot.slane %v1974, 2
    %v1976 = vmax.f32 %v1974, %v1975
    %v1977 = vrot.slane %v1976, 1
    %v1978 = vmax.f32 %v1976, %v1977
    %v1979 = vmax.f32 %v1927, %v1929
    %v1980 = vmax.f32 %v1979, %v1931
    %v1981 = vmax.f32 %v1980, %v1933
    %v1982 = vrot.slane %v1981, 4
    %v1983 = vmax.f32 %v1981, %v1982
    %v1984 = vrot.slane %v1983, 2
    %v1985 = vmax.f32 %v1983, %v1984
    %v1986 = vrot.slane %v1985, 1
    %v1987 = vmax.f32 %v1985, %v1986
    %v1988 = vmax.f32 %v1928, %v1930
    %v1989 = vmax.f32 %v1988, %v1932
    %v1990 = vmax.f32 %v1989, %v1934
    %v1991 = vrot.slane %v1990, 4
    %v1992 = vmax.f32 %v1990, %v1991
    %v1993 = vrot.slane %v1992, 2
    %v1994 = vmax.f32 %v1992, %v1993
    %v1995 = vrot.slane %v1994, 1
    %v1996 = vmax.f32 %v1994, %v1995
    %v1997 = vmax.f32 %v1935, %v1937
    %v1998 = vmax.f32 %v1997, %v1939
    %v1999 = vmax.f32 %v1998, %v1941
    %v2000 = vrot.slane %v1999, 4
    %v2001 = vmax.f32 %v1999, %v2000
    %v2002 = vrot.slane %v2001, 2
    %v2003 = vmax.f32 %v2001, %v2002
    %v2004 = vrot.slane %v2003, 1
    %v2005 = vmax.f32 %v2003, %v2004
    %v2006 = vmax.f32 %v1936, %v1938
    %v2007 = vmax.f32 %v2006, %v1940
    %v2008 = vmax.f32 %v2007, %v1942
    %v2009 = vrot.slane %v2008, 4
    %v2010 = vmax.f32 %v2008, %v2009
    %v2011 = vrot.slane %v2010, 2
    %v2012 = vmax.f32 %v2010, %v2011
    %v2013 = vrot.slane %v2012, 1
    %v2014 = vmax.f32 %v2012, %v2013
    %v2015 = vadd.f32 %v1911, %v1913
    %v2016 = vadd.f32 %v2015, %v1915
    %v2017 = vadd.f32 %v2016, %v1917
    %v2018 = vrot.slane %v2017, 4
    %v2019 = vadd.f32 %v2017, %v2018
    %v2020 = vrot.slane %v2019, 2
    %v2021 = vadd.f32 %v2019, %v2020
    %v2022 = vrot.slane %v2021, 1
    %v2023 = vadd.f32 %v2021, %v2022
    %v2024 = vadd.f32 %v1912, %v1914
    %v2025 = vadd.f32 %v2024, %v1916
    %v2026 = vadd.f32 %v2025, %v1918
    %v2027 = vrot.slane %v2026, 4
    %v2028 = vadd.f32 %v2026, %v2027
    %v2029 = vrot.slane %v2028, 2
    %v2030 = vadd.f32 %v2028, %v2029
    %v2031 = vrot.slane %v2030, 1
    %v2032 = vadd.f32 %v2030, %v2031
    %v2033 = vadd.f32 %v1919, %v1921
    %v2034 = vadd.f32 %v2033, %v1923
    %v2035 = vadd.f32 %v2034, %v1925
    %v2036 = vrot.slane %v2035, 4
    %v2037 = vadd.f32 %v2035, %v2036
    %v2038 = vrot.slane %v2037, 2
    %v2039 = vadd.f32 %v2037, %v2038
    %v2040 = vrot.slane %v2039, 1
    %v2041 = vadd.f32 %v2039, %v2040
    %v2042 = vadd.f32 %v1920, %v1922
    %v2043 = vadd.f32 %v2042, %v1924
    %v2044 = vadd.f32 %v2043, %v1926
    %v2045 = vrot.slane %v2044, 4
    %v2046 = vadd.f32 %v2044, %v2045
    %v2047 = vrot.slane %v2046, 2
    %v2048 = vadd.f32 %v2046, %v2047
    %v2049 = vrot.slane %v2048, 1
    %v2050 = vadd.f32 %v2048, %v2049
    %v2051 = vadd.f32 %v1927, %v1929
    %v2052 = vadd.f32 %v2051, %v1931
    %v2053 = vadd.f32 %v2052, %v1933
    %v2054 = vrot.slane %v2053, 4
    %v2055 = vadd.f32 %v2053, %v2054
    %v2056 = vrot.slane %v2055, 2
    %v2057 = vadd.f32 %v2055, %v2056
    %v2058 = vrot.slane %v2057, 1
    %v2059 = vadd.f32 %v2057, %v2058
    %v2060 = vadd.f32 %v1928, %v1930
    %v2061 = vadd.f32 %v2060, %v1932
    %v2062 = vadd.f32 %v2061, %v1934
    %v2063 = vrot.slane %v2062, 4
    %v2064 = vadd.f32 %v2062, %v2063
    %v2065 = vrot.slane %v2064, 2
    %v2066 = vadd.f32 %v2064, %v2065
    %v2067 = vrot.slane %v2066, 1
    %v2068 = vadd.f32 %v2066, %v2067
    %v2069 = vadd.f32 %v1935, %v1937
    %v2070 = vadd.f32 %v2069, %v1939
    %v2071 = vadd.f32 %v2070, %v1941
    %v2072 = vrot.slane %v2071, 4
    %v2073 = vadd.f32 %v2071, %v2072
    %v2074 = vrot.slane %v2073, 2
    %v2075 = vadd.f32 %v2073, %v2074
    %v2076 = vrot.slane %v2075, 1
    %v2077 = vadd.f32 %v2075, %v2076
    %v2078 = vadd.f32 %v1936, %v1938
    %v2079 = vadd.f32 %v2078, %v1940
    %v2080 = vadd.f32 %v2079, %v1942
    %v2081 = vrot.slane %v2080, 4
    %v2082 = vadd.f32 %v2080, %v2081
    %v2083 = vrot.slane %v2082, 2
    %v2084 = vadd.f32 %v2082, %v2083
    %v2085 = vrot.slane %v2084, 1
    %v2086 = vadd.f32 %v2084, %v2085
    %v2087 = vrcp.pop 32.0
    %v2088 = vmul.f32 %v2023, %v2087
    %v2089 = vmul.f32 %v2032, %v2087
    %v2090 = vmul.f32 %v2041, %v2087
    %v2091 = vmul.f32 %v2050, %v2087
    %v2092 = vmul.f32 %v2059, %v2087
    %v2093 = vmul.f32 %v2068, %v2087
    %v2094 = vmul.f32 %v2077, %v2087
    %v2095 = vmul.f32 %v2086, %v2087
    %v2104 = vsel %vm298, %v1969, %v1951
    %v2105 = vsel %vm300, %v1987, %v2104
    %v2106 = vsel %vm302, %v2005, %v2105
    %v2107 = vsel %vm298, %v1978, %v1960
    %v2108 = vsel %vm300, %v1996, %v2107
    %v2109 = vsel %vm302, %v2014, %v2108
    %v2120 = vsel %vm298, %v2090, %v2088
    %v2121 = vsel %vm300, %v2092, %v2120
    %v2122 = vsel %vm302, %v2094, %v2121
    %v2123 = vsel %vm298, %v2091, %v2089
    %v2124 = vsel %vm300, %v2093, %v2123
    %v2125 = vsel %vm302, %v2095, %v2124
    %v2128 = vld [vmem:[#allocation6] sm:$0xff]
    %v2129 = vld [vmem:[#allocation6 + $0x8] sm:$0xff]
    %v2130 = vld [vmem:[#allocation6 + $0x10] sm:$0xff]
    %v2131 = vld [vmem:[#allocation6 + $0x18] sm:$0xff]
    %v2132 = vld [vmem:[#allocation6 + $0x20] sm:$0xff]
    %v2133 = vld [vmem:[#allocation6 + $0x28] sm:$0xff]
    %v2134 = vld [vmem:[#allocation6 + $0x30] sm:$0xff]
    %v2135 = vld [vmem:[#allocation6 + $0x38] sm:$0xff]
    %v2136 = vld [vmem:[#allocation6 + $0x40] sm:$0xff]
    %v2137 = vld [vmem:[#allocation6 + $0x48] sm:$0xff]
    %v2138 = vld [vmem:[#allocation6 + $0x50] sm:$0xff]
    %v2139 = vld [vmem:[#allocation6 + $0x58] sm:$0xff]
    %v2140 = vld [vmem:[#allocation6 + $0x60] sm:$0xff]
    %v2141 = vld [vmem:[#allocation6 + $0x68] sm:$0xff]
    %v2142 = vld [vmem:[#allocation6 + $0x70] sm:$0xff]
    %v2143 = vld [vmem:[#allocation6 + $0x78] sm:$0xff]
    %v2144 = vld [vmem:[#allocation6 + $0x80] sm:$0xff]
    %v2145 = vld [vmem:[#allocation6 + $0x88] sm:$0xff]
    %v2146 = vld [vmem:[#allocation6 + $0x90] sm:$0xff]
    %v2147 = vld [vmem:[#allocation6 + $0x98] sm:$0xff]
    %v2148 = vld [vmem:[#allocation6 + $0xa0] sm:$0xff]
    %v2149 = vld [vmem:[#allocation6 + $0xa8] sm:$0xff]
    %v2150 = vld [vmem:[#allocation6 + $0xb0] sm:$0xff]
    %v2151 = vld [vmem:[#allocation6 + $0xb8] sm:$0xff]
    %v2152 = vld [vmem:[#allocation6 + $0xc0] sm:$0xff]
    %v2153 = vld [vmem:[#allocation6 + $0xc8] sm:$0xff]
    %v2154 = vld [vmem:[#allocation6 + $0xd0] sm:$0xff]
    %v2155 = vld [vmem:[#allocation6 + $0xd8] sm:$0xff]
    %v2156 = vld [vmem:[#allocation6 + $0xe0] sm:$0xff]
    %v2157 = vld [vmem:[#allocation6 + $0xe8] sm:$0xff]
    %v2158 = vld [vmem:[#allocation6 + $0xf0] sm:$0xff]
    %v2159 = vld [vmem:[#allocation6 + $0xf8] sm:$0xff]
    %v2160 = vld [vmem:[#allocation6 + $0x100] sm:$0xff]
    %v2161 = vld [vmem:[#allocation6 + $0x108] sm:$0xff]
    %v2162 = vld [vmem:[#allocation6 + $0x110] sm:$0xff]
    %v2163 = vld [vmem:[#allocation6 + $0x118] sm:$0xff]
    %v2164 = vld [vmem:[#allocation6 + $0x120] sm:$0xff]
    %v2165 = vld [vmem:[#allocation6 + $0x128] sm:$0xff]
    %v2166 = vld [vmem:[#allocation6 + $0x130] sm:$0xff]
    %v2167 = vld [vmem:[#allocation6 + $0x138] sm:$0xff]
    %v2168 = vld [vmem:[#allocation6 + $0x140] sm:$0xff]
    %v2169 = vld [vmem:[#allocation6 + $0x148] sm:$0xff]
    %v2170 = vld [vmem:[#allocation6 + $0x150] sm:$0xff]
    %v2171 = vld [vmem:[#allocation6 + $0x158] sm:$0xff]
    %v2172 = vld [vmem:[#allocation6 + $0x160] sm:$0xff]
    %v2173 = vld [vmem:[#allocation6 + $0x168] sm:$0xff]
    %v2174 = vld [vmem:[#allocation6 + $0x170] sm:$0xff]
    %v2175 = vld [vmem:[#allocation6 + $0x178] sm:$0xff]
    %v2176 = vld [vmem:[#allocation6 + $0x180] sm:$0xff]
    %v2177 = vld [vmem:[#allocation6 + $0x188] sm:$0xff]
    %v2178 = vld [vmem:[#allocation6 + $0x190] sm:$0xff]
    %v2179 = vld [vmem:[#allocation6 + $0x198] sm:$0xff]
    %v2180 = vld [vmem:[#allocation6 + $0x1a0] sm:$0xff]
    %v2181 = vld [vmem:[#allocation6 + $0x1a8] sm:$0xff]
    %v2182 = vld [vmem:[#allocation6 + $0x1b0] sm:$0xff]
    %v2183 = vld [vmem:[#allocation6 + $0x1b8] sm:$0xff]
    %v2184 = vld [vmem:[#allocation6 + $0x1c0] sm:$0xff]
    %v2185 = vld [vmem:[#allocation6 + $0x1c8] sm:$0xff]
    %v2186 = vld [vmem:[#allocation6 + $0x1d0] sm:$0xff]
    %v2187 = vld [vmem:[#allocation6 + $0x1d8] sm:$0xff]
    %v2188 = vld [vmem:[#allocation6 + $0x1e0] sm:$0xff]
    %v2189 = vld [vmem:[#allocation6 + $0x1e8] sm:$0xff]
    %v2190 = vld [vmem:[#allocation6 + $0x1f0] sm:$0xff]
    %v2191 = vld [vmem:[#allocation6 + $0x1f8] sm:$0xff]
    %v2192 = vld [vmem:[#allocation6 + $0x200] sm:$0xff]
    %v2193 = vld [vmem:[#allocation6 + $0x208] sm:$0xff]
    %v2194 = vld [vmem:[#allocation6 + $0x210] sm:$0xff]
    %v2195 = vld [vmem:[#allocation6 + $0x218] sm:$0xff]
    %v2196 = vld [vmem:[#allocation6 + $0x220] sm:$0xff]
    %v2197 = vld [vmem:[#allocation6 + $0x228] sm:$0xff]
    %v2198 = vld [vmem:[#allocation6 + $0x230] sm:$0xff]
    %v2199 = vld [vmem:[#allocation6 + $0x238] sm:$0xff]
    %v2200 = vld [vmem:[#allocation6 + $0x240] sm:$0xff]
    %v2201 = vld [vmem:[#allocation6 + $0x248] sm:$0xff]
    %v2202 = vld [vmem:[#allocation6 + $0x250] sm:$0xff]
    %v2203 = vld [vmem:[#allocation6 + $0x258] sm:$0xff]
    %v2204 = vld [vmem:[#allocation6 + $0x260] sm:$0xff]
    %v2205 = vld [vmem:[#allocation6 + $0x268] sm:$0xff]
    %v2206 = vld [vmem:[#allocation6 + $0x270] sm:$0xff]
    %v2207 = vld [vmem:[#allocation6 + $0x278] sm:$0xff]
    %v2208 = vld [vmem:[#allocation6 + $0x280] sm:$0xff]
    %v2209 = vld [vmem:[#allocation6 + $0x288] sm:$0xff]
    %v2210 = vld [vmem:[#allocation6 + $0x290] sm:$0xff]
    %v2211 = vld [vmem:[#allocation6 + $0x298] sm:$0xff]
    %v2212 = vld [vmem:[#allocation6 + $0x2a0] sm:$0xff]
    %v2213 = vld [vmem:[#allocation6 + $0x2a8] sm:$0xff]
    %v2214 = vld [vmem:[#allocation6 + $0x2b0] sm:$0xff]
    %v2215 = vld [vmem:[#allocation6 + $0x2b8] sm:$0xff]
    %v2216 = vld [vmem:[#allocation6 + $0x2c0] sm:$0xff]
    %v2217 = vld [vmem:[#allocation6 + $0x2c8] sm:$0xff]
    %v2218 = vld [vmem:[#allocation6 + $0x2d0] sm:$0xff]
    %v2219 = vld [vmem:[#allocation6 + $0x2d8] sm:$0xff]
    %v2220 = vld [vmem:[#allocation6 + $0x2e0] sm:$0xff]
    %v2221 = vld [vmem:[#allocation6 + $0x2e8] sm:$0xff]
    %v2222 = vld [vmem:[#allocation6 + $0x2f0] sm:$0xff]
    %v2223 = vld [vmem:[#allocation6 + $0x2f8] sm:$0xff]
    %v2224 = vld [vmem:[#allocation6 + $0x300] sm:$0xff]
    %v2225 = vld [vmem:[#allocation6 + $0x308] sm:$0xff]
    %v2226 = vld [vmem:[#allocation6 + $0x310] sm:$0xff]
    %v2227 = vld [vmem:[#allocation6 + $0x318] sm:$0xff]
    %v2228 = vld [vmem:[#allocation6 + $0x320] sm:$0xff]
    %v2229 = vld [vmem:[#allocation6 + $0x328] sm:$0xff]
    %v2230 = vld [vmem:[#allocation6 + $0x330] sm:$0xff]
    %v2231 = vld [vmem:[#allocation6 + $0x338] sm:$0xff]
    %v2232 = vld [vmem:[#allocation6 + $0x340] sm:$0xff]
    %v2233 = vld [vmem:[#allocation6 + $0x348] sm:$0xff]
    %v2234 = vld [vmem:[#allocation6 + $0x350] sm:$0xff]
    %v2235 = vld [vmem:[#allocation6 + $0x358] sm:$0xff]
    %v2236 = vld [vmem:[#allocation6 + $0x360] sm:$0xff]
    %v2237 = vld [vmem:[#allocation6 + $0x368] sm:$0xff]
    %v2238 = vld [vmem:[#allocation6 + $0x370] sm:$0xff]
    %v2239 = vld [vmem:[#allocation6 + $0x378] sm:$0xff]
    %v2240 = vld [vmem:[#allocation6 + $0x380] sm:$0xff]
    %v2241 = vld [vmem:[#allocation6 + $0x388] sm:$0xff]
    %v2242 = vld [vmem:[#allocation6 + $0x390] sm:$0xff]
    %v2243 = vld [vmem:[#allocation6 + $0x398] sm:$0xff]
    %v2244 = vld [vmem:[#allocation6 + $0x3a0] sm:$0xff]
    %v2245 = vld [vmem:[#allocation6 + $0x3a8] sm:$0xff]
    %v2246 = vld [vmem:[#allocation6 + $0x3b0] sm:$0xff]
    %v2247 = vld [vmem:[#allocation6 + $0x3b8] sm:$0xff]
    %v2248 = vld [vmem:[#allocation6 + $0x3c0] sm:$0xff]
    %v2249 = vld [vmem:[#allocation6 + $0x3c8] sm:$0xff]
    %v2250 = vld [vmem:[#allocation6 + $0x3d0] sm:$0xff]
    %v2251 = vld [vmem:[#allocation6 + $0x3d8] sm:$0xff]
    %v2252 = vld [vmem:[#allocation6 + $0x3e0] sm:$0xff]
    %v2253 = vld [vmem:[#allocation6 + $0x3e8] sm:$0xff]
    %v2254 = vld [vmem:[#allocation6 + $0x3f0] sm:$0xff]
    %v2255 = vld [vmem:[#allocation6 + $0x3f8] sm:$0xff]
    %s2256 = sld [smem:[#allocation2]]
    %v2257 = vstv %s2256
    %v2258 = vand.u32 %v2129, 4294901760
    %2259 = vmatprep.subr.mxu0 %v2258
    %v2260 = vand.u32 %v2128, 4294901760
    %2261 = vmatpush1.msra.mxu0 %v2260
    %v2262 = vand.u32 %v2131, 4294901760
    %2263 = vmatprep.subr.mxu0 %v2262
    %v2264 = vand.u32 %v2130, 4294901760
    %2265 = vmatpush1.msra.mxu0 %v2264
    %v2266 = vand.u32 %v2133, 4294901760
    %2267 = vmatprep.subr.mxu0 %v2266
    %v2268 = vand.u32 %v2132, 4294901760
    %2269 = vmatpush1.msra.mxu0 %v2268
    %v2270 = vand.u32 %v2135, 4294901760
    %2271 = vmatprep.subr.mxu0 %v2270
    %v2272 = vand.u32 %v2134, 4294901760
    %2273 = vmatpush1.msra.mxu0 %v2272
    %v2274 = vand.u32 %v2137, 4294901760
    %2275 = vmatprep.subr.mxu0 %v2274
    %v2276 = vand.u32 %v2136, 4294901760
    %2277 = vmatpush1.msra.mxu0 %v2276
    %v2278 = vand.u32 %v2139, 4294901760
    %2279 = vmatprep.subr.mxu0 %v2278
    %v2280 = vand.u32 %v2138, 4294901760
    %2281 = vmatpush1.msra.mxu0 %v2280
    %v2282 = vand.u32 %v2141, 4294901760
    %2283 = vmatprep.subr.mxu0 %v2282
    %v2284 = vand.u32 %v2140, 4294901760
    %2285 = vmatpush1.msra.mxu0 %v2284
    %v2286 = vand.u32 %v2143, 4294901760
    %2287 = vmatprep.subr.mxu0 %v2286
    %v2288 = vand.u32 %v2142, 4294901760
    %2289 = vmatpush1.msra.mxu0 %v2288
    %v2290 = vand.u32 %v2145, 4294901760
    %2291 = vmatprep.subr.mxu0 %v2290
    %v2292 = vand.u32 %v2144, 4294901760
    %2293 = vmatpush1.msra.mxu0 %v2292
    %v2294 = vand.u32 %v2147, 4294901760
    %2295 = vmatprep.subr.mxu0 %v2294
    %v2296 = vand.u32 %v2146, 4294901760
    %2297 = vmatpush1.msra.mxu0 %v2296
    %v2298 = vand.u32 %v2149, 4294901760
    %2299 = vmatprep.subr.mxu0 %v2298
    %v2300 = vand.u32 %v2148, 4294901760
    %2301 = vmatpush1.msra.mxu0 %v2300
    %v2302 = vand.u32 %v2151, 4294901760
    %2303 = vmatprep.subr.mxu0 %v2302
    %v2304 = vand.u32 %v2150, 4294901760
    %2305 = vmatpush1.msra.mxu0 %v2304
    %v2306 = vand.u32 %v2153, 4294901760
    %2307 = vmatprep.subr.mxu0 %v2306
    %v2308 = vand.u32 %v2152, 4294901760
    %2309 = vmatpush1.msra.mxu0 %v2308
    %v2310 = vand.u32 %v2155, 4294901760
    %2311 = vmatprep.subr.mxu0 %v2310
    %v2312 = vand.u32 %v2154, 4294901760
    %2313 = vmatpush1.msra.mxu0 %v2312
    %v2314 = vand.u32 %v2157, 4294901760
    %2315 = vmatprep.subr.mxu0 %v2314
    %v2316 = vand.u32 %v2156, 4294901760
    %2317 = vmatpush1.msra.mxu0 %v2316
    %v2318 = vand.u32 %v2159, 4294901760
    %2319 = vmatprep.subr.mxu0 %v2318
    %v2320 = vand.u32 %v2158, 4294901760
    %2321 = vmatpush1.msra.mxu0 %v2320
    %v2322 = vand.u32 %v2161, 4294901760
    %2323 = vmatprep.subr.mxu0 %v2322
    %v2324 = vand.u32 %v2160, 4294901760
    %2325 = vmatpush1.msra.mxu0 %v2324
    %v2326 = vand.u32 %v2163, 4294901760
    %2327 = vmatprep.subr.mxu0 %v2326
    %v2328 = vand.u32 %v2162, 4294901760
    %2329 = vmatpush1.msra.mxu0 %v2328
    %v2330 = vand.u32 %v2165, 4294901760
    %2331 = vmatprep.subr.mxu0 %v2330
    %v2332 = vand.u32 %v2164, 4294901760
    %2333 = vmatpush1.msra.mxu0 %v2332
    %v2334 = vand.u32 %v2167, 4294901760
    %2335 = vmatprep.subr.mxu0 %v2334
    %v2336 = vand.u32 %v2166, 4294901760
    %2337 = vmatpush1.msra.mxu0 %v2336
    %v2338 = vand.u32 %v2169, 4294901760
    %2339 = vmatprep.subr.mxu0 %v2338
    %v2340 = vand.u32 %v2168, 4294901760
    %2341 = vmatpush1.msra.mxu0 %v2340
    %v2342 = vand.u32 %v2171, 4294901760
    %2343 = vmatprep.subr.mxu0 %v2342
    %v2344 = vand.u32 %v2170, 4294901760
    %2345 = vmatpush1.msra.mxu0 %v2344
    %v2346 = vand.u32 %v2173, 4294901760
    %2347 = vmatprep.subr.mxu0 %v2346
    %v2348 = vand.u32 %v2172, 4294901760
    %2349 = vmatpush1.msra.mxu0 %v2348
    %v2350 = vand.u32 %v2175, 4294901760
    %2351 = vmatprep.subr.mxu0 %v2350
    %v2352 = vand.u32 %v2174, 4294901760
    %2353 = vmatpush1.msra.mxu0 %v2352
    %v2354 = vand.u32 %v2177, 4294901760
    %2355 = vmatprep.subr.mxu0 %v2354
    %v2356 = vand.u32 %v2176, 4294901760
    %2357 = vmatpush1.msra.mxu0 %v2356
    %v2358 = vand.u32 %v2179, 4294901760
    %2359 = vmatprep.subr.mxu0 %v2358
    %v2360 = vand.u32 %v2178, 4294901760
    %2361 = vmatpush1.msra.mxu0 %v2360
    %v2362 = vand.u32 %v2181, 4294901760
    %2363 = vmatprep.subr.mxu0 %v2362
    %v2364 = vand.u32 %v2180, 4294901760
    %2365 = vmatpush1.msra.mxu0 %v2364
    %v2366 = vand.u32 %v2183, 4294901760
    %2367 = vmatprep.subr.mxu0 %v2366
    %v2368 = vand.u32 %v2182, 4294901760
    %2369 = vmatpush1.msra.mxu0 %v2368
    %v2370 = vand.u32 %v2185, 4294901760
    %2371 = vmatprep.subr.mxu0 %v2370
    %v2372 = vand.u32 %v2184, 4294901760
    %2373 = vmatpush1.msra.mxu0 %v2372
    %v2374 = vand.u32 %v2187, 4294901760
    %2375 = vmatprep.subr.mxu0 %v2374
    %v2376 = vand.u32 %v2186, 4294901760
    %2377 = vmatpush1.msra.mxu0 %v2376
    %v2378 = vand.u32 %v2189, 4294901760
    %2379 = vmatprep.subr.mxu0 %v2378
    %v2380 = vand.u32 %v2188, 4294901760
    %2381 = vmatpush1.msra.mxu0 %v2380
    %v2382 = vand.u32 %v2191, 4294901760
    %2383 = vmatprep.subr.mxu0 %v2382
    %v2384 = vand.u32 %v2190, 4294901760
    %2385 = vmatpush1.msra.mxu0 %v2384
    %v2386 = vand.u32 %v2109, 4294901760
    %v2387 = vsub.f32 %v2109, %v2386
    %v2388 = vand.u32 %v2387, 4294901760
    %v2389 = vsub.f32 %v2387, %v2388
    %v2390 = vand.u32 %v2389, 4294901760
    %2391 = vmatprep.mubr.f32.mxu0 %v2390
    %v2392 = vand.u32 %v2106, 4294901760
    %v2393 = vsub.f32 %v2106, %v2392
    %v2394 = vand.u32 %v2393, 4294901760
    %v2395 = vsub.f32 %v2393, %v2394
    %v2396 = vand.u32 %v2395, 4294901760
    %2397 = vmatmul.mubr.f32.gmra.mrb[0].mxu0 %v2396
    %v2398 = vpop.f32.mrb[0].mxu0
    %v2399 = vadd.f32 %v2257, %v2398
    %v2400 = vpop.f32.mrb[0].mxu0
    %v2401 = vadd.f32 %v2257, %v2400
    %2402 = vdwg.mxu0
    %v2403 = vand.u32 %v2129, 4294901760
    %v2404 = vsub.f32 %v2129, %v2403
    %v2405 = vand.u32 %v2404, 4294901760
    %v2406 = vsub.f32 %v2404, %v2405
    %v2407 = vand.u32 %v2406, 4294901760
    %2408 = vmatprep.subr.mxu0 %v2407
    %v2409 = vand.u32 %v2128, 4294901760
    %v2410 = vsub.f32 %v2128, %v2409
    %v2411 = vand.u32 %v2410, 4294901760
    %v2412 = vsub.f32 %v2410, %v2411
    %v2413 = vand.u32 %v2412, 4294901760
    %2414 = vmatpush1.msra.mxu0 %v2413
    %v2415 = vand.u32 %v2131, 4294901760
    %v2416 = vsub.f32 %v2131, %v2415
    %v2417 = vand.u32 %v2416, 4294901760
    %v2418 = vsub.f32 %v2416, %v2417
    %v2419 = vand.u32 %v2418, 4294901760
    %2420 = vmatprep.subr.mxu0 %v2419
    %v2421 = vand.u32 %v2130, 4294901760
    %v2422 = vsub.f32 %v2130, %v2421
    %v2423 = vand.u32 %v2422, 4294901760
    %v2424 = vsub.f32 %v2422, %v2423
    %v2425 = vand.u32 %v2424, 4294901760
    %2426 = vmatpush1.msra.mxu0 %v2425
    %v2427 = vand.u32 %v2133, 4294901760
    %v2428 = vsub.f32 %v2133, %v2427
    %v2429 = vand.u32 %v2428, 4294901760
    %v2430 = vsub.f32 %v2428, %v2429
    %v2431 = vand.u32 %v2430, 4294901760
    %2432 = vmatprep.subr.mxu0 %v2431
    %v2433 = vand.u32 %v2132, 4294901760
    %v2434 = vsub.f32 %v2132, %v2433
    %v2435 = vand.u32 %v2434, 4294901760
    %v2436 = vsub.f32 %v2434, %v2435
    %v2437 = vand.u32 %v2436, 4294901760
    %2438 = vmatpush1.msra.mxu0 %v2437
    %v2439 = vand.u32 %v2135, 4294901760
    %v2440 = vsub.f32 %v2135, %v2439
    %v2441 = vand.u32 %v2440, 4294901760
    %v2442 = vsub.f32 %v2440, %v2441
    %v2443 = vand.u32 %v2442, 4294901760
    %2444 = vmatprep.subr.mxu0 %v2443
    %v2445 = vand.u32 %v2134, 4294901760
    %v2446 = vsub.f32 %v2134, %v2445
    %v2447 = vand.u32 %v2446, 4294901760
    %v2448 = vsub.f32 %v2446, %v2447
    %v2449 = vand.u32 %v2448, 4294901760
    %2450 = vmatpush1.msra.mxu0 %v2449
    %v2451 = vand.u32 %v2137, 4294901760
    %v2452 = vsub.f32 %v2137, %v2451
    %v2453 = vand.u32 %v2452, 4294901760
    %v2454 = vsub.f32 %v2452, %v2453
    %v2455 = vand.u32 %v2454, 4294901760
    %2456 = vmatprep.subr.mxu0 %v2455
    %v2457 = vand.u32 %v2136, 4294901760
    %v2458 = vsub.f32 %v2136, %v2457
    %v2459 = vand.u32 %v2458, 4294901760
    %v2460 = vsub.f32 %v2458, %v2459
    %v2461 = vand.u32 %v2460, 4294901760
    %2462 = vmatpush1.msra.mxu0 %v2461
    %v2463 = vand.u32 %v2139, 4294901760
    %v2464 = vsub.f32 %v2139, %v2463
    %v2465 = vand.u32 %v2464, 4294901760
    %v2466 = vsub.f32 %v2464, %v2465
    %v2467 = vand.u32 %v2466, 4294901760
    %2468 = vmatprep.subr.mxu0 %v2467
    %v2469 = vand.u32 %v2138, 4294901760
    %v2470 = vsub.f32 %v2138, %v2469
    %v2471 = vand.u32 %v2470, 4294901760
    %v2472 = vsub.f32 %v2470, %v2471
    %v2473 = vand.u32 %v2472, 4294901760
    %2474 = vmatpush1.msra.mxu0 %v2473
    %v2475 = vand.u32 %v2141, 4294901760
    %v2476 = vsub.f32 %v2141, %v2475
    %v2477 = vand.u32 %v2476, 4294901760
    %v2478 = vsub.f32 %v2476, %v2477
    %v2479 = vand.u32 %v2478, 4294901760
    %2480 = vmatprep.subr.mxu0 %v2479
    %v2481 = vand.u32 %v2140, 4294901760
    %v2482 = vsub.f32 %v2140, %v2481
    %v2483 = vand.u32 %v2482, 4294901760
    %v2484 = vsub.f32 %v2482, %v2483
    %v2485 = vand.u32 %v2484, 4294901760
    %2486 = vmatpush1.msra.mxu0 %v2485
    %v2487 = vand.u32 %v2143, 4294901760
    %v2488 = vsub.f32 %v2143, %v2487
    %v2489 = vand.u32 %v2488, 4294901760
    %v2490 = vsub.f32 %v2488, %v2489
    %v2491 = vand.u32 %v2490, 4294901760
    %2492 = vmatprep.subr.mxu0 %v2491
    %v2493 = vand.u32 %v2142, 4294901760
    %v2494 = vsub.f32 %v2142, %v2493
    %v2495 = vand.u32 %v2494, 4294901760
    %v2496 = vsub.f32 %v2494, %v2495
    %v2497 = vand.u32 %v2496, 4294901760
    %2498 = vmatpush1.msra.mxu0 %v2497
    %v2499 = vand.u32 %v2145, 4294901760
    %v2500 = vsub.f32 %v2145, %v2499
    %v2501 = vand.u32 %v2500, 4294901760
    %v2502 = vsub.f32 %v2500, %v2501
    %v2503 = vand.u32 %v2502, 4294901760
    %2504 = vmatprep.subr.mxu0 %v2503
    %v2505 = vand.u32 %v2144, 4294901760
    %v2506 = vsub.f32 %v2144, %v2505
    %v2507 = vand.u32 %v2506, 4294901760
    %v2508 = vsub.f32 %v2506, %v2507
    %v2509 = vand.u32 %v2508, 4294901760
    %2510 = vmatpush1.msra.mxu0 %v2509
    %v2511 = vand.u32 %v2147, 4294901760
    %v2512 = vsub.f32 %v2147, %v2511
    %v2513 = vand.u32 %v2512, 4294901760
    %v2514 = vsub.f32 %v2512, %v2513
    %v2515 = vand.u32 %v2514, 4294901760
    %2516 = vmatprep.subr.mxu0 %v2515
    %v2517 = vand.u32 %v2146, 4294901760
    %v2518 = vsub.f32 %v2146, %v2517
    %v2519 = vand.u32 %v2518, 4294901760
    %v2520 = vsub.f32 %v2518, %v2519
    %v2521 = vand.u32 %v2520, 4294901760
    %2522 = vmatpush1.msra.mxu0 %v2521
    %v2523 = vand.u32 %v2149, 4294901760
    %v2524 = vsub.f32 %v2149, %v2523
    %v2525 = vand.u32 %v2524, 4294901760
    %v2526 = vsub.f32 %v2524, %v2525
    %v2527 = vand.u32 %v2526, 4294901760
    %2528 = vmatprep.subr.mxu0 %v2527
    %v2529 = vand.u32 %v2148, 4294901760
    %v2530 = vsub.f32 %v2148, %v2529
    %v2531 = vand.u32 %v2530, 4294901760
    %v2532 = vsub.f32 %v2530, %v2531
    %v2533 = vand.u32 %v2532, 4294901760
    %2534 = vmatpush1.msra.mxu0 %v2533
    %v2535 = vand.u32 %v2151, 4294901760
    %v2536 = vsub.f32 %v2151, %v2535
    %v2537 = vand.u32 %v2536, 4294901760
    %v2538 = vsub.f32 %v2536, %v2537
    %v2539 = vand.u32 %v2538, 4294901760
    %2540 = vmatprep.subr.mxu0 %v2539
    %v2541 = vand.u32 %v2150, 4294901760
    %v2542 = vsub.f32 %v2150, %v2541
    %v2543 = vand.u32 %v2542, 4294901760
    %v2544 = vsub.f32 %v2542, %v2543
    %v2545 = vand.u32 %v2544, 4294901760
    %2546 = vmatpush1.msra.mxu0 %v2545
    %v2547 = vand.u32 %v2153, 4294901760
    %v2548 = vsub.f32 %v2153, %v2547
    %v2549 = vand.u32 %v2548, 4294901760
    %v2550 = vsub.f32 %v2548, %v2549
    %v2551 = vand.u32 %v2550, 4294901760
    %2552 = vmatprep.subr.mxu0 %v2551
    %v2553 = vand.u32 %v2152, 4294901760
    %v2554 = vsub.f32 %v2152, %v2553
    %v2555 = vand.u32 %v2554, 4294901760
    %v2556 = vsub.f32 %v2554, %v2555
    %v2557 = vand.u32 %v2556, 4294901760
    %2558 = vmatpush1.msra.mxu0 %v2557
    %v2559 = vand.u32 %v2155, 4294901760
    %v2560 = vsub.f32 %v2155, %v2559
    %v2561 = vand.u32 %v2560, 4294901760
    %v2562 = vsub.f32 %v2560, %v2561
    %v2563 = vand.u32 %v2562, 4294901760
    %2564 = vmatprep.subr.mxu0 %v2563
    %v2565 = vand.u32 %v2154, 4294901760
    %v2566 = vsub.f32 %v2154, %v2565
    %v2567 = vand.u32 %v2566, 4294901760
    %v2568 = vsub.f32 %v2566, %v2567
    %v2569 = vand.u32 %v2568, 4294901760
    %2570 = vmatpush1.msra.mxu0 %v2569
    %v2571 = vand.u32 %v2157, 4294901760
    %v2572 = vsub.f32 %v2157, %v2571
    %v2573 = vand.u32 %v2572, 4294901760
    %v2574 = vsub.f32 %v2572, %v2573
    %v2575 = vand.u32 %v2574, 4294901760
    %2576 = vmatprep.subr.mxu0 %v2575
    %v2577 = vand.u32 %v2156, 4294901760
    %v2578 = vsub.f32 %v2156, %v2577
    %v2579 = vand.u32 %v2578, 4294901760
    %v2580 = vsub.f32 %v2578, %v2579
    %v2581 = vand.u32 %v2580, 4294901760
    %2582 = vmatpush1.msra.mxu0 %v2581
    %v2583 = vand.u32 %v2159, 4294901760
    %v2584 = vsub.f32 %v2159, %v2583
    %v2585 = vand.u32 %v2584, 4294901760
    %v2586 = vsub.f32 %v2584, %v2585
    %v2587 = vand.u32 %v2586, 4294901760
    %2588 = vmatprep.subr.mxu0 %v2587
    %v2589 = vand.u32 %v2158, 4294901760
    %v2590 = vsub.f32 %v2158, %v2589
    %v2591 = vand.u32 %v2590, 4294901760
    %v2592 = vsub.f32 %v2590, %v2591
    %v2593 = vand.u32 %v2592, 4294901760
    %2594 = vmatpush1.msra.mxu0 %v2593
    %v2595 = vand.u32 %v2161, 4294901760
    %v2596 = vsub.f32 %v2161, %v2595
    %v2597 = vand.u32 %v2596, 4294901760
    %v2598 = vsub.f32 %v2596, %v2597
    %v2599 = vand.u32 %v2598, 4294901760
    %2600 = vmatprep.subr.mxu0 %v2599
    %v2601 = vand.u32 %v2160, 4294901760
    %v2602 = vsub.f32 %v2160, %v2601
    %v2603 = vand.u32 %v2602, 4294901760
    %v2604 = vsub.f32 %v2602, %v2603
    %v2605 = vand.u32 %v2604, 4294901760
    %2606 = vmatpush1.msra.mxu0 %v2605
    %v2607 = vand.u32 %v2163, 4294901760
    %v2608 = vsub.f32 %v2163, %v2607
    %v2609 = vand.u32 %v2608, 4294901760
    %v2610 = vsub.f32 %v2608, %v2609
    %v2611 = vand.u32 %v2610, 4294901760
    %2612 = vmatprep.subr.mxu0 %v2611
    %v2613 = vand.u32 %v2162, 4294901760
    %v2614 = vsub.f32 %v2162, %v2613
    %v2615 = vand.u32 %v2614, 4294901760
    %v2616 = vsub.f32 %v2614, %v2615
    %v2617 = vand.u32 %v2616, 4294901760
    %2618 = vmatpush1.msra.mxu0 %v2617
    %v2619 = vand.u32 %v2165, 4294901760
    %v2620 = vsub.f32 %v2165, %v2619
    %v2621 = vand.u32 %v2620, 4294901760
    %v2622 = vsub.f32 %v2620, %v2621
    %v2623 = vand.u32 %v2622, 4294901760
    %2624 = vmatprep.subr.mxu0 %v2623
    %v2625 = vand.u32 %v2164, 4294901760
    %v2626 = vsub.f32 %v2164, %v2625
    %v2627 = vand.u32 %v2626, 4294901760
    %v2628 = vsub.f32 %v2626, %v2627
    %v2629 = vand.u32 %v2628, 4294901760
    %2630 = vmatpush1.msra.mxu0 %v2629
    %v2631 = vand.u32 %v2167, 4294901760
    %v2632 = vsub.f32 %v2167, %v2631
    %v2633 = vand.u32 %v2632, 4294901760
    %v2634 = vsub.f32 %v2632, %v2633
    %v2635 = vand.u32 %v2634, 4294901760
    %2636 = vmatprep.subr.mxu0 %v2635
    %v2637 = vand.u32 %v2166, 4294901760
    %v2638 = vsub.f32 %v2166, %v2637
    %v2639 = vand.u32 %v2638, 4294901760
    %v2640 = vsub.f32 %v2638, %v2639
    %v2641 = vand.u32 %v2640, 4294901760
    %2642 = vmatpush1.msra.mxu0 %v2641
    %v2643 = vand.u32 %v2169, 4294901760
    %v2644 = vsub.f32 %v2169, %v2643
    %v2645 = vand.u32 %v2644, 4294901760
    %v2646 = vsub.f32 %v2644, %v2645
    %v2647 = vand.u32 %v2646, 4294901760
    %2648 = vmatprep.subr.mxu0 %v2647
    %v2649 = vand.u32 %v2168, 4294901760
    %v2650 = vsub.f32 %v2168, %v2649
    %v2651 = vand.u32 %v2650, 4294901760
    %v2652 = vsub.f32 %v2650, %v2651
    %v2653 = vand.u32 %v2652, 4294901760
    %2654 = vmatpush1.msra.mxu0 %v2653
    %v2655 = vand.u32 %v2171, 4294901760
    %v2656 = vsub.f32 %v2171, %v2655
    %v2657 = vand.u32 %v2656, 4294901760
    %v2658 = vsub.f32 %v2656, %v2657
    %v2659 = vand.u32 %v2658, 4294901760
    %2660 = vmatprep.subr.mxu0 %v2659
    %v2661 = vand.u32 %v2170, 4294901760
    %v2662 = vsub.f32 %v2170, %v2661
    %v2663 = vand.u32 %v2662, 4294901760
    %v2664 = vsub.f32 %v2662, %v2663
    %v2665 = vand.u32 %v2664, 4294901760
    %2666 = vmatpush1.msra.mxu0 %v2665
    %v2667 = vand.u32 %v2173, 4294901760
    %v2668 = vsub.f32 %v2173, %v2667
    %v2669 = vand.u32 %v2668, 4294901760
    %v2670 = vsub.f32 %v2668, %v2669
    %v2671 = vand.u32 %v2670, 4294901760
    %2672 = vmatprep.subr.mxu0 %v2671
    %v2673 = vand.u32 %v2172, 4294901760
    %v2674 = vsub.f32 %v2172, %v2673
    %v2675 = vand.u32 %v2674, 4294901760
    %v2676 = vsub.f32 %v2674, %v2675
    %v2677 = vand.u32 %v2676, 4294901760
    %2678 = vmatpush1.msra.mxu0 %v2677
    %v2679 = vand.u32 %v2175, 4294901760
    %v2680 = vsub.f32 %v2175, %v2679
    %v2681 = vand.u32 %v2680, 4294901760
    %v2682 = vsub.f32 %v2680, %v2681
    %v2683 = vand.u32 %v2682, 4294901760
    %2684 = vmatprep.subr.mxu0 %v2683
    %v2685 = vand.u32 %v2174, 4294901760
    %v2686 = vsub.f32 %v2174, %v2685
    %v2687 = vand.u32 %v2686, 4294901760
    %v2688 = vsub.f32 %v2686, %v2687
    %v2689 = vand.u32 %v2688, 4294901760
    %2690 = vmatpush1.msra.mxu0 %v2689
    %v2691 = vand.u32 %v2177, 4294901760
    %v2692 = vsub.f32 %v2177, %v2691
    %v2693 = vand.u32 %v2692, 4294901760
    %v2694 = vsub.f32 %v2692, %v2693
    %v2695 = vand.u32 %v2694, 4294901760
    %2696 = vmatprep.subr.mxu0 %v2695
    %v2697 = vand.u32 %v2176, 4294901760
    %v2698 = vsub.f32 %v2176, %v2697
    %v2699 = vand.u32 %v2698, 4294901760
    %v2700 = vsub.f32 %v2698, %v2699
    %v2701 = vand.u32 %v2700, 4294901760
    %2702 = vmatpush1.msra.mxu0 %v2701
    %v2703 = vand.u32 %v2179, 4294901760
    %v2704 = vsub.f32 %v2179, %v2703
    %v2705 = vand.u32 %v2704, 4294901760
    %v2706 = vsub.f32 %v2704, %v2705
    %v2707 = vand.u32 %v2706, 4294901760
    %2708 = vmatprep.subr.mxu0 %v2707
    %v2709 = vand.u32 %v2178, 4294901760
    %v2710 = vsub.f32 %v2178, %v2709
    %v2711 = vand.u32 %v2710, 4294901760
    %v2712 = vsub.f32 %v2710, %v2711
    %v2713 = vand.u32 %v2712, 4294901760
    %2714 = vmatpush1.msra.mxu0 %v2713
    %v2715 = vand.u32 %v2181, 4294901760
    %v2716 = vsub.f32 %v2181, %v2715
    %v2717 = vand.u32 %v2716, 4294901760
    %v2718 = vsub.f32 %v2716, %v2717
    %v2719 = vand.u32 %v2718, 4294901760
    %2720 = vmatprep.subr.mxu0 %v2719
    %v2721 = vand.u32 %v2180, 4294901760
    %v2722 = vsub.f32 %v2180, %v2721
    %v2723 = vand.u32 %v2722, 4294901760
    %v2724 = vsub.f32 %v2722, %v2723
    %v2725 = vand.u32 %v2724, 4294901760
    %2726 = vmatpush1.msra.mxu0 %v2725
    %v2727 = vand.u32 %v2183, 4294901760
    %v2728 = vsub.f32 %v2183, %v2727
    %v2729 = vand.u32 %v2728, 4294901760
    %v2730 = vsub.f32 %v2728, %v2729
    %v2731 = vand.u32 %v2730, 4294901760
    %2732 = vmatprep.subr.mxu0 %v2731
    %v2733 = vand.u32 %v2182, 4294901760
    %v2734 = vsub.f32 %v2182, %v2733
    %v2735 = vand.u32 %v2734, 4294901760
    %v2736 = vsub.f32 %v2734, %v2735
    %v2737 = vand.u32 %v2736, 4294901760
    %2738 = vmatpush1.msra.mxu0 %v2737
    %v2739 = vand.u32 %v2185, 4294901760
    %v2740 = vsub.f32 %v2185, %v2739
    %v2741 = vand.u32 %v2740, 4294901760
    %v2742 = vsub.f32 %v2740, %v2741
    %v2743 = vand.u32 %v2742, 4294901760
    %2744 = vmatprep.subr.mxu0 %v2743
    %v2745 = vand.u32 %v2184, 4294901760
    %v2746 = vsub.f32 %v2184, %v2745
    %v2747 = vand.u32 %v2746, 4294901760
    %v2748 = vsub.f32 %v2746, %v2747
    %v2749 = vand.u32 %v2748, 4294901760
    %2750 = vmatpush1.msra.mxu0 %v2749
    %v2751 = vand.u32 %v2187, 4294901760
    %v2752 = vsub.f32 %v2187, %v2751
    %v2753 = vand.u32 %v2752, 4294901760
    %v2754 = vsub.f32 %v2752, %v2753
    %v2755 = vand.u32 %v2754, 4294901760
    %2756 = vmatprep.subr.mxu0 %v2755
    %v2757 = vand.u32 %v2186, 4294901760
    %v2758 = vsub.f32 %v2186, %v2757
    %v2759 = vand.u32 %v2758, 4294901760
    %v2760 = vsub.f32 %v2758, %v2759
    %v2761 = vand.u32 %v2760, 4294901760
    %2762 = vmatpush1.msra.mxu0 %v2761
    %v2763 = vand.u32 %v2189, 4294901760
    %v2764 = vsub.f32 %v2189, %v2763
    %v2765 = vand.u32 %v2764, 4294901760
    %v2766 = vsub.f32 %v2764, %v2765
    %v2767 = vand.u32 %v2766, 4294901760
    %2768 = vmatprep.subr.mxu0 %v2767
    %v2769 = vand.u32 %v2188, 4294901760
    %v2770 = vsub.f32 %v2188, %v2769
    %v2771 = vand.u32 %v2770, 4294901760
    %v2772 = vsub.f32 %v2770, %v2771
    %v2773 = vand.u32 %v2772, 4294901760
    %2774 = vmatpush1.msra.mxu0 %v2773
    %v2775 = vand.u32 %v2191, 4294901760
    %v2776 = vsub.f32 %v2191, %v2775
    %v2777 = vand.u32 %v2776, 4294901760
    %v2778 = vsub.f32 %v2776, %v2777
    %v2779 = vand.u32 %v2778, 4294901760
    %2780 = vmatprep.subr.mxu0 %v2779
    %v2781 = vand.u32 %v2190, 4294901760
    %v2782 = vsub.f32 %v2190, %v2781
    %v2783 = vand.u32 %v2782, 4294901760
    %v2784 = vsub.f32 %v2782, %v2783
    %v2785 = vand.u32 %v2784, 4294901760
    %2786 = vmatpush1.msra.mxu0 %v2785
    %v2787 = vand.u32 %v2109, 4294901760
    %2788 = vmatprep.mubr.f32.mxu0 %v2787
    %v2789 = vand.u32 %v2106, 4294901760
    %2790 = vmatmul.mubr.f32.gmra.mrb[0].mxu0 %v2789
    %v2791 = vpop.f32.mrb[0].mxu0
    %v2792 = vadd.f32 %v2399, %v2791
    %v2793 = vpop.f32.mrb[0].mxu0
    %v2794 = vadd.f32 %v2401, %v2793
    %2795 = vdwg.mxu0
    %v2796 = vand.u32 %v2129, 4294901760
    %v2797 = vsub.f32 %v2129, %v2796
    %2798 = vmatprep.subr.mxu0 %v2797
    %v2799 = vand.u32 %v2128, 4294901760
    %v2800 = vsub.f32 %v2128, %v2799
    %2801 = vmatpush1.msra.mxu0 %v2800
    %v2802 = vand.u32 %v2131, 4294901760
    %v2803 = vsub.f32 %v2131, %v2802
    %2804 = vmatprep.subr.mxu0 %v2803
    %v2805 = vand.u32 %v2130, 4294901760
    %v2806 = vsub.f32 %v2130, %v2805
    %2807 = vmatpush1.msra.mxu0 %v2806
    %v2808 = vand.u32 %v2133, 4294901760
    %v2809 = vsub.f32 %v2133, %v2808
    %2810 = vmatprep.subr.mxu0 %v2809
    %v2811 = vand.u32 %v2132, 4294901760
    %v2812 = vsub.f32 %v2132, %v2811
    %2813 = vmatpush1.msra.mxu0 %v2812
    %v2814 = vand.u32 %v2135, 4294901760
    %v2815 = vsub.f32 %v2135, %v2814
    %2816 = vmatprep.subr.mxu0 %v2815
    %v2817 = vand.u32 %v2134, 4294901760
    %v2818 = vsub.f32 %v2134, %v2817
    %2819 = vmatpush1.msra.mxu0 %v2818
    %v2820 = vand.u32 %v2137, 4294901760
    %v2821 = vsub.f32 %v2137, %v2820
    %2822 = vmatprep.subr.mxu0 %v2821
    %v2823 = vand.u32 %v2136, 4294901760
    %v2824 = vsub.f32 %v2136, %v2823
    %2825 = vmatpush1.msra.mxu0 %v2824
    %v2826 = vand.u32 %v2139, 4294901760
    %v2827 = vsub.f32 %v2139, %v2826
    %2828 = vmatprep.subr.mxu0 %v2827
    %v2829 = vand.u32 %v2138, 4294901760
    %v2830 = vsub.f32 %v2138, %v2829
    %2831 = vmatpush1.msra.mxu0 %v2830
    %v2832 = vand.u32 %v2141, 4294901760
    %v2833 = vsub.f32 %v2141, %v2832
    %2834 = vmatprep.subr.mxu0 %v2833
    %v2835 = vand.u32 %v2140, 4294901760
    %v2836 = vsub.f32 %v2140, %v2835
    %2837 = vmatpush1.msra.mxu0 %v2836
    %v2838 = vand.u32 %v2143, 4294901760
    %v2839 = vsub.f32 %v2143, %v2838
    %2840 = vmatprep.subr.mxu0 %v2839
    %v2841 = vand.u32 %v2142, 4294901760
    %v2842 = vsub.f32 %v2142, %v2841
    %2843 = vmatpush1.msra.mxu0 %v2842
    %v2844 = vand.u32 %v2145, 4294901760
    %v2845 = vsub.f32 %v2145, %v2844
    %2846 = vmatprep.subr.mxu0 %v2845
    %v2847 = vand.u32 %v2144, 4294901760
    %v2848 = vsub.f32 %v2144, %v2847
    %2849 = vmatpush1.msra.mxu0 %v2848
    %v2850 = vand.u32 %v2147, 4294901760
    %v2851 = vsub.f32 %v2147, %v2850
    %2852 = vmatprep.subr.mxu0 %v2851
    %v2853 = vand.u32 %v2146, 4294901760
    %v2854 = vsub.f32 %v2146, %v2853
    %2855 = vmatpush1.msra.mxu0 %v2854
    %v2856 = vand.u32 %v2149, 4294901760
    %v2857 = vsub.f32 %v2149, %v2856
    %2858 = vmatprep.subr.mxu0 %v2857
    %v2859 = vand.u32 %v2148, 4294901760
    %v2860 = vsub.f32 %v2148, %v2859
    %2861 = vmatpush1.msra.mxu0 %v2860
    %v2862 = vand.u32 %v2151, 4294901760
    %v2863 = vsub.f32 %v2151, %v2862
    %2864 = vmatprep.subr.mxu0 %v2863
    %v2865 = vand.u32 %v2150, 4294901760
    %v2866 = vsub.f32 %v2150, %v2865
    %2867 = vmatpush1.msra.mxu0 %v2866
    %v2868 = vand.u32 %v2153, 4294901760
    %v2869 = vsub.f32 %v2153, %v2868
    %2870 = vmatprep.subr.mxu0 %v2869
    %v2871 = vand.u32 %v2152, 4294901760
    %v2872 = vsub.f32 %v2152, %v2871
    %2873 = vmatpush1.msra.mxu0 %v2872
    %v2874 = vand.u32 %v2155, 4294901760
    %v2875 = vsub.f32 %v2155, %v2874
    %2876 = vmatprep.subr.mxu0 %v2875
    %v2877 = vand.u32 %v2154, 4294901760
    %v2878 = vsub.f32 %v2154, %v2877
    %2879 = vmatpush1.msra.mxu0 %v2878
    %v2880 = vand.u32 %v2157, 4294901760
    %v2881 = vsub.f32 %v2157, %v2880
    %2882 = vmatprep.subr.mxu0 %v2881
    %v2883 = vand.u32 %v2156, 4294901760
    %v2884 = vsub.f32 %v2156, %v2883
    %2885 = vmatpush1.msra.mxu0 %v2884
    %v2886 = vand.u32 %v2159, 4294901760
    %v2887 = vsub.f32 %v2159, %v2886
    %2888 = vmatprep.subr.mxu0 %v2887
    %v2889 = vand.u32 %v2158, 4294901760
    %v2890 = vsub.f32 %v2158, %v2889
    %2891 = vmatpush1.msra.mxu0 %v2890
    %v2892 = vand.u32 %v2161, 4294901760
    %v2893 = vsub.f32 %v2161, %v2892
    %2894 = vmatprep.subr.mxu0 %v2893
    %v2895 = vand.u32 %v2160, 4294901760
    %v2896 = vsub.f32 %v2160, %v2895
    %2897 = vmatpush1.msra.mxu0 %v2896
    %v2898 = vand.u32 %v2163, 4294901760
    %v2899 = vsub.f32 %v2163, %v2898
    %2900 = vmatprep.subr.mxu0 %v2899
    %v2901 = vand.u32 %v2162, 4294901760
    %v2902 = vsub.f32 %v2162, %v2901
    %2903 = vmatpush1.msra.mxu0 %v2902
    %v2904 = vand.u32 %v2165, 4294901760
    %v2905 = vsub.f32 %v2165, %v2904
    %2906 = vmatprep.subr.mxu0 %v2905
    %v2907 = vand.u32 %v2164, 4294901760
    %v2908 = vsub.f32 %v2164, %v2907
    %2909 = vmatpush1.msra.mxu0 %v2908
    %v2910 = vand.u32 %v2167, 4294901760
    %v2911 = vsub.f32 %v2167, %v2910
    %2912 = vmatprep.subr.mxu0 %v2911
    %v2913 = vand.u32 %v2166, 4294901760
    %v2914 = vsub.f32 %v2166, %v2913
    %2915 = vmatpush1.msra.mxu0 %v2914
    %v2916 = vand.u32 %v2169, 4294901760
    %v2917 = vsub.f32 %v2169, %v2916
    %2918 = vmatprep.subr.mxu0 %v2917
    %v2919 = vand.u32 %v2168, 4294901760
    %v2920 = vsub.f32 %v2168, %v2919
    %2921 = vmatpush1.msra.mxu0 %v2920
    %v2922 = vand.u32 %v2171, 4294901760
    %v2923 = vsub.f32 %v2171, %v2922
    %2924 = vmatprep.subr.mxu0 %v2923
    %v2925 = vand.u32 %v2170, 4294901760
    %v2926 = vsub.f32 %v2170, %v2925
    %2927 = vmatpush1.msra.mxu0 %v2926
    %v2928 = vand.u32 %v2173, 4294901760
    %v2929 = vsub.f32 %v2173, %v2928
    %2930 = vmatprep.subr.mxu0 %v2929
    %v2931 = vand.u32 %v2172, 4294901760
    %v2932 = vsub.f32 %v2172, %v2931
    %2933 = vmatpush1.msra.mxu0 %v2932
    %v2934 = vand.u32 %v2175, 4294901760
    %v2935 = vsub.f32 %v2175, %v2934
    %2936 = vmatprep.subr.mxu0 %v2935
    %v2937 = vand.u32 %v2174, 4294901760
    %v2938 = vsub.f32 %v2174, %v2937
    %2939 = vmatpush1.msra.mxu0 %v2938
    %v2940 = vand.u32 %v2177, 4294901760
    %v2941 = vsub.f32 %v2177, %v2940
    %2942 = vmatprep.subr.mxu0 %v2941
    %v2943 = vand.u32 %v2176, 4294901760
    %v2944 = vsub.f32 %v2176, %v2943
    %2945 = vmatpush1.msra.mxu0 %v2944
    %v2946 = vand.u32 %v2179, 4294901760
    %v2947 = vsub.f32 %v2179, %v2946
    %2948 = vmatprep.subr.mxu0 %v2947
    %v2949 = vand.u32 %v2178, 4294901760
    %v2950 = vsub.f32 %v2178, %v2949
    %2951 = vmatpush1.msra.mxu0 %v2950
    %v2952 = vand.u32 %v2181, 4294901760
    %v2953 = vsub.f32 %v2181, %v2952
    %2954 = vmatprep.subr.mxu0 %v2953
    %v2955 = vand.u32 %v2180, 4294901760
    %v2956 = vsub.f32 %v2180, %v2955
    %2957 = vmatpush1.msra.mxu0 %v2956
    %v2958 = vand.u32 %v2183, 4294901760
    %v2959 = vsub.f32 %v2183, %v2958
    %2960 = vmatprep.subr.mxu0 %v2959
    %v2961 = vand.u32 %v2182, 4294901760
    %v2962 = vsub.f32 %v2182, %v2961
    %2963 = vmatpush1.msra.mxu0 %v2962
    %v2964 = vand.u32 %v2185, 4294901760
    %v2965 = vsub.f32 %v2185, %v2964
    %2966 = vmatprep.subr.mxu0 %v2965
    %v2967 = vand.u32 %v2184, 4294901760
    %v2968 = vsub.f32 %v2184, %v2967
    %2969 = vmatpush1.msra.mxu0 %v2968
    %v2970 = vand.u32 %v2187, 4294901760
    %v2971 = vsub.f32 %v2187, %v2970
    %2972 = vmatprep.subr.mxu0 %v2971
    %v2973 = vand.u32 %v2186, 4294901760
    %v2974 = vsub.f32 %v2186, %v2973
    %2975 = vmatpush1.msra.mxu0 %v2974
    %v2976 = vand.u32 %v2189, 4294901760
    %v2977 = vsub.f32 %v2189, %v2976
    %2978 = vmatprep.subr.mxu0 %v2977
    %v2979 = vand.u32 %v2188, 4294901760
    %v2980 = vsub.f32 %v2188, %v2979
    %2981 = vmatpush1.msra.mxu0 %v2980
    %v2982 = vand.u32 %v2191, 4294901760
    %v2983 = vsub.f32 %v2191, %v2982
    %2984 = vmatprep.subr.mxu0 %v2983
    %v2985 = vand.u32 %v2190, 4294901760
    %v2986 = vsub.f32 %v2190, %v2985
    %2987 = vmatpush1.msra.mxu0 %v2986
    %v2988 = vand.u32 %v2109, 4294901760
    %v2989 = vsub.f32 %v2109, %v2988
    %2990 = vmatprep.mubr.f32.mxu0 %v2989
    %v2991 = vand.u32 %v2106, 4294901760
    %v2992 = vsub.f32 %v2106, %v2991
    %2993 = vmatmul.mubr.f32.gmra.mrb[0].mxu0 %v2992
    %v2994 = vpop.f32.mrb[0].mxu0
    %v2995 = vadd.f32 %v2792, %v2994
    %v2996 = vpop.f32.mrb[0].mxu0
    %v2997 = vadd.f32 %v2794, %v2996
    %2998 = vdwg.mxu0
    %v2999 = vand.u32 %v2129, 4294901760
    %3000 = vmatprep.subr.mxu0 %v2999
    %v3001 = vand.u32 %v2128, 4294901760
    %3002 = vmatpush1.msra.mxu0 %v3001
    %v3003 = vand.u32 %v2131, 4294901760
    %3004 = vmatprep.subr.mxu0 %v3003
    %v3005 = vand.u32 %v2130, 4294901760
    %3006 = vmatpush1.msra.mxu0 %v3005
    %v3007 = vand.u32 %v2133, 4294901760
    %3008 = vmatprep.subr.mxu0 %v3007
    %v3009 = vand.u32 %v2132, 4294901760
    %3010 = vmatpush1.msra.mxu0 %v3009
    %v3011 = vand.u32 %v2135, 4294901760
    %3012 = vmatprep.subr.mxu0 %v3011
    %v3013 = vand.u32 %v2134, 4294901760
    %3014 = vmatpush1.msra.mxu0 %v3013
    %v3015 = vand.u32 %v2137, 4294901760
    %3016 = vmatprep.subr.mxu0 %v3015
    %v3017 = vand.u32 %v2136, 4294901760
    %3018 = vmatpush1.msra.mxu0 %v3017
    %v3019 = vand.u32 %v2139, 4294901760
    %3020 = vmatprep.subr.mxu0 %v3019
    %v3021 = vand.u32 %v2138, 4294901760
    %3022 = vmatpush1.msra.mxu0 %v3021
    %v3023 = vand.u32 %v2141, 4294901760
    %3024 = vmatprep.subr.mxu0 %v3023
    %v3025 = vand.u32 %v2140, 4294901760
    %3026 = vmatpush1.msra.mxu0 %v3025
    %v3027 = vand.u32 %v2143, 4294901760
    %3028 = vmatprep.subr.mxu0 %v3027
    %v3029 = vand.u32 %v2142, 4294901760
    %3030 = vmatpush1.msra.mxu0 %v3029
    %v3031 = vand.u32 %v2145, 4294901760
    %3032 = vmatprep.subr.mxu0 %v3031
    %v3033 = vand.u32 %v2144, 4294901760
    %3034 = vmatpush1.msra.mxu0 %v3033
    %v3035 = vand.u32 %v2147, 4294901760
    %3036 = vmatprep.subr.mxu0 %v3035
    %v3037 = vand.u32 %v2146, 4294901760
    %3038 = vmatpush1.msra.mxu0 %v3037
    %v3039 = vand.u32 %v2149, 4294901760
    %3040 = vmatprep.subr.mxu0 %v3039
    %v3041 = vand.u32 %v2148, 4294901760
    %3042 = vmatpush1.msra.mxu0 %v3041
    %v3043 = vand.u32 %v2151, 4294901760
    %3044 = vmatprep.subr.mxu0 %v3043
    %v3045 = vand.u32 %v2150, 4294901760
    %3046 = vmatpush1.msra.mxu0 %v3045
    %v3047 = vand.u32 %v2153, 4294901760
    %3048 = vmatprep.subr.mxu0 %v3047
    %v3049 = vand.u32 %v2152, 4294901760
    %3050 = vmatpush1.msra.mxu0 %v3049
    %v3051 = vand.u32 %v2155, 4294901760
    %3052 = vmatprep.subr.mxu0 %v3051
    %v3053 = vand.u32 %v2154, 4294901760
    %3054 = vmatpush1.msra.mxu0 %v3053
    %v3055 = vand.u32 %v2157, 4294901760
    %3056 = vmatprep.subr.mxu0 %v3055
    %v3057 = vand.u32 %v2156, 4294901760
    %3058 = vmatpush1.msra.mxu0 %v3057
    %v3059 = vand.u32 %v2159, 4294901760
    %3060 = vmatprep.subr.mxu0 %v3059
    %v3061 = vand.u32 %v2158, 4294901760
    %3062 = vmatpush1.msra.mxu0 %v3061
    %v3063 = vand.u32 %v2161, 4294901760
    %3064 = vmatprep.subr.mxu0 %v3063
    %v3065 = vand.u32 %v2160, 4294901760
    %3066 = vmatpush1.msra.mxu0 %v3065
    %v3067 = vand.u32 %v2163, 4294901760
    %3068 = vmatprep.subr.mxu0 %v3067
    %v3069 = vand.u32 %v2162, 4294901760
    %3070 = vmatpush1.msra.mxu0 %v3069
    %v3071 = vand.u32 %v2165, 4294901760
    %3072 = vmatprep.subr.mxu0 %v3071
    %v3073 = vand.u32 %v2164, 4294901760
    %3074 = vmatpush1.msra.mxu0 %v3073
    %v3075 = vand.u32 %v2167, 4294901760
    %3076 = vmatprep.subr.mxu0 %v3075
    %v3077 = vand.u32 %v2166, 4294901760
    %3078 = vmatpush1.msra.mxu0 %v3077
    %v3079 = vand.u32 %v2169, 4294901760
    %3080 = vmatprep.subr.mxu0 %v3079
    %v3081 = vand.u32 %v2168, 4294901760
    %3082 = vmatpush1.msra.mxu0 %v3081
    %v3083 = vand.u32 %v2171, 4294901760
    %3084 = vmatprep.subr.mxu0 %v3083
    %v3085 = vand.u32 %v2170, 4294901760
    %3086 = vmatpush1.msra.mxu0 %v3085
    %v3087 = vand.u32 %v2173, 4294901760
    %3088 = vmatprep.subr.mxu0 %v3087
    %v3089 = vand.u32 %v2172, 4294901760
    %3090 = vmatpush1.msra.mxu0 %v3089
    %v3091 = vand.u32 %v2175, 4294901760
    %3092 = vmatprep.subr.mxu0 %v3091
    %v3093 = vand.u32 %v2174, 4294901760
    %3094 = vmatpush1.msra.mxu0 %v3093
    %v3095 = vand.u32 %v2177, 4294901760
    %3096 = vmatprep.subr.mxu0 %v3095
    %v3097 = vand.u32 %v2176, 4294901760
    %3098 = vmatpush1.msra.mxu0 %v3097
    %v3099 = vand.u32 %v2179, 4294901760
    %3100 = vmatprep.subr.mxu0 %v3099
    %v3101 = vand.u32 %v2178, 4294901760
    %3102 = vmatpush1.msra.mxu0 %v3101
    %v3103 = vand.u32 %v2181, 4294901760
    %3104 = vmatprep.subr.mxu0 %v3103
    %v3105 = vand.u32 %v2180, 4294901760
    %3106 = vmatpush1.msra.mxu0 %v3105
    %v3107 = vand.u32 %v2183, 4294901760
    %3108 = vmatprep.subr.mxu0 %v3107
    %v3109 = vand.u32 %v2182, 4294901760
    %3110 = vmatpush1.msra.mxu0 %v3109
    %v3111 = vand.u32 %v2185, 4294901760
    %3112 = vmatprep.subr.mxu0 %v3111
    %v3113 = vand.u32 %v2184, 4294901760
    %3114 = vmatpush1.msra.mxu0 %v3113
    %v3115 = vand.u32 %v2187, 4294901760
    %3116 = vmatprep.subr.mxu0 %v3115
    %v3117 = vand.u32 %v2186, 4294901760
    %3118 = vmatpush1.msra.mxu0 %v3117
    %v3119 = vand.u32 %v2189, 4294901760
    %3120 = vmatprep.subr.mxu0 %v3119
    %v3121 = vand.u32 %v2188, 4294901760
    %3122 = vmatpush1.msra.mxu0 %v3121
    %v3123 = vand.u32 %v2191, 4294901760
    %3124 = vmatprep.subr.mxu0 %v3123
    %v3125 = vand.u32 %v2190, 4294901760
    %3126 = vmatpush1.msra.mxu0 %v3125
    %v3127 = vand.u32 %v2109, 4294901760
    %v3128 = vsub.f32 %v2109, %v3127
    %v3129 = vand.u32 %v3128, 4294901760
    %3130 = vmatprep.mubr.f32.mxu0 %v3129
    %v3131 = vand.u32 %v2106, 4294901760
    %v3132 = vsub.f32 %v2106, %v3131
    %v3133 = vand.u32 %v3132, 4294901760
    %3134 = vmatmul.mubr.f32.gmra.mrb[0].mxu0 %v3133
    %v3135 = vpop.f32.mrb[0].mxu0
    %v3136 = vadd.f32 %v2995, %v3135
    %v3137 = vpop.f32.mrb[0].mxu0
    %v3138 = vadd.f32 %v2997, %v3137
    %3139 = vdwg.mxu0
    %v3140 = vand.u32 %v2129, 4294901760
    %v3141 = vsub.f32 %v2129, %v3140
    %v3142 = vand.u32 %v3141, 4294901760
    %3143 = vmatprep.subr.mxu0 %v3142
    %v3144 = vand.u32 %v2128, 4294901760
    %v3145 = vsub.f32 %v2128, %v3144
    %v3146 = vand.u32 %v3145, 4294901760
    %3147 = vmatpush1.msra.mxu0 %v3146
    %v3148 = vand.u32 %v2131, 4294901760
    %v3149 = vsub.f32 %v2131, %v3148
    %v3150 = vand.u32 %v3149, 4294901760
    %3151 = vmatprep.subr.mxu0 %v3150
    %v3152 = vand.u32 %v2130, 4294901760
    %v3153 = vsub.f32 %v2130, %v3152
    %v3154 = vand.u32 %v3153, 4294901760
    %3155 = vmatpush1.msra.mxu0 %v3154
    %v3156 = vand.u32 %v2133, 4294901760
    %v3157 = vsub.f32 %v2133, %v3156
    %v3158 = vand.u32 %v3157, 4294901760
    %3159 = vmatprep.subr.mxu0 %v3158
    %v3160 = vand.u32 %v2132, 4294901760
    %v3161 = vsub.f32 %v2132, %v3160
    %v3162 = vand.u32 %v3161, 4294901760
    %3163 = vmatpush1.msra.mxu0 %v3162
    %v3164 = vand.u32 %v2135, 4294901760
    %v3165 = vsub.f32 %v2135, %v3164
    %v3166 = vand.u32 %v3165, 4294901760
    %3167 = vmatprep.subr.mxu0 %v3166
    %v3168 = vand.u32 %v2134, 4294901760
    %v3169 = vsub.f32 %v2134, %v3168
    %v3170 = vand.u32 %v3169, 4294901760
    %3171 = vmatpush1.msra.mxu0 %v3170
    %v3172 = vand.u32 %v2137, 4294901760
    %v3173 = vsub.f32 %v2137, %v3172
    %v3174 = vand.u32 %v3173, 4294901760
    %3175 = vmatprep.subr.mxu0 %v3174
    %v3176 = vand.u32 %v2136, 4294901760
    %v3177 = vsub.f32 %v2136, %v3176
    %v3178 = vand.u32 %v3177, 4294901760
    %3179 = vmatpush1.msra.mxu0 %v3178
    %v3180 = vand.u32 %v2139, 4294901760
    %v3181 = vsub.f32 %v2139, %v3180
    %v3182 = vand.u32 %v3181, 4294901760
    %3183 = vmatprep.subr.mxu0 %v3182
    %v3184 = vand.u32 %v2138, 4294901760
    %v3185 = vsub.f32 %v2138, %v3184
    %v3186 = vand.u32 %v3185, 4294901760
    %3187 = vmatpush1.msra.mxu0 %v3186
    %v3188 = vand.u32 %v2141, 4294901760
    %v3189 = vsub.f32 %v2141, %v3188
    %v3190 = vand.u32 %v3189, 4294901760
    %3191 = vmatprep.subr.mxu0 %v3190
    %v3192 = vand.u32 %v2140, 4294901760
    %v3193 = vsub.f32 %v2140, %v3192
    %v3194 = vand.u32 %v3193, 4294901760
    %3195 = vmatpush1.msra.mxu0 %v3194
    %v3196 = vand.u32 %v2143, 4294901760
    %v3197 = vsub.f32 %v2143, %v3196
    %v3198 = vand.u32 %v3197, 4294901760
    %3199 = vmatprep.subr.mxu0 %v3198
    %v3200 = vand.u32 %v2142, 4294901760
    %v3201 = vsub.f32 %v2142, %v3200
    %v3202 = vand.u32 %v3201, 4294901760
    %3203 = vmatpush1.msra.mxu0 %v3202
    %v3204 = vand.u32 %v2145, 4294901760
    %v3205 = vsub.f32 %v2145, %v3204
    %v3206 = vand.u32 %v3205, 4294901760
    %3207 = vmatprep.subr.mxu0 %v3206
    %v3208 = vand.u32 %v2144, 4294901760
    %v3209 = vsub.f32 %v2144, %v3208
    %v3210 = vand.u32 %v3209, 4294901760
    %3211 = vmatpush1.msra.mxu0 %v3210
    %v3212 = vand.u32 %v2147, 4294901760
    %v3213 = vsub.f32 %v2147, %v3212
    %v3214 = vand.u32 %v3213, 4294901760
    %3215 = vmatprep.subr.mxu0 %v3214
    %v3216 = vand.u32 %v2146, 4294901760
    %v3217 = vsub.f32 %v2146, %v3216
    %v3218 = vand.u32 %v3217, 4294901760
    %3219 = vmatpush1.msra.mxu0 %v3218
    %v3220 = vand.u32 %v2149, 4294901760
    %v3221 = vsub.f32 %v2149, %v3220
    %v3222 = vand.u32 %v3221, 4294901760
    %3223 = vmatprep.subr.mxu0 %v3222
    %v3224 = vand.u32 %v2148, 4294901760
    %v3225 = vsub.f32 %v2148, %v3224
    %v3226 = vand.u32 %v3225, 4294901760
    %3227 = vmatpush1.msra.mxu0 %v3226
    %v3228 = vand.u32 %v2151, 4294901760
    %v3229 = vsub.f32 %v2151, %v3228
    %v3230 = vand.u32 %v3229, 4294901760
    %3231 = vmatprep.subr.mxu0 %v3230
    %v3232 = vand.u32 %v2150, 4294901760
    %v3233 = vsub.f32 %v2150, %v3232
    %v3234 = vand.u32 %v3233, 4294901760
    %3235 = vmatpush1.msra.mxu0 %v3234
    %v3236 = vand.u32 %v2153, 4294901760
    %v3237 = vsub.f32 %v2153, %v3236
    %v3238 = vand.u32 %v3237, 4294901760
    %3239 = vmatprep.subr.mxu0 %v3238
    %v3240 = vand.u32 %v2152, 4294901760
    %v3241 = vsub.f32 %v2152, %v3240
    %v3242 = vand.u32 %v3241, 4294901760
    %3243 = vmatpush1.msra.mxu0 %v3242
    %v3244 = vand.u32 %v2155, 4294901760
    %v3245 = vsub.f32 %v2155, %v3244
    %v3246 = vand.u32 %v3245, 4294901760
    %3247 = vmatprep.subr.mxu0 %v3246
    %v3248 = vand.u32 %v2154, 4294901760
    %v3249 = vsub.f32 %v2154, %v3248
    %v3250 = vand.u32 %v3249, 4294901760
    %3251 = vmatpush1.msra.mxu0 %v3250
    %v3252 = vand.u32 %v2157, 4294901760
    %v3253 = vsub.f32 %v2157, %v3252
    %v3254 = vand.u32 %v3253, 4294901760
    %3255 = vmatprep.subr.mxu0 %v3254
    %v3256 = vand.u32 %v2156, 4294901760
    %v3257 = vsub.f32 %v2156, %v3256
    %v3258 = vand.u32 %v3257, 4294901760
    %3259 = vmatpush1.msra.mxu0 %v3258
    %v3260 = vand.u32 %v2159, 4294901760
    %v3261 = vsub.f32 %v2159, %v3260
    %v3262 = vand.u32 %v3261, 4294901760
    %3263 = vmatprep.subr.mxu0 %v3262
    %v3264 = vand.u32 %v2158, 4294901760
    %v3265 = vsub.f32 %v2158, %v3264
    %v3266 = vand.u32 %v3265, 4294901760
    %3267 = vmatpush1.msra.mxu0 %v3266
    %v3268 = vand.u32 %v2161, 4294901760
    %v3269 = vsub.f32 %v2161, %v3268
    %v3270 = vand.u32 %v3269, 4294901760
    %3271 = vmatprep.subr.mxu0 %v3270
    %v3272 = vand.u32 %v2160, 4294901760
    %v3273 = vsub.f32 %v2160, %v3272
    %v3274 = vand.u32 %v3273, 4294901760
    %3275 = vmatpush1.msra.mxu0 %v3274
    %v3276 = vand.u32 %v2163, 4294901760
    %v3277 = vsub.f32 %v2163, %v3276
    %v3278 = vand.u32 %v3277, 4294901760
    %3279 = vmatprep.subr.mxu0 %v3278
    %v3280 = vand.u32 %v2162, 4294901760
    %v3281 = vsub.f32 %v2162, %v3280
    %v3282 = vand.u32 %v3281, 4294901760
    %3283 = vmatpush1.msra.mxu0 %v3282
    %v3284 = vand.u32 %v2165, 4294901760
    %v3285 = vsub.f32 %v2165, %v3284
    %v3286 = vand.u32 %v3285, 4294901760
    %3287 = vmatprep.subr.mxu0 %v3286
    %v3288 = vand.u32 %v2164, 4294901760
    %v3289 = vsub.f32 %v2164, %v3288
    %v3290 = vand.u32 %v3289, 4294901760
    %3291 = vmatpush1.msra.mxu0 %v3290
    %v3292 = vand.u32 %v2167, 4294901760
    %v3293 = vsub.f32 %v2167, %v3292
    %v3294 = vand.u32 %v3293, 4294901760
    %3295 = vmatprep.subr.mxu0 %v3294
    %v3296 = vand.u32 %v2166, 4294901760
    %v3297 = vsub.f32 %v2166, %v3296
    %v3298 = vand.u32 %v3297, 4294901760
    %3299 = vmatpush1.msra.mxu0 %v3298
    %v3300 = vand.u32 %v2169, 4294901760
    %v3301 = vsub.f32 %v2169, %v3300
    %v3302 = vand.u32 %v3301, 4294901760
    %3303 = vmatprep.subr.mxu0 %v3302
    %v3304 = vand.u32 %v2168, 4294901760
    %v3305 = vsub.f32 %v2168, %v3304
    %v3306 = vand.u32 %v3305, 4294901760
    %3307 = vmatpush1.msra.mxu0 %v3306
    %v3308 = vand.u32 %v2171, 4294901760
    %v3309 = vsub.f32 %v2171, %v3308
    %v3310 = vand.u32 %v3309, 4294901760
    %3311 = vmatprep.subr.mxu0 %v3310
    %v3312 = vand.u32 %v2170, 4294901760
    %v3313 = vsub.f32 %v2170, %v3312
    %v3314 = vand.u32 %v3313, 4294901760
    %3315 = vmatpush1.msra.mxu0 %v3314
    %v3316 = vand.u32 %v2173, 4294901760
    %v3317 = vsub.f32 %v2173, %v3316
    %v3318 = vand.u32 %v3317, 4294901760
    %3319 = vmatprep.subr.mxu0 %v3318
    %v3320 = vand.u32 %v2172, 4294901760
    %v3321 = vsub.f32 %v2172, %v3320
    %v3322 = vand.u32 %v3321, 4294901760
    %3323 = vmatpush1.msra.mxu0 %v3322
    %v3324 = vand.u32 %v2175, 4294901760
    %v3325 = vsub.f32 %v2175, %v3324
    %v3326 = vand.u32 %v3325, 4294901760
    %3327 = vmatprep.subr.mxu0 %v3326
    %v3328 = vand.u32 %v2174, 4294901760
    %v3329 = vsub.f32 %v2174, %v3328
    %v3330 = vand.u32 %v3329, 4294901760
    %3331 = vmatpush1.msra.mxu0 %v3330
    %v3332 = vand.u32 %v2177, 4294901760
    %v3333 = vsub.f32 %v2177, %v3332
    %v3334 = vand.u32 %v3333, 4294901760
    %3335 = vmatprep.subr.mxu0 %v3334
    %v3336 = vand.u32 %v2176, 4294901760
    %v3337 = vsub.f32 %v2176, %v3336
    %v3338 = vand.u32 %v3337, 4294901760
    %3339 = vmatpush1.msra.mxu0 %v3338
    %v3340 = vand.u32 %v2179, 4294901760
    %v3341 = vsub.f32 %v2179, %v3340
    %v3342 = vand.u32 %v3341, 4294901760
    %3343 = vmatprep.subr.mxu0 %v3342
    %v3344 = vand.u32 %v2178, 4294901760
    %v3345 = vsub.f32 %v2178, %v3344
    %v3346 = vand.u32 %v3345, 4294901760
    %3347 = vmatpush1.msra.mxu0 %v3346
    %v3348 = vand.u32 %v2181, 4294901760
    %v3349 = vsub.f32 %v2181, %v3348
    %v3350 = vand.u32 %v3349, 4294901760
    %3351 = vmatprep.subr.mxu0 %v3350
    %v3352 = vand.u32 %v2180, 4294901760
    %v3353 = vsub.f32 %v2180, %v3352
    %v3354 = vand.u32 %v3353, 4294901760
    %3355 = vmatpush1.msra.mxu0 %v3354
    %v3356 = vand.u32 %v2183, 4294901760
    %v3357 = vsub.f32 %v2183, %v3356
    %v3358 = vand.u32 %v3357, 4294901760
    %3359 = vmatprep.subr.mxu0 %v3358
    %v3360 = vand.u32 %v2182, 4294901760
    %v3361 = vsub.f32 %v2182, %v3360
    %v3362 = vand.u32 %v3361, 4294901760
    %3363 = vmatpush1.msra.mxu0 %v3362
    %v3364 = vand.u32 %v2185, 4294901760
    %v3365 = vsub.f32 %v2185, %v3364
    %v3366 = vand.u32 %v3365, 4294901760
    %3367 = vmatprep.subr.mxu0 %v3366
    %v3368 = vand.u32 %v2184, 4294901760
    %v3369 = vsub.f32 %v2184, %v3368
    %v3370 = vand.u32 %v3369, 4294901760
    %3371 = vmatpush1.msra.mxu0 %v3370
    %v3372 = vand.u32 %v2187, 4294901760
    %v3373 = vsub.f32 %v2187, %v3372
    %v3374 = vand.u32 %v3373, 4294901760
    %3375 = vmatprep.subr.mxu0 %v3374
    %v3376 = vand.u32 %v2186, 4294901760
    %v3377 = vsub.f32 %v2186, %v3376
    %v3378 = vand.u32 %v3377, 4294901760
    %3379 = vmatpush1.msra.mxu0 %v3378
    %v3380 = vand.u32 %v2189, 4294901760
    %v3381 = vsub.f32 %v2189, %v3380
    %v3382 = vand.u32 %v3381, 4294901760
    %3383 = vmatprep.subr.mxu0 %v3382
    %v3384 = vand.u32 %v2188, 4294901760
    %v3385 = vsub.f32 %v2188, %v3384
    %v3386 = vand.u32 %v3385, 4294901760
    %3387 = vmatpush1.msra.mxu0 %v3386
    %v3388 = vand.u32 %v2191, 4294901760
    %v3389 = vsub.f32 %v2191, %v3388
    %v3390 = vand.u32 %v3389, 4294901760
    %3391 = vmatprep.subr.mxu0 %v3390
    %v3392 = vand.u32 %v2190, 4294901760
    %v3393 = vsub.f32 %v2190, %v3392
    %v3394 = vand.u32 %v3393, 4294901760
    %3395 = vmatpush1.msra.mxu0 %v3394
    %v3396 = vand.u32 %v2109, 4294901760
    %3397 = vmatprep.mubr.f32.mxu0 %v3396
    %v3398 = vand.u32 %v2106, 4294901760
    %3399 = vmatmul.mubr.f32.gmra.mrb[0].mxu0 %v3398
    %v3400 = vpop.f32.mrb[0].mxu0
    %v3401 = vadd.f32 %v3136, %v3400
    %v3402 = vpop.f32.mrb[0].mxu0
    %v3403 = vadd.f32 %v3138, %v3402
    %3404 = vdwg.mxu0
    %v3405 = vand.u32 %v2129, 4294901760
    %3406 = vmatprep.subr.mxu0 %v3405
    %v3407 = vand.u32 %v2128, 4294901760
    %3408 = vmatpush1.msra.mxu0 %v3407
    %v3409 = vand.u32 %v2131, 4294901760
    %3410 = vmatprep.subr.mxu0 %v3409
    %v3411 = vand.u32 %v2130, 4294901760
    %3412 = vmatpush1.msra.mxu0 %v3411
    %v3413 = vand.u32 %v2133, 4294901760
    %3414 = vmatprep.subr.mxu0 %v3413
    %v3415 = vand.u32 %v2132, 4294901760
    %3416 = vmatpush1.msra.mxu0 %v3415
    %v3417 = vand.u32 %v2135, 4294901760
    %3418 = vmatprep.subr.mxu0 %v3417
    %v3419 = vand.u32 %v2134, 4294901760
    %3420 = vmatpush1.msra.mxu0 %v3419
    %v3421 = vand.u32 %v2137, 4294901760
    %3422 = vmatprep.subr.mxu0 %v3421
    %v3423 = vand.u32 %v2136, 4294901760
    %3424 = vmatpush1.msra.mxu0 %v3423
    %v3425 = vand.u32 %v2139, 4294901760
    %3426 = vmatprep.subr.mxu0 %v3425
    %v3427 = vand.u32 %v2138, 4294901760
    %3428 = vmatpush1.msra.mxu0 %v3427
    %v3429 = vand.u32 %v2141, 4294901760
    %3430 = vmatprep.subr.mxu0 %v3429
    %v3431 = vand.u32 %v2140, 4294901760
    %3432 = vmatpush1.msra.mxu0 %v3431
    %v3433 = vand.u32 %v2143, 4294901760
    %3434 = vmatprep.subr.mxu0 %v3433
    %v3435 = vand.u32 %v2142, 4294901760
    %3436 = vmatpush1.msra.mxu0 %v3435
    %v3437 = vand.u32 %v2145, 4294901760
    %3438 = vmatprep.subr.mxu0 %v3437
    %v3439 = vand.u32 %v2144, 4294901760
    %3440 = vmatpush1.msra.mxu0 %v3439
    %v3441 = vand.u32 %v2147, 4294901760
    %3442 = vmatprep.subr.mxu0 %v3441
    %v3443 = vand.u32 %v2146, 4294901760
    %3444 = vmatpush1.msra.mxu0 %v3443
    %v3445 = vand.u32 %v2149, 4294901760
    %3446 = vmatprep.subr.mxu0 %v3445
    %v3447 = vand.u32 %v2148, 4294901760
    %3448 = vmatpush1.msra.mxu0 %v3447
    %v3449 = vand.u32 %v2151, 4294901760
    %3450 = vmatprep.subr.mxu0 %v3449
    %v3451 = vand.u32 %v2150, 4294901760
    %3452 = vmatpush1.msra.mxu0 %v3451
    %v3453 = vand.u32 %v2153, 4294901760
    %3454 = vmatprep.subr.mxu0 %v3453
    %v3455 = vand.u32 %v2152, 4294901760
    %3456 = vmatpush1.msra.mxu0 %v3455
    %v3457 = vand.u32 %v2155, 4294901760
    %3458 = vmatprep.subr.mxu0 %v3457
    %v3459 = vand.u32 %v2154, 4294901760
    %3460 = vmatpush1.msra.mxu0 %v3459
    %v3461 = vand.u32 %v2157, 4294901760
    %3462 = vmatprep.subr.mxu0 %v3461
    %v3463 = vand.u32 %v2156, 4294901760
    %3464 = vmatpush1.msra.mxu0 %v3463
    %v3465 = vand.u32 %v2159, 4294901760
    %3466 = vmatprep.subr.mxu0 %v3465
    %v3467 = vand.u32 %v2158, 4294901760
    %3468 = vmatpush1.msra.mxu0 %v3467
    %v3469 = vand.u32 %v2161, 4294901760
    %3470 = vmatprep.subr.mxu0 %v3469
    %v3471 = vand.u32 %v2160, 4294901760
    %3472 = vmatpush1.msra.mxu0 %v3471
    %v3473 = vand.u32 %v2163, 4294901760
    %3474 = vmatprep.subr.mxu0 %v3473
    %v3475 = vand.u32 %v2162, 4294901760
    %3476 = vmatpush1.msra.mxu0 %v3475
    %v3477 = vand.u32 %v2165, 4294901760
    %3478 = vmatprep.subr.mxu0 %v3477
    %v3479 = vand.u32 %v2164, 4294901760
    %3480 = vmatpush1.msra.mxu0 %v3479
    %v3481 = vand.u32 %v2167, 4294901760
    %3482 = vmatprep.subr.mxu0 %v3481
    %v3483 = vand.u32 %v2166, 4294901760
    %3484 = vmatpush1.msra.mxu0 %v3483
    %v3485 = vand.u32 %v2169, 4294901760
    %3486 = vmatprep.subr.mxu0 %v3485
    %v3487 = vand.u32 %v2168, 4294901760
    %3488 = vmatpush1.msra.mxu0 %v3487
    %v3489 = vand.u32 %v2171, 4294901760
    %3490 = vmatprep.subr.mxu0 %v3489
    %v3491 = vand.u32 %v2170, 4294901760
    %3492 = vmatpush1.msra.mxu0 %v3491
    %v3493 = vand.u32 %v2173, 4294901760
    %3494 = vmatprep.subr.mxu0 %v3493
    %v3495 = vand.u32 %v2172, 4294901760
    %3496 = vmatpush1.msra.mxu0 %v3495
    %v3497 = vand.u32 %v2175, 4294901760
    %3498 = vmatprep.subr.mxu0 %v3497
    %v3499 = vand.u32 %v2174, 4294901760
    %3500 = vmatpush1.msra.mxu0 %v3499
    %v3501 = vand.u32 %v2177, 4294901760
    %3502 = vmatprep.subr.mxu0 %v3501
    %v3503 = vand.u32 %v2176, 4294901760
    %3504 = vmatpush1.msra.mxu0 %v3503
    %v3505 = vand.u32 %v2179, 4294901760
    %3506 = vmatprep.subr.mxu0 %v3505
    %v3507 = vand.u32 %v2178, 4294901760
    %3508 = vmatpush1.msra.mxu0 %v3507
    %v3509 = vand.u32 %v2181, 4294901760
    %3510 = vmatprep.subr.mxu0 %v3509
    %v3511 = vand.u32 %v2180, 4294901760
    %3512 = vmatpush1.msra.mxu0 %v3511
    %v3513 = vand.u32 %v2183, 4294901760
    %3514 = vmatprep.subr.mxu0 %v3513
    %v3515 = vand.u32 %v2182, 4294901760
    %3516 = vmatpush1.msra.mxu0 %v3515
    %v3517 = vand.u32 %v2185, 4294901760
    %3518 = vmatprep.subr.mxu0 %v3517
    %v3519 = vand.u32 %v2184, 4294901760
    %3520 = vmatpush1.msra.mxu0 %v3519
    %v3521 = vand.u32 %v2187, 4294901760
    %3522 = vmatprep.subr.mxu0 %v3521
    %v3523 = vand.u32 %v2186, 4294901760
    %3524 = vmatpush1.msra.mxu0 %v3523
    %v3525 = vand.u32 %v2189, 4294901760
    %3526 = vmatprep.subr.mxu0 %v3525
    %v3527 = vand.u32 %v2188, 4294901760
    %3528 = vmatpush1.msra.mxu0 %v3527
    %v3529 = vand.u32 %v2191, 4294901760
    %3530 = vmatprep.subr.mxu0 %v3529
    %v3531 = vand.u32 %v2190, 4294901760
    %3532 = vmatpush1.msra.mxu0 %v3531
    %v3533 = vand.u32 %v2109, 4294901760
    %3534 = vmatprep.mubr.f32.mxu0 %v3533
    %v3535 = vand.u32 %v2106, 4294901760
    %3536 = vmatmul.mubr.f32.gmra.mrb[0].mxu0 %v3535
    %v3537 = vpop.f32.mrb[0].mxu0
    %v3538 = vadd.f32 %v3401, %v3537
    %v3539 = vpop.f32.mrb[0].mxu0
    %v3540 = vadd.f32 %v3403, %v3539
    %3541 = vdwg.mxu0
    %v3542 = vand.u32 %v2193, 4294901760
    %3543 = vmatprep.subr.mxu0 %v3542
    %v3544 = vand.u32 %v2192, 4294901760
    %3545 = vmatpush1.msra.mxu0 %v3544
    %v3546 = vand.u32 %v2195, 4294901760
    %3547 = vmatprep.subr.mxu0 %v3546
    %v3548 = vand.u32 %v2194, 4294901760
    %3549 = vmatpush1.msra.mxu0 %v3548
    %v3550 = vand.u32 %v2197, 4294901760
    %3551 = vmatprep.subr.mxu0 %v3550
    %v3552 = vand.u32 %v2196, 4294901760
    %3553 = vmatpush1.msra.mxu0 %v3552
    %v3554 = vand.u32 %v2199, 4294901760
    %3555 = vmatprep.subr.mxu0 %v3554
    %v3556 = vand.u32 %v2198, 4294901760
    %3557 = vmatpush1.msra.mxu0 %v3556
    %v3558 = vand.u32 %v2201, 4294901760
    %3559 = vmatprep.subr.mxu0 %v3558
    %v3560 = vand.u32 %v2200, 4294901760
    %3561 = vmatpush1.msra.mxu0 %v3560
    %v3562 = vand.u32 %v2203, 4294901760
    %3563 = vmatprep.subr.mxu0 %v3562
    %v3564 = vand.u32 %v2202, 4294901760
    %3565 = vmatpush1.msra.mxu0 %v3564
    %v3566 = vand.u32 %v2205, 4294901760
    %3567 = vmatprep.subr.mxu0 %v3566
    %v3568 = vand.u32 %v2204, 4294901760
    %3569 = vmatpush1.msra.mxu0 %v3568
    %v3570 = vand.u32 %v2207, 4294901760
    %3571 = vmatprep.subr.mxu0 %v3570
    %v3572 = vand.u32 %v2206, 4294901760
    %3573 = vmatpush1.msra.mxu0 %v3572
    %v3574 = vand.u32 %v2209, 4294901760
    %3575 = vmatprep.subr.mxu0 %v3574
    %v3576 = vand.u32 %v2208, 4294901760
    %3577 = vmatpush1.msra.mxu0 %v3576
    %v3578 = vand.u32 %v2211, 4294901760
    %3579 = vmatprep.subr.mxu0 %v3578
    %v3580 = vand.u32 %v2210, 4294901760
    %3581 = vmatpush1.msra.mxu0 %v3580
    %v3582 = vand.u32 %v2213, 4294901760
    %3583 = vmatprep.subr.mxu0 %v3582
    %v3584 = vand.u32 %v2212, 4294901760
    %3585 = vmatpush1.msra.mxu0 %v3584
    %v3586 = vand.u32 %v2215, 4294901760
    %3587 = vmatprep.subr.mxu0 %v3586
    %v3588 = vand.u32 %v2214, 4294901760
    %3589 = vmatpush1.msra.mxu0 %v3588
    %v3590 = vand.u32 %v2217, 4294901760
    %3591 = vmatprep.subr.mxu0 %v3590
    %v3592 = vand.u32 %v2216, 4294901760
    %3593 = vmatpush1.msra.mxu0 %v3592
    %v3594 = vand.u32 %v2219, 4294901760
    %3595 = vmatprep.subr.mxu0 %v3594
    %v3596 = vand.u32 %v2218, 4294901760
    %3597 = vmatpush1.msra.mxu0 %v3596
    %v3598 = vand.u32 %v2221, 4294901760
    %3599 = vmatprep.subr.mxu0 %v3598
    %v3600 = vand.u32 %v2220, 4294901760
    %3601 = vmatpush1.msra.mxu0 %v3600
    %v3602 = vand.u32 %v2223, 4294901760
    %3603 = vmatprep.subr.mxu0 %v3602
    %v3604 = vand.u32 %v2222, 4294901760
    %3605 = vmatpush1.msra.mxu0 %v3604
    %v3606 = vand.u32 %v2225, 4294901760
    %3607 = vmatprep.subr.mxu0 %v3606
    %v3608 = vand.u32 %v2224, 4294901760
    %3609 = vmatpush1.msra.mxu0 %v3608
    %v3610 = vand.u32 %v2227, 4294901760
    %3611 = vmatprep.subr.mxu0 %v3610
    %v3612 = vand.u32 %v2226, 4294901760
    %3613 = vmatpush1.msra.mxu0 %v3612
    %v3614 = vand.u32 %v2229, 4294901760
    %3615 = vmatprep.subr.mxu0 %v3614
    %v3616 = vand.u32 %v2228, 4294901760
    %3617 = vmatpush1.msra.mxu0 %v3616
    %v3618 = vand.u32 %v2231, 4294901760
    %3619 = vmatprep.subr.mxu0 %v3618
    %v3620 = vand.u32 %v2230, 4294901760
    %3621 = vmatpush1.msra.mxu0 %v3620
    %v3622 = vand.u32 %v2233, 4294901760
    %3623 = vmatprep.subr.mxu0 %v3622
    %v3624 = vand.u32 %v2232, 4294901760
    %3625 = vmatpush1.msra.mxu0 %v3624
    %v3626 = vand.u32 %v2235, 4294901760
    %3627 = vmatprep.subr.mxu0 %v3626
    %v3628 = vand.u32 %v2234, 4294901760
    %3629 = vmatpush1.msra.mxu0 %v3628
    %v3630 = vand.u32 %v2237, 4294901760
    %3631 = vmatprep.subr.mxu0 %v3630
    %v3632 = vand.u32 %v2236, 4294901760
    %3633 = vmatpush1.msra.mxu0 %v3632
    %v3634 = vand.u32 %v2239, 4294901760
    %3635 = vmatprep.subr.mxu0 %v3634
    %v3636 = vand.u32 %v2238, 4294901760
    %3637 = vmatpush1.msra.mxu0 %v3636
    %v3638 = vand.u32 %v2241, 4294901760
    %3639 = vmatprep.subr.mxu0 %v3638
    %v3640 = vand.u32 %v2240, 4294901760
    %3641 = vmatpush1.msra.mxu0 %v3640
    %v3642 = vand.u32 %v2243, 4294901760
    %3643 = vmatprep.subr.mxu0 %v3642
    %v3644 = vand.u32 %v2242, 4294901760
    %3645 = vmatpush1.msra.mxu0 %v3644
    %v3646 = vand.u32 %v2245, 4294901760
    %3647 = vmatprep.subr.mxu0 %v3646
    %v3648 = vand.u32 %v2244, 4294901760
    %3649 = vmatpush1.msra.mxu0 %v3648
    %v3650 = vand.u32 %v2247, 4294901760
    %3651 = vmatprep.subr.mxu0 %v3650
    %v3652 = vand.u32 %v2246, 4294901760
    %3653 = vmatpush1.msra.mxu0 %v3652
    %v3654 = vand.u32 %v2249, 4294901760
    %3655 = vmatprep.subr.mxu0 %v3654
    %v3656 = vand.u32 %v2248, 4294901760
    %3657 = vmatpush1.msra.mxu0 %v3656
    %v3658 = vand.u32 %v2251, 4294901760
    %3659 = vmatprep.subr.mxu0 %v3658
    %v3660 = vand.u32 %v2250, 4294901760
    %3661 = vmatpush1.msra.mxu0 %v3660
    %v3662 = vand.u32 %v2253, 4294901760
    %3663 = vmatprep.subr.mxu0 %v3662
    %v3664 = vand.u32 %v2252, 4294901760
    %3665 = vmatpush1.msra.mxu0 %v3664
    %v3666 = vand.u32 %v2255, 4294901760
    %3667 = vmatprep.subr.mxu0 %v3666
    %v3668 = vand.u32 %v2254, 4294901760
    %3669 = vmatpush1.msra.mxu0 %v3668
    %v3670 = vand.u32 %v2125, 4294901760
    %v3671 = vsub.f32 %v2125, %v3670
    %v3672 = vand.u32 %v3671, 4294901760
    %v3673 = vsub.f32 %v3671, %v3672
    %v3674 = vand.u32 %v3673, 4294901760
    %3675 = vmatprep.mubr.f32.mxu0 %v3674
    %v3676 = vand.u32 %v2122, 4294901760
    %v3677 = vsub.f32 %v2122, %v3676
    %v3678 = vand.u32 %v3677, 4294901760
    %v3679 = vsub.f32 %v3677, %v3678
    %v3680 = vand.u32 %v3679, 4294901760
    %3681 = vmatmul.mubr.f32.gmra.mrb[0].mxu0 %v3680
    %v3682 = vpop.f32.mrb[0].mxu0
    %v3683 = vadd.f32 %v3538, %v3682
    %v3684 = vpop.f32.mrb[0].mxu0
    %v3685 = vadd.f32 %v3540, %v3684
    %3686 = vdwg.mxu0
    %v3687 = vand.u32 %v2193, 4294901760
    %v3688 = vsub.f32 %v2193, %v3687
    %v3689 = vand.u32 %v3688, 4294901760
    %v3690 = vsub.f32 %v3688, %v3689
    %v3691 = vand.u32 %v3690, 4294901760
    %3692 = vmatprep.subr.mxu0 %v3691
    %v3693 = vand.u32 %v2192, 4294901760
    %v3694 = vsub.f32 %v2192, %v3693
    %v3695 = vand.u32 %v3694, 4294901760
    %v3696 = vsub.f32 %v3694, %v3695
    %v3697 = vand.u32 %v3696, 4294901760
    %3698 = vmatpush1.msra.mxu0 %v3697
    %v3699 = vand.u32 %v2195, 4294901760
    %v3700 = vsub.f32 %v2195, %v3699
    %v3701 = vand.u32 %v3700, 4294901760
    %v3702 = vsub.f32 %v3700, %v3701
    %v3703 = vand.u32 %v3702, 4294901760
    %3704 = vmatprep.subr.mxu0 %v3703
    %v3705 = vand.u32 %v2194, 4294901760
    %v3706 = vsub.f32 %v2194, %v3705
    %v3707 = vand.u32 %v3706, 4294901760
    %v3708 = vsub.f32 %v3706, %v3707
    %v3709 = vand.u32 %v3708, 4294901760
    %3710 = vmatpush1.msra.mxu0 %v3709
    %v3711 = vand.u32 %v2197, 4294901760
    %v3712 = vsub.f32 %v2197, %v3711
    %v3713 = vand.u32 %v3712, 4294901760
    %v3714 = vsub.f32 %v3712, %v3713
    %v3715 = vand.u32 %v3714, 4294901760
    %3716 = vmatprep.subr.mxu0 %v3715
    %v3717 = vand.u32 %v2196, 4294901760
    %v3718 = vsub.f32 %v2196, %v3717
    %v3719 = vand.u32 %v3718, 4294901760
    %v3720 = vsub.f32 %v3718, %v3719
    %v3721 = vand.u32 %v3720, 4294901760
    %3722 = vmatpush1.msra.mxu0 %v3721
    %v3723 = vand.u32 %v2199, 4294901760
    %v3724 = vsub.f32 %v2199, %v3723
    %v3725 = vand.u32 %v3724, 4294901760
    %v3726 = vsub.f32 %v3724, %v3725
    %v3727 = vand.u32 %v3726, 4294901760
    %3728 = vmatprep.subr.mxu0 %v3727
    %v3729 = vand.u32 %v2198, 4294901760
    %v3730 = vsub.f32 %v2198, %v3729
    %v3731 = vand.u32 %v3730, 4294901760
    %v3732 = vsub.f32 %v3730, %v3731
    %v3733 = vand.u32 %v3732, 4294901760
    %3734 = vmatpush1.msra.mxu0 %v3733
    %v3735 = vand.u32 %v2201, 4294901760
    %v3736 = vsub.f32 %v2201, %v3735
    %v3737 = vand.u32 %v3736, 4294901760
    %v3738 = vsub.f32 %v3736, %v3737
    %v3739 = vand.u32 %v3738, 4294901760
    %3740 = vmatprep.subr.mxu0 %v3739
    %v3741 = vand.u32 %v2200, 4294901760
    %v3742 = vsub.f32 %v2200, %v3741
    %v3743 = vand.u32 %v3742, 4294901760
    %v3744 = vsub.f32 %v3742, %v3743
    %v3745 = vand.u32 %v3744, 4294901760
    %3746 = vmatpush1.msra.mxu0 %v3745
    %v3747 = vand.u32 %v2203, 4294901760
    %v3748 = vsub.f32 %v2203, %v3747
    %v3749 = vand.u32 %v3748, 4294901760
    %v3750 = vsub.f32 %v3748, %v3749
    %v3751 = vand.u32 %v3750, 4294901760
    %3752 = vmatprep.subr.mxu0 %v3751
    %v3753 = vand.u32 %v2202, 4294901760
    %v3754 = vsub.f32 %v2202, %v3753
    %v3755 = vand.u32 %v3754, 4294901760
    %v3756 = vsub.f32 %v3754, %v3755
    %v3757 = vand.u32 %v3756, 4294901760
    %3758 = vmatpush1.msra.mxu0 %v3757
    %v3759 = vand.u32 %v2205, 4294901760
    %v3760 = vsub.f32 %v2205, %v3759
    %v3761 = vand.u32 %v3760, 4294901760
    %v3762 = vsub.f32 %v3760, %v3761
    %v3763 = vand.u32 %v3762, 4294901760
    %3764 = vmatprep.subr.mxu0 %v3763
    %v3765 = vand.u32 %v2204, 4294901760
    %v3766 = vsub.f32 %v2204, %v3765
    %v3767 = vand.u32 %v3766, 4294901760
    %v3768 = vsub.f32 %v3766, %v3767
    %v3769 = vand.u32 %v3768, 4294901760
    %3770 = vmatpush1.msra.mxu0 %v3769
    %v3771 = vand.u32 %v2207, 4294901760
    %v3772 = vsub.f32 %v2207, %v3771
    %v3773 = vand.u32 %v3772, 4294901760
    %v3774 = vsub.f32 %v3772, %v3773
    %v3775 = vand.u32 %v3774, 4294901760
    %3776 = vmatprep.subr.mxu0 %v3775
    %v3777 = vand.u32 %v2206, 4294901760
    %v3778 = vsub.f32 %v2206, %v3777
    %v3779 = vand.u32 %v3778, 4294901760
    %v3780 = vsub.f32 %v3778, %v3779
    %v3781 = vand.u32 %v3780, 4294901760
    %3782 = vmatpush1.msra.mxu0 %v3781
    %v3783 = vand.u32 %v2209, 4294901760
    %v3784 = vsub.f32 %v2209, %v3783
    %v3785 = vand.u32 %v3784, 4294901760
    %v3786 = vsub.f32 %v3784, %v3785
    %v3787 = vand.u32 %v3786, 4294901760
    %3788 = vmatprep.subr.mxu0 %v3787
    %v3789 = vand.u32 %v2208, 4294901760
    %v3790 = vsub.f32 %v2208, %v3789
    %v3791 = vand.u32 %v3790, 4294901760
    %v3792 = vsub.f32 %v3790, %v3791
    %v3793 = vand.u32 %v3792, 4294901760
    %3794 = vmatpush1.msra.mxu0 %v3793
    %v3795 = vand.u32 %v2211, 4294901760
    %v3796 = vsub.f32 %v2211, %v3795
    %v3797 = vand.u32 %v3796, 4294901760
    %v3798 = vsub.f32 %v3796, %v3797
    %v3799 = vand.u32 %v3798, 4294901760
    %3800 = vmatprep.subr.mxu0 %v3799
    %v3801 = vand.u32 %v2210, 4294901760
    %v3802 = vsub.f32 %v2210, %v3801
    %v3803 = vand.u32 %v3802, 4294901760
    %v3804 = vsub.f32 %v3802, %v3803
    %v3805 = vand.u32 %v3804, 4294901760
    %3806 = vmatpush1.msra.mxu0 %v3805
    %v3807 = vand.u32 %v2213, 4294901760
    %v3808 = vsub.f32 %v2213, %v3807
    %v3809 = vand.u32 %v3808, 4294901760
    %v3810 = vsub.f32 %v3808, %v3809
    %v3811 = vand.u32 %v3810, 4294901760
    %3812 = vmatprep.subr.mxu0 %v3811
    %v3813 = vand.u32 %v2212, 4294901760
    %v3814 = vsub.f32 %v2212, %v3813
    %v3815 = vand.u32 %v3814, 4294901760
    %v3816 = vsub.f32 %v3814, %v3815
    %v3817 = vand.u32 %v3816, 4294901760
    %3818 = vmatpush1.msra.mxu0 %v3817
    %v3819 = vand.u32 %v2215, 4294901760
    %v3820 = vsub.f32 %v2215, %v3819
    %v3821 = vand.u32 %v3820, 4294901760
    %v3822 = vsub.f32 %v3820, %v3821
    %v3823 = vand.u32 %v3822, 4294901760
    %3824 = vmatprep.subr.mxu0 %v3823
    %v3825 = vand.u32 %v2214, 4294901760
    %v3826 = vsub.f32 %v2214, %v3825
    %v3827 = vand.u32 %v3826, 4294901760
    %v3828 = vsub.f32 %v3826, %v3827
    %v3829 = vand.u32 %v3828, 4294901760
    %3830 = vmatpush1.msra.mxu0 %v3829
    %v3831 = vand.u32 %v2217, 4294901760
    %v3832 = vsub.f32 %v2217, %v3831
    %v3833 = vand.u32 %v3832, 4294901760
    %v3834 = vsub.f32 %v3832, %v3833
    %v3835 = vand.u32 %v3834, 4294901760
    %3836 = vmatprep.subr.mxu0 %v3835
    %v3837 = vand.u32 %v2216, 4294901760
    %v3838 = vsub.f32 %v2216, %v3837
    %v3839 = vand.u32 %v3838, 4294901760
    %v3840 = vsub.f32 %v3838, %v3839
    %v3841 = vand.u32 %v3840, 4294901760
    %3842 = vmatpush1.msra.mxu0 %v3841
    %v3843 = vand.u32 %v2219, 4294901760
    %v3844 = vsub.f32 %v2219, %v3843
    %v3845 = vand.u32 %v3844, 4294901760
    %v3846 = vsub.f32 %v3844, %v3845
    %v3847 = vand.u32 %v3846, 4294901760
    %3848 = vmatprep.subr.mxu0 %v3847
    %v3849 = vand.u32 %v2218, 4294901760
    %v3850 = vsub.f32 %v2218, %v3849
    %v3851 = vand.u32 %v3850, 4294901760
    %v3852 = vsub.f32 %v3850, %v3851
    %v3853 = vand.u32 %v3852, 4294901760
    %3854 = vmatpush1.msra.mxu0 %v3853
    %v3855 = vand.u32 %v2221, 4294901760
    %v3856 = vsub.f32 %v2221, %v3855
    %v3857 = vand.u32 %v3856, 4294901760
    %v3858 = vsub.f32 %v3856, %v3857
    %v3859 = vand.u32 %v3858, 4294901760
    %3860 = vmatprep.subr.mxu0 %v3859
    %v3861 = vand.u32 %v2220, 4294901760
    %v3862 = vsub.f32 %v2220, %v3861
    %v3863 = vand.u32 %v3862, 4294901760
    %v3864 = vsub.f32 %v3862, %v3863
    %v3865 = vand.u32 %v3864, 4294901760
    %3866 = vmatpush1.msra.mxu0 %v3865
    %v3867 = vand.u32 %v2223, 4294901760
    %v3868 = vsub.f32 %v2223, %v3867
    %v3869 = vand.u32 %v3868, 4294901760
    %v3870 = vsub.f32 %v3868, %v3869
    %v3871 = vand.u32 %v3870, 4294901760
    %3872 = vmatprep.subr.mxu0 %v3871
    %v3873 = vand.u32 %v2222, 4294901760
    %v3874 = vsub.f32 %v2222, %v3873
    %v3875 = vand.u32 %v3874, 4294901760
    %v3876 = vsub.f32 %v3874, %v3875
    %v3877 = vand.u32 %v3876, 4294901760
    %3878 = vmatpush1.msra.mxu0 %v3877
    %v3879 = vand.u32 %v2225, 4294901760
    %v3880 = vsub.f32 %v2225, %v3879
    %v3881 = vand.u32 %v3880, 4294901760
    %v3882 = vsub.f32 %v3880, %v3881
    %v3883 = vand.u32 %v3882, 4294901760
    %3884 = vmatprep.subr.mxu0 %v3883
    %v3885 = vand.u32 %v2224, 4294901760
    %v3886 = vsub.f32 %v2224, %v3885
    %v3887 = vand.u32 %v3886, 4294901760
    %v3888 = vsub.f32 %v3886, %v3887
    %v3889 = vand.u32 %v3888, 4294901760
    %3890 = vmatpush1.msra.mxu0 %v3889
    %v3891 = vand.u32 %v2227, 4294901760
    %v3892 = vsub.f32 %v2227, %v3891
    %v3893 = vand.u32 %v3892, 4294901760
    %v3894 = vsub.f32 %v3892, %v3893
    %v3895 = vand.u32 %v3894, 4294901760
    %3896 = vmatprep.subr.mxu0 %v3895
    %v3897 = vand.u32 %v2226, 4294901760
    %v3898 = vsub.f32 %v2226, %v3897
    %v3899 = vand.u32 %v3898, 4294901760
    %v3900 = vsub.f32 %v3898, %v3899
    %v3901 = vand.u32 %v3900, 4294901760
    %3902 = vmatpush1.msra.mxu0 %v3901
    %v3903 = vand.u32 %v2229, 4294901760
    %v3904 = vsub.f32 %v2229, %v3903
    %v3905 = vand.u32 %v3904, 4294901760
    %v3906 = vsub.f32 %v3904, %v3905
    %v3907 = vand.u32 %v3906, 4294901760
    %3908 = vmatprep.subr.mxu0 %v3907
    %v3909 = vand.u32 %v2228, 4294901760
    %v3910 = vsub.f32 %v2228, %v3909
    %v3911 = vand.u32 %v3910, 4294901760
    %v3912 = vsub.f32 %v3910, %v3911
    %v3913 = vand.u32 %v3912, 4294901760
    %3914 = vmatpush1.msra.mxu0 %v3913
    %v3915 = vand.u32 %v2231, 4294901760
    %v3916 = vsub.f32 %v2231, %v3915
    %v3917 = vand.u32 %v3916, 4294901760
    %v3918 = vsub.f32 %v3916, %v3917
    %v3919 = vand.u32 %v3918, 4294901760
    %3920 = vmatprep.subr.mxu0 %v3919
    %v3921 = vand.u32 %v2230, 4294901760
    %v3922 = vsub.f32 %v2230, %v3921
    %v3923 = vand.u32 %v3922, 4294901760
    %v3924 = vsub.f32 %v3922, %v3923
    %v3925 = vand.u32 %v3924, 4294901760
    %3926 = vmatpush1.msra.mxu0 %v3925
    %v3927 = vand.u32 %v2233, 4294901760
    %v3928 = vsub.f32 %v2233, %v3927
    %v3929 = vand.u32 %v3928, 4294901760
    %v3930 = vsub.f32 %v3928, %v3929
    %v3931 = vand.u32 %v3930, 4294901760
    %3932 = vmatprep.subr.mxu0 %v3931
    %v3933 = vand.u32 %v2232, 4294901760
    %v3934 = vsub.f32 %v2232, %v3933
    %v3935 = vand.u32 %v3934, 4294901760
    %v3936 = vsub.f32 %v3934, %v3935
    %v3937 = vand.u32 %v3936, 4294901760
    %3938 = vmatpush1.msra.mxu0 %v3937
    %v3939 = vand.u32 %v2235, 4294901760
    %v3940 = vsub.f32 %v2235, %v3939
    %v3941 = vand.u32 %v3940, 4294901760
    %v3942 = vsub.f32 %v3940, %v3941
    %v3943 = vand.u32 %v3942, 4294901760
    %3944 = vmatprep.subr.mxu0 %v3943
    %v3945 = vand.u32 %v2234, 4294901760
    %v3946 = vsub.f32 %v2234, %v3945
    %v3947 = vand.u32 %v3946, 4294901760
    %v3948 = vsub.f32 %v3946, %v3947
    %v3949 = vand.u32 %v3948, 4294901760
    %3950 = vmatpush1.msra.mxu0 %v3949
    %v3951 = vand.u32 %v2237, 4294901760
    %v3952 = vsub.f32 %v2237, %v3951
    %v3953 = vand.u32 %v3952, 4294901760
    %v3954 = vsub.f32 %v3952, %v3953
    %v3955 = vand.u32 %v3954, 4294901760
    %3956 = vmatprep.subr.mxu0 %v3955
    %v3957 = vand.u32 %v2236, 4294901760
    %v3958 = vsub.f32 %v2236, %v3957
    %v3959 = vand.u32 %v3958, 4294901760
    %v3960 = vsub.f32 %v3958, %v3959
    %v3961 = vand.u32 %v3960, 4294901760
    %3962 = vmatpush1.msra.mxu0 %v3961
    %v3963 = vand.u32 %v2239, 4294901760
    %v3964 = vsub.f32 %v2239, %v3963
    %v3965 = vand.u32 %v3964, 4294901760
    %v3966 = vsub.f32 %v3964, %v3965
    %v3967 = vand.u32 %v3966, 4294901760
    %3968 = vmatprep.subr.mxu0 %v3967
    %v3969 = vand.u32 %v2238, 4294901760
    %v3970 = vsub.f32 %v2238, %v3969
    %v3971 = vand.u32 %v3970, 4294901760
    %v3972 = vsub.f32 %v3970, %v3971
    %v3973 = vand.u32 %v3972, 4294901760
    %3974 = vmatpush1.msra.mxu0 %v3973
    %v3975 = vand.u32 %v2241, 4294901760
    %v3976 = vsub.f32 %v2241, %v3975
    %v3977 = vand.u32 %v3976, 4294901760
    %v3978 = vsub.f32 %v3976, %v3977
    %v3979 = vand.u32 %v3978, 4294901760
    %3980 = vmatprep.subr.mxu0 %v3979
    %v3981 = vand.u32 %v2240, 4294901760
    %v3982 = vsub.f32 %v2240, %v3981
    %v3983 = vand.u32 %v3982, 4294901760
    %v3984 = vsub.f32 %v3982, %v3983
    %v3985 = vand.u32 %v3984, 4294901760
    %3986 = vmatpush1.msra.mxu0 %v3985
    %v3987 = vand.u32 %v2243, 4294901760
    %v3988 = vsub.f32 %v2243, %v3987
    %v3989 = vand.u32 %v3988, 4294901760
    %v3990 = vsub.f32 %v3988, %v3989
    %v3991 = vand.u32 %v3990, 4294901760
    %3992 = vmatprep.subr.mxu0 %v3991
    %v3993 = vand.u32 %v2242, 4294901760
    %v3994 = vsub.f32 %v2242, %v3993
    %v3995 = vand.u32 %v3994, 4294901760
    %v3996 = vsub.f32 %v3994, %v3995
    %v3997 = vand.u32 %v3996, 4294901760
    %3998 = vmatpush1.msra.mxu0 %v3997
    %v3999 = vand.u32 %v2245, 4294901760
    %v4000 = vsub.f32 %v2245, %v3999
    %v4001 = vand.u32 %v4000, 4294901760
    %v4002 = vsub.f32 %v4000, %v4001
    %v4003 = vand.u32 %v4002, 4294901760
    %4004 = vmatprep.subr.mxu0 %v4003
    %v4005 = vand.u32 %v2244, 4294901760
    %v4006 = vsub.f32 %v2244, %v4005
    %v4007 = vand.u32 %v4006, 4294901760
    %v4008 = vsub.f32 %v4006, %v4007
    %v4009 = vand.u32 %v4008, 4294901760
    %4010 = vmatpush1.msra.mxu0 %v4009
    %v4011 = vand.u32 %v2247, 4294901760
    %v4012 = vsub.f32 %v2247, %v4011
    %v4013 = vand.u32 %v4012, 4294901760
    %v4014 = vsub.f32 %v4012, %v4013
    %v4015 = vand.u32 %v4014, 4294901760
    %4016 = vmatprep.subr.mxu0 %v4015
    %v4017 = vand.u32 %v2246, 4294901760
    %v4018 = vsub.f32 %v2246, %v4017
    %v4019 = vand.u32 %v4018, 4294901760
    %v4020 = vsub.f32 %v4018, %v4019
    %v4021 = vand.u32 %v4020, 4294901760
    %4022 = vmatpush1.msra.mxu0 %v4021
    %v4023 = vand.u32 %v2249, 4294901760
    %v4024 = vsub.f32 %v2249, %v4023
    %v4025 = vand.u32 %v4024, 4294901760
    %v4026 = vsub.f32 %v4024, %v4025
    %v4027 = vand.u32 %v4026, 4294901760
    %4028 = vmatprep.subr.mxu0 %v4027
    %v4029 = vand.u32 %v2248, 4294901760
    %v4030 = vsub.f32 %v2248, %v4029
    %v4031 = vand.u32 %v4030, 4294901760
    %v4032 = vsub.f32 %v4030, %v4031
    %v4033 = vand.u32 %v4032, 4294901760
    %4034 = vmatpush1.msra.mxu0 %v4033
    %v4035 = vand.u32 %v2251, 4294901760
    %v4036 = vsub.f32 %v2251, %v4035
    %v4037 = vand.u32 %v4036, 4294901760
    %v4038 = vsub.f32 %v4036, %v4037
    %v4039 = vand.u32 %v4038, 4294901760
    %4040 = vmatprep.subr.mxu0 %v4039
    %v4041 = vand.u32 %v2250, 4294901760
    %v4042 = vsub.f32 %v2250, %v4041
    %v4043 = vand.u32 %v4042, 4294901760
    %v4044 = vsub.f32 %v4042, %v4043
    %v4045 = vand.u32 %v4044, 4294901760
    %4046 = vmatpush1.msra.mxu0 %v4045
    %v4047 = vand.u32 %v2253, 4294901760
    %v4048 = vsub.f32 %v2253, %v4047
    %v4049 = vand.u32 %v4048, 4294901760
    %v4050 = vsub.f32 %v4048, %v4049
    %v4051 = vand.u32 %v4050, 4294901760
    %4052 = vmatprep.subr.mxu0 %v4051
    %v4053 = vand.u32 %v2252, 4294901760
    %v4054 = vsub.f32 %v2252, %v4053
    %v4055 = vand.u32 %v4054, 4294901760
    %v4056 = vsub.f32 %v4054, %v4055
    %v4057 = vand.u32 %v4056, 4294901760
    %4058 = vmatpush1.msra.mxu0 %v4057
    %v4059 = vand.u32 %v2255, 4294901760
    %v4060 = vsub.f32 %v2255, %v4059
    %v4061 = vand.u32 %v4060, 4294901760
    %v4062 = vsub.f32 %v4060, %v4061
    %v4063 = vand.u32 %v4062, 4294901760
    %4064 = vmatprep.subr.mxu0 %v4063
    %v4065 = vand.u32 %v2254, 4294901760
    %v4066 = vsub.f32 %v2254, %v4065
    %v4067 = vand.u32 %v4066, 4294901760
    %v4068 = vsub.f32 %v4066, %v4067
    %v4069 = vand.u32 %v4068, 4294901760
    %4070 = vmatpush1.msra.mxu0 %v4069
    %v4071 = vand.u32 %v2125, 4294901760
    %4072 = vmatprep.mubr.f32.mxu0 %v4071
    %v4073 = vand.u32 %v2122, 4294901760
    %4074 = vmatmul.mubr.f32.gmra.mrb[0].mxu0 %v4073
    %v4075 = vpop.f32.mrb[0].mxu0
    %v4076 = vadd.f32 %v3683, %v4075
    %v4077 = vpop.f32.mrb[0].mxu0
    %v4078 = vadd.f32 %v3685, %v4077
    %4079 = vdwg.mxu0
    %v4080 = vand.u32 %v2193, 4294901760
    %v4081 = vsub.f32 %v2193, %v4080
    %4082 = vmatprep.subr.mxu0 %v4081
    %v4083 = vand.u32 %v2192, 4294901760
    %v4084 = vsub.f32 %v2192, %v4083
    %4085 = vmatpush1.msra.mxu0 %v4084
    %v4086 = vand.u32 %v2195, 4294901760
    %v4087 = vsub.f32 %v2195, %v4086
    %4088 = vmatprep.subr.mxu0 %v4087
    %v4089 = vand.u32 %v2194, 4294901760
    %v4090 = vsub.f32 %v2194, %v4089
    %4091 = vmatpush1.msra.mxu0 %v4090
    %v4092 = vand.u32 %v2197, 4294901760
    %v4093 = vsub.f32 %v2197, %v4092
    %4094 = vmatprep.subr.mxu0 %v4093
    %v4095 = vand.u32 %v2196, 4294901760
    %v4096 = vsub.f32 %v2196, %v4095
    %4097 = vmatpush1.msra.mxu0 %v4096
    %v4098 = vand.u32 %v2199, 4294901760
    %v4099 = vsub.f32 %v2199, %v4098
    %4100 = vmatprep.subr.mxu0 %v4099
    %v4101 = vand.u32 %v2198, 4294901760
    %v4102 = vsub.f32 %v2198, %v4101
    %4103 = vmatpush1.msra.mxu0 %v4102
    %v4104 = vand.u32 %v2201, 4294901760
    %v4105 = vsub.f32 %v2201, %v4104
    %4106 = vmatprep.subr.mxu0 %v4105
    %v4107 = vand.u32 %v2200, 4294901760
    %v4108 = vsub.f32 %v2200, %v4107
    %4109 = vmatpush1.msra.mxu0 %v4108
    %v4110 = vand.u32 %v2203, 4294901760
    %v4111 = vsub.f32 %v2203, %v4110
    %4112 = vmatprep.subr.mxu0 %v4111
    %v4113 = vand.u32 %v2202, 4294901760
    %v4114 = vsub.f32 %v2202, %v4113
    %4115 = vmatpush1.msra.mxu0 %v4114
    %v4116 = vand.u32 %v2205, 4294901760
    %v4117 = vsub.f32 %v2205, %v4116
    %4118 = vmatprep.subr.mxu0 %v4117
    %v4119 = vand.u32 %v2204, 4294901760
    %v4120 = vsub.f32 %v2204, %v4119
    %4121 = vmatpush1.msra.mxu0 %v4120
    %v4122 = vand.u32 %v2207, 4294901760
    %v4123 = vsub.f32 %v2207, %v4122
    %4124 = vmatprep.subr.mxu0 %v4123
    %v4125 = vand.u32 %v2206, 4294901760
    %v4126 = vsub.f32 %v2206, %v4125
    %4127 = vmatpush1.msra.mxu0 %v4126
    %v4128 = vand.u32 %v2209, 4294901760
    %v4129 = vsub.f32 %v2209, %v4128
    %4130 = vmatprep.subr.mxu0 %v4129
    %v4131 = vand.u32 %v2208, 4294901760
    %v4132 = vsub.f32 %v2208, %v4131
    %4133 = vmatpush1.msra.mxu0 %v4132
    %v4134 = vand.u32 %v2211, 4294901760
    %v4135 = vsub.f32 %v2211, %v4134
    %4136 = vmatprep.subr.mxu0 %v4135
    %v4137 = vand.u32 %v2210, 4294901760
    %v4138 = vsub.f32 %v2210, %v4137
    %4139 = vmatpush1.msra.mxu0 %v4138
    %v4140 = vand.u32 %v2213, 4294901760
    %v4141 = vsub.f32 %v2213, %v4140
    %4142 = vmatprep.subr.mxu0 %v4141
    %v4143 = vand.u32 %v2212, 4294901760
    %v4144 = vsub.f32 %v2212, %v4143
    %4145 = vmatpush1.msra.mxu0 %v4144
    %v4146 = vand.u32 %v2215, 4294901760
    %v4147 = vsub.f32 %v2215, %v4146
    %4148 = vmatprep.subr.mxu0 %v4147
    %v4149 = vand.u32 %v2214, 4294901760
    %v4150 = vsub.f32 %v2214, %v4149
    %4151 = vmatpush1.msra.mxu0 %v4150
    %v4152 = vand.u32 %v2217, 4294901760
    %v4153 = vsub.f32 %v2217, %v4152
    %4154 = vmatprep.subr.mxu0 %v4153
    %v4155 = vand.u32 %v2216, 4294901760
    %v4156 = vsub.f32 %v2216, %v4155
    %4157 = vmatpush1.msra.mxu0 %v4156
    %v4158 = vand.u32 %v2219, 4294901760
    %v4159 = vsub.f32 %v2219, %v4158
    %4160 = vmatprep.subr.mxu0 %v4159
    %v4161 = vand.u32 %v2218, 4294901760
    %v4162 = vsub.f32 %v2218, %v4161
    %4163 = vmatpush1.msra.mxu0 %v4162
    %v4164 = vand.u32 %v2221, 4294901760
    %v4165 = vsub.f32 %v2221, %v4164
    %4166 = vmatprep.subr.mxu0 %v4165
    %v4167 = vand.u32 %v2220, 4294901760
    %v4168 = vsub.f32 %v2220, %v4167
    %4169 = vmatpush1.msra.mxu0 %v4168
    %v4170 = vand.u32 %v2223, 4294901760
    %v4171 = vsub.f32 %v2223, %v4170
    %4172 = vmatprep.subr.mxu0 %v4171
    %v4173 = vand.u32 %v2222, 4294901760
    %v4174 = vsub.f32 %v2222, %v4173
    %4175 = vmatpush1.msra.mxu0 %v4174
    %v4176 = vand.u32 %v2225, 4294901760
    %v4177 = vsub.f32 %v2225, %v4176
    %4178 = vmatprep.subr.mxu0 %v4177
    %v4179 = vand.u32 %v2224, 4294901760
    %v4180 = vsub.f32 %v2224, %v4179
    %4181 = vmatpush1.msra.mxu0 %v4180
    %v4182 = vand.u32 %v2227, 4294901760
    %v4183 = vsub.f32 %v2227, %v4182
    %4184 = vmatprep.subr.mxu0 %v4183
    %v4185 = vand.u32 %v2226, 4294901760
    %v4186 = vsub.f32 %v2226, %v4185
    %4187 = vmatpush1.msra.mxu0 %v4186
    %v4188 = vand.u32 %v2229, 4294901760
    %v4189 = vsub.f32 %v2229, %v4188
    %4190 = vmatprep.subr.mxu0 %v4189
    %v4191 = vand.u32 %v2228, 4294901760
    %v4192 = vsub.f32 %v2228, %v4191
    %4193 = vmatpush1.msra.mxu0 %v4192
    %v4194 = vand.u32 %v2231, 4294901760
    %v4195 = vsub.f32 %v2231, %v4194
    %4196 = vmatprep.subr.mxu0 %v4195
    %v4197 = vand.u32 %v2230, 4294901760
    %v4198 = vsub.f32 %v2230, %v4197
    %4199 = vmatpush1.msra.mxu0 %v4198
    %v4200 = vand.u32 %v2233, 4294901760
    %v4201 = vsub.f32 %v2233, %v4200
    %4202 = vmatprep.subr.mxu0 %v4201
    %v4203 = vand.u32 %v2232, 4294901760
    %v4204 = vsub.f32 %v2232, %v4203
    %4205 = vmatpush1.msra.mxu0 %v4204
    %v4206 = vand.u32 %v2235, 4294901760
    %v4207 = vsub.f32 %v2235, %v4206
    %4208 = vmatprep.subr.mxu0 %v4207
    %v4209 = vand.u32 %v2234, 4294901760
    %v4210 = vsub.f32 %v2234, %v4209
    %4211 = vmatpush1.msra.mxu0 %v4210
    %v4212 = vand.u32 %v2237, 4294901760
    %v4213 = vsub.f32 %v2237, %v4212
    %4214 = vmatprep.subr.mxu0 %v4213
    %v4215 = vand.u32 %v2236, 4294901760
    %v4216 = vsub.f32 %v2236, %v4215
    %4217 = vmatpush1.msra.mxu0 %v4216
    %v4218 = vand.u32 %v2239, 4294901760
    %v4219 = vsub.f32 %v2239, %v4218
    %4220 = vmatprep.subr.mxu0 %v4219
    %v4221 = vand.u32 %v2238, 4294901760
    %v4222 = vsub.f32 %v2238, %v4221
    %4223 = vmatpush1.msra.mxu0 %v4222
    %v4224 = vand.u32 %v2241, 4294901760
    %v4225 = vsub.f32 %v2241, %v4224
    %4226 = vmatprep.subr.mxu0 %v4225
    %v4227 = vand.u32 %v2240, 4294901760
    %v4228 = vsub.f32 %v2240, %v4227
    %4229 = vmatpush1.msra.mxu0 %v4228
    %v4230 = vand.u32 %v2243, 4294901760
    %v4231 = vsub.f32 %v2243, %v4230
    %4232 = vmatprep.subr.mxu0 %v4231
    %v4233 = vand.u32 %v2242, 4294901760
    %v4234 = vsub.f32 %v2242, %v4233
    %4235 = vmatpush1.msra.mxu0 %v4234
    %v4236 = vand.u32 %v2245, 4294901760
    %v4237 = vsub.f32 %v2245, %v4236
    %4238 = vmatprep.subr.mxu0 %v4237
    %v4239 = vand.u32 %v2244, 4294901760
    %v4240 = vsub.f32 %v2244, %v4239
    %4241 = vmatpush1.msra.mxu0 %v4240
    %v4242 = vand.u32 %v2247, 4294901760
    %v4243 = vsub.f32 %v2247, %v4242
    %4244 = vmatprep.subr.mxu0 %v4243
    %v4245 = vand.u32 %v2246, 4294901760
    %v4246 = vsub.f32 %v2246, %v4245
    %4247 = vmatpush1.msra.mxu0 %v4246
    %v4248 = vand.u32 %v2249, 4294901760
    %v4249 = vsub.f32 %v2249, %v4248
    %4250 = vmatprep.subr.mxu0 %v4249
    %v4251 = vand.u32 %v2248, 4294901760
    %v4252 = vsub.f32 %v2248, %v4251
    %4253 = vmatpush1.msra.mxu0 %v4252
    %v4254 = vand.u32 %v2251, 4294901760
    %v4255 = vsub.f32 %v2251, %v4254
    %4256 = vmatprep.subr.mxu0 %v4255
    %v4257 = vand.u32 %v2250, 4294901760
    %v4258 = vsub.f32 %v2250, %v4257
    %4259 = vmatpush1.msra.mxu0 %v4258
    %v4260 = vand.u32 %v2253, 4294901760
    %v4261 = vsub.f32 %v2253, %v4260
    %4262 = vmatprep.subr.mxu0 %v4261
    %v4263 = vand.u32 %v2252, 4294901760
    %v4264 = vsub.f32 %v2252, %v4263
    %4265 = vmatpush1.msra.mxu0 %v4264
    %v4266 = vand.u32 %v2255, 4294901760
    %v4267 = vsub.f32 %v2255, %v4266
    %4268 = vmatprep.subr.mxu0 %v4267
    %v4269 = vand.u32 %v2254, 4294901760
    %v4270 = vsub.f32 %v2254, %v4269
    %4271 = vmatpush1.msra.mxu0 %v4270
    %v4272 = vand.u32 %v2125, 4294901760
    %v4273 = vsub.f32 %v2125, %v4272
    %4274 = vmatprep.mubr.f32.mxu0 %v4273
    %v4275 = vand.u32 %v2122, 4294901760
    %v4276 = vsub.f32 %v2122, %v4275
    %4277 = vmatmul.mubr.f32.gmra.mrb[0].mxu0 %v4276
    %v4278 = vpop.f32.mrb[0].mxu0
    %v4279 = vadd.f32 %v4076, %v4278
    %v4280 = vpop.f32.mrb[0].mxu0
    %v4281 = vadd.f32 %v4078, %v4280
    %4282 = vdwg.mxu0
    %v4283 = vand.u32 %v2193, 4294901760
    %4284 = vmatprep.subr.mxu0 %v4283
    %v4285 = vand.u32 %v2192, 4294901760
    %4286 = vmatpush1.msra.mxu0 %v4285
    %v4287 = vand.u32 %v2195, 4294901760
    %4288 = vmatprep.subr.mxu0 %v4287
    %v4289 = vand.u32 %v2194, 4294901760
    %4290 = vmatpush1.msra.mxu0 %v4289
    %v4291 = vand.u32 %v2197, 4294901760
    %4292 = vmatprep.subr.mxu0 %v4291
    %v4293 = vand.u32 %v2196, 4294901760
    %4294 = vmatpush1.msra.mxu0 %v4293
    %v4295 = vand.u32 %v2199, 4294901760
    %4296 = vmatprep.subr.mxu0 %v4295
    %v4297 = vand.u32 %v2198, 4294901760
    %4298 = vmatpush1.msra.mxu0 %v4297
    %v4299 = vand.u32 %v2201, 4294901760
    %4300 = vmatprep.subr.mxu0 %v4299
    %v4301 = vand.u32 %v2200, 4294901760
    %4302 = vmatpush1.msra.mxu0 %v4301
    %v4303 = vand.u32 %v2203, 4294901760
    %4304 = vmatprep.subr.mxu0 %v4303
    %v4305 = vand.u32 %v2202, 4294901760
    %4306 = vmatpush1.msra.mxu0 %v4305
    %v4307 = vand.u32 %v2205, 4294901760
    %4308 = vmatprep.subr.mxu0 %v4307
    %v4309 = vand.u32 %v2204, 4294901760
    %4310 = vmatpush1.msra.mxu0 %v4309
    %v4311 = vand.u32 %v2207, 4294901760
    %4312 = vmatprep.subr.mxu0 %v4311
    %v4313 = vand.u32 %v2206, 4294901760
    %4314 = vmatpush1.msra.mxu0 %v4313
    %v4315 = vand.u32 %v2209, 4294901760
    %4316 = vmatprep.subr.mxu0 %v4315
    %v4317 = vand.u32 %v2208, 4294901760
    %4318 = vmatpush1.msra.mxu0 %v4317
    %v4319 = vand.u32 %v2211, 4294901760
    %4320 = vmatprep.subr.mxu0 %v4319
    %v4321 = vand.u32 %v2210, 4294901760
    %4322 = vmatpush1.msra.mxu0 %v4321
    %v4323 = vand.u32 %v2213, 4294901760
    %4324 = vmatprep.subr.mxu0 %v4323
    %v4325 = vand.u32 %v2212, 4294901760
    %4326 = vmatpush1.msra.mxu0 %v4325
    %v4327 = vand.u32 %v2215, 4294901760
    %4328 = vmatprep.subr.mxu0 %v4327
    %v4329 = vand.u32 %v2214, 4294901760
    %4330 = vmatpush1.msra.mxu0 %v4329
    %v4331 = vand.u32 %v2217, 4294901760
    %4332 = vmatprep.subr.mxu0 %v4331
    %v4333 = vand.u32 %v2216, 4294901760
    %4334 = vmatpush1.msra.mxu0 %v4333
    %v4335 = vand.u32 %v2219, 4294901760
    %4336 = vmatprep.subr.mxu0 %v4335
    %v4337 = vand.u32 %v2218, 4294901760
    %4338 = vmatpush1.msra.mxu0 %v4337
    %v4339 = vand.u32 %v2221, 4294901760
    %4340 = vmatprep.subr.mxu0 %v4339
    %v4341 = vand.u32 %v2220, 4294901760
    %4342 = vmatpush1.msra.mxu0 %v4341
    %v4343 = vand.u32 %v2223, 4294901760
    %4344 = vmatprep.subr.mxu0 %v4343
    %v4345 = vand.u32 %v2222, 4294901760
    %4346 = vmatpush1.msra.mxu0 %v4345
    %v4347 = vand.u32 %v2225, 4294901760
    %4348 = vmatprep.subr.mxu0 %v4347
    %v4349 = vand.u32 %v2224, 4294901760
    %4350 = vmatpush1.msra.mxu0 %v4349
    %v4351 = vand.u32 %v2227, 4294901760
    %4352 = vmatprep.subr.mxu0 %v4351
    %v4353 = vand.u32 %v2226, 4294901760
    %4354 = vmatpush1.msra.mxu0 %v4353
    %v4355 = vand.u32 %v2229, 4294901760
    %4356 = vmatprep.subr.mxu0 %v4355
    %v4357 = vand.u32 %v2228, 4294901760
    %4358 = vmatpush1.msra.mxu0 %v4357
    %v4359 = vand.u32 %v2231, 4294901760
    %4360 = vmatprep.subr.mxu0 %v4359
    %v4361 = vand.u32 %v2230, 4294901760
    %4362 = vmatpush1.msra.mxu0 %v4361
    %v4363 = vand.u32 %v2233, 4294901760
    %4364 = vmatprep.subr.mxu0 %v4363
    %v4365 = vand.u32 %v2232, 4294901760
    %4366 = vmatpush1.msra.mxu0 %v4365
    %v4367 = vand.u32 %v2235, 4294901760
    %4368 = vmatprep.subr.mxu0 %v4367
    %v4369 = vand.u32 %v2234, 4294901760
    %4370 = vmatpush1.msra.mxu0 %v4369
    %v4371 = vand.u32 %v2237, 4294901760
    %4372 = vmatprep.subr.mxu0 %v4371
    %v4373 = vand.u32 %v2236, 4294901760
    %4374 = vmatpush1.msra.mxu0 %v4373
    %v4375 = vand.u32 %v2239, 4294901760
    %4376 = vmatprep.subr.mxu0 %v4375
    %v4377 = vand.u32 %v2238, 4294901760
    %4378 = vmatpush1.msra.mxu0 %v4377
    %v4379 = vand.u32 %v2241, 4294901760
    %4380 = vmatprep.subr.mxu0 %v4379
    %v4381 = vand.u32 %v2240, 4294901760
    %4382 = vmatpush1.msra.mxu0 %v4381
    %v4383 = vand.u32 %v2243, 4294901760
    %4384 = vmatprep.subr.mxu0 %v4383
    %v4385 = vand.u32 %v2242, 4294901760
    %4386 = vmatpush1.msra.mxu0 %v4385
    %v4387 = vand.u32 %v2245, 4294901760
    %4388 = vmatprep.subr.mxu0 %v4387
    %v4389 = vand.u32 %v2244, 4294901760
    %4390 = vmatpush1.msra.mxu0 %v4389
    %v4391 = vand.u32 %v2247, 4294901760
    %4392 = vmatprep.subr.mxu0 %v4391
    %v4393 = vand.u32 %v2246, 4294901760
    %4394 = vmatpush1.msra.mxu0 %v4393
    %v4395 = vand.u32 %v2249, 4294901760
    %4396 = vmatprep.subr.mxu0 %v4395
    %v4397 = vand.u32 %v2248, 4294901760
    %4398 = vmatpush1.msra.mxu0 %v4397
    %v4399 = vand.u32 %v2251, 4294901760
    %4400 = vmatprep.subr.mxu0 %v4399
    %v4401 = vand.u32 %v2250, 4294901760
    %4402 = vmatpush1.msra.mxu0 %v4401
    %v4403 = vand.u32 %v2253, 4294901760
    %4404 = vmatprep.subr.mxu0 %v4403
    %v4405 = vand.u32 %v2252, 4294901760
    %4406 = vmatpush1.msra.mxu0 %v4405
    %v4407 = vand.u32 %v2255, 4294901760
    %4408 = vmatprep.subr.mxu0 %v4407
    %v4409 = vand.u32 %v2254, 4294901760
    %4410 = vmatpush1.msra.mxu0 %v4409
    %v4411 = vand.u32 %v2125, 4294901760
    %v4412 = vsub.f32 %v2125, %v4411
    %v4413 = vand.u32 %v4412, 4294901760
    %4414 = vmatprep.mubr.f32.mxu0 %v4413
    %v4415 = vand.u32 %v2122, 4294901760
    %v4416 = vsub.f32 %v2122, %v4415
    %v4417 = vand.u32 %v4416, 4294901760
    %4418 = vmatmul.mubr.f32.gmra.mrb[0].mxu0 %v4417
    %v4419 = vpop.f32.mrb[0].mxu0
    %v4420 = vadd.f32 %v4279, %v4419
    %v4421 = vpop.f32.mrb[0].mxu0
    %v4422 = vadd.f32 %v4281, %v4421
    %4423 = vdwg.mxu0
    %v4424 = vand.u32 %v2193, 4294901760
    %v4425 = vsub.f32 %v2193, %v4424
    %v4426 = vand.u32 %v4425, 4294901760
    %4427 = vmatprep.subr.mxu0 %v4426
    %v4428 = vand.u32 %v2192, 4294901760
    %v4429 = vsub.f32 %v2192, %v4428
    %v4430 = vand.u32 %v4429, 4294901760
    %4431 = vmatpush1.msra.mxu0 %v4430
    %v4432 = vand.u32 %v2195, 4294901760
    %v4433 = vsub.f32 %v2195, %v4432
    %v4434 = vand.u32 %v4433, 4294901760
    %4435 = vmatprep.subr.mxu0 %v4434
    %v4436 = vand.u32 %v2194, 4294901760
    %v4437 = vsub.f32 %v2194, %v4436
    %v4438 = vand.u32 %v4437, 4294901760
    %4439 = vmatpush1.msra.mxu0 %v4438
    %v4440 = vand.u32 %v2197, 4294901760
    %v4441 = vsub.f32 %v2197, %v4440
    %v4442 = vand.u32 %v4441, 4294901760
    %4443 = vmatprep.subr.mxu0 %v4442
    %v4444 = vand.u32 %v2196, 4294901760
    %v4445 = vsub.f32 %v2196, %v4444
    %v4446 = vand.u32 %v4445, 4294901760
    %4447 = vmatpush1.msra.mxu0 %v4446
    %v4448 = vand.u32 %v2199, 4294901760
    %v4449 = vsub.f32 %v2199, %v4448
    %v4450 = vand.u32 %v4449, 4294901760
    %4451 = vmatprep.subr.mxu0 %v4450
    %v4452 = vand.u32 %v2198, 4294901760
    %v4453 = vsub.f32 %v2198, %v4452
    %v4454 = vand.u32 %v4453, 4294901760
    %4455 = vmatpush1.msra.mxu0 %v4454
    %v4456 = vand.u32 %v2201, 4294901760
    %v4457 = vsub.f32 %v2201, %v4456
    %v4458 = vand.u32 %v4457, 4294901760
    %4459 = vmatprep.subr.mxu0 %v4458
    %v4460 = vand.u32 %v2200, 4294901760
    %v4461 = vsub.f32 %v2200, %v4460
    %v4462 = vand.u32 %v4461, 4294901760
    %4463 = vmatpush1.msra.mxu0 %v4462
    %v4464 = vand.u32 %v2203, 4294901760
    %v4465 = vsub.f32 %v2203, %v4464
    %v4466 = vand.u32 %v4465, 4294901760
    %4467 = vmatprep.subr.mxu0 %v4466
    %v4468 = vand.u32 %v2202, 4294901760
    %v4469 = vsub.f32 %v2202, %v4468
    %v4470 = vand.u32 %v4469, 4294901760
    %4471 = vmatpush1.msra.mxu0 %v4470
    %v4472 = vand.u32 %v2205, 4294901760
    %v4473 = vsub.f32 %v2205, %v4472
    %v4474 = vand.u32 %v4473, 4294901760
    %4475 = vmatprep.subr.mxu0 %v4474
    %v4476 = vand.u32 %v2204, 4294901760
    %v4477 = vsub.f32 %v2204, %v4476
    %v4478 = vand.u32 %v4477, 4294901760
    %4479 = vmatpush1.msra.mxu0 %v4478
    %v4480 = vand.u32 %v2207, 4294901760
    %v4481 = vsub.f32 %v2207, %v4480
    %v4482 = vand.u32 %v4481, 4294901760
    %4483 = vmatprep.subr.mxu0 %v4482
    %v4484 = vand.u32 %v2206, 4294901760
    %v4485 = vsub.f32 %v2206, %v4484
    %v4486 = vand.u32 %v4485, 4294901760
    %4487 = vmatpush1.msra.mxu0 %v4486
    %v4488 = vand.u32 %v2209, 4294901760
    %v4489 = vsub.f32 %v2209, %v4488
    %v4490 = vand.u32 %v4489, 4294901760
    %4491 = vmatprep.subr.mxu0 %v4490
    %v4492 = vand.u32 %v2208, 4294901760
    %v4493 = vsub.f32 %v2208, %v4492
    %v4494 = vand.u32 %v4493, 4294901760
    %4495 = vmatpush1.msra.mxu0 %v4494
    %v4496 = vand.u32 %v2211, 4294901760
    %v4497 = vsub.f32 %v2211, %v4496
    %v4498 = vand.u32 %v4497, 4294901760
    %4499 = vmatprep.subr.mxu0 %v4498
    %v4500 = vand.u32 %v2210, 4294901760
    %v4501 = vsub.f32 %v2210, %v4500
    %v4502 = vand.u32 %v4501, 4294901760
    %4503 = vmatpush1.msra.mxu0 %v4502
    %v4504 = vand.u32 %v2213, 4294901760
    %v4505 = vsub.f32 %v2213, %v4504
    %v4506 = vand.u32 %v4505, 4294901760
    %4507 = vmatprep.subr.mxu0 %v4506
    %v4508 = vand.u32 %v2212, 4294901760
    %v4509 = vsub.f32 %v2212, %v4508
    %v4510 = vand.u32 %v4509, 4294901760
    %4511 = vmatpush1.msra.mxu0 %v4510
    %v4512 = vand.u32 %v2215, 4294901760
    %v4513 = vsub.f32 %v2215, %v4512
    %v4514 = vand.u32 %v4513, 4294901760
    %4515 = vmatprep.subr.mxu0 %v4514
    %v4516 = vand.u32 %v2214, 4294901760
    %v4517 = vsub.f32 %v2214, %v4516
    %v4518 = vand.u32 %v4517, 4294901760
    %4519 = vmatpush1.msra.mxu0 %v4518
    %v4520 = vand.u32 %v2217, 4294901760
    %v4521 = vsub.f32 %v2217, %v4520
    %v4522 = vand.u32 %v4521, 4294901760
    %4523 = vmatprep.subr.mxu0 %v4522
    %v4524 = vand.u32 %v2216, 4294901760
    %v4525 = vsub.f32 %v2216, %v4524
    %v4526 = vand.u32 %v4525, 4294901760
    %4527 = vmatpush1.msra.mxu0 %v4526
    %v4528 = vand.u32 %v2219, 4294901760
    %v4529 = vsub.f32 %v2219, %v4528
    %v4530 = vand.u32 %v4529, 4294901760
    %4531 = vmatprep.subr.mxu0 %v4530
    %v4532 = vand.u32 %v2218, 4294901760
    %v4533 = vsub.f32 %v2218, %v4532
    %v4534 = vand.u32 %v4533, 4294901760
    %4535 = vmatpush1.msra.mxu0 %v4534
    %v4536 = vand.u32 %v2221, 4294901760
    %v4537 = vsub.f32 %v2221, %v4536
    %v4538 = vand.u32 %v4537, 4294901760
    %4539 = vmatprep.subr.mxu0 %v4538
    %v4540 = vand.u32 %v2220, 4294901760
    %v4541 = vsub.f32 %v2220, %v4540
    %v4542 = vand.u32 %v4541, 4294901760
    %4543 = vmatpush1.msra.mxu0 %v4542
    %v4544 = vand.u32 %v2223, 4294901760
    %v4545 = vsub.f32 %v2223, %v4544
    %v4546 = vand.u32 %v4545, 4294901760
    %4547 = vmatprep.subr.mxu0 %v4546
    %v4548 = vand.u32 %v2222, 4294901760
    %v4549 = vsub.f32 %v2222, %v4548
    %v4550 = vand.u32 %v4549, 4294901760
    %4551 = vmatpush1.msra.mxu0 %v4550
    %v4552 = vand.u32 %v2225, 4294901760
    %v4553 = vsub.f32 %v2225, %v4552
    %v4554 = vand.u32 %v4553, 4294901760
    %4555 = vmatprep.subr.mxu0 %v4554
    %v4556 = vand.u32 %v2224, 4294901760
    %v4557 = vsub.f32 %v2224, %v4556
    %v4558 = vand.u32 %v4557, 4294901760
    %4559 = vmatpush1.msra.mxu0 %v4558
    %v4560 = vand.u32 %v2227, 4294901760
    %v4561 = vsub.f32 %v2227, %v4560
    %v4562 = vand.u32 %v4561, 4294901760
    %4563 = vmatprep.subr.mxu0 %v4562
    %v4564 = vand.u32 %v2226, 4294901760
    %v4565 = vsub.f32 %v2226, %v4564
    %v4566 = vand.u32 %v4565, 4294901760
    %4567 = vmatpush1.msra.mxu0 %v4566
    %v4568 = vand.u32 %v2229, 4294901760
    %v4569 = vsub.f32 %v2229, %v4568
    %v4570 = vand.u32 %v4569, 4294901760
    %4571 = vmatprep.subr.mxu0 %v4570
    %v4572 = vand.u32 %v2228, 4294901760
    %v4573 = vsub.f32 %v2228, %v4572
    %v4574 = vand.u32 %v4573, 4294901760
    %4575 = vmatpush1.msra.mxu0 %v4574
    %v4576 = vand.u32 %v2231, 4294901760
    %v4577 = vsub.f32 %v2231, %v4576
    %v4578 = vand.u32 %v4577, 4294901760
    %4579 = vmatprep.subr.mxu0 %v4578
    %v4580 = vand.u32 %v2230, 4294901760
    %v4581 = vsub.f32 %v2230, %v4580
    %v4582 = vand.u32 %v4581, 4294901760
    %4583 = vmatpush1.msra.mxu0 %v4582
    %v4584 = vand.u32 %v2233, 4294901760
    %v4585 = vsub.f32 %v2233, %v4584
    %v4586 = vand.u32 %v4585, 4294901760
    %4587 = vmatprep.subr.mxu0 %v4586
    %v4588 = vand.u32 %v2232, 4294901760
    %v4589 = vsub.f32 %v2232, %v4588
    %v4590 = vand.u32 %v4589, 4294901760
    %4591 = vmatpush1.msra.mxu0 %v4590
    %v4592 = vand.u32 %v2235, 4294901760
    %v4593 = vsub.f32 %v2235, %v4592
    %v4594 = vand.u32 %v4593, 4294901760
    %4595 = vmatprep.subr.mxu0 %v4594
    %v4596 = vand.u32 %v2234, 4294901760
    %v4597 = vsub.f32 %v2234, %v4596
    %v4598 = vand.u32 %v4597, 4294901760
    %4599 = vmatpush1.msra.mxu0 %v4598
    %v4600 = vand.u32 %v2237, 4294901760
    %v4601 = vsub.f32 %v2237, %v4600
    %v4602 = vand.u32 %v4601, 4294901760
    %4603 = vmatprep.subr.mxu0 %v4602
    %v4604 = vand.u32 %v2236, 4294901760
    %v4605 = vsub.f32 %v2236, %v4604
    %v4606 = vand.u32 %v4605, 4294901760
    %4607 = vmatpush1.msra.mxu0 %v4606
    %v4608 = vand.u32 %v2239, 4294901760
    %v4609 = vsub.f32 %v2239, %v4608
    %v4610 = vand.u32 %v4609, 4294901760
    %4611 = vmatprep.subr.mxu0 %v4610
    %v4612 = vand.u32 %v2238, 4294901760
    %v4613 = vsub.f32 %v2238, %v4612
    %v4614 = vand.u32 %v4613, 4294901760
    %4615 = vmatpush1.msra.mxu0 %v4614
    %v4616 = vand.u32 %v2241, 4294901760
    %v4617 = vsub.f32 %v2241, %v4616
    %v4618 = vand.u32 %v4617, 4294901760
    %4619 = vmatprep.subr.mxu0 %v4618
    %v4620 = vand.u32 %v2240, 4294901760
    %v4621 = vsub.f32 %v2240, %v4620
    %v4622 = vand.u32 %v4621, 4294901760
    %4623 = vmatpush1.msra.mxu0 %v4622
    %v4624 = vand.u32 %v2243, 4294901760
    %v4625 = vsub.f32 %v2243, %v4624
    %v4626 = vand.u32 %v4625, 4294901760
    %4627 = vmatprep.subr.mxu0 %v4626
    %v4628 = vand.u32 %v2242, 4294901760
    %v4629 = vsub.f32 %v2242, %v4628
    %v4630 = vand.u32 %v4629, 4294901760
    %4631 = vmatpush1.msra.mxu0 %v4630
    %v4632 = vand.u32 %v2245, 4294901760
    %v4633 = vsub.f32 %v2245, %v4632
    %v4634 = vand.u32 %v4633, 4294901760
    %4635 = vmatprep.subr.mxu0 %v4634
    %v4636 = vand.u32 %v2244, 4294901760
    %v4637 = vsub.f32 %v2244, %v4636
    %v4638 = vand.u32 %v4637, 4294901760
    %4639 = vmatpush1.msra.mxu0 %v4638
    %v4640 = vand.u32 %v2247, 4294901760
    %v4641 = vsub.f32 %v2247, %v4640
    %v4642 = vand.u32 %v4641, 4294901760
    %4643 = vmatprep.subr.mxu0 %v4642
    %v4644 = vand.u32 %v2246, 4294901760
    %v4645 = vsub.f32 %v2246, %v4644
    %v4646 = vand.u32 %v4645, 4294901760
    %4647 = vmatpush1.msra.mxu0 %v4646
    %v4648 = vand.u32 %v2249, 4294901760
    %v4649 = vsub.f32 %v2249, %v4648
    %v4650 = vand.u32 %v4649, 4294901760
    %4651 = vmatprep.subr.mxu0 %v4650
    %v4652 = vand.u32 %v2248, 4294901760
    %v4653 = vsub.f32 %v2248, %v4652
    %v4654 = vand.u32 %v4653, 4294901760
    %4655 = vmatpush1.msra.mxu0 %v4654
    %v4656 = vand.u32 %v2251, 4294901760
    %v4657 = vsub.f32 %v2251, %v4656
    %v4658 = vand.u32 %v4657, 4294901760
    %4659 = vmatprep.subr.mxu0 %v4658
    %v4660 = vand.u32 %v2250, 4294901760
    %v4661 = vsub.f32 %v2250, %v4660
    %v4662 = vand.u32 %v4661, 4294901760
    %4663 = vmatpush1.msra.mxu0 %v4662
    %v4664 = vand.u32 %v2253, 4294901760
    %v4665 = vsub.f32 %v2253, %v4664
    %v4666 = vand.u32 %v4665, 4294901760
    %4667 = vmatprep.subr.mxu0 %v4666
    %v4668 = vand.u32 %v2252, 4294901760
    %v4669 = vsub.f32 %v2252, %v4668
    %v4670 = vand.u32 %v4669, 4294901760
    %4671 = vmatpush1.msra.mxu0 %v4670
    %v4672 = vand.u32 %v2255, 4294901760
    %v4673 = vsub.f32 %v2255, %v4672
    %v4674 = vand.u32 %v4673, 4294901760
    %4675 = vmatprep.subr.mxu0 %v4674
    %v4676 = vand.u32 %v2254, 4294901760
    %v4677 = vsub.f32 %v2254, %v4676
    %v4678 = vand.u32 %v4677, 4294901760
    %4679 = vmatpush1.msra.mxu0 %v4678
    %v4680 = vand.u32 %v2125, 4294901760
    %4681 = vmatprep.mubr.f32.mxu0 %v4680
    %v4682 = vand.u32 %v2122, 4294901760
    %4683 = vmatmul.mubr.f32.gmra.mrb[0].mxu0 %v4682
    %v4684 = vpop.f32.mrb[0].mxu0
    %v4685 = vadd.f32 %v4420, %v4684
    %v4686 = vpop.f32.mrb[0].mxu0
    %v4687 = vadd.f32 %v4422, %v4686
    %4688 = vdwg.mxu0
    %v4689 = vand.u32 %v2193, 4294901760
    %4690 = vmatprep.subr.mxu0 %v4689
    %v4691 = vand.u32 %v2192, 4294901760
    %4692 = vmatpush1.msra.mxu0 %v4691
    %v4693 = vand.u32 %v2195, 4294901760
    %4694 = vmatprep.subr.mxu0 %v4693
    %v4695 = vand.u32 %v2194, 4294901760
    %4696 = vmatpush1.msra.mxu0 %v4695
    %v4697 = vand.u32 %v2197, 4294901760
    %4698 = vmatprep.subr.mxu0 %v4697
    %v4699 = vand.u32 %v2196, 4294901760
    %4700 = vmatpush1.msra.mxu0 %v4699
    %v4701 = vand.u32 %v2199, 4294901760
    %4702 = vmatprep.subr.mxu0 %v4701
    %v4703 = vand.u32 %v2198, 4294901760
    %4704 = vmatpush1.msra.mxu0 %v4703
    %v4705 = vand.u32 %v2201, 4294901760
    %4706 = vmatprep.subr.mxu0 %v4705
    %v4707 = vand.u32 %v2200, 4294901760
    %4708 = vmatpush1.msra.mxu0 %v4707
    %v4709 = vand.u32 %v2203, 4294901760
    %4710 = vmatprep.subr.mxu0 %v4709
    %v4711 = vand.u32 %v2202, 4294901760
    %4712 = vmatpush1.msra.mxu0 %v4711
    %v4713 = vand.u32 %v2205, 4294901760
    %4714 = vmatprep.subr.mxu0 %v4713
    %v4715 = vand.u32 %v2204, 4294901760
    %4716 = vmatpush1.msra.mxu0 %v4715
    %v4717 = vand.u32 %v2207, 4294901760
    %4718 = vmatprep.subr.mxu0 %v4717
    %v4719 = vand.u32 %v2206, 4294901760
    %4720 = vmatpush1.msra.mxu0 %v4719
    %v4721 = vand.u32 %v2209, 4294901760
    %4722 = vmatprep.subr.mxu0 %v4721
    %v4723 = vand.u32 %v2208, 4294901760
    %4724 = vmatpush1.msra.mxu0 %v4723
    %v4725 = vand.u32 %v2211, 4294901760
    %4726 = vmatprep.subr.mxu0 %v4725
    %v4727 = vand.u32 %v2210, 4294901760
    %4728 = vmatpush1.msra.mxu0 %v4727
    %v4729 = vand.u32 %v2213, 4294901760
    %4730 = vmatprep.subr.mxu0 %v4729
    %v4731 = vand.u32 %v2212, 4294901760
    %4732 = vmatpush1.msra.mxu0 %v4731
    %v4733 = vand.u32 %v2215, 4294901760
    %4734 = vmatprep.subr.mxu0 %v4733
    %v4735 = vand.u32 %v2214, 4294901760
    %4736 = vmatpush1.msra.mxu0 %v4735
    %v4737 = vand.u32 %v2217, 4294901760
    %4738 = vmatprep.subr.mxu0 %v4737
    %v4739 = vand.u32 %v2216, 4294901760
    %4740 = vmatpush1.msra.mxu0 %v4739
    %v4741 = vand.u32 %v2219, 4294901760
    %4742 = vmatprep.subr.mxu0 %v4741
    %v4743 = vand.u32 %v2218, 4294901760
    %4744 = vmatpush1.msra.mxu0 %v4743
    %v4745 = vand.u32 %v2221, 4294901760
    %4746 = vmatprep.subr.mxu0 %v4745
    %v4747 = vand.u32 %v2220, 4294901760
    %4748 = vmatpush1.msra.mxu0 %v4747
    %v4749 = vand.u32 %v2223, 4294901760
    %4750 = vmatprep.subr.mxu0 %v4749
    %v4751 = vand.u32 %v2222, 4294901760
    %4752 = vmatpush1.msra.mxu0 %v4751
    %v4753 = vand.u32 %v2225, 4294901760
    %4754 = vmatprep.subr.mxu0 %v4753
    %v4755 = vand.u32 %v2224, 4294901760
    %4756 = vmatpush1.msra.mxu0 %v4755
    %v4757 = vand.u32 %v2227, 4294901760
    %4758 = vmatprep.subr.mxu0 %v4757
    %v4759 = vand.u32 %v2226, 4294901760
    %4760 = vmatpush1.msra.mxu0 %v4759
    %v4761 = vand.u32 %v2229, 4294901760
    %4762 = vmatprep.subr.mxu0 %v4761
    %v4763 = vand.u32 %v2228, 4294901760
    %4764 = vmatpush1.msra.mxu0 %v4763
    %v4765 = vand.u32 %v2231, 4294901760
    %4766 = vmatprep.subr.mxu0 %v4765
    %v4767 = vand.u32 %v2230, 4294901760
    %4768 = vmatpush1.msra.mxu0 %v4767
    %v4769 = vand.u32 %v2233, 4294901760
    %4770 = vmatprep.subr.mxu0 %v4769
    %v4771 = vand.u32 %v2232, 4294901760
    %4772 = vmatpush1.msra.mxu0 %v4771
    %v4773 = vand.u32 %v2235, 4294901760
    %4774 = vmatprep.subr.mxu0 %v4773
    %v4775 = vand.u32 %v2234, 4294901760
    %4776 = vmatpush1.msra.mxu0 %v4775
    %v4777 = vand.u32 %v2237, 4294901760
    %4778 = vmatprep.subr.mxu0 %v4777
    %v4779 = vand.u32 %v2236, 4294901760
    %4780 = vmatpush1.msra.mxu0 %v4779
    %v4781 = vand.u32 %v2239, 4294901760
    %4782 = vmatprep.subr.mxu0 %v4781
    %v4783 = vand.u32 %v2238, 4294901760
    %4784 = vmatpush1.msra.mxu0 %v4783
    %v4785 = vand.u32 %v2241, 4294901760
    %4786 = vmatprep.subr.mxu0 %v4785
    %v4787 = vand.u32 %v2240, 4294901760
    %4788 = vmatpush1.msra.mxu0 %v4787
    %v4789 = vand.u32 %v2243, 4294901760
    %4790 = vmatprep.subr.mxu0 %v4789
    %v4791 = vand.u32 %v2242, 4294901760
    %4792 = vmatpush1.msra.mxu0 %v4791
    %v4793 = vand.u32 %v2245, 4294901760
    %4794 = vmatprep.subr.mxu0 %v4793
    %v4795 = vand.u32 %v2244, 4294901760
    %4796 = vmatpush1.msra.mxu0 %v4795
    %v4797 = vand.u32 %v2247, 4294901760
    %4798 = vmatprep.subr.mxu0 %v4797
    %v4799 = vand.u32 %v2246, 4294901760
    %4800 = vmatpush1.msra.mxu0 %v4799
    %v4801 = vand.u32 %v2249, 4294901760
    %4802 = vmatprep.subr.mxu0 %v4801
    %v4803 = vand.u32 %v2248, 4294901760
    %4804 = vmatpush1.msra.mxu0 %v4803
    %v4805 = vand.u32 %v2251, 4294901760
    %4806 = vmatprep.subr.mxu0 %v4805
    %v4807 = vand.u32 %v2250, 4294901760
    %4808 = vmatpush1.msra.mxu0 %v4807
    %v4809 = vand.u32 %v2253, 4294901760
    %4810 = vmatprep.subr.mxu0 %v4809
    %v4811 = vand.u32 %v2252, 4294901760
    %4812 = vmatpush1.msra.mxu0 %v4811
    %v4813 = vand.u32 %v2255, 4294901760
    %4814 = vmatprep.subr.mxu0 %v4813
    %v4815 = vand.u32 %v2254, 4294901760
    %4816 = vmatpush1.msra.mxu0 %v4815
    %v4817 = vand.u32 %v2125, 4294901760
    %4818 = vmatprep.mubr.f32.mxu0 %v4817
    %v4819 = vand.u32 %v2122, 4294901760
    %4820 = vmatmul.mubr.f32.gmra.mrb[0].mxu0 %v4819
    %v4821 = vpop.f32.mrb[0].mxu0
    %v4822 = vadd.f32 %v4685, %v4821
    %v4823 = vpop.f32.mrb[0].mxu0
    %v4824 = vadd.f32 %v4687, %v4823
    %4825 = vdwg.mxu0
    %v4826 = vxor.u32 %v4822, 2147483648
    %v4827 = vxor.u32 %v4824, 2147483648
    %v4828 = vmul.f32 %v4826, 1.442695
    %v4829 = vpow.pop %v4828
    %v4830 = vmul.f32 %v4827, 1.442695
    %v4831 = vpow.pop %v4830
    %v4832 = vadd.f32 %v4829, 1.0
    %v4833 = vadd.f32 %v4831, 1.0
    %v4834 = vrcp.pop %v4832
    %v4835 = vmul.f32 1.0, %v4834
    %v4836 = vrcp.pop %v4833
    %v4837 = vmul.f32 1.0, %v4836
    %v4840 = vcombine.low %v4835, %v4837
    %v4842 = vunpack.c.l.s4 1966171168
    %v4843 = vunpack.c.0.s8 %v4842
    %v4844 = vlaneseq
    %v4845 = vshrl.u32 %v4844, 7
    %v4846 = vsub.s32 %v4843, %v4845
    %v4847 = vrot.slane %v4840, %v4846
    %v4848 = vcombine.high %v4847, %v4847
    %v4850 = vunpack.c.l.s4 1966171168
    %v4851 = vunpack.c.0.s8 %v4850
    %v4852 = vlaneseq
    %v4853 = vshrl.u32 %v4852, 7
    %v4854 = vsub.s32 %v4851, %v4853
    %v4855 = vrot.slane %v4847, %v4854
    %v4857 = vunpack.c.l.s4 1966171168
    %v4858 = vunpack.c.0.s8 %v4857
    %v4859 = vlaneseq
    %v4860 = vshrl.u32 %v4859, 7
    %v4861 = vsub.s32 %v4858, %v4860
    %v4862 = vrot.slane %v4848, %v4861
    %v4863 = vcombine.high %v4855, %v4855
    %v4864 = vcombine.high %v4862, %v4862
    %v4869 = vadd.f32 %v4855, 1.0
    %v4870 = vadd.f32 %v4862, 1.0
    %v4871 = vadd.f32 %v4863, 1.0
    %v4872 = vadd.f32 %v4864, 1.0
    %v4877 = vlaneseq
    %v4878 = vshrl.u32 %v4877, 7
    %v4879 = vsub.s32 0, %v4878
    %v4880 = vrot.slane %v4869, %v4879
    %v4881 = vlaneseq
    %v4882 = vshrl.u32 %v4881, 7
    %v4883 = vsub.s32 1, %v4882
    %v4884 = vrot.slane %v4869, %v4883
    %v4885 = vlaneseq
    %v4886 = vshrl.u32 %v4885, 7
    %v4887 = vsub.s32 0, %v4886
    %v4888 = vrot.slane %v4870, %v4887
    %v4889 = vlaneseq
    %v4890 = vshrl.u32 %v4889, 7
    %v4891 = vsub.s32 1, %v4890
    %v4892 = vrot.slane %v4870, %v4891
    %v4893 = vlaneseq
    %v4894 = vshrl.u32 %v4893, 7
    %v4895 = vsub.s32 0, %v4894
    %v4896 = vrot.slane %v4871, %v4895
    %v4897 = vlaneseq
    %v4898 = vshrl.u32 %v4897, 7
    %v4899 = vsub.s32 1, %v4898
    %v4900 = vrot.slane %v4871, %v4899
    %v4901 = vlaneseq
    %v4902 = vshrl.u32 %v4901, 7
    %v4903 = vsub.s32 0, %v4902
    %v4904 = vrot.slane %v4872, %v4903
    %v4905 = vlaneseq
    %v4906 = vshrl.u32 %v4905, 7
    %v4907 = vsub.s32 1, %v4906
    %v4908 = vrot.slane %v4872, %v4907
    %v4917 = vmul.f32 %v1911, %v4880
    %v4918 = vmul.f32 %v1912, %v4884
    %v4919 = vmul.f32 %v1913, %v4880
    %v4920 = vmul.f32 %v1914, %v4884
    %v4921 = vmul.f32 %v1915, %v4880
    %v4922 = vmul.f32 %v1916, %v4884
    %v4923 = vmul.f32 %v1917, %v4880
    %v4924 = vmul.f32 %v1918, %v4884
    %v4925 = vmul.f32 %v1919, %v4888
    %v4926 = vmul.f32 %v1920, %v4892
    %v4927 = vmul.f32 %v1921, %v4888
    %v4928 = vmul.f32 %v1922, %v4892
    %v4929 = vmul.f32 %v1923, %v4888
    %v4930 = vmul.f32 %v1924, %v4892
    %v4931 = vmul.f32 %v1925, %v4888
    %v4932 = vmul.f32 %v1926, %v4892
    %v4933 = vmul.f32 %v1927, %v4896
    %v4934 = vmul.f32 %v1928, %v4900
    %v4935 = vmul.f32 %v1929, %v4896
    %v4936 = vmul.f32 %v1930, %v4900
    %v4937 = vmul.f32 %v1931, %v4896
    %v4938 = vmul.f32 %v1932, %v4900
    %v4939 = vmul.f32 %v1933, %v4896
    %v4940 = vmul.f32 %v1934, %v4900
    %v4941 = vmul.f32 %v1935, %v4904
    %v4942 = vmul.f32 %v1936, %v4908
    %v4943 = vmul.f32 %v1937, %v4904
    %v4944 = vmul.f32 %v1938, %v4908
    %v4945 = vmul.f32 %v1939, %v4904
    %v4946 = vmul.f32 %v1940, %v4908
    %v4947 = vmul.f32 %v1941, %v4904
    %v4948 = vmul.f32 %v1942, %v4908
    %4949 = vst [vmem:[#allocation8] sm:$0xff] %v4917
    %4950 = vst [vmem:[#allocation8 + $0x8] sm:$0xff] %v4918
    %4951 = vst [vmem:[#allocation8 + $0x10] sm:$0xff] %v4919
    %4952 = vst [vmem:[#allocation8 + $0x18] sm:$0xff] %v4920
    %4953 = vst [vmem:[#allocation8 + $0x20] sm:$0xff] %v4921
    %4954 = vst [vmem:[#allocation8 + $0x28] sm:$0xff] %v4922
    %4955 = vst [vmem:[#allocation8 + $0x30] sm:$0xff] %v4923
    %4956 = vst [vmem:[#allocation8 + $0x38] sm:$0xff] %v4924
    %4957 = vst [vmem:[#allocation8 + $0x40] sm:$0xff] %v4925
    %4958 = vst [vmem:[#allocation8 + $0x48] sm:$0xff] %v4926
    %4959 = vst [vmem:[#allocation8 + $0x50] sm:$0xff] %v4927
    %4960 = vst [vmem:[#allocation8 + $0x58] sm:$0xff] %v4928
    %4961 = vst [vmem:[#allocation8 + $0x60] sm:$0xff] %v4929
    %4962 = vst [vmem:[#allocation8 + $0x68] sm:$0xff] %v4930
    %4963 = vst [vmem:[#allocation8 + $0x70] sm:$0xff] %v4931
    %4964 = vst [vmem:[#allocation8 + $0x78] sm:$0xff] %v4932
    %4965 = vst [vmem:[#allocation8 + $0x80] sm:$0xff] %v4933
    %4966 = vst [vmem:[#allocation8 + $0x88] sm:$0xff] %v4934
    %4967 = vst [vmem:[#allocation8 + $0x90] sm:$0xff] %v4935
    %4968 = vst [vmem:[#allocation8 + $0x98] sm:$0xff] %v4936
    %4969 = vst [vmem:[#allocation8 + $0xa0] sm:$0xff] %v4937
    %4970 = vst [vmem:[#allocation8 + $0xa8] sm:$0xff] %v4938
    %4971 = vst [vmem:[#allocation8 + $0xb0] sm:$0xff] %v4939
    %4972 = vst [vmem:[#allocation8 + $0xb8] sm:$0xff] %v4940
    %4973 = vst [vmem:[#allocation8 + $0xc0] sm:$0xff] %v4941
    %4974 = vst [vmem:[#allocation8 + $0xc8] sm:$0xff] %v4942
    %4975 = vst [vmem:[#allocation8 + $0xd0] sm:$0xff] %v4943
    %4976 = vst [vmem:[#allocation8 + $0xd8] sm:$0xff] %v4944
    %4977 = vst [vmem:[#allocation8 + $0xe0] sm:$0xff] %v4945
    %4978 = vst [vmem:[#allocation8 + $0xe8] sm:$0xff] %v4946
    %4979 = vst [vmem:[#allocation8 + $0xf0] sm:$0xff] %v4947
    %4980 = vst [vmem:[#allocation8 + $0xf8] sm:$0xff] %v4948
    // Predicated region
    $region34: #{tpu_custom_call.1} parent=1 // pred_check
      _
    $region35: #{tpu_custom_call.1} parent=1 // pred_check_branch
      %4982 = sbr.rel (0) target = $region37
    $region36: #{tpu_custom_call.1} parent=1 // pred_region
      %s4984 = ssub.s32 4096, 4096
      %4985 = vsyncadd [#allocation5], %s4984
      %s4986 = sshll.u32 [#allocation8], 4
      %s4987 = int_to_ptr.vmem [resolvable:$true] %s4986
      %4992 = dma.vmem_to_hbm [thread:$0]  %s4987, 4096, %s6, [#allocation5], 256, 256, 16
    $region37: #{tpu_custom_call.1} parent=1 // pred_fallthru
      _
    // Predicated region
    $region38: #{tpu_custom_call.1} parent=1 // pred_check
      _
    $region39: #{tpu_custom_call.1} parent=1 // pred_check_branch
      %4994 = sbr.rel (0) target = $region41
    $region40: #{tpu_custom_call.1} parent=1 // pred_region
      %4995 = dma.done [#allocation5], 4096
    $region41: #{tpu_custom_call.1} parent=1 // pred_fallthru
      _
    %4996 = vsyncpa [#allocation4], 1
    %4997 = vsyncpa [#allocation7], 1
    %4998 = vsyncpa [#allocation5], 1

// kernel: tpu_custom_call.1
$region0: #{tpu_custom_call.1}
  #allocation0 [shape = 'u32[]', space=smem, size = 0x4, offset = 0x4, fixed_abs, tag = 'smem constant byte address 0x4 - core index']
  #allocation1 [shape = 'u32[144,128]{1,0:T(1,128)}', space=vmem, size = 0x12000, scoped, tag = 'internal scratch']
  #allocation2 [shape = 'f32[1]{0:T(128)S(6)}', space=smem, size = 0x200, scoped, tag = 'scoped memory for tpu_custom_call.1']
  %s0 = inlined_call_operand.hbm [shape: f32[4,32,256], index: 0, kind: input, shape index: {}]
  %s1 = inlined_call_operand.vmem [shape: f32[32,2], index: 1, kind: input, shape index: {}]
  %s2 = inlined_call_operand.vmem [shape: f32[2,2], index: 2, kind: input, shape index: {}]
  %s3 = inlined_call_operand.vmem [shape: f32[2,32], index: 3, kind: input, shape index: {}]
  %s4 = inlined_call_operand.hbm [shape: f32[512,256], index: 4, kind: input, shape index: {}]
  %s5 = inlined_call_operand.<no memory space> [shape: f32[1], index: 5, kind: input, shape index: {}]
  %s6 = inlined_call_operand.hbm [shape: f32[4,32,256], index: 6, kind: output, shape index: {}]
  %s7 = sld [smem:[#allocation0]]
  $region42: #{tpu_custom_call.1} parent=0
    _
  %s9 = ssub.s32 1, %s7
  %s10 = scalar_select 0, %s9, %s7
  %11 = sst [smem:[#allocation2]] %s5
  $region1: #{tpu_custom_call.1} parent=0
    #allocation3 [shape = 'u8[131072]{0}', space=vmem, size = 0x20000, scoped, tag = 'input window, operand 0, single buffered']
    #allocation4 [shape = 's32[1]{0}', space=sflag, size = 0x4, scoped, tag = 'scoped memory for tpu_custom_call.1']
    #allocation5 [shape = 's32[1]{0}', space=sflag, size = 0x4, scoped, tag = 'scoped memory for tpu_custom_call.1']
    #allocation6 [shape = 'u8[524288]{0}', space=vmem, size = 0x80000, scoped, tag = 'input window, operand 4, single buffered']
    #allocation7 [shape = 's32[1]{0}', space=sflag, size = 0x4, scoped, tag = 'scoped memory for tpu_custom_call.1']
    #allocation8 [shape = 'u8[131072]{0}', space=vmem, size = 0x20000, scoped, tag = 'output window, operand 0, single buffered']
    %12 = vsyncpa [#allocation4], 0
    %13 = vsyncpa [#allocation7], 0
    %14 = vsyncpa [#allocation5], 0
    // Predicated region
    $region2: #{tpu_custom_call.1} parent=1 // pred_check
      _
    $region3: #{tpu_custom_call.1} parent=1 // pred_check_branch
      %16 = sbr.rel (0) target = $region5
    $region4: #{tpu_custom_call.1} parent=1 // pred_region
      %s18 = ssub.s32 4096, 4096
      %19 = vsyncadd [#allocation4], %s18
      %s20 = sshll.u32 [#allocation3], 4
      %s21 = int_to_ptr.vmem [resolvable:$true] %s20
      %26 = dma.hbm_to_vmem [thread:$0]  %s0, 4096, %s21, [#allocation4], 256, 256, 16
    $region5: #{tpu_custom_call.1} parent=1 // pred_fallthru
      _
    // Predicated region
    $region6: #{tpu_custom_call.1} parent=1 // pred_check
      _
    $region7: #{tpu_custom_call.1} parent=1 // pred_check_branch
      %28 = sbr.rel (0) target = $region9
    $region8: #{tpu_custom_call.1} parent=1 // pred_region
      _
    $region9: #{tpu_custom_call.1} parent=1 // pred_fallthru
      _
    // Predicated region
    $region10: #{tpu_custom_call.1} parent=1 // pred_check
      _
    $region11: #{tpu_custom_call.1} parent=1 // pred_check_branch
      %30 = sbr.rel (0) target = $region13
    $region12: #{tpu_custom_call.1} parent=1 // pred_region
      _
    $region13: #{tpu_custom_call.1} parent=1 // pred_fallthru
      _
    // Predicated region
    $region14: #{tpu_custom_call.1} parent=1 // pred_check
      _
    $region15: #{tpu_custom_call.1} parent=1 // pred_check_branch
      %32 = sbr.rel (0) target = $region17
    $region16: #{tpu_custom_call.1} parent=1 // pred_region
      _
    $region17: #{tpu_custom_call.1} parent=1 // pred_fallthru
      _
    // Predicated region
    $region18: #{tpu_custom_call.1} parent=1 // pred_check
      _
    $region19: #{tpu_custom_call.1} parent=1 // pred_check_branch
      %34 = sbr.rel (0) target = $region21
    $region20: #{tpu_custom_call.1} parent=1 // pred_region
      %s36 = ssub.s32 16384, 16384
      %37 = vsyncadd [#allocation7], %s36
      %s38 = sshll.u32 [#allocation6], 4
      %s39 = int_to_ptr.vmem [resolvable:$true] %s38
      %44 = dma.hbm_to_vmem [thread:$0]  %s4, 16384, %s39, [#allocation7], 256, 256, 16
    $region21: #{tpu_custom_call.1} parent=1 // pred_fallthru
      _
    // Predicated region
    $region22: #{tpu_custom_call.1} parent=1 // pred_check
      _
    $region23: #{tpu_custom_call.1} parent=1 // pred_check_branch
      %46 = sbr.rel (0) target = $region25
    $region24: #{tpu_custom_call.1} parent=1 // pred_region
      _
    $region25: #{tpu_custom_call.1} parent=1 // pred_fallthru
      _
    // Predicated region
    $region26: #{tpu_custom_call.1} parent=1 // pred_check
      _
    $region27: #{tpu_custom_call.1} parent=1 // pred_check_branch
      %48 = sbr.rel (0) target = $region29
    $region28: #{tpu_custom_call.1} parent=1 // pred_region
      %49 = dma.done [#allocation4], 4096
    $region29: #{tpu_custom_call.1} parent=1 // pred_fallthru
      _
    // Predicated region
    $region30: #{tpu_custom_call.1} parent=1 // pred_check
      _
    $region31: #{tpu_custom_call.1} parent=1 // pred_check_branch
      %51 = sbr.rel (0) target = $region33
    $region32: #{tpu_custom_call.1} parent=1 // pred_region
      %52 = dma.done [#allocation7], 16384
    $region33: #{tpu_custom_call.1} parent=1 // pred_fallthru
      _
    %v53 = vld [vmem:[#allocation3] sm:$0xff]
    %v54 = vld [vmem:[#allocation3 + $0x8] sm:$0xff]
    %v55 = vld [vmem:[#allocation3 + $0x10] sm:$0xff]
    %v56 = vld [vmem:[#allocation3 + $0x18] sm:$0xff]
    %v57 = vld [vmem:[#allocation3 + $0x20] sm:$0xff]
    %v58 = vld [vmem:[#allocation3 + $0x28] sm:$0xff]
    %v59 = vld [vmem:[#allocation3 + $0x30] sm:$0xff]
    %v60 = vld [vmem:[#allocation3 + $0x38] sm:$0xff]
    %v61 = vld [vmem:[#allocation3 + $0x40] sm:$0xff]
    %v62 = vld [vmem:[#allocation3 + $0x48] sm:$0xff]
    %v63 = vld [vmem:[#allocation3 + $0x50] sm:$0xff]
    %v64 = vld [vmem:[#allocation3 + $0x58] sm:$0xff]
    %v65 = vld [vmem:[#allocation3 + $0x60] sm:$0xff]
    %v66 = vld [vmem:[#allocation3 + $0x68] sm:$0xff]
    %v67 = vld [vmem:[#allocation3 + $0x70] sm:$0xff]
    %v68 = vld [vmem:[#allocation3 + $0x78] sm:$0xff]
    %v69 = vld [vmem:[#allocation3 + $0x80] sm:$0xff]
    %v70 = vld [vmem:[#allocation3 + $0x88] sm:$0xff]
    %v71 = vld [vmem:[#allocation3 + $0x90] sm:$0xff]
    %v72 = vld [vmem:[#allocation3 + $0x98] sm:$0xff]
    %v73 = vld [vmem:[#allocation3 + $0xa0] sm:$0xff]
    %v74 = vld [vmem:[#allocation3 + $0xa8] sm:$0xff]
    %v75 = vld [vmem:[#allocation3 + $0xb0] sm:$0xff]
    %v76 = vld [vmem:[#allocation3 + $0xb8] sm:$0xff]
    %v77 = vld [vmem:[#allocation3 + $0xc0] sm:$0xff]
    %v78 = vld [vmem:[#allocation3 + $0xc8] sm:$0xff]
    %v79 = vld [vmem:[#allocation3 + $0xd0] sm:$0xff]
    %v80 = vld [vmem:[#allocation3 + $0xd8] sm:$0xff]
    %v81 = vld [vmem:[#allocation3 + $0xe0] sm:$0xff]
    %v82 = vld [vmem:[#allocation3 + $0xe8] sm:$0xff]
    %v83 = vld [vmem:[#allocation3 + $0xf0] sm:$0xff]
    %v84 = vld [vmem:[#allocation3 + $0xf8] sm:$0xff]
    %v85 = vadd.f32 %v53, %v54
    %86 = vadd.xlane.f32.xlu0 %v85
    %v87 = vpop.xlane.xlu0 %86
    %v88 = vadd.f32 %v55, %v56
    %89 = vadd.xlane.f32.xlu0 %v88
    %v90 = vpop.xlane.xlu0 %89
    %v91 = vadd.f32 %v57, %v58
    %92 = vadd.xlane.f32.xlu0 %v91
    %v93 = vpop.xlane.xlu0 %92
    %v94 = vadd.f32 %v59, %v60
    %95 = vadd.xlane.f32.xlu0 %v94
    %v96 = vpop.xlane.xlu0 %95
    %v97 = vadd.f32 %v61, %v62
    %98 = vadd.xlane.f32.xlu0 %v97
    %v99 = vpop.xlane.xlu0 %98
    %v100 = vadd.f32 %v63, %v64
    %101 = vadd.xlane.f32.xlu0 %v100
    %v102 = vpop.xlane.xlu0 %101
    %v103 = vadd.f32 %v65, %v66
    %104 = vadd.xlane.f32.xlu0 %v103
    %v105 = vpop.xlane.xlu0 %104
    %v106 = vadd.f32 %v67, %v68
    %107 = vadd.xlane.f32.xlu0 %v106
    %v108 = vpop.xlane.xlu0 %107
    %v109 = vadd.f32 %v69, %v70
    %110 = vadd.xlane.f32.xlu0 %v109
    %v111 = vpop.xlane.xlu0 %110
    %v112 = vadd.f32 %v71, %v72
    %113 = vadd.xlane.f32.xlu0 %v112
    %v114 = vpop.xlane.xlu0 %113
    %v115 = vadd.f32 %v73, %v74
    %116 = vadd.xlane.f32.xlu0 %v115
    %v117 = vpop.xlane.xlu0 %116
    %v118 = vadd.f32 %v75, %v76
    %119 = vadd.xlane.f32.xlu0 %v118
    %v120 = vpop.xlane.xlu0 %119
    %v121 = vadd.f32 %v77, %v78
    %122 = vadd.xlane.f32.xlu0 %v121
    %v123 = vpop.xlane.xlu0 %122
    %v124 = vadd.f32 %v79, %v80
    %125 = vadd.xlane.f32.xlu0 %v124
    %v126 = vpop.xlane.xlu0 %125
    %v127 = vadd.f32 %v81, %v82
    %128 = vadd.xlane.f32.xlu0 %v127
    %v129 = vpop.xlane.xlu0 %128
    %v130 = vadd.f32 %v83, %v84
    %131 = vadd.xlane.f32.xlu0 %v130
    %v132 = vpop.xlane.xlu0 %131
    %v133 = vrcp.pop 256.0
    %v134 = vmul.f32 %v87, %v133
    %v135 = vmul.f32 %v90, %v133
    %v136 = vmul.f32 %v93, %v133
    %v137 = vmul.f32 %v96, %v133
    %v138 = vmul.f32 %v99, %v133
    %v139 = vmul.f32 %v102, %v133
    %v140 = vmul.f32 %v105, %v133
    %v141 = vmul.f32 %v108, %v133
    %v142 = vmul.f32 %v111, %v133
    %v143 = vmul.f32 %v114, %v133
    %v144 = vmul.f32 %v117, %v133
    %v145 = vmul.f32 %v120, %v133
    %v146 = vmul.f32 %v123, %v133
    %v147 = vmul.f32 %v126, %v133
    %v148 = vmul.f32 %v129, %v133
    %v149 = vmul.f32 %v132, %v133
    %v150 = vmax.f32 %v53, %v54
    %151 = vmax.xlane.f32.xlu0 %v150
    %v152 = vpop.xlane.xlu0 %151
    %v153 = vmax.f32 %v55, %v56
    %154 = vmax.xlane.f32.xlu0 %v153
    %v155 = vpop.xlane.xlu0 %154
    %v156 = vmax.f32 %v57, %v58
    %157 = vmax.xlane.f32.xlu0 %v156
    %v158 = vpop.xlane.xlu0 %157
    %v159 = vmax.f32 %v59, %v60
    %160 = vmax.xlane.f32.xlu0 %v159
    %v161 = vpop.xlane.xlu0 %160
    %v162 = vmax.f32 %v61, %v62
    %163 = vmax.xlane.f32.xlu0 %v162
    %v164 = vpop.xlane.xlu0 %163
    %v165 = vmax.f32 %v63, %v64
    %166 = vmax.xlane.f32.xlu0 %v165
    %v167 = vpop.xlane.xlu0 %166
    %v168 = vmax.f32 %v65, %v66
    %169 = vmax.xlane.f32.xlu0 %v168
    %v170 = vpop.xlane.xlu0 %169
    %v171 = vmax.f32 %v67, %v68
    %172 = vmax.xlane.f32.xlu0 %v171
    %v173 = vpop.xlane.xlu0 %172
    %v174 = vmax.f32 %v69, %v70
    %175 = vmax.xlane.f32.xlu0 %v174
    %v176 = vpop.xlane.xlu0 %175
    %v177 = vmax.f32 %v71, %v72
    %178 = vmax.xlane.f32.xlu0 %v177
    %v179 = vpop.xlane.xlu0 %178
    %v180 = vmax.f32 %v73, %v74
    %181 = vmax.xlane.f32.xlu0 %v180
    %v182 = vpop.xlane.xlu0 %181
    %v183 = vmax.f32 %v75, %v76
    %184 = vmax.xlane.f32.xlu0 %v183
    %v185 = vpop.xlane.xlu0 %184
    %v186 = vmax.f32 %v77, %v78
    %187 = vmax.xlane.f32.xlu0 %v186
    %v188 = vpop.xlane.xlu0 %187
    %v189 = vmax.f32 %v79, %v80
    %190 = vmax.xlane.f32.xlu0 %v189
    %v191 = vpop.xlane.xlu0 %190
    %v192 = vmax.f32 %v81, %v82
    %193 = vmax.xlane.f32.xlu0 %v192
    %v194 = vpop.xlane.xlu0 %193
    %v195 = vmax.f32 %v83, %v84
    %196 = vmax.xlane.f32.xlu0 %v195
    %v197 = vpop.xlane.xlu0 %196
    %v214 = vlaneseq
    %v215 = vand.u32 %v214, 127
    %v216 = vlaneseq
    %v217 = vshrl.u32 %v216, 7
    %v218 = vsub.s32 %v215, %v217
    %v219 = vrot.slane %v134, %v218
    %v220 = vadd.s32 %v215, 4294967288
    %v221 = vlaneseq
    %v222 = vshrl.u32 %v221, 7
    %v223 = vsub.s32 %v220, %v222
    %v224 = vrot.slane %v135, %v223
    %vm225 = vcmask 130112
    %v226 = vsel %vm225, %v224, %v219
    %v227 = vadd.s32 %v215, 4294967280
    %v228 = vlaneseq
    %v229 = vshrl.u32 %v228, 7
    %v230 = vsub.s32 %v227, %v229
    %v231 = vrot.slane %v136, %v230
    %vm232 = vcmask 195712
    %v233 = vsel %vm232, %v231, %v226
    %v234 = vadd.s32 %v215, 4294967272
    %v235 = vlaneseq
    %v236 = vshrl.u32 %v235, 7
    %v237 = vsub.s32 %v234, %v236
    %v238 = vrot.slane %v137, %v237
    %vm239 = vcmask 261312
    %v240 = vsel %vm239, %v238, %v233
    %v241 = vlaneseq
    %v242 = vshrl.u32 %v241, 7
    %v243 = vsub.s32 %v215, %v242
    %v244 = vrot.slane %v138, %v243
    %v245 = vlaneseq
    %v246 = vshrl.u32 %v245, 7
    %v247 = vsub.s32 %v220, %v246
    %v248 = vrot.slane %v139, %v247
    %v249 = vsel %vm225, %v248, %v244
    %v250 = vlaneseq
    %v251 = vshrl.u32 %v250, 7
    %v252 = vsub.s32 %v227, %v251
    %v253 = vrot.slane %v140, %v252
    %v254 = vsel %vm232, %v253, %v249
    %v255 = vlaneseq
    %v256 = vshrl.u32 %v255, 7
    %v257 = vsub.s32 %v234, %v256
    %v258 = vrot.slane %v141, %v257
    %v259 = vsel %vm239, %v258, %v254
    %v260 = vlaneseq
    %v261 = vshrl.u32 %v260, 7
    %v262 = vsub.s32 %v215, %v261
    %v263 = vrot.slane %v142, %v262
    %v264 = vlaneseq
    %v265 = vshrl.u32 %v264, 7
    %v266 = vsub.s32 %v220, %v265
    %v267 = vrot.slane %v143, %v266
    %v268 = vsel %vm225, %v267, %v263
    %v269 = vlaneseq
    %v270 = vshrl.u32 %v269, 7
    %v271 = vsub.s32 %v227, %v270
    %v272 = vrot.slane %v144, %v271
    %v273 = vsel %vm232, %v272, %v268
    %v274 = vlaneseq
    %v275 = vshrl.u32 %v274, 7
    %v276 = vsub.s32 %v234, %v275
    %v277 = vrot.slane %v145, %v276
    %v278 = vsel %vm239, %v277, %v273
    %v279 = vlaneseq
    %v280 = vshrl.u32 %v279, 7
    %v281 = vsub.s32 %v215, %v280
    %v282 = vrot.slane %v146, %v281
    %v283 = vlaneseq
    %v284 = vshrl.u32 %v283, 7
    %v285 = vsub.s32 %v220, %v284
    %v286 = vrot.slane %v147, %v285
    %v287 = vsel %vm225, %v286, %v282
    %v288 = vlaneseq
    %v289 = vshrl.u32 %v288, 7
    %v290 = vsub.s32 %v227, %v289
    %v291 = vrot.slane %v148, %v290
    %v292 = vsel %vm232, %v291, %v287
    %v293 = vlaneseq
    %v294 = vshrl.u32 %v293, 7
    %v295 = vsub.s32 %v234, %v294
    %v296 = vrot.slane %v149, %v295
    %v297 = vsel %vm239, %v296, %v292
    %vm298 = vcmask 1041409
    %v299 = vsel %vm298, %v259, %v240
    %vm300 = vcmask 1042434
    %v301 = vsel %vm300, %v278, %v299
    %vm302 = vcmask 1043459
    %v303 = vsel %vm302, %v297, %v301
    %v321 = vlaneseq
    %v322 = vshrl.u32 %v321, 7
    %v323 = vsub.s32 %v215, %v322
    %v324 = vrot.slane %v152, %v323
    %v325 = vlaneseq
    %v326 = vshrl.u32 %v325, 7
    %v327 = vsub.s32 %v220, %v326
    %v328 = vrot.slane %v155, %v327
    %v329 = vsel %vm225, %v328, %v324
    %v330 = vlaneseq
    %v331 = vshrl.u32 %v330, 7
    %v332 = vsub.s32 %v227, %v331
    %v333 = vrot.slane %v158, %v332
    %v334 = vsel %vm232, %v333, %v329
    %v335 = vlaneseq
    %v336 = vshrl.u32 %v335, 7
    %v337 = vsub.s32 %v234, %v336
    %v338 = vrot.slane %v161, %v337
    %v339 = vsel %vm239, %v338, %v334
    %v340 = vlaneseq
    %v341 = vshrl.u32 %v340, 7
    %v342 = vsub.s32 %v215, %v341
    %v343 = vrot.slane %v164, %v342
    %v344 = vlaneseq
    %v345 = vshrl.u32 %v344, 7
    %v346 = vsub.s32 %v220, %v345
    %v347 = vrot.slane %v167, %v346
    %v348 = vsel %vm225, %v347, %v343
    %v349 = vlaneseq
    %v350 = vshrl.u32 %v349, 7
    %v351 = vsub.s32 %v227, %v350
    %v352 = vrot.slane %v170, %v351
    %v353 = vsel %vm232, %v352, %v348
    %v354 = vlaneseq
    %v355 = vshrl.u32 %v354, 7
    %v356 = vsub.s32 %v234, %v355
    %v357 = vrot.slane %v173, %v356
    %v358 = vsel %vm239, %v357, %v353
    %v359 = vlaneseq
    %v360 = vshrl.u32 %v359, 7
    %v361 = vsub.s32 %v215, %v360
    %v362 = vrot.slane %v176, %v361
    %v363 = vlaneseq
    %v364 = vshrl.u32 %v363, 7
    %v365 = vsub.s32 %v220, %v364
    %v366 = vrot.slane %v179, %v365
    %v367 = vsel %vm225, %v366, %v362
    %v368 = vlaneseq
    %v369 = vshrl.u32 %v368, 7
    %v370 = vsub.s32 %v227, %v369
    %v371 = vrot.slane %v182, %v370
    %v372 = vsel %vm232, %v371, %v367
    %v373 = vlaneseq
    %v374 = vshrl.u32 %v373, 7
    %v375 = vsub.s32 %v234, %v374
    %v376 = vrot.slane %v185, %v375
    %v377 = vsel %vm239, %v376, %v372
    %v378 = vlaneseq
    %v379 = vshrl.u32 %v378, 7
    %v380 = vsub.s32 %v215, %v379
    %v381 = vrot.slane %v188, %v380
    %v382 = vlaneseq
    %v383 = vshrl.u32 %v382, 7
    %v384 = vsub.s32 %v220, %v383
    %v385 = vrot.slane %v191, %v384
    %v386 = vsel %vm225, %v385, %v381
    %v387 = vlaneseq
    %v388 = vshrl.u32 %v387, 7
    %v389 = vsub.s32 %v227, %v388
    %v390 = vrot.slane %v194, %v389
    %v391 = vsel %vm232, %v390, %v386
    %v392 = vlaneseq
    %v393 = vshrl.u32 %v392, 7
    %v394 = vsub.s32 %v234, %v393
    %v395 = vrot.slane %v197, %v394
    %v396 = vsel %vm239, %v395, %v391
    %vm397 = vcmask 1045509
    %v398 = vsel %vm397, %v358, %v339
    %vm399 = vcmask 1046534
    %v400 = vsel %vm399, %v377, %v398
    %vm401 = vcmask 1047559
    %v402 = vsel %vm401, %v396, %v400
    %vm404 = vcmask 1043456
    %v405 = vsel %vm404, %v303, %v402
    %v406 = vld [vmem:[%s1] sm:$0xff]
    %v407 = vld [vmem:[%s1 + $0x8] sm:$0xff]
    %v408 = vld [vmem:[%s1 + $0x10] sm:$0xff]
    %v409 = vld [vmem:[%s1 + $0x18] sm:$0xff]
    %vm410 = vcmask 261120
    %v412 = vsel %vm410, %v405, 0
    %414 = vmatprep.subr.mxu0 0.0
    %415 = vmatpush1.msra.mxu0 %v406
    %416 = vmatprep.subr.mxu0 0.0
    %417 = vmatpush1.msra.mxu0 %v407
    %418 = vmatprep.subr.mxu0 0.0
    %419 = vmatpush1.msra.mxu0 %v408
    %420 = vmatprep.subr.mxu0 0.0
    %421 = vmatpush1.msra.mxu0 %v409
    %422 = vmatprep.subr.mxu0 0.0
    %423 = vmatpush1.msra.mxu0 0.0
    %424 = vmatprep.subr.mxu0 0.0
    %425 = vmatpush1.msra.mxu0 0.0
    %426 = vmatprep.subr.mxu0 0.0
    %427 = vmatpush1.msra.mxu0 0.0
    %428 = vmatprep.subr.mxu0 0.0
    %429 = vmatpush1.msra.mxu0 0.0
    %430 = vmatprep.subr.mxu0 0.0
    %431 = vmatpush1.msra.mxu0 0.0
    %432 = vmatprep.subr.mxu0 0.0
    %433 = vmatpush1.msra.mxu0 0.0
    %434 = vmatprep.subr.mxu0 0.0
    %435 = vmatpush1.msra.mxu0 0.0
    %436 = vmatprep.subr.mxu0 0.0
    %437 = vmatpush1.msra.mxu0 0.0
    %438 = vmatprep.subr.mxu0 0.0
    %439 = vmatpush1.msra.mxu0 0.0
    %440 = vmatprep.subr.mxu0 0.0
    %441 = vmatpush1.msra.mxu0 0.0
    %442 = vmatprep.subr.mxu0 0.0
    %443 = vmatpush1.msra.mxu0 0.0
    %444 = vmatprep.subr.mxu0 0.0
    %445 = vmatpush1.msra.mxu0 0.0
    %446 = vmatprep.subr.mxu0 0.0
    %447 = vmatpush1.msra.mxu0 0.0
    %448 = vmatprep.subr.mxu0 0.0
    %449 = vmatpush1.msra.mxu0 0.0
    %450 = vmatprep.subr.mxu0 0.0
    %451 = vmatpush1.msra.mxu0 0.0
    %452 = vmatprep.subr.mxu0 0.0
    %453 = vmatpush1.msra.mxu0 0.0
    %454 = vmatprep.subr.mxu0 0.0
    %455 = vmatpush1.msra.mxu0 0.0
    %456 = vmatprep.subr.mxu0 0.0
    %457 = vmatpush1.msra.mxu0 0.0
    %458 = vmatprep.subr.mxu0 0.0
    %459 = vmatpush1.msra.mxu0 0.0
    %460 = vmatprep.subr.mxu0 0.0
    %461 = vmatpush1.msra.mxu0 0.0
    %462 = vmatprep.subr.mxu0 0.0
    %463 = vmatpush1.msra.mxu0 0.0
    %464 = vmatprep.subr.mxu0 0.0
    %465 = vmatpush1.msra.mxu0 0.0
    %466 = vmatprep.subr.mxu0 0.0
    %467 = vmatpush1.msra.mxu0 0.0
    %468 = vmatprep.subr.mxu0 0.0
    %469 = vmatpush1.msra.mxu0 0.0
    %470 = vmatprep.subr.mxu0 0.0
    %471 = vmatpush1.msra.mxu0 0.0
    %472 = vmatprep.subr.mxu0 0.0
    %473 = vmatpush1.msra.mxu0 0.0
    %474 = vmatprep.subr.mxu0 0.0
    %475 = vmatpush1.msra.mxu0 0.0
    %476 = vmatprep.subr.mxu0 0.0
    %477 = vmatpush1.msra.mxu0 0.0
    %478 = vmatprep.mubr.f32.mxu0 0.0
    %479 = vmatmul.mubr.f32.gmra.mrb[0].mxu0 %v412
    %v480 = vpop.f32.mrb[0].mxu0
    %v481 = vadd.f32 0.0, %v480
    %v482 = vpop.f32.mrb[0].mxu0
    %483 = vdwg.mxu0
    %v484 = vmax.f32 %v481, 0.0
    %v485 = vld [vmem:[%s2] sm:$0x3]
    %vm486 = vcmask 15360
    %v488 = vsel %vm486, %v484, 0
    %vm490 = vcmask 1041408
    %v492 = vsel %vm490, %v485, 0
    %494 = vmatprep.subr.mxu0 0.0
    %495 = vmatpush1.msra.mxu0 %v492
    %496 = vmatprep.subr.mxu0 0.0
    %497 = vmatpush1.msra.mxu0 0.0
    %498 = vmatprep.subr.mxu0 0.0
    %499 = vmatpush1.msra.mxu0 0.0
    %500 = vmatprep.subr.mxu0 0.0
    %501 = vmatpush1.msra.mxu0 0.0
    %502 = vmatprep.subr.mxu0 0.0
    %503 = vmatpush1.msra.mxu0 0.0
    %504 = vmatprep.subr.mxu0 0.0
    %505 = vmatpush1.msra.mxu0 0.0
    %506 = vmatprep.subr.mxu0 0.0
    %507 = vmatpush1.msra.mxu0 0.0
    %508 = vmatprep.subr.mxu0 0.0
    %509 = vmatpush1.msra.mxu0 0.0
    %510 = vmatprep.subr.mxu0 0.0
    %511 = vmatpush1.msra.mxu0 0.0
    %512 = vmatprep.subr.mxu0 0.0
    %513 = vmatpush1.msra.mxu0 0.0
    %514 = vmatprep.subr.mxu0 0.0
    %515 = vmatpush1.msra.mxu0 0.0
    %516 = vmatprep.subr.mxu0 0.0
    %517 = vmatpush1.msra.mxu0 0.0
    %518 = vmatprep.subr.mxu0 0.0
    %519 = vmatpush1.msra.mxu0 0.0
    %520 = vmatprep.subr.mxu0 0.0
    %521 = vmatpush1.msra.mxu0 0.0
    %522 = vmatprep.subr.mxu0 0.0
    %523 = vmatpush1.msra.mxu0 0.0
    %524 = vmatprep.subr.mxu0 0.0
    %525 = vmatpush1.msra.mxu0 0.0
    %526 = vmatprep.subr.mxu0 0.0
    %527 = vmatpush1.msra.mxu0 0.0
    %528 = vmatprep.subr.mxu0 0.0
    %529 = vmatpush1.msra.mxu0 0.0
    %530 = vmatprep.subr.mxu0 0.0
    %531 = vmatpush1.msra.mxu0 0.0
    %532 = vmatprep.subr.mxu0 0.0
    %533 = vmatpush1.msra.mxu0 0.0
    %534 = vmatprep.subr.mxu0 0.0
    %535 = vmatpush1.msra.mxu0 0.0
    %536 = vmatprep.subr.mxu0 0.0
    %537 = vmatpush1.msra.mxu0 0.0
    %538 = vmatprep.subr.mxu0 0.0
    %539 = vmatpush1.msra.mxu0 0.0
    %540 = vmatprep.subr.mxu0 0.0
    %541 = vmatpush1.msra.mxu0 0.0
    %542 = vmatprep.subr.mxu0 0.0
    %543 = vmatpush1.msra.mxu0 0.0
    %544 = vmatprep.subr.mxu0 0.0
    %545 = vmatpush1.msra.mxu0 0.0
    %546 = vmatprep.subr.mxu0 0.0
    %547 = vmatpush1.msra.mxu0 0.0
    %548 = vmatprep.subr.mxu0 0.0
    %549 = vmatpush1.msra.mxu0 0.0
    %550 = vmatprep.subr.mxu0 0.0
    %551 = vmatpush1.msra.mxu0 0.0
    %552 = vmatprep.subr.mxu0 0.0
    %553 = vmatpush1.msra.mxu0 0.0
    %554 = vmatprep.subr.mxu0 0.0
    %555 = vmatpush1.msra.mxu0 0.0
    %556 = vmatprep.subr.mxu0 0.0
    %557 = vmatpush1.msra.mxu0 0.0
    %558 = vmatprep.mubr.f32.mxu0 0.0
    %559 = vmatmul.mubr.f32.gmra.mrb[0].mxu0 %v488
    %v560 = vpop.f32.mrb[0].mxu0
    %v561 = vadd.f32 0.0, %v560
    %v562 = vpop.f32.mrb[0].mxu0
    %563 = vdwg.mxu0
    %v564 = vmax.f32 %v561, 0.0
    %v565 = vld [vmem:[%s3] sm:$0x3]
    %v567 = vsel %vm486, %v564, 0
    %v570 = vsel %vm490, %v565, 0
    %572 = vmatprep.subr.mxu0 0.0
    %573 = vmatpush1.msra.mxu0 %v570
    %574 = vmatprep.subr.mxu0 0.0
    %575 = vmatpush1.msra.mxu0 0.0
    %576 = vmatprep.subr.mxu0 0.0
    %577 = vmatpush1.msra.mxu0 0.0
    %578 = vmatprep.subr.mxu0 0.0
    %579 = vmatpush1.msra.mxu0 0.0
    %580 = vmatprep.subr.mxu0 0.0
    %581 = vmatpush1.msra.mxu0 0.0
    %582 = vmatprep.subr.mxu0 0.0
    %583 = vmatpush1.msra.mxu0 0.0
    %584 = vmatprep.subr.mxu0 0.0
    %585 = vmatpush1.msra.mxu0 0.0
    %586 = vmatprep.subr.mxu0 0.0
    %587 = vmatpush1.msra.mxu0 0.0
    %588 = vmatprep.subr.mxu0 0.0
    %589 = vmatpush1.msra.mxu0 0.0
    %590 = vmatprep.subr.mxu0 0.0
    %591 = vmatpush1.msra.mxu0 0.0
    %592 = vmatprep.subr.mxu0 0.0
    %593 = vmatpush1.msra.mxu0 0.0
    %594 = vmatprep.subr.mxu0 0.0
    %595 = vmatpush1.msra.mxu0 0.0
    %596 = vmatprep.subr.mxu0 0.0
    %597 = vmatpush1.msra.mxu0 0.0
    %598 = vmatprep.subr.mxu0 0.0
    %599 = vmatpush1.msra.mxu0 0.0
    %600 = vmatprep.subr.mxu0 0.0
    %601 = vmatpush1.msra.mxu0 0.0
    %602 = vmatprep.subr.mxu0 0.0
    %603 = vmatpush1.msra.mxu0 0.0
    %604 = vmatprep.subr.mxu0 0.0
    %605 = vmatpush1.msra.mxu0 0.0
    %606 = vmatprep.subr.mxu0 0.0
    %607 = vmatpush1.msra.mxu0 0.0
    %608 = vmatprep.subr.mxu0 0.0
    %609 = vmatpush1.msra.mxu0 0.0
    %610 = vmatprep.subr.mxu0 0.0
    %611 = vmatpush1.msra.mxu0 0.0
    %612 = vmatprep.subr.mxu0 0.0
    %613 = vmatpush1.msra.mxu0 0.0
    %614 = vmatprep.subr.mxu0 0.0
    %615 = vmatpush1.msra.mxu0 0.0
    %616 = vmatprep.subr.mxu0 0.0
    %617 = vmatpush1.msra.mxu0 0.0
    %618 = vmatprep.subr.mxu0 0.0
    %619 = vmatpush1.msra.mxu0 0.0
    %620 = vmatprep.subr.mxu0 0.0
    %621 = vmatpush1.msra.mxu0 0.0
    %622 = vmatprep.subr.mxu0 0.0
    %623 = vmatpush1.msra.mxu0 0.0
    %624 = vmatprep.subr.mxu0 0.0
    %625 = vmatpush1.msra.mxu0 0.0
    %626 = vmatprep.subr.mxu0 0.0
    %627 = vmatpush1.msra.mxu0 0.0
    %628 = vmatprep.subr.mxu0 0.0
    %629 = vmatpush1.msra.mxu0 0.0
    %630 = vmatprep.subr.mxu0 0.0
    %631 = vmatpush1.msra.mxu0 0.0
    %632 = vmatprep.subr.mxu0 0.0
    %633 = vmatpush1.msra.mxu0 0.0
    %634 = vmatprep.subr.mxu0 0.0
    %635 = vmatpush1.msra.mxu0 0.0
    %636 = vmatprep.mubr.f32.mxu0 0.0
    %637 = vmatmul.mubr.f32.gmra.mrb[0].mxu0 %v567
    %v638 = vpop.f32.mrb[0].mxu0
    %v639 = vadd.f32 0.0, %v638
    %v640 = vpop.f32.mrb[0].mxu0
    %641 = vdwg.mxu0
    %v643 = vrot.slane %v639, 4
    %v645 = vadd.f32 %v639, %v643
    %v646 = vxor.u32 %v645, 2147483648
    %v647 = vmul.f32 %v646, 1.442695
    %v648 = vpow.pop %v647
    %v649 = vadd.f32 %v648, 1.0
    %v650 = vrcp.pop %v649
    %v651 = vmul.f32 1.0, %v650
    %v652 = vlaneseq
    %v653 = vshrl.u32 %v652, 7
    %v654 = vsub.s32 0, %v653
    %v655 = vrot.slane %v651, %v654
    %657 = vbcast.lane.b32.xlu0 %v655, 256
    %v658 = vpop.permute.xlu0 %657
    %s660 = sor.u32 256, 8
    %661 = vbcast.lane.b32.xlu0 %v655, %s660
    %v662 = vpop.permute.xlu0 %661
    %s664 = sor.u32 256, 16
    %665 = vbcast.lane.b32.xlu0 %v655, %s664
    %v666 = vpop.permute.xlu0 %665
    %s668 = sor.u32 256, 24
    %669 = vbcast.lane.b32.xlu0 %v655, %s668
    %v670 = vpop.permute.xlu0 %669
    %v671 = vlaneseq
    %v672 = vshrl.u32 %v671, 7
    %v673 = vsub.s32 1, %v672
    %v674 = vrot.slane %v651, %v673
    %676 = vbcast.lane.b32.xlu0 %v674, 256
    %v677 = vpop.permute.xlu0 %676
    %s679 = sor.u32 256, 8
    %680 = vbcast.lane.b32.xlu0 %v674, %s679
    %v681 = vpop.permute.xlu0 %680
    %s683 = sor.u32 256, 16
    %684 = vbcast.lane.b32.xlu0 %v674, %s683
    %v685 = vpop.permute.xlu0 %684
    %s687 = sor.u32 256, 24
    %688 = vbcast.lane.b32.xlu0 %v674, %s687
    %v689 = vpop.permute.xlu0 %688
    %v690 = vlaneseq
    %v691 = vshrl.u32 %v690, 7
    %v692 = vsub.s32 2, %v691
    %v693 = vrot.slane %v651, %v692
    %695 = vbcast.lane.b32.xlu0 %v693, 256
    %v696 = vpop.permute.xlu0 %695
    %s698 = sor.u32 256, 8
    %699 = vbcast.lane.b32.xlu0 %v693, %s698
    %v700 = vpop.permute.xlu0 %699
    %s702 = sor.u32 256, 16
    %703 = vbcast.lane.b32.xlu0 %v693, %s702
    %v704 = vpop.permute.xlu0 %703
    %s706 = sor.u32 256, 24
    %707 = vbcast.lane.b32.xlu0 %v693, %s706
    %v708 = vpop.permute.xlu0 %707
    %v709 = vlaneseq
    %v710 = vshrl.u32 %v709, 7
    %v711 = vsub.s32 3, %v710
    %v712 = vrot.slane %v651, %v711
    %714 = vbcast.lane.b32.xlu0 %v712, 256
    %v715 = vpop.permute.xlu0 %714
    %s717 = sor.u32 256, 8
    %718 = vbcast.lane.b32.xlu0 %v712, %s717
    %v719 = vpop.permute.xlu0 %718
    %s721 = sor.u32 256, 16
    %722 = vbcast.lane.b32.xlu0 %v712, %s721
    %v723 = vpop.permute.xlu0 %722
    %s725 = sor.u32 256, 24
    %726 = vbcast.lane.b32.xlu0 %v712, %s725
    %v727 = vpop.permute.xlu0 %726
    %v728 = vadd.f32 %v658, 1.0
    %v729 = vadd.f32 %v662, 1.0
    %v730 = vadd.f32 %v666, 1.0
    %v731 = vadd.f32 %v670, 1.0
    %v732 = vadd.f32 %v677, 1.0
    %v733 = vadd.f32 %v681, 1.0
    %v734 = vadd.f32 %v685, 1.0
    %v735 = vadd.f32 %v689, 1.0
    %v736 = vadd.f32 %v696, 1.0
    %v737 = vadd.f32 %v700, 1.0
    %v738 = vadd.f32 %v704, 1.0
    %v739 = vadd.f32 %v708, 1.0
    %v740 = vadd.f32 %v715, 1.0
    %v741 = vadd.f32 %v719, 1.0
    %v742 = vadd.f32 %v723, 1.0
    %v743 = vadd.f32 %v727, 1.0
    %v744 = vmul.f32 %v53, %v728
    %v745 = vmul.f32 %v54, %v728
    %v746 = vmul.f32 %v55, %v729
    %v747 = vmul.f32 %v56, %v729
    %v748 = vmul.f32 %v57, %v730
    %v749 = vmul.f32 %v58, %v730
    %v750 = vmul.f32 %v59, %v731
    %v751 = vmul.f32 %v60, %v731
    %v752 = vmul.f32 %v61, %v732
    %v753 = vmul.f32 %v62, %v732
    %v754 = vmul.f32 %v63, %v733
    %v755 = vmul.f32 %v64, %v733
    %v756 = vmul.f32 %v65, %v734
    %v757 = vmul.f32 %v66, %v734
    %v758 = vmul.f32 %v67, %v735
    %v759 = vmul.f32 %v68, %v735
    %v760 = vmul.f32 %v69, %v736
    %v761 = vmul.f32 %v70, %v736
    %v762 = vmul.f32 %v71, %v737
    %v763 = vmul.f32 %v72, %v737
    %v764 = vmul.f32 %v73, %v738
    %v765 = vmul.f32 %v74, %v738
    %v766 = vmul.f32 %v75, %v739
    %v767 = vmul.f32 %v76, %v739
    %v768 = vmul.f32 %v77, %v740
    %v769 = vmul.f32 %v78, %v740
    %v770 = vmul.f32 %v79, %v741
    %v771 = vmul.f32 %v80, %v741
    %v772 = vmul.f32 %v81, %v742
    %v773 = vmul.f32 %v82, %v742
    %v774 = vmul.f32 %v83, %v743
    %v775 = vmul.f32 %v84, %v743
    %v776 = vmax.f32 %v744, %v746
    %v777 = vmax.f32 %v776, %v748
    %v778 = vmax.f32 %v777, %v750
    %v779 = vrot.slane %v778, 4
    %v780 = vmax.f32 %v778, %v779
    %v781 = vrot.slane %v780, 2
    %v782 = vmax.f32 %v780, %v781
    %v783 = vrot.slane %v782, 1
    %v784 = vmax.f32 %v782, %v783
    %v785 = vmax.f32 %v745, %v747
    %v786 = vmax.f32 %v785, %v749
    %v787 = vmax.f32 %v786, %v751
    %v788 = vrot.slane %v787, 4
    %v789 = vmax.f32 %v787, %v788
    %v790 = vrot.slane %v789, 2
    %v791 = vmax.f32 %v789, %v790
    %v792 = vrot.slane %v791, 1
    %v793 = vmax.f32 %v791, %v792
    %v794 = vmax.f32 %v752, %v754
    %v795 = vmax.f32 %v794, %v756
    %v796 = vmax.f32 %v795, %v758
    %v797 = vrot.slane %v796, 4
    %v798 = vmax.f32 %v796, %v797
    %v799 = vrot.slane %v798, 2
    %v800 = vmax.f32 %v798, %v799
    %v801 = vrot.slane %v800, 1
    %v802 = vmax.f32 %v800, %v801
    %v803 = vmax.f32 %v753, %v755
    %v804 = vmax.f32 %v803, %v757
    %v805 = vmax.f32 %v804, %v759
    %v806 = vrot.slane %v805, 4
    %v807 = vmax.f32 %v805, %v806
    %v808 = vrot.slane %v807, 2
    %v809 = vmax.f32 %v807, %v808
    %v810 = vrot.slane %v809, 1
    %v811 = vmax.f32 %v809, %v810
    %v812 = vmax.f32 %v760, %v762
    %v813 = vmax.f32 %v812, %v764
    %v814 = vmax.f32 %v813, %v766
    %v815 = vrot.slane %v814, 4
    %v816 = vmax.f32 %v814, %v815
    %v817 = vrot.slane %v816, 2
    %v818 = vmax.f32 %v816, %v817
    %v819 = vrot.slane %v818, 1
    %v820 = vmax.f32 %v818, %v819
    %v821 = vmax.f32 %v761, %v763
    %v822 = vmax.f32 %v821, %v765
    %v823 = vmax.f32 %v822, %v767
    %v824 = vrot.slane %v823, 4
    %v825 = vmax.f32 %v823, %v824
    %v826 = vrot.slane %v825, 2
    %v827 = vmax.f32 %v825, %v826
    %v828 = vrot.slane %v827, 1
    %v829 = vmax.f32 %v827, %v828
    %v830 = vmax.f32 %v768, %v770
    %v831 = vmax.f32 %v830, %v772
    %v832 = vmax.f32 %v831, %v774
    %v833 = vrot.slane %v832, 4
    %v834 = vmax.f32 %v832, %v833
    %v835 = vrot.slane %v834, 2
    %v836 = vmax.f32 %v834, %v835
    %v837 = vrot.slane %v836, 1
    %v838 = vmax.f32 %v836, %v837
    %v839 = vmax.f32 %v769, %v771
    %v840 = vmax.f32 %v839, %v773
    %v841 = vmax.f32 %v840, %v775
    %v842 = vrot.slane %v841, 4
    %v843 = vmax.f32 %v841, %v842
    %v844 = vrot.slane %v843, 2
    %v845 = vmax.f32 %v843, %v844
    %v846 = vrot.slane %v845, 1
    %v847 = vmax.f32 %v845, %v846
    %v848 = vadd.f32 %v744, %v746
    %v849 = vadd.f32 %v848, %v748
    %v850 = vadd.f32 %v849, %v750
    %v851 = vrot.slane %v850, 4
    %v852 = vadd.f32 %v850, %v851
    %v853 = vrot.slane %v852, 2
    %v854 = vadd.f32 %v852, %v853
    %v855 = vrot.slane %v854, 1
    %v856 = vadd.f32 %v854, %v855
    %v857 = vadd.f32 %v745, %v747
    %v858 = vadd.f32 %v857, %v749
    %v859 = vadd.f32 %v858, %v751
    %v860 = vrot.slane %v859, 4
    %v861 = vadd.f32 %v859, %v860
    %v862 = vrot.slane %v861, 2
    %v863 = vadd.f32 %v861, %v862
    %v864 = vrot.slane %v863, 1
    %v865 = vadd.f32 %v863, %v864
    %v866 = vadd.f32 %v752, %v754
    %v867 = vadd.f32 %v866, %v756
    %v868 = vadd.f32 %v867, %v758
    %v869 = vrot.slane %v868, 4
    %v870 = vadd.f32 %v868, %v869
    %v871 = vrot.slane %v870, 2
    %v872 = vadd.f32 %v870, %v871
    %v873 = vrot.slane %v872, 1
    %v874 = vadd.f32 %v872, %v873
    %v875 = vadd.f32 %v753, %v755
    %v876 = vadd.f32 %v875, %v757
    %v877 = vadd.f32 %v876, %v759
    %v878 = vrot.slane %v877, 4
    %v879 = vadd.f32 %v877, %v878
    %v880 = vrot.slane %v879, 2
    %v881 = vadd.f32 %v879, %v880
    %v882 = vrot.slane %v881, 1
    %v883 = vadd.f32 %v881, %v882
    %v884 = vadd.f32 %v760, %v762
    %v885 = vadd.f32 %v884, %v764
    %v886 = vadd.f32 %v885, %v766
    %v887 = vrot.slane %v886, 4
    %v888 = vadd.f32 %v886, %v887
    %v889 = vrot.slane %v888, 2
    %v890 = vadd.f32 %v888, %v889
    %v891 = vrot.slane %v890, 1
    %v892 = vadd.f32 %v890, %v891
    %v893 = vadd.f32 %v761, %v763
    %v894 = vadd.f32 %v893, %v765
    %v895 = vadd.f32 %v894, %v767
    %v896 = vrot.slane %v895, 4
    %v897 = vadd.f32 %v895, %v896
    %v898 = vrot.slane %v897, 2
    %v899 = vadd.f32 %v897, %v898
    %v900 = vrot.slane %v899, 1
    %v901 = vadd.f32 %v899, %v900
    %v902 = vadd.f32 %v768, %v770
    %v903 = vadd.f32 %v902, %v772
    %v904 = vadd.f32 %v903, %v774
    %v905 = vrot.slane %v904, 4
    %v906 = vadd.f32 %v904, %v905
    %v907 = vrot.slane %v906, 2
    %v908 = vadd.f32 %v906, %v907
    %v909 = vrot.slane %v908, 1
    %v910 = vadd.f32 %v908, %v909
    %v911 = vadd.f32 %v769, %v771
    %v912 = vadd.f32 %v911, %v773
    %v913 = vadd.f32 %v912, %v775
    %v914 = vrot.slane %v913, 4
    %v915 = vadd.f32 %v913, %v914
    %v916 = vrot.slane %v915, 2
    %v917 = vadd.f32 %v915, %v916
    %v918 = vrot.slane %v917, 1
    %v919 = vadd.f32 %v917, %v918
    %v920 = vrcp.pop 32.0
    %v921 = vmul.f32 %v856, %v920
    %v922 = vmul.f32 %v865, %v920
    %v923 = vmul.f32 %v874, %v920
    %v924 = vmul.f32 %v883, %v920
    %v925 = vmul.f32 %v892, %v920
    %v926 = vmul.f32 %v901, %v920
    %v927 = vmul.f32 %v910, %v920
    %v928 = vmul.f32 %v919, %v920
    %v937 = vsel %vm298, %v802, %v784
    %v938 = vsel %vm300, %v820, %v937
    %v939 = vsel %vm302, %v838, %v938
    %v940 = vsel %vm298, %v811, %v793
    %v941 = vsel %vm300, %v829, %v940
    %v942 = vsel %vm302, %v847, %v941
    %v953 = vsel %vm298, %v923, %v921
    %v954 = vsel %vm300, %v925, %v953
    %v955 = vsel %vm302, %v927, %v954
    %v956 = vsel %vm298, %v924, %v922
    %v957 = vsel %vm300, %v926, %v956
    %v958 = vsel %vm302, %v928, %v957
    %v961 = vld [vmem:[#allocation6] sm:$0xff]
    %v962 = vld [vmem:[#allocation6 + $0x8] sm:$0xff]
    %v963 = vld [vmem:[#allocation6 + $0x10] sm:$0xff]
    %v964 = vld [vmem:[#allocation6 + $0x18] sm:$0xff]
    %v965 = vld [vmem:[#allocation6 + $0x20] sm:$0xff]
    %v966 = vld [vmem:[#allocation6 + $0x28] sm:$0xff]
    %v967 = vld [vmem:[#allocation6 + $0x30] sm:$0xff]
    %v968 = vld [vmem:[#allocation6 + $0x38] sm:$0xff]
    %v969 = vld [vmem:[#allocation6 + $0x40] sm:$0xff]
    %v970 = vld [vmem:[#allocation6 + $0x48] sm:$0xff]
    %v971 = vld [vmem:[#allocation6 + $0x50] sm:$0xff]
    %v972 = vld [vmem:[#allocation6 + $0x58] sm:$0xff]
    %v973 = vld [vmem:[#allocation6 + $0x60] sm:$0xff]
    %v974 = vld [vmem:[#allocation6 + $0x68] sm:$0xff]
    %v975 = vld [vmem:[#allocation6 + $0x70] sm:$0xff]
    %v976 = vld [vmem:[#allocation6 + $0x78] sm:$0xff]
    %v977 = vld [vmem:[#allocation6 + $0x80] sm:$0xff]
    %v978 = vld [vmem:[#allocation6 + $0x88] sm:$0xff]
    %v979 = vld [vmem:[#allocation6 + $0x90] sm:$0xff]
    %v980 = vld [vmem:[#allocation6 + $0x98] sm:$0xff]
    %v981 = vld [vmem:[#allocation6 + $0xa0] sm:$0xff]
    %v982 = vld [vmem:[#allocation6 + $0xa8] sm:$0xff]
    %v983 = vld [vmem:[#allocation6 + $0xb0] sm:$0xff]
    %v984 = vld [vmem:[#allocation6 + $0xb8] sm:$0xff]
    %v985 = vld [vmem:[#allocation6 + $0xc0] sm:$0xff]
    %v986 = vld [vmem:[#allocation6 + $0xc8] sm:$0xff]
    %v987 = vld [vmem:[#allocation6 + $0xd0] sm:$0xff]
    %v988 = vld [vmem:[#allocation6 + $0xd8] sm:$0xff]
    %v989 = vld [vmem:[#allocation6 + $0xe0] sm:$0xff]
    %v990 = vld [vmem:[#allocation6 + $0xe8] sm:$0xff]
    %v991 = vld [vmem:[#allocation6 + $0xf0] sm:$0xff]
    %v992 = vld [vmem:[#allocation6 + $0xf8] sm:$0xff]
    %v993 = vld [vmem:[#allocation6 + $0x100] sm:$0xff]
    %v994 = vld [vmem:[#allocation6 + $0x108] sm:$0xff]
    %v995 = vld [vmem:[#allocation6 + $0x110] sm:$0xff]
    %v996 = vld [vmem:[#allocation6 + $0x118] sm:$0xff]
    %v997 = vld [vmem:[#allocation6 + $0x120] sm:$0xff]
    %v998 = vld [vmem:[#allocation6 + $0x128] sm:$0xff]
    %v999 = vld [vmem:[#allocation6 + $0x130] sm:$0xff]
    %v1000 = vld [vmem:[#allocation6 + $0x138] sm:$0xff]
    %v1001 = vld [vmem:[#allocation6 + $0x140] sm:$0xff]
    %v1002 = vld [vmem:[#allocation6 + $0x148] sm:$0xff]
    %v1003 = vld [vmem:[#allocation6 + $0x150] sm:$0xff]
    %v1004 = vld [vmem:[#allocation6 + $0x158] sm:$0xff]
    %v1005 = vld [vmem:[#allocation6 + $0x160] sm:$0xff]
    %v1006 = vld [vmem:[#allocation6 + $0x168] sm:$0xff]
    %v1007 = vld [vmem:[#allocation6 + $0x170] sm:$0xff]
    %v1008 = vld [vmem:[#allocation6 + $0x178] sm:$0xff]
    %v1009 = vld [vmem:[#allocation6 + $0x180] sm:$0xff]
    %v1010 = vld [vmem:[#allocation6 + $0x188] sm:$0xff]
    %v1011 = vld [vmem:[#allocation6 + $0x190] sm:$0xff]
    %v1012 = vld [vmem:[#allocation6 + $0x198] sm:$0xff]
    %v1013 = vld [vmem:[#allocation6 + $0x1a0] sm:$0xff]
    %v1014 = vld [vmem:[#allocation6 + $0x1a8] sm:$0xff]
    %v1015 = vld [vmem:[#allocation6 + $0x1b0] sm:$0xff]
    %v1016 = vld [vmem:[#allocation6 + $0x1b8] sm:$0xff]
    %v1017 = vld [vmem:[#allocation6 + $0x1c0] sm:$0xff]
    %v1018 = vld [vmem:[#allocation6 + $0x1c8] sm:$0xff]
    %v1019 = vld [vmem:[#allocation6 + $0x1d0] sm:$0xff]
    %v1020 = vld [vmem:[#allocation6 + $0x1d8] sm:$0xff]
    %v1021 = vld [vmem:[#allocation6 + $0x1e0] sm:$0xff]
    %v1022 = vld [vmem:[#allocation6 + $0x1e8] sm:$0xff]
    %v1023 = vld [vmem:[#allocation6 + $0x1f0] sm:$0xff]
    %v1024 = vld [vmem:[#allocation6 + $0x1f8] sm:$0xff]
    %v1025 = vld [vmem:[#allocation6 + $0x200] sm:$0xff]
    %v1026 = vld [vmem:[#allocation6 + $0x208] sm:$0xff]
    %v1027 = vld [vmem:[#allocation6 + $0x210] sm:$0xff]
    %v1028 = vld [vmem:[#allocation6 + $0x218] sm:$0xff]
    %v1029 = vld [vmem:[#allocation6 + $0x220] sm:$0xff]
    %v1030 = vld [vmem:[#allocation6 + $0x228] sm:$0xff]
    %v1031 = vld [vmem:[#allocation6 + $0x230] sm:$0xff]
    %v1032 = vld [vmem:[#allocation6 + $0x238] sm:$0xff]
    %v1033 = vld [vmem:[#allocation6 + $0x240] sm:$0xff]
    %v1034 = vld [vmem:[#allocation6 + $0x248] sm:$0xff]
    %v1035 = vld [vmem:[#allocation6 + $0x250] sm:$0xff]
    %v1036 = vld [vmem:[#allocation6 + $0x258] sm:$0xff]
    %v1037 = vld [vmem:[#allocation6 + $0x260] sm:$0xff]
    %v1038 = vld [vmem:[#allocation6 + $0x268] sm:$0xff]
    %v1039 = vld [vmem:[#allocation6 + $0x270] sm:$0xff]
    %v1040 = vld [vmem:[#allocation6 + $0x278] sm:$0xff]
    %v1041 = vld [vmem:[#allocation6 + $0x280] sm:$0xff]
    %v1042 = vld [vmem:[#allocation6 + $0x288] sm:$0xff]
    %v1043 = vld [vmem:[#allocation6 + $0x290] sm:$0xff]
    %v1044 = vld [vmem:[#allocation6 + $0x298] sm:$0xff]
    %v1045 = vld [vmem:[#allocation6 + $0x2a0] sm:$0xff]
    %v1046 = vld [vmem:[#allocation6 + $0x2a8] sm:$0xff]
    %v1047 = vld [vmem:[#allocation6 + $0x2b0] sm:$0xff]
    %v1048 = vld [vmem:[#allocation6 + $0x2b8] sm:$0xff]
    %v1049 = vld [vmem:[#allocation6 + $0x2c0] sm:$0xff]
    %v1050 = vld [vmem:[#allocation6 + $0x2c8] sm:$0xff]
    %v1051 = vld [vmem:[#allocation6 + $0x2d0] sm:$0xff]
    %v1052 = vld [vmem:[#allocation6 + $0x2d8] sm:$0xff]
    %v1053 = vld [vmem:[#allocation6 + $0x2e0] sm:$0xff]
    %v1054 = vld [vmem:[#allocation6 + $0x2e8] sm:$0xff]
    %v1055 = vld [vmem:[#allocation6 + $0x2f0] sm:$0xff]
    %v1056 = vld [vmem:[#allocation6 + $0x2f8] sm:$0xff]
    %v1057 = vld [vmem:[#allocation6 + $0x300] sm:$0xff]
    %v1058 = vld [vmem:[#allocation6 + $0x308] sm:$0xff]
    %v1059 = vld [vmem:[#allocation6 + $0x310] sm:$0xff]
    %v1060 = vld [vmem:[#allocation6 + $0x318] sm:$0xff]
    %v1061 = vld [vmem:[#allocation6 + $0x320] sm:$0xff]
    %v1062 = vld [vmem:[#allocation6 + $0x328] sm:$0xff]
    %v1063 = vld [vmem:[#allocation6 + $0x330] sm:$0xff]
    %v1064 = vld [vmem:[#allocation6 + $0x338] sm:$0xff]
    %v1065 = vld [vmem:[#allocation6 + $0x340] sm:$0xff]
    %v1066 = vld [vmem:[#allocation6 + $0x348] sm:$0xff]
    %v1067 = vld [vmem:[#allocation6 + $0x350] sm:$0xff]
    %v1068 = vld [vmem:[#allocation6 + $0x358] sm:$0xff]
    %v1069 = vld [vmem:[#allocation6 + $0x360] sm:$0xff]
    %v1070 = vld [vmem:[#allocation6 + $0x368] sm:$0xff]
    %v1071 = vld [vmem:[#allocation6 + $0x370] sm:$0xff]
    %v1072 = vld [vmem:[#allocation6 + $0x378] sm:$0xff]
    %v1073 = vld [vmem:[#allocation6 + $0x380] sm:$0xff]
    %v1074 = vld [vmem:[#allocation6 + $0x388] sm:$0xff]
    %v1075 = vld [vmem:[#allocation6 + $0x390] sm:$0xff]
    %v1076 = vld [vmem:[#allocation6 + $0x398] sm:$0xff]
    %v1077 = vld [vmem:[#allocation6 + $0x3a0] sm:$0xff]
    %v1078 = vld [vmem:[#allocation6 + $0x3a8] sm:$0xff]
    %v1079 = vld [vmem:[#allocation6 + $0x3b0] sm:$0xff]
    %v1080 = vld [vmem:[#allocation6 + $0x3b8] sm:$0xff]
    %v1081 = vld [vmem:[#allocation6 + $0x3c0] sm:$0xff]
    %v1082 = vld [vmem:[#allocation6 + $0x3c8] sm:$0xff]
    %v1083 = vld [vmem:[#allocation6 + $0x3d0] sm:$0xff]
    %v1084 = vld [vmem:[#allocation6 + $0x3d8] sm:$0xff]
    %v1085 = vld [vmem:[#allocation6 + $0x3e0] sm:$0xff]
    %v1086 = vld [vmem:[#allocation6 + $0x3e8] sm:$0xff]
    %v1087 = vld [vmem:[#allocation6 + $0x3f0] sm:$0xff]
    %v1088 = vld [vmem:[#allocation6 + $0x3f8] sm:$0xff]
    %s1089 = sld [smem:[#allocation2]]
    %v1090 = vstv %s1089
    %1091 = vmatprep.subr.mxu0 %v962
    %1092 = vmatpush1.msra.mxu0 %v961
    %1093 = vmatprep.subr.mxu0 %v964
    %1094 = vmatpush1.msra.mxu0 %v963
    %1095 = vmatprep.subr.mxu0 %v966
    %1096 = vmatpush1.msra.mxu0 %v965
    %1097 = vmatprep.subr.mxu0 %v968
    %1098 = vmatpush1.msra.mxu0 %v967
    %1099 = vmatprep.subr.mxu0 %v970
    %1100 = vmatpush1.msra.mxu0 %v969
    %1101 = vmatprep.subr.mxu0 %v972
    %1102 = vmatpush1.msra.mxu0 %v971
    %1103 = vmatprep.subr.mxu0 %v974
    %1104 = vmatpush1.msra.mxu0 %v973
    %1105 = vmatprep.subr.mxu0 %v976
    %1106 = vmatpush1.msra.mxu0 %v975
    %1107 = vmatprep.subr.mxu0 %v978
    %1108 = vmatpush1.msra.mxu0 %v977
    %1109 = vmatprep.subr.mxu0 %v980
    %1110 = vmatpush1.msra.mxu0 %v979
    %1111 = vmatprep.subr.mxu0 %v982
    %1112 = vmatpush1.msra.mxu0 %v981
    %1113 = vmatprep.subr.mxu0 %v984
    %1114 = vmatpush1.msra.mxu0 %v983
    %1115 = vmatprep.subr.mxu0 %v986
    %1116 = vmatpush1.msra.mxu0 %v985
    %1117 = vmatprep.subr.mxu0 %v988
    %1118 = vmatpush1.msra.mxu0 %v987
    %1119 = vmatprep.subr.mxu0 %v990
    %1120 = vmatpush1.msra.mxu0 %v989
    %1121 = vmatprep.subr.mxu0 %v992
    %1122 = vmatpush1.msra.mxu0 %v991
    %1123 = vmatprep.subr.mxu0 %v994
    %1124 = vmatpush1.msra.mxu0 %v993
    %1125 = vmatprep.subr.mxu0 %v996
    %1126 = vmatpush1.msra.mxu0 %v995
    %1127 = vmatprep.subr.mxu0 %v998
    %1128 = vmatpush1.msra.mxu0 %v997
    %1129 = vmatprep.subr.mxu0 %v1000
    %1130 = vmatpush1.msra.mxu0 %v999
    %1131 = vmatprep.subr.mxu0 %v1002
    %1132 = vmatpush1.msra.mxu0 %v1001
    %1133 = vmatprep.subr.mxu0 %v1004
    %1134 = vmatpush1.msra.mxu0 %v1003
    %1135 = vmatprep.subr.mxu0 %v1006
    %1136 = vmatpush1.msra.mxu0 %v1005
    %1137 = vmatprep.subr.mxu0 %v1008
    %1138 = vmatpush1.msra.mxu0 %v1007
    %1139 = vmatprep.subr.mxu0 %v1010
    %1140 = vmatpush1.msra.mxu0 %v1009
    %1141 = vmatprep.subr.mxu0 %v1012
    %1142 = vmatpush1.msra.mxu0 %v1011
    %1143 = vmatprep.subr.mxu0 %v1014
    %1144 = vmatpush1.msra.mxu0 %v1013
    %1145 = vmatprep.subr.mxu0 %v1016
    %1146 = vmatpush1.msra.mxu0 %v1015
    %1147 = vmatprep.subr.mxu0 %v1018
    %1148 = vmatpush1.msra.mxu0 %v1017
    %1149 = vmatprep.subr.mxu0 %v1020
    %1150 = vmatpush1.msra.mxu0 %v1019
    %1151 = vmatprep.subr.mxu0 %v1022
    %1152 = vmatpush1.msra.mxu0 %v1021
    %1153 = vmatprep.subr.mxu0 %v1024
    %1154 = vmatpush1.msra.mxu0 %v1023
    %1155 = vmatprep.mubr.f32.mxu0 %v942
    %1156 = vmatmul.mubr.f32.gmra.mrb[0].mxu0 %v939
    %v1157 = vpop.f32.mrb[0].mxu0
    %v1158 = vadd.f32 %v1090, %v1157
    %v1159 = vpop.f32.mrb[0].mxu0
    %v1160 = vadd.f32 %v1090, %v1159
    %1161 = vdwg.mxu0
    %1162 = vmatprep.subr.mxu0 %v1026
    %1163 = vmatpush1.msra.mxu0 %v1025
    %1164 = vmatprep.subr.mxu0 %v1028
    %1165 = vmatpush1.msra.mxu0 %v1027
    %1166 = vmatprep.subr.mxu0 %v1030
    %1167 = vmatpush1.msra.mxu0 %v1029
    %1168 = vmatprep.subr.mxu0 %v1032
    %1169 = vmatpush1.msra.mxu0 %v1031
    %1170 = vmatprep.subr.mxu0 %v1034
    %1171 = vmatpush1.msra.mxu0 %v1033
    %1172 = vmatprep.subr.mxu0 %v1036
    %1173 = vmatpush1.msra.mxu0 %v1035
    %1174 = vmatprep.subr.mxu0 %v1038
    %1175 = vmatpush1.msra.mxu0 %v1037
    %1176 = vmatprep.subr.mxu0 %v1040
    %1177 = vmatpush1.msra.mxu0 %v1039
    %1178 = vmatprep.subr.mxu0 %v1042
    %1179 = vmatpush1.msra.mxu0 %v1041
    %1180 = vmatprep.subr.mxu0 %v1044
    %1181 = vmatpush1.msra.mxu0 %v1043
    %1182 = vmatprep.subr.mxu0 %v1046
    %1183 = vmatpush1.msra.mxu0 %v1045
    %1184 = vmatprep.subr.mxu0 %v1048
    %1185 = vmatpush1.msra.mxu0 %v1047
    %1186 = vmatprep.subr.mxu0 %v1050
    %1187 = vmatpush1.msra.mxu0 %v1049
    %1188 = vmatprep.subr.mxu0 %v1052
    %1189 = vmatpush1.msra.mxu0 %v1051
    %1190 = vmatprep.subr.mxu0 %v1054
    %1191 = vmatpush1.msra.mxu0 %v1053
    %1192 = vmatprep.subr.mxu0 %v1056
    %1193 = vmatpush1.msra.mxu0 %v1055
    %1194 = vmatprep.subr.mxu0 %v1058
    %1195 = vmatpush1.msra.mxu0 %v1057
    %1196 = vmatprep.subr.mxu0 %v1060
    %1197 = vmatpush1.msra.mxu0 %v1059
    %1198 = vmatprep.subr.mxu0 %v1062
    %1199 = vmatpush1.msra.mxu0 %v1061
    %1200 = vmatprep.subr.mxu0 %v1064
    %1201 = vmatpush1.msra.mxu0 %v1063
    %1202 = vmatprep.subr.mxu0 %v1066
    %1203 = vmatpush1.msra.mxu0 %v1065
    %1204 = vmatprep.subr.mxu0 %v1068
    %1205 = vmatpush1.msra.mxu0 %v1067
    %1206 = vmatprep.subr.mxu0 %v1070
    %1207 = vmatpush1.msra.mxu0 %v1069
    %1208 = vmatprep.subr.mxu0 %v1072
    %1209 = vmatpush1.msra.mxu0 %v1071
    %1210 = vmatprep.subr.mxu0 %v1074
    %1211 = vmatpush1.msra.mxu0 %v1073
    %1212 = vmatprep.subr.mxu0 %v1076
    %1213 = vmatpush1.msra.mxu0 %v1075
    %1214 = vmatprep.subr.mxu0 %v1078
    %1215 = vmatpush1.msra.mxu0 %v1077
    %1216 = vmatprep.subr.mxu0 %v1080
    %1217 = vmatpush1.msra.mxu0 %v1079
    %1218 = vmatprep.subr.mxu0 %v1082
    %1219 = vmatpush1.msra.mxu0 %v1081
    %1220 = vmatprep.subr.mxu0 %v1084
    %1221 = vmatpush1.msra.mxu0 %v1083
    %1222 = vmatprep.subr.mxu0 %v1086
    %1223 = vmatpush1.msra.mxu0 %v1085
    %1224 = vmatprep.subr.mxu0 %v1088
    %1225 = vmatpush1.msra.mxu0 %v1087
    %1226 = vmatprep.mubr.f32.mxu0 %v958
    %1227 = vmatmul.mubr.f32.gmra.mrb[0].mxu0 %v955
    %v1228 = vpop.f32.mrb[0].mxu0
    %v1229 = vadd.f32 %v1158, %v1228
    %v1230 = vpop.f32.mrb[0].mxu0
    %v1231 = vadd.f32 %v1160, %v1230
    %1232 = vdwg.mxu0
    %v1233 = vxor.u32 %v1229, 2147483648
    %v1234 = vxor.u32 %v1231, 2147483648
    %v1235 = vmul.f32 %v1233, 1.442695
    %v1236 = vpow.pop %v1235
    %v1237 = vmul.f32 %v1234, 1.442695
    %v1238 = vpow.pop %v1237
    %v1239 = vadd.f32 %v1236, 1.0
    %v1240 = vadd.f32 %v1238, 1.0
    %v1241 = vrcp.pop %v1239
    %v1242 = vmul.f32 1.0, %v1241
    %v1243 = vrcp.pop %v1240
    %v1244 = vmul.f32 1.0, %v1243
    %v1247 = vcombine.low %v1242, %v1244
    %v1249 = vunpack.c.l.s4 1966171168
    %v1250 = vunpack.c.0.s8 %v1249
    %v1251 = vlaneseq
    %v1252 = vshrl.u32 %v1251, 7
    %v1253 = vsub.s32 %v1250, %v1252
    %v1254 = vrot.slane %v1247, %v1253
    %v1255 = vcombine.high %v1254, %v1254
    %v1257 = vunpack.c.l.s4 1966171168
    %v1258 = vunpack.c.0.s8 %v1257
    %v1259 = vlaneseq
    %v1260 = vshrl.u32 %v1259, 7
    %v1261 = vsub.s32 %v1258, %v1260
    %v1262 = vrot.slane %v1254, %v1261
    %v1264 = vunpack.c.l.s4 1966171168
    %v1265 = vunpack.c.0.s8 %v1264
    %v1266 = vlaneseq
    %v1267 = vshrl.u32 %v1266, 7
    %v1268 = vsub.s32 %v1265, %v1267
    %v1269 = vrot.slane %v1255, %v1268
    %v1270 = vcombine.high %v1262, %v1262
    %v1271 = vcombine.high %v1269, %v1269
    %v1276 = vadd.f32 %v1262, 1.0
    %v1277 = vadd.f32 %v1269, 1.0
    %v1278 = vadd.f32 %v1270, 1.0
    %v1279 = vadd.f32 %v1271, 1.0
    %v1284 = vlaneseq
    %v1285 = vshrl.u32 %v1284, 7
    %v1286 = vsub.s32 0, %v1285
    %v1287 = vrot.slane %v1276, %v1286
    %v1288 = vlaneseq
    %v1289 = vshrl.u32 %v1288, 7
    %v1290 = vsub.s32 1, %v1289
    %v1291 = vrot.slane %v1276, %v1290
    %v1292 = vlaneseq
    %v1293 = vshrl.u32 %v1292, 7
    %v1294 = vsub.s32 0, %v1293
    %v1295 = vrot.slane %v1277, %v1294
    %v1296 = vlaneseq
    %v1297 = vshrl.u32 %v1296, 7
    %v1298 = vsub.s32 1, %v1297
    %v1299 = vrot.slane %v1277, %v1298
    %v1300 = vlaneseq
    %v1301 = vshrl.u32 %v1300, 7
    %v1302 = vsub.s32 0, %v1301
    %v1303 = vrot.slane %v1278, %v1302
    %v1304 = vlaneseq
    %v1305 = vshrl.u32 %v1304, 7
    %v1306 = vsub.s32 1, %v1305
    %v1307 = vrot.slane %v1278, %v1306
    %v1308 = vlaneseq
    %v1309 = vshrl.u32 %v1308, 7
    %v1310 = vsub.s32 0, %v1309
    %v1311 = vrot.slane %v1279, %v1310
    %v1312 = vlaneseq
    %v1313 = vshrl.u32 %v1312, 7
    %v1314 = vsub.s32 1, %v1313
    %v1315 = vrot.slane %v1279, %v1314
    %v1324 = vmul.f32 %v744, %v1287
    %v1325 = vmul.f32 %v745, %v1291
    %v1326 = vmul.f32 %v746, %v1287
    %v1327 = vmul.f32 %v747, %v1291
    %v1328 = vmul.f32 %v748, %v1287
    %v1329 = vmul.f32 %v749, %v1291
    %v1330 = vmul.f32 %v750, %v1287
    %v1331 = vmul.f32 %v751, %v1291
    %v1332 = vmul.f32 %v752, %v1295
    %v1333 = vmul.f32 %v753, %v1299
    %v1334 = vmul.f32 %v754, %v1295
    %v1335 = vmul.f32 %v755, %v1299
    %v1336 = vmul.f32 %v756, %v1295
    %v1337 = vmul.f32 %v757, %v1299
    %v1338 = vmul.f32 %v758, %v1295
    %v1339 = vmul.f32 %v759, %v1299
    %v1340 = vmul.f32 %v760, %v1303
    %v1341 = vmul.f32 %v761, %v1307
    %v1342 = vmul.f32 %v762, %v1303
    %v1343 = vmul.f32 %v763, %v1307
    %v1344 = vmul.f32 %v764, %v1303
    %v1345 = vmul.f32 %v765, %v1307
    %v1346 = vmul.f32 %v766, %v1303
    %v1347 = vmul.f32 %v767, %v1307
    %v1348 = vmul.f32 %v768, %v1311
    %v1349 = vmul.f32 %v769, %v1315
    %v1350 = vmul.f32 %v770, %v1311
    %v1351 = vmul.f32 %v771, %v1315
    %v1352 = vmul.f32 %v772, %v1311
    %v1353 = vmul.f32 %v773, %v1315
    %v1354 = vmul.f32 %v774, %v1311
    %v1355 = vmul.f32 %v775, %v1315
    %1356 = vst [vmem:[#allocation8] sm:$0xff] %v1324
    %1357 = vst [vmem:[#allocation8 + $0x8] sm:$0xff] %v1325
    %1358 = vst [vmem:[#allocation8 + $0x10] sm:$0xff] %v1326
    %1359 = vst [vmem:[#allocation8 + $0x18] sm:$0xff] %v1327
    %1360 = vst [vmem:[#allocation8 + $0x20] sm:$0xff] %v1328
    %1361 = vst [vmem:[#allocation8 + $0x28] sm:$0xff] %v1329
    %1362 = vst [vmem:[#allocation8 + $0x30] sm:$0xff] %v1330
    %1363 = vst [vmem:[#allocation8 + $0x38] sm:$0xff] %v1331
    %1364 = vst [vmem:[#allocation8 + $0x40] sm:$0xff] %v1332
    %1365 = vst [vmem:[#allocation8 + $0x48] sm:$0xff] %v1333
    %1366 = vst [vmem:[#allocation8 + $0x50] sm:$0xff] %v1334
    %1367 = vst [vmem:[#allocation8 + $0x58] sm:$0xff] %v1335
    %1368 = vst [vmem:[#allocation8 + $0x60] sm:$0xff] %v1336
    %1369 = vst [vmem:[#allocation8 + $0x68] sm:$0xff] %v1337
    %1370 = vst [vmem:[#allocation8 + $0x70] sm:$0xff] %v1338
    %1371 = vst [vmem:[#allocation8 + $0x78] sm:$0xff] %v1339
    %1372 = vst [vmem:[#allocation8 + $0x80] sm:$0xff] %v1340
    %1373 = vst [vmem:[#allocation8 + $0x88] sm:$0xff] %v1341
    %1374 = vst [vmem:[#allocation8 + $0x90] sm:$0xff] %v1342
    %1375 = vst [vmem:[#allocation8 + $0x98] sm:$0xff] %v1343
    %1376 = vst [vmem:[#allocation8 + $0xa0] sm:$0xff] %v1344
    %1377 = vst [vmem:[#allocation8 + $0xa8] sm:$0xff] %v1345
    %1378 = vst [vmem:[#allocation8 + $0xb0] sm:$0xff] %v1346
    %1379 = vst [vmem:[#allocation8 + $0xb8] sm:$0xff] %v1347
    %1380 = vst [vmem:[#allocation8 + $0xc0] sm:$0xff] %v1348
    %1381 = vst [vmem:[#allocation8 + $0xc8] sm:$0xff] %v1349
    %1382 = vst [vmem:[#allocation8 + $0xd0] sm:$0xff] %v1350
    %1383 = vst [vmem:[#allocation8 + $0xd8] sm:$0xff] %v1351
    %1384 = vst [vmem:[#allocation8 + $0xe0] sm:$0xff] %v1352
    %1385 = vst [vmem:[#allocation8 + $0xe8] sm:$0xff] %v1353
    %1386 = vst [vmem:[#allocation8 + $0xf0] sm:$0xff] %v1354
    %1387 = vst [vmem:[#allocation8 + $0xf8] sm:$0xff] %v1355
    // Predicated region
    $region34: #{tpu_custom_call.1} parent=1 // pred_check
      _
    $region35: #{tpu_custom_call.1} parent=1 // pred_check_branch
      %1389 = sbr.rel (0) target = $region37
    $region36: #{tpu_custom_call.1} parent=1 // pred_region
      %s1391 = ssub.s32 4096, 4096
      %1392 = vsyncadd [#allocation5], %s1391
      %s1393 = sshll.u32 [#allocation8], 4
      %s1394 = int_to_ptr.vmem [resolvable:$true] %s1393
      %1399 = dma.vmem_to_hbm [thread:$0]  %s1394, 4096, %s6, [#allocation5], 256, 256, 16
    $region37: #{tpu_custom_call.1} parent=1 // pred_fallthru
      _
    // Predicated region
    $region38: #{tpu_custom_call.1} parent=1 // pred_check
      _
    $region39: #{tpu_custom_call.1} parent=1 // pred_check_branch
      %1401 = sbr.rel (0) target = $region41
    $region40: #{tpu_custom_call.1} parent=1 // pred_region
      %1402 = dma.done [#allocation5], 4096
    $region41: #{tpu_custom_call.1} parent=1 // pred_fallthru
      _
    %1403 = vsyncpa [#allocation4], 1
    %1404 = vsyncpa [#allocation7], 1
    %1405 = vsyncpa [#allocation5], 1

</llo_original>
